<compile_context>
chip_gen: v6e
topology: v6e:2x2x1
jax: 0.10.0
libtpu: 0.0.40
codegen_flags: <defaults>
</compile_context>

<pallas_src>
import math

import jax
import jax.numpy as jnp
from jax.experimental import pallas as pl
from jax.experimental.pallas import tpu as pltpu

D_MODEL = 32
N_HEADS = 4
DK = D_MODEL // N_HEADS
D_FF = 64
N_LAYERS = 2
EPS = 1e-6  # Annotated-Transformer LayerNorm eps


def _layer_norm(x, a, b):
    # Annotated-Transformer LayerNorm: a*(x-mean)/(std+eps)+b with torch's
    # unbiased std (ddof=1), eps added to std (not variance).
    mean = jnp.mean(x, axis=-1, keepdims=True)
    centered = x - mean
    var = jnp.sum(centered * centered, axis=-1, keepdims=True) * jnp.float32(
        1.0 / (x.shape[-1] - 1))
    inv = pl.reciprocal(jnp.sqrt(var) + jnp.float32(EPS), approx=False)
    return a * centered * inv + b


def encoder_kernel(x_ref, mask_ref,
                   w_qkv_ref, b_qkv_ref, w_o_ref,
                   ln_ab_ref, bias_d_ref,
                   w1_ref, b1_ref, w2_ref,
                   final_ab_ref,
                   out_ref):
    B, S, D = x_ref.shape
    BS = B * S

    # Residual stream kept flat (B*S, D): every dense matmul is a plain 2-D matmul.
    x2 = x_ref[...].reshape(BS, D)

    # Hoisted mask test (matches scores.masked_fill(mask == 0, -1e9)).
    keep = mask_ref[...] != 0.0                       # (B, 1, S) bool
    neg_inf = jnp.float32(-1e9)
    inv_sqrt_dk = jnp.float32(1.0 / math.sqrt(DK))

    for l in range(N_LAYERS):                         # static unroll (N_LAYERS = 2)
        # ---------- self-attention sublayer: x + attn(norm(x)) ----------
        xn = _layer_norm(x2, ln_ab_ref[4 * l + 0], ln_ab_ref[4 * l + 1])
        attn = jnp.zeros((BS, D), jnp.float32)
        for h in range(N_HEADS):                      # static unroll, per-head weights
            iq = (3 * l + 0) * N_HEADS + h
            ik = (3 * l + 1) * N_HEADS + h
            iv = (3 * l + 2) * N_HEADS + h
            qh = jnp.dot(xn, w_qkv_ref[iq],
                         preferred_element_type=jnp.float32) + b_qkv_ref[iq]
            kh = jnp.dot(xn, w_qkv_ref[ik],
                         preferred_element_type=jnp.float32) + b_qkv_ref[ik]
            vh = jnp.dot(xn, w_qkv_ref[iv],
                         preferred_element_type=jnp.float32) + b_qkv_ref[iv]
            qh3 = qh.reshape(B, S, DK)
            kh3 = kh.reshape(B, S, DK)
            vh3 = vh.reshape(B, S, DK)
            scores = jnp.einsum('bqd,bkd->bqk', qh3, kh3,
                                preferred_element_type=jnp.float32) * inv_sqrt_dk
            scores = jnp.where(keep, scores, neg_inf)         # (B,1,S) bcast -> (B,S,S)
            scores = scores - jnp.max(scores, axis=-1, keepdims=True)
            p = jnp.exp(scores)
            p = p * pl.reciprocal(jnp.sum(p, axis=-1, keepdims=True), approx=False)
            ctx = jnp.einsum('bqk,bkd->bqd', p, vh3,
                             preferred_element_type=jnp.float32)
            attn = attn + jnp.dot(ctx.reshape(BS, DK), w_o_ref[l * N_HEADS + h],
                                  preferred_element_type=jnp.float32)
        x2 = x2 + attn + bias_d_ref[2 * l + 0]        # + bo, residual (dropout == id)

        # ---------- feed-forward sublayer: x + W2(relu(W1(norm(x)))) ----------
        yn = _layer_norm(x2, ln_ab_ref[4 * l + 2], ln_ab_ref[4 * l + 3])
        h1 = jnp.maximum(
            jnp.dot(yn, w1_ref[l], preferred_element_type=jnp.float32) + b1_ref[l],
            0.0)
        x2 = x2 + jnp.dot(h1, w2_ref[l],
                          preferred_element_type=jnp.float32) + bias_d_ref[2 * l + 1]

    # ---------- final LayerNorm ----------
    out = _layer_norm(x2, final_ab_ref[0], final_ab_ref[1])
    out_ref[...] = out.reshape(B, S, D)


_VMEM = pl.BlockSpec(memory_space=pltpu.MemorySpace.VMEM)


@jax.jit
def encoder_forward(src, tgt, src_mask, tgt_mask, packed):
    """EncoderClass.forward(src, tgt, src_mask, tgt_mask) -> encode(src, src_mask).
    tgt / tgt_mask are accepted but unused, exactly like the PyTorch module."""
    del tgt, tgt_mask
    args = (src, src_mask,
            packed['w_qkv'], packed['b_qkv'], packed['w_o'],
            packed['ln_ab'], packed['bias_d'],
            packed['w1'], packed['b1'], packed['w2'],
            packed['final_ab'])
    return pl.pallas_call(
        encoder_kernel,
        out_shape=jax.ShapeDtypeStruct(src.shape, jnp.float32),
        in_specs=[_VMEM] * len(args),
        out_specs=_VMEM,
    )(*args)


def init_params(key):
    # Deterministic synthetic init (weights stored as (d_in, d_out), i.e. y = x @ W + b).
    def lin(k, din, dout):
        kw, kb = jax.random.split(k)
        w = jax.random.normal(kw, (din, dout), jnp.float32) * (1.0 / math.sqrt(din))
        b = jax.random.normal(kb, (1, dout), jnp.float32) * 0.01
        return w, b

    layers = []
    for i in range(N_LAYERS):
        ks = jax.random.split(jax.random.fold_in(key, i), 6)
        wq, bq = lin(ks[0], D_MODEL, D_MODEL)
        wk, bk = lin(ks[1], D_MODEL, D_MODEL)
        wv, bv = lin(ks[2], D_MODEL, D_MODEL)
        wo, bo = lin(ks[3], D_MODEL, D_MODEL)
        w1, b1 = lin(ks[4], D_MODEL, D_FF)
        w2, b2 = lin(ks[5], D_FF, D_MODEL)
        layers.append(dict(
            wq=wq, bq=bq, wk=wk, bk=bk, wv=wv, bv=bv, wo=wo, bo=bo,
            ln1a=jnp.ones((1, D_MODEL), jnp.float32),
            ln1b=jnp.zeros((1, D_MODEL), jnp.float32),
            ln2a=jnp.ones((1, D_MODEL), jnp.float32),
            ln2b=jnp.zeros((1, D_MODEL), jnp.float32),
            w1=w1, b1=b1, w2=w2, b2=b2))
    return dict(layers=layers,
                norm_a=jnp.ones((1, D_MODEL), jnp.float32),
                norm_b=jnp.zeros((1, D_MODEL), jnp.float32))


def pack_params(params):
    """Stack per-layer weights on a leading axis, pre-split Q/K/V/O per head, and
    consolidate the tiny (1,D) vectors so the fused kernel sees a handful of refs."""
    L = len(params['layers'])
    stack = lambda name: jnp.stack([lp[name] for lp in params['layers']])

    def heads_in(w):   # (L, D, D) used as x @ W  ->  (L, H, D, dk)
        return w.reshape(L, D_MODEL, N_HEADS, DK).transpose(0, 2, 1, 3)

    def heads_b(b):    # (L, 1, D) -> (L, H, 1, dk)
        return b.reshape(L, N_HEADS, DK)[:, :, None, :]

    # ordering = [layer][q,k,v][head]  ->  flat index (3*l + which)*H + h
    w_qkv = jnp.stack([heads_in(stack('wq')), heads_in(stack('wk')),
                       heads_in(stack('wv'))], axis=1).reshape(L * 3 * N_HEADS,
                                                               D_MODEL, DK)
    b_qkv = jnp.stack([heads_b(stack('bq')), heads_b(stack('bk')),
                       heads_b(stack('bv'))], axis=1).reshape(L * 3 * N_HEADS, 1, DK)
    # wo rows h*dk:(h+1)*dk belong to head h -> (L*H, dk, D), flat index l*H + h
    w_o = stack('wo').reshape(L * N_HEADS, DK, D_MODEL)
    # [ln1a, ln1b, ln2a, ln2b] per layer -> flat index 4*l + j
    ln_ab = jnp.stack([stack('ln1a'), stack('ln1b'), stack('ln2a'), stack('ln2b')],
                      axis=1).reshape(L * 4, 1, D_MODEL)
    # [bo, b2] per layer -> flat index 2*l + j
    bias_d = jnp.stack([stack('bo'), stack('b2')], axis=1).reshape(L * 2, 1, D_MODEL)
    final_ab = jnp.stack([params['norm_a'], params['norm_b']], axis=0)  # (2, 1, D)
    return dict(w_qkv=w_qkv, b_qkv=b_qkv, w_o=w_o, ln_ab=ln_ab, bias_d=bias_d,
                w1=stack('w1'), b1=stack('b1'), w2=stack('w2'), final_ab=final_ab)


if __name__ == "__main__":
    B, S = 2, 8
    key = jax.random.PRNGKey(0)
    k_src, k_par = jax.random.split(key)

    src = jax.random.normal(k_src, (B, S, D_MODEL), jnp.float32)       # already embedded
    tgt = jnp.zeros((B, S, D_MODEL), jnp.float32)                      # unused by forward
    src_mask = jnp.ones((B, 1, S), jnp.float32).at[1, 0, 6:].set(0.0)  # pad last 2 of batch 1
    tgt_mask = jnp.ones((B, 1, S), jnp.float32)                        # unused by forward

    packed = pack_params(init_params(k_par))
    out = encoder_forward(src, tgt, src_mask, tgt_mask, packed)
    jax.block_until_ready(out)

    assert out.shape == (B, S, D_MODEL), out.shape
    assert bool(jnp.all(jnp.isfinite(out)))
    print("KERNEL_OK")
</pallas_src>

<mosaic_0001>
module attributes {stable_mosaic.version = 11 : i64} {
  func.func @encoder_kernel(%arg0: memref<2x8x32xf32, #tpu.memory_space<vmem>>, %arg1: memref<2x1x8xf32, #tpu.memory_space<vmem>>, %arg2: memref<24x32x8xf32, #tpu.memory_space<vmem>>, %arg3: memref<24x1x8xf32, #tpu.memory_space<vmem>>, %arg4: memref<8x8x32xf32, #tpu.memory_space<vmem>>, %arg5: memref<8x1x32xf32, #tpu.memory_space<vmem>>, %arg6: memref<4x1x32xf32, #tpu.memory_space<vmem>>, %arg7: memref<2x32x64xf32, #tpu.memory_space<vmem>>, %arg8: memref<2x1x64xf32, #tpu.memory_space<vmem>>, %arg9: memref<2x64x32xf32, #tpu.memory_space<vmem>>, %arg10: memref<2x1x32xf32, #tpu.memory_space<vmem>>, %arg11: memref<2x8x32xf32, #tpu.memory_space<vmem>>) attributes {dimension_semantics = [], scalar_prefetch = 0 : i64, scratch_operands = 0 : i64, tpu.core_type = #tpu.core_type<tc>} {
    %c0 = arith.constant 0 : index
    %c0_0 = arith.constant 0 : index
    %c0_1 = arith.constant 0 : index
    %0 = vector.load %arg0[%c0, %c0_0, %c0_1] : memref<2x8x32xf32, #tpu.memory_space<vmem>>, vector<2x8x32xf32>
    %1 = vector.shape_cast %0 : vector<2x8x32xf32> to vector<16x32xf32>
    %c0_2 = arith.constant 0 : index
    %c0_3 = arith.constant 0 : index
    %c0_4 = arith.constant 0 : index
    %2 = vector.load %arg1[%c0_2, %c0_3, %c0_4] : memref<2x1x8xf32, #tpu.memory_space<vmem>>, vector<2x1x8xf32>
    %cst = arith.constant 0.000000e+00 : f32
    %3 = vector.broadcast %cst : f32 to vector<2x1x8xf32>
    %4 = arith.cmpf one, %2, %3 : vector<2x1x8xf32>
    %c0_5 = arith.constant 0 : index
    %c0_6 = arith.constant 0 : index
    %c0_7 = arith.constant 0 : index
    %5 = vector.load %arg5[%c0_5, %c0_6, %c0_7] : memref<8x1x32xf32, #tpu.memory_space<vmem>>, vector<1x1x32xf32>
    %6 = vector.shape_cast %5 : vector<1x1x32xf32> to vector<1x32xf32>
    %c1 = arith.constant 1 : index
    %c0_8 = arith.constant 0 : index
    %c0_9 = arith.constant 0 : index
    %7 = vector.load %arg5[%c1, %c0_8, %c0_9] : memref<8x1x32xf32, #tpu.memory_space<vmem>>, vector<1x1x32xf32>
    %8 = vector.shape_cast %7 : vector<1x1x32xf32> to vector<1x32xf32>
    %cst_10 = arith.constant dense<0.000000e+00> : vector<16xf32>
    %9 = vector.multi_reduction <add>, %1, %cst_10 [1] : vector<16x32xf32> to vector<16xf32>
    %10 = vector.shape_cast %9 : vector<16xf32> to vector<16x1xf32>
    %cst_11 = arith.constant 3.200000e+01 : f32
    %11 = vector.broadcast %cst_11 : f32 to vector<16x1xf32>
    %12 = arith.divf %10, %11 : vector<16x1xf32>
    %13 = vector.broadcast %12 : vector<16x1xf32> to vector<16x32xf32>
    %14 = arith.subf %1, %13 : vector<16x32xf32>
    %15 = arith.mulf %14, %14 : vector<16x32xf32>
    %cst_12 = arith.constant dense<0.000000e+00> : vector<16xf32>
    %16 = vector.multi_reduction <add>, %15, %cst_12 [1] : vector<16x32xf32> to vector<16xf32>
    %17 = vector.shape_cast %16 : vector<16xf32> to vector<16x1xf32>
    %cst_13 = arith.constant 0.0322580636 : f32
    %18 = vector.broadcast %cst_13 : f32 to vector<16x1xf32>
    %19 = arith.mulf %17, %18 : vector<16x1xf32>
    %20 = math.sqrt %19 : vector<16x1xf32>
    %cst_14 = arith.constant 9.99999997E-7 : f32
    %21 = vector.broadcast %cst_14 : f32 to vector<16x1xf32>
    %22 = arith.addf %20, %21 : vector<16x1xf32>
    %23 = tpu.reciprocal %22 : vector<16x1xf32> -> vector<16x1xf32>
    %24 = vector.broadcast %6 : vector<1x32xf32> to vector<16x32xf32>
    %25 = arith.mulf %24, %14 : vector<16x32xf32>
    %26 = vector.broadcast %23 : vector<16x1xf32> to vector<16x32xf32>
    %27 = arith.mulf %25, %26 : vector<16x32xf32>
    %28 = vector.broadcast %8 : vector<1x32xf32> to vector<16x32xf32>
    %29 = arith.addf %27, %28 : vector<16x32xf32>
    %cst_15 = arith.constant 0.000000e+00 : f32
    %30 = vector.broadcast %cst_15 : f32 to vector<16x32xf32>
    %c0_16 = arith.constant 0 : index
    %c0_17 = arith.constant 0 : index
    %c0_18 = arith.constant 0 : index
    %31 = vector.load %arg2[%c0_16, %c0_17, %c0_18] : memref<24x32x8xf32, #tpu.memory_space<vmem>>, vector<1x32x8xf32>
    %32 = vector.shape_cast %31 : vector<1x32x8xf32> to vector<32x8xf32>
    %cst_19 = arith.constant dense<0.000000e+00> : vector<16x8xf32>
    %33 = tpu.matmul %29, %32, %cst_19 {dimension_numbers = #tpu.dot_dimension_numbers<[1], [0], [0], [1], [0, 0, 1, 1], [], []>} : vector<16x32xf32>, vector<32x8xf32>, vector<16x8xf32> -> vector<16x8xf32>
    %c0_20 = arith.constant 0 : index
    %c0_21 = arith.constant 0 : index
    %c0_22 = arith.constant 0 : index
    %34 = vector.load %arg3[%c0_20, %c0_21, %c0_22] : memref<24x1x8xf32, #tpu.memory_space<vmem>>, vector<1x1x8xf32>
    %35 = vector.shape_cast %34 : vector<1x1x8xf32> to vector<1x8xf32>
    %36 = vector.broadcast %35 : vector<1x8xf32> to vector<16x8xf32>
    %37 = arith.addf %33, %36 : vector<16x8xf32>
    %c4 = arith.constant 4 : index
    %c0_23 = arith.constant 0 : index
    %c0_24 = arith.constant 0 : index
    %38 = vector.load %arg2[%c4, %c0_23, %c0_24] : memref<24x32x8xf32, #tpu.memory_space<vmem>>, vector<1x32x8xf32>
    %39 = vector.shape_cast %38 : vector<1x32x8xf32> to vector<32x8xf32>
    %cst_25 = arith.constant dense<0.000000e+00> : vector<16x8xf32>
    %40 = tpu.matmul %29, %39, %cst_25 {dimension_numbers = #tpu.dot_dimension_numbers<[1], [0], [0], [1], [0, 0, 1, 1], [], []>} : vector<16x32xf32>, vector<32x8xf32>, vector<16x8xf32> -> vector<16x8xf32>
    %c4_26 = arith.constant 4 : index
    %c0_27 = arith.constant 0 : index
    %c0_28 = arith.constant 0 : index
    %41 = vector.load %arg3[%c4_26, %c0_27, %c0_28] : memref<24x1x8xf32, #tpu.memory_space<vmem>>, vector<1x1x8xf32>
    %42 = vector.shape_cast %41 : vector<1x1x8xf32> to vector<1x8xf32>
    %43 = vector.broadcast %42 : vector<1x8xf32> to vector<16x8xf32>
    %44 = arith.addf %40, %43 : vector<16x8xf32>
    %c8 = arith.constant 8 : index
    %c0_29 = arith.constant 0 : index
    %c0_30 = arith.constant 0 : index
    %45 = vector.load %arg2[%c8, %c0_29, %c0_30] : memref<24x32x8xf32, #tpu.memory_space<vmem>>, vector<1x32x8xf32>
    %46 = vector.shape_cast %45 : vector<1x32x8xf32> to vector<32x8xf32>
    %cst_31 = arith.constant dense<0.000000e+00> : vector<16x8xf32>
    %47 = tpu.matmul %29, %46, %cst_31 {dimension_numbers = #tpu.dot_dimension_numbers<[1], [0], [0], [1], [0, 0, 1, 1], [], []>} : vector<16x32xf32>, vector<32x8xf32>, vector<16x8xf32> -> vector<16x8xf32>
    %c8_32 = arith.constant 8 : index
    %c0_33 = arith.constant 0 : index
    %c0_34 = arith.constant 0 : index
    %48 = vector.load %arg3[%c8_32, %c0_33, %c0_34] : memref<24x1x8xf32, #tpu.memory_space<vmem>>, vector<1x1x8xf32>
    %49 = vector.shape_cast %48 : vector<1x1x8xf32> to vector<1x8xf32>
    %50 = vector.broadcast %49 : vector<1x8xf32> to vector<16x8xf32>
    %51 = arith.addf %47, %50 : vector<16x8xf32>
    %52 = vector.shape_cast %37 : vector<16x8xf32> to vector<2x8x8xf32>
    %53 = vector.shape_cast %44 : vector<16x8xf32> to vector<2x8x8xf32>
    %54 = vector.shape_cast %51 : vector<16x8xf32> to vector<2x8x8xf32>
    "tpu.trace_start"() <{level = 10 : i32, message = "bqd,bkd->bqk"}> : () -> ()
    %cst_35 = arith.constant dense<0.000000e+00> : vector<2x8x8xf32>
    %55 = tpu.matmul %52, %53, %cst_35 {dimension_numbers = #tpu.dot_dimension_numbers<[2], [2], [1], [1], [0, 0, 0, 1, 1, 1], [0], [0]>} : vector<2x8x8xf32>, vector<2x8x8xf32>, vector<2x8x8xf32> -> vector<2x8x8xf32>
    "tpu.trace_stop"() : () -> ()
    %cst_36 = arith.constant 0.353553385 : f32
    %56 = vector.broadcast %cst_36 : f32 to vector<2x8x8xf32>
    %57 = arith.mulf %55, %56 : vector<2x8x8xf32>
    %cst_37 = arith.constant -1.000000e+09 : f32
    %58 = vector.shape_cast %4 : vector<2x1x8xi1> to vector<2x1x8xi1>
    %59 = vector.broadcast %58 : vector<2x1x8xi1> to vector<2x8x8xi1>
    %60 = vector.broadcast %cst_37 : f32 to vector<2x8x8xf32>
    %61 = arith.select %59, %57, %60 : vector<2x8x8xi1>, vector<2x8x8xf32>
    %cst_38 = arith.constant dense<0xFF800000> : vector<2x8xf32>
    %62 = vector.multi_reduction <maximumf>, %61, %cst_38 [2] : vector<2x8x8xf32> to vector<2x8xf32>
    %63 = vector.shape_cast %62 : vector<2x8xf32> to vector<2x8x1xf32>
    %64 = vector.broadcast %63 : vector<2x8x1xf32> to vector<2x8x8xf32>
    %65 = arith.subf %61, %64 : vector<2x8x8xf32>
    %66 = math.exp %65 : vector<2x8x8xf32>
    %cst_39 = arith.constant dense<0.000000e+00> : vector<2x8xf32>
    %67 = vector.multi_reduction <add>, %66, %cst_39 [2] : vector<2x8x8xf32> to vector<2x8xf32>
    %68 = vector.shape_cast %67 : vector<2x8xf32> to vector<2x8x1xf32>
    %69 = tpu.reciprocal %68 : vector<2x8x1xf32> -> vector<2x8x1xf32>
    %70 = vector.broadcast %69 : vector<2x8x1xf32> to vector<2x8x8xf32>
    %71 = arith.mulf %66, %70 : vector<2x8x8xf32>
    "tpu.trace_start"() <{level = 10 : i32, message = "bqk,bkd->bqd"}> : () -> ()
    %cst_40 = arith.constant dense<0.000000e+00> : vector<2x8x8xf32>
    %72 = tpu.matmul %71, %54, %cst_40 {dimension_numbers = #tpu.dot_dimension_numbers<[2], [1], [1], [2], [0, 0, 0, 1, 1, 2], [0], [0]>} : vector<2x8x8xf32>, vector<2x8x8xf32>, vector<2x8x8xf32> -> vector<2x8x8xf32>
    "tpu.trace_stop"() : () -> ()
    %73 = vector.shape_cast %72 : vector<2x8x8xf32> to vector<16x8xf32>
    %c0_41 = arith.constant 0 : index
    %c0_42 = arith.constant 0 : index
    %c0_43 = arith.constant 0 : index
    %74 = vector.load %arg4[%c0_41, %c0_42, %c0_43] : memref<8x8x32xf32, #tpu.memory_space<vmem>>, vector<1x8x32xf32>
    %75 = vector.shape_cast %74 : vector<1x8x32xf32> to vector<8x32xf32>
    %cst_44 = arith.constant dense<0.000000e+00> : vector<16x32xf32>
    %76 = tpu.matmul %73, %75, %cst_44 {dimension_numbers = #tpu.dot_dimension_numbers<[1], [0], [0], [1], [0, 0, 1, 1], [], []>} : vector<16x8xf32>, vector<8x32xf32>, vector<16x32xf32> -> vector<16x32xf32>
    %77 = arith.addf %30, %76 : vector<16x32xf32>
    %c1_45 = arith.constant 1 : index
    %c0_46 = arith.constant 0 : index
    %c0_47 = arith.constant 0 : index
    %78 = vector.load %arg2[%c1_45, %c0_46, %c0_47] : memref<24x32x8xf32, #tpu.memory_space<vmem>>, vector<1x32x8xf32>
    %79 = vector.shape_cast %78 : vector<1x32x8xf32> to vector<32x8xf32>
    %cst_48 = arith.constant dense<0.000000e+00> : vector<16x8xf32>
    %80 = tpu.matmul %29, %79, %cst_48 {dimension_numbers = #tpu.dot_dimension_numbers<[1], [0], [0], [1], [0, 0, 1, 1], [], []>} : vector<16x32xf32>, vector<32x8xf32>, vector<16x8xf32> -> vector<16x8xf32>
    %c1_49 = arith.constant 1 : index
    %c0_50 = arith.constant 0 : index
    %c0_51 = arith.constant 0 : index
    %81 = vector.load %arg3[%c1_49, %c0_50, %c0_51] : memref<24x1x8xf32, #tpu.memory_space<vmem>>, vector<1x1x8xf32>
    %82 = vector.shape_cast %81 : vector<1x1x8xf32> to vector<1x8xf32>
    %83 = vector.broadcast %82 : vector<1x8xf32> to vector<16x8xf32>
    %84 = arith.addf %80, %83 : vector<16x8xf32>
    %c5 = arith.constant 5 : index
    %c0_52 = arith.constant 0 : index
    %c0_53 = arith.constant 0 : index
    %85 = vector.load %arg2[%c5, %c0_52, %c0_53] : memref<24x32x8xf32, #tpu.memory_space<vmem>>, vector<1x32x8xf32>
    %86 = vector.shape_cast %85 : vector<1x32x8xf32> to vector<32x8xf32>
    %cst_54 = arith.constant dense<0.000000e+00> : vector<16x8xf32>
    %87 = tpu.matmul %29, %86, %cst_54 {dimension_numbers = #tpu.dot_dimension_numbers<[1], [0], [0], [1], [0, 0, 1, 1], [], []>} : vector<16x32xf32>, vector<32x8xf32>, vector<16x8xf32> -> vector<16x8xf32>
    %c5_55 = arith.constant 5 : index
    %c0_56 = arith.constant 0 : index
    %c0_57 = arith.constant 0 : index
    %88 = vector.load %arg3[%c5_55, %c0_56, %c0_57] : memref<24x1x8xf32, #tpu.memory_space<vmem>>, vector<1x1x8xf32>
    %89 = vector.shape_cast %88 : vector<1x1x8xf32> to vector<1x8xf32>
    %90 = vector.broadcast %89 : vector<1x8xf32> to vector<16x8xf32>
    %91 = arith.addf %87, %90 : vector<16x8xf32>
    %c9 = arith.constant 9 : index
    %c0_58 = arith.constant 0 : index
    %c0_59 = arith.constant 0 : index
    %92 = vector.load %arg2[%c9, %c0_58, %c0_59] : memref<24x32x8xf32, #tpu.memory_space<vmem>>, vector<1x32x8xf32>
    %93 = vector.shape_cast %92 : vector<1x32x8xf32> to vector<32x8xf32>
    %cst_60 = arith.constant dense<0.000000e+00> : vector<16x8xf32>
    %94 = tpu.matmul %29, %93, %cst_60 {dimension_numbers = #tpu.dot_dimension_numbers<[1], [0], [0], [1], [0, 0, 1, 1], [], []>} : vector<16x32xf32>, vector<32x8xf32>, vector<16x8xf32> -> vector<16x8xf32>
    %c9_61 = arith.constant 9 : index
    %c0_62 = arith.constant 0 : index
    %c0_63 = arith.constant 0 : index
    %95 = vector.load %arg3[%c9_61, %c0_62, %c0_63] : memref<24x1x8xf32, #tpu.memory_space<vmem>>, vector<1x1x8xf32>
    %96 = vector.shape_cast %95 : vector<1x1x8xf32> to vector<1x8xf32>
    %97 = vector.broadcast %96 : vector<1x8xf32> to vector<16x8xf32>
    %98 = arith.addf %94, %97 : vector<16x8xf32>
    %99 = vector.shape_cast %84 : vector<16x8xf32> to vector<2x8x8xf32>
    %100 = vector.shape_cast %91 : vector<16x8xf32> to vector<2x8x8xf32>
    %101 = vector.shape_cast %98 : vector<16x8xf32> to vector<2x8x8xf32>
    "tpu.trace_start"() <{level = 10 : i32, message = "bqd,bkd->bqk"}> : () -> ()
    %cst_64 = arith.constant dense<0.000000e+00> : vector<2x8x8xf32>
    %102 = tpu.matmul %99, %100, %cst_64 {dimension_numbers = #tpu.dot_dimension_numbers<[2], [2], [1], [1], [0, 0, 0, 1, 1, 1], [0], [0]>} : vector<2x8x8xf32>, vector<2x8x8xf32>, vector<2x8x8xf32> -> vector<2x8x8xf32>
    "tpu.trace_stop"() : () -> ()
    %cst_65 = arith.constant 0.353553385 : f32
    %103 = vector.broadcast %cst_65 : f32 to vector<2x8x8xf32>
    %104 = arith.mulf %102, %103 : vector<2x8x8xf32>
    %cst_66 = arith.constant -1.000000e+09 : f32
    %105 = vector.shape_cast %4 : vector<2x1x8xi1> to vector<2x1x8xi1>
    %106 = vector.broadcast %105 : vector<2x1x8xi1> to vector<2x8x8xi1>
    %107 = vector.broadcast %cst_66 : f32 to vector<2x8x8xf32>
    %108 = arith.select %106, %104, %107 : vector<2x8x8xi1>, vector<2x8x8xf32>
    %cst_67 = arith.constant dense<0xFF800000> : vector<2x8xf32>
    %109 = vector.multi_reduction <maximumf>, %108, %cst_67 [2] : vector<2x8x8xf32> to vector<2x8xf32>
    %110 = vector.shape_cast %109 : vector<2x8xf32> to vector<2x8x1xf32>
    %111 = vector.broadcast %110 : vector<2x8x1xf32> to vector<2x8x8xf32>
    %112 = arith.subf %108, %111 : vector<2x8x8xf32>
    %113 = math.exp %112 : vector<2x8x8xf32>
    %cst_68 = arith.constant dense<0.000000e+00> : vector<2x8xf32>
    %114 = vector.multi_reduction <add>, %113, %cst_68 [2] : vector<2x8x8xf32> to vector<2x8xf32>
    %115 = vector.shape_cast %114 : vector<2x8xf32> to vector<2x8x1xf32>
    %116 = tpu.reciprocal %115 : vector<2x8x1xf32> -> vector<2x8x1xf32>
    %117 = vector.broadcast %116 : vector<2x8x1xf32> to vector<2x8x8xf32>
    %118 = arith.mulf %113, %117 : vector<2x8x8xf32>
    "tpu.trace_start"() <{level = 10 : i32, message = "bqk,bkd->bqd"}> : () -> ()
    %cst_69 = arith.constant dense<0.000000e+00> : vector<2x8x8xf32>
    %119 = tpu.matmul %118, %101, %cst_69 {dimension_numbers = #tpu.dot_dimension_numbers<[2], [1], [1], [2], [0, 0, 0, 1, 1, 2], [0], [0]>} : vector<2x8x8xf32>, vector<2x8x8xf32>, vector<2x8x8xf32> -> vector<2x8x8xf32>
    "tpu.trace_stop"() : () -> ()
    %120 = vector.shape_cast %119 : vector<2x8x8xf32> to vector<16x8xf32>
    %c1_70 = arith.constant 1 : index
    %c0_71 = arith.constant 0 : index
    %c0_72 = arith.constant 0 : index
    %121 = vector.load %arg4[%c1_70, %c0_71, %c0_72] : memref<8x8x32xf32, #tpu.memory_space<vmem>>, vector<1x8x32xf32>
    %122 = vector.shape_cast %121 : vector<1x8x32xf32> to vector<8x32xf32>
    %cst_73 = arith.constant dense<0.000000e+00> : vector<16x32xf32>
    %123 = tpu.matmul %120, %122, %cst_73 {dimension_numbers = #tpu.dot_dimension_numbers<[1], [0], [0], [1], [0, 0, 1, 1], [], []>} : vector<16x8xf32>, vector<8x32xf32>, vector<16x32xf32> -> vector<16x32xf32>
    %124 = arith.addf %77, %123 : vector<16x32xf32>
    %c2 = arith.constant 2 : index
    %c0_74 = arith.constant 0 : index
    %c0_75 = arith.constant 0 : index
    %125 = vector.load %arg2[%c2, %c0_74, %c0_75] : memref<24x32x8xf32, #tpu.memory_space<vmem>>, vector<1x32x8xf32>
    %126 = vector.shape_cast %125 : vector<1x32x8xf32> to vector<32x8xf32>
    %cst_76 = arith.constant dense<0.000000e+00> : vector<16x8xf32>
    %127 = tpu.matmul %29, %126, %cst_76 {dimension_numbers = #tpu.dot_dimension_numbers<[1], [0], [0], [1], [0, 0, 1, 1], [], []>} : vector<16x32xf32>, vector<32x8xf32>, vector<16x8xf32> -> vector<16x8xf32>
    %c2_77 = arith.constant 2 : index
    %c0_78 = arith.constant 0 : index
    %c0_79 = arith.constant 0 : index
    %128 = vector.load %arg3[%c2_77, %c0_78, %c0_79] : memref<24x1x8xf32, #tpu.memory_space<vmem>>, vector<1x1x8xf32>
    %129 = vector.shape_cast %128 : vector<1x1x8xf32> to vector<1x8xf32>
    %130 = vector.broadcast %129 : vector<1x8xf32> to vector<16x8xf32>
    %131 = arith.addf %127, %130 : vector<16x8xf32>
    %c6 = arith.constant 6 : index
    %c0_80 = arith.constant 0 : index
    %c0_81 = arith.constant 0 : index
    %132 = vector.load %arg2[%c6, %c0_80, %c0_81] : memref<24x32x8xf32, #tpu.memory_space<vmem>>, vector<1x32x8xf32>
    %133 = vector.shape_cast %132 : vector<1x32x8xf32> to vector<32x8xf32>
    %cst_82 = arith.constant dense<0.000000e+00> : vector<16x8xf32>
    %134 = tpu.matmul %29, %133, %cst_82 {dimension_numbers = #tpu.dot_dimension_numbers<[1], [0], [0], [1], [0, 0, 1, 1], [], []>} : vector<16x32xf32>, vector<32x8xf32>, vector<16x8xf32> -> vector<16x8xf32>
    %c6_83 = arith.constant 6 : index
    %c0_84 = arith.constant 0 : index
    %c0_85 = arith.constant 0 : index
    %135 = vector.load %arg3[%c6_83, %c0_84, %c0_85] : memref<24x1x8xf32, #tpu.memory_space<vmem>>, vector<1x1x8xf32>
    %136 = vector.shape_cast %135 : vector<1x1x8xf32> to vector<1x8xf32>
    %137 = vector.broadcast %136 : vector<1x8xf32> to vector<16x8xf32>
    %138 = arith.addf %134, %137 : vector<16x8xf32>
    %c10 = arith.constant 10 : index
    %c0_86 = arith.constant 0 : index
    %c0_87 = arith.constant 0 : index
    %139 = vector.load %arg2[%c10, %c0_86, %c0_87] : memref<24x32x8xf32, #tpu.memory_space<vmem>>, vector<1x32x8xf32>
    %140 = vector.shape_cast %139 : vector<1x32x8xf32> to vector<32x8xf32>
    %cst_88 = arith.constant dense<0.000000e+00> : vector<16x8xf32>
    %141 = tpu.matmul %29, %140, %cst_88 {dimension_numbers = #tpu.dot_dimension_numbers<[1], [0], [0], [1], [0, 0, 1, 1], [], []>} : vector<16x32xf32>, vector<32x8xf32>, vector<16x8xf32> -> vector<16x8xf32>
    %c10_89 = arith.constant 10 : index
    %c0_90 = arith.constant 0 : index
    %c0_91 = arith.constant 0 : index
    %142 = vector.load %arg3[%c10_89, %c0_90, %c0_91] : memref<24x1x8xf32, #tpu.memory_space<vmem>>, vector<1x1x8xf32>
    %143 = vector.shape_cast %142 : vector<1x1x8xf32> to vector<1x8xf32>
    %144 = vector.broadcast %143 : vector<1x8xf32> to vector<16x8xf32>
    %145 = arith.addf %141, %144 : vector<16x8xf32>
    %146 = vector.shape_cast %131 : vector<16x8xf32> to vector<2x8x8xf32>
    %147 = vector.shape_cast %138 : vector<16x8xf32> to vector<2x8x8xf32>
    %148 = vector.shape_cast %145 : vector<16x8xf32> to vector<2x8x8xf32>
    "tpu.trace_start"() <{level = 10 : i32, message = "bqd,bkd->bqk"}> : () -> ()
    %cst_92 = arith.constant dense<0.000000e+00> : vector<2x8x8xf32>
    %149 = tpu.matmul %146, %147, %cst_92 {dimension_numbers = #tpu.dot_dimension_numbers<[2], [2], [1], [1], [0, 0, 0, 1, 1, 1], [0], [0]>} : vector<2x8x8xf32>, vector<2x8x8xf32>, vector<2x8x8xf32> -> vector<2x8x8xf32>
    "tpu.trace_stop"() : () -> ()
    %cst_93 = arith.constant 0.353553385 : f32
    %150 = vector.broadcast %cst_93 : f32 to vector<2x8x8xf32>
    %151 = arith.mulf %149, %150 : vector<2x8x8xf32>
    %cst_94 = arith.constant -1.000000e+09 : f32
    %152 = vector.shape_cast %4 : vector<2x1x8xi1> to vector<2x1x8xi1>
    %153 = vector.broadcast %152 : vector<2x1x8xi1> to vector<2x8x8xi1>
    %154 = vector.broadcast %cst_94 : f32 to vector<2x8x8xf32>
    %155 = arith.select %153, %151, %154 : vector<2x8x8xi1>, vector<2x8x8xf32>
    %cst_95 = arith.constant dense<0xFF800000> : vector<2x8xf32>
    %156 = vector.multi_reduction <maximumf>, %155, %cst_95 [2] : vector<2x8x8xf32> to vector<2x8xf32>
    %157 = vector.shape_cast %156 : vector<2x8xf32> to vector<2x8x1xf32>
    %158 = vector.broadcast %157 : vector<2x8x1xf32> to vector<2x8x8xf32>
    %159 = arith.subf %155, %158 : vector<2x8x8xf32>
    %160 = math.exp %159 : vector<2x8x8xf32>
    %cst_96 = arith.constant dense<0.000000e+00> : vector<2x8xf32>
    %161 = vector.multi_reduction <add>, %160, %cst_96 [2] : vector<2x8x8xf32> to vector<2x8xf32>
    %162 = vector.shape_cast %161 : vector<2x8xf32> to vector<2x8x1xf32>
    %163 = tpu.reciprocal %162 : vector<2x8x1xf32> -> vector<2x8x1xf32>
    %164 = vector.broadcast %163 : vector<2x8x1xf32> to vector<2x8x8xf32>
    %165 = arith.mulf %160, %164 : vector<2x8x8xf32>
    "tpu.trace_start"() <{level = 10 : i32, message = "bqk,bkd->bqd"}> : () -> ()
    %cst_97 = arith.constant dense<0.000000e+00> : vector<2x8x8xf32>
    %166 = tpu.matmul %165, %148, %cst_97 {dimension_numbers = #tpu.dot_dimension_numbers<[2], [1], [1], [2], [0, 0, 0, 1, 1, 2], [0], [0]>} : vector<2x8x8xf32>, vector<2x8x8xf32>, vector<2x8x8xf32> -> vector<2x8x8xf32>
    "tpu.trace_stop"() : () -> ()
    %167 = vector.shape_cast %166 : vector<2x8x8xf32> to vector<16x8xf32>
    %c2_98 = arith.constant 2 : index
    %c0_99 = arith.constant 0 : index
    %c0_100 = arith.constant 0 : index
    %168 = vector.load %arg4[%c2_98, %c0_99, %c0_100] : memref<8x8x32xf32, #tpu.memory_space<vmem>>, vector<1x8x32xf32>
    %169 = vector.shape_cast %168 : vector<1x8x32xf32> to vector<8x32xf32>
    %cst_101 = arith.constant dense<0.000000e+00> : vector<16x32xf32>
    %170 = tpu.matmul %167, %169, %cst_101 {dimension_numbers = #tpu.dot_dimension_numbers<[1], [0], [0], [1], [0, 0, 1, 1], [], []>} : vector<16x8xf32>, vector<8x32xf32>, vector<16x32xf32> -> vector<16x32xf32>
    %171 = arith.addf %124, %170 : vector<16x32xf32>
    %c3 = arith.constant 3 : index
    %c0_102 = arith.constant 0 : index
    %c0_103 = arith.constant 0 : index
    %172 = vector.load %arg2[%c3, %c0_102, %c0_103] : memref<24x32x8xf32, #tpu.memory_space<vmem>>, vector<1x32x8xf32>
    %173 = vector.shape_cast %172 : vector<1x32x8xf32> to vector<32x8xf32>
    %cst_104 = arith.constant dense<0.000000e+00> : vector<16x8xf32>
    %174 = tpu.matmul %29, %173, %cst_104 {dimension_numbers = #tpu.dot_dimension_numbers<[1], [0], [0], [1], [0, 0, 1, 1], [], []>} : vector<16x32xf32>, vector<32x8xf32>, vector<16x8xf32> -> vector<16x8xf32>
    %c3_105 = arith.constant 3 : index
    %c0_106 = arith.constant 0 : index
    %c0_107 = arith.constant 0 : index
    %175 = vector.load %arg3[%c3_105, %c0_106, %c0_107] : memref<24x1x8xf32, #tpu.memory_space<vmem>>, vector<1x1x8xf32>
    %176 = vector.shape_cast %175 : vector<1x1x8xf32> to vector<1x8xf32>
    %177 = vector.broadcast %176 : vector<1x8xf32> to vector<16x8xf32>
    %178 = arith.addf %174, %177 : vector<16x8xf32>
    %c7 = arith.constant 7 : index
    %c0_108 = arith.constant 0 : index
    %c0_109 = arith.constant 0 : index
    %179 = vector.load %arg2[%c7, %c0_108, %c0_109] : memref<24x32x8xf32, #tpu.memory_space<vmem>>, vector<1x32x8xf32>
    %180 = vector.shape_cast %179 : vector<1x32x8xf32> to vector<32x8xf32>
    %cst_110 = arith.constant dense<0.000000e+00> : vector<16x8xf32>
    %181 = tpu.matmul %29, %180, %cst_110 {dimension_numbers = #tpu.dot_dimension_numbers<[1], [0], [0], [1], [0, 0, 1, 1], [], []>} : vector<16x32xf32>, vector<32x8xf32>, vector<16x8xf32> -> vector<16x8xf32>
    %c7_111 = arith.constant 7 : index
    %c0_112 = arith.constant 0 : index
    %c0_113 = arith.constant 0 : index
    %182 = vector.load %arg3[%c7_111, %c0_112, %c0_113] : memref<24x1x8xf32, #tpu.memory_space<vmem>>, vector<1x1x8xf32>
    %183 = vector.shape_cast %182 : vector<1x1x8xf32> to vector<1x8xf32>
    %184 = vector.broadcast %183 : vector<1x8xf32> to vector<16x8xf32>
    %185 = arith.addf %181, %184 : vector<16x8xf32>
    %c11 = arith.constant 11 : index
    %c0_114 = arith.constant 0 : index
    %c0_115 = arith.constant 0 : index
    %186 = vector.load %arg2[%c11, %c0_114, %c0_115] : memref<24x32x8xf32, #tpu.memory_space<vmem>>, vector<1x32x8xf32>
    %187 = vector.shape_cast %186 : vector<1x32x8xf32> to vector<32x8xf32>
    %cst_116 = arith.constant dense<0.000000e+00> : vector<16x8xf32>
    %188 = tpu.matmul %29, %187, %cst_116 {dimension_numbers = #tpu.dot_dimension_numbers<[1], [0], [0], [1], [0, 0, 1, 1], [], []>} : vector<16x32xf32>, vector<32x8xf32>, vector<16x8xf32> -> vector<16x8xf32>
    %c11_117 = arith.constant 11 : index
    %c0_118 = arith.constant 0 : index
    %c0_119 = arith.constant 0 : index
    %189 = vector.load %arg3[%c11_117, %c0_118, %c0_119] : memref<24x1x8xf32, #tpu.memory_space<vmem>>, vector<1x1x8xf32>
    %190 = vector.shape_cast %189 : vector<1x1x8xf32> to vector<1x8xf32>
    %191 = vector.broadcast %190 : vector<1x8xf32> to vector<16x8xf32>
    %192 = arith.addf %188, %191 : vector<16x8xf32>
    %193 = vector.shape_cast %178 : vector<16x8xf32> to vector<2x8x8xf32>
    %194 = vector.shape_cast %185 : vector<16x8xf32> to vector<2x8x8xf32>
    %195 = vector.shape_cast %192 : vector<16x8xf32> to vector<2x8x8xf32>
    "tpu.trace_start"() <{level = 10 : i32, message = "bqd,bkd->bqk"}> : () -> ()
    %cst_120 = arith.constant dense<0.000000e+00> : vector<2x8x8xf32>
    %196 = tpu.matmul %193, %194, %cst_120 {dimension_numbers = #tpu.dot_dimension_numbers<[2], [2], [1], [1], [0, 0, 0, 1, 1, 1], [0], [0]>} : vector<2x8x8xf32>, vector<2x8x8xf32>, vector<2x8x8xf32> -> vector<2x8x8xf32>
    "tpu.trace_stop"() : () -> ()
    %cst_121 = arith.constant 0.353553385 : f32
    %197 = vector.broadcast %cst_121 : f32 to vector<2x8x8xf32>
    %198 = arith.mulf %196, %197 : vector<2x8x8xf32>
    %cst_122 = arith.constant -1.000000e+09 : f32
    %199 = vector.shape_cast %4 : vector<2x1x8xi1> to vector<2x1x8xi1>
    %200 = vector.broadcast %199 : vector<2x1x8xi1> to vector<2x8x8xi1>
    %201 = vector.broadcast %cst_122 : f32 to vector<2x8x8xf32>
    %202 = arith.select %200, %198, %201 : vector<2x8x8xi1>, vector<2x8x8xf32>
    %cst_123 = arith.constant dense<0xFF800000> : vector<2x8xf32>
    %203 = vector.multi_reduction <maximumf>, %202, %cst_123 [2] : vector<2x8x8xf32> to vector<2x8xf32>
    %204 = vector.shape_cast %203 : vector<2x8xf32> to vector<2x8x1xf32>
    %205 = vector.broadcast %204 : vector<2x8x1xf32> to vector<2x8x8xf32>
    %206 = arith.subf %202, %205 : vector<2x8x8xf32>
    %207 = math.exp %206 : vector<2x8x8xf32>
    %cst_124 = arith.constant dense<0.000000e+00> : vector<2x8xf32>
    %208 = vector.multi_reduction <add>, %207, %cst_124 [2] : vector<2x8x8xf32> to vector<2x8xf32>
    %209 = vector.shape_cast %208 : vector<2x8xf32> to vector<2x8x1xf32>
    %210 = tpu.reciprocal %209 : vector<2x8x1xf32> -> vector<2x8x1xf32>
    %211 = vector.broadcast %210 : vector<2x8x1xf32> to vector<2x8x8xf32>
    %212 = arith.mulf %207, %211 : vector<2x8x8xf32>
    "tpu.trace_start"() <{level = 10 : i32, message = "bqk,bkd->bqd"}> : () -> ()
    %cst_125 = arith.constant dense<0.000000e+00> : vector<2x8x8xf32>
    %213 = tpu.matmul %212, %195, %cst_125 {dimension_numbers = #tpu.dot_dimension_numbers<[2], [1], [1], [2], [0, 0, 0, 1, 1, 2], [0], [0]>} : vector<2x8x8xf32>, vector<2x8x8xf32>, vector<2x8x8xf32> -> vector<2x8x8xf32>
    "tpu.trace_stop"() : () -> ()
    %214 = vector.shape_cast %213 : vector<2x8x8xf32> to vector<16x8xf32>
    %c3_126 = arith.constant 3 : index
    %c0_127 = arith.constant 0 : index
    %c0_128 = arith.constant 0 : index
    %215 = vector.load %arg4[%c3_126, %c0_127, %c0_128] : memref<8x8x32xf32, #tpu.memory_space<vmem>>, vector<1x8x32xf32>
    %216 = vector.shape_cast %215 : vector<1x8x32xf32> to vector<8x32xf32>
    %cst_129 = arith.constant dense<0.000000e+00> : vector<16x32xf32>
    %217 = tpu.matmul %214, %216, %cst_129 {dimension_numbers = #tpu.dot_dimension_numbers<[1], [0], [0], [1], [0, 0, 1, 1], [], []>} : vector<16x8xf32>, vector<8x32xf32>, vector<16x32xf32> -> vector<16x32xf32>
    %218 = arith.addf %171, %217 : vector<16x32xf32>
    %219 = arith.addf %1, %218 : vector<16x32xf32>
    %c0_130 = arith.constant 0 : index
    %c0_131 = arith.constant 0 : index
    %c0_132 = arith.constant 0 : index
    %220 = vector.load %arg6[%c0_130, %c0_131, %c0_132] : memref<4x1x32xf32, #tpu.memory_space<vmem>>, vector<1x1x32xf32>
    %221 = vector.shape_cast %220 : vector<1x1x32xf32> to vector<1x32xf32>
    %222 = vector.broadcast %221 : vector<1x32xf32> to vector<16x32xf32>
    %223 = arith.addf %219, %222 : vector<16x32xf32>
    %c2_133 = arith.constant 2 : index
    %c0_134 = arith.constant 0 : index
    %c0_135 = arith.constant 0 : index
    %224 = vector.load %arg5[%c2_133, %c0_134, %c0_135] : memref<8x1x32xf32, #tpu.memory_space<vmem>>, vector<1x1x32xf32>
    %225 = vector.shape_cast %224 : vector<1x1x32xf32> to vector<1x32xf32>
    %c3_136 = arith.constant 3 : index
    %c0_137 = arith.constant 0 : index
    %c0_138 = arith.constant 0 : index
    %226 = vector.load %arg5[%c3_136, %c0_137, %c0_138] : memref<8x1x32xf32, #tpu.memory_space<vmem>>, vector<1x1x32xf32>
    %227 = vector.shape_cast %226 : vector<1x1x32xf32> to vector<1x32xf32>
    %cst_139 = arith.constant dense<0.000000e+00> : vector<16xf32>
    %228 = vector.multi_reduction <add>, %223, %cst_139 [1] : vector<16x32xf32> to vector<16xf32>
    %229 = vector.shape_cast %228 : vector<16xf32> to vector<16x1xf32>
    %cst_140 = arith.constant 3.200000e+01 : f32
    %230 = vector.broadcast %cst_140 : f32 to vector<16x1xf32>
    %231 = arith.divf %229, %230 : vector<16x1xf32>
    %232 = vector.broadcast %231 : vector<16x1xf32> to vector<16x32xf32>
    %233 = arith.subf %223, %232 : vector<16x32xf32>
    %234 = arith.mulf %233, %233 : vector<16x32xf32>
    %cst_141 = arith.constant dense<0.000000e+00> : vector<16xf32>
    %235 = vector.multi_reduction <add>, %234, %cst_141 [1] : vector<16x32xf32> to vector<16xf32>
    %236 = vector.shape_cast %235 : vector<16xf32> to vector<16x1xf32>
    %cst_142 = arith.constant 0.0322580636 : f32
    %237 = vector.broadcast %cst_142 : f32 to vector<16x1xf32>
    %238 = arith.mulf %236, %237 : vector<16x1xf32>
    %239 = math.sqrt %238 : vector<16x1xf32>
    %cst_143 = arith.constant 9.99999997E-7 : f32
    %240 = vector.broadcast %cst_143 : f32 to vector<16x1xf32>
    %241 = arith.addf %239, %240 : vector<16x1xf32>
    %242 = tpu.reciprocal %241 : vector<16x1xf32> -> vector<16x1xf32>
    %243 = vector.broadcast %225 : vector<1x32xf32> to vector<16x32xf32>
    %244 = arith.mulf %243, %233 : vector<16x32xf32>
    %245 = vector.broadcast %242 : vector<16x1xf32> to vector<16x32xf32>
    %246 = arith.mulf %244, %245 : vector<16x32xf32>
    %247 = vector.broadcast %227 : vector<1x32xf32> to vector<16x32xf32>
    %248 = arith.addf %246, %247 : vector<16x32xf32>
    %c0_144 = arith.constant 0 : index
    %c0_145 = arith.constant 0 : index
    %c0_146 = arith.constant 0 : index
    %249 = vector.load %arg7[%c0_144, %c0_145, %c0_146] : memref<2x32x64xf32, #tpu.memory_space<vmem>>, vector<1x32x64xf32>
    %250 = vector.shape_cast %249 : vector<1x32x64xf32> to vector<32x64xf32>
    %cst_147 = arith.constant dense<0.000000e+00> : vector<16x64xf32>
    %251 = tpu.matmul %248, %250, %cst_147 {dimension_numbers = #tpu.dot_dimension_numbers<[1], [0], [0], [1], [0, 0, 1, 1], [], []>} : vector<16x32xf32>, vector<32x64xf32>, vector<16x64xf32> -> vector<16x64xf32>
    %c0_148 = arith.constant 0 : index
    %c0_149 = arith.constant 0 : index
    %c0_150 = arith.constant 0 : index
    %252 = vector.load %arg8[%c0_148, %c0_149, %c0_150] : memref<2x1x64xf32, #tpu.memory_space<vmem>>, vector<1x1x64xf32>
    %253 = vector.shape_cast %252 : vector<1x1x64xf32> to vector<1x64xf32>
    %254 = vector.broadcast %253 : vector<1x64xf32> to vector<16x64xf32>
    %255 = arith.addf %251, %254 : vector<16x64xf32>
    %cst_151 = arith.constant 0.000000e+00 : f32
    %256 = vector.broadcast %cst_151 : f32 to vector<16x64xf32>
    %257 = arith.maximumf %255, %256 : vector<16x64xf32>
    %c0_152 = arith.constant 0 : index
    %c0_153 = arith.constant 0 : index
    %c0_154 = arith.constant 0 : index
    %258 = vector.load %arg9[%c0_152, %c0_153, %c0_154] : memref<2x64x32xf32, #tpu.memory_space<vmem>>, vector<1x64x32xf32>
    %259 = vector.shape_cast %258 : vector<1x64x32xf32> to vector<64x32xf32>
    %cst_155 = arith.constant dense<0.000000e+00> : vector<16x32xf32>
    %260 = tpu.matmul %257, %259, %cst_155 {dimension_numbers = #tpu.dot_dimension_numbers<[1], [0], [0], [1], [0, 0, 1, 1], [], []>} : vector<16x64xf32>, vector<64x32xf32>, vector<16x32xf32> -> vector<16x32xf32>
    %261 = arith.addf %223, %260 : vector<16x32xf32>
    %c1_156 = arith.constant 1 : index
    %c0_157 = arith.constant 0 : index
    %c0_158 = arith.constant 0 : index
    %262 = vector.load %arg6[%c1_156, %c0_157, %c0_158] : memref<4x1x32xf32, #tpu.memory_space<vmem>>, vector<1x1x32xf32>
    %263 = vector.shape_cast %262 : vector<1x1x32xf32> to vector<1x32xf32>
    %264 = vector.broadcast %263 : vector<1x32xf32> to vector<16x32xf32>
    %265 = arith.addf %261, %264 : vector<16x32xf32>
    %c4_159 = arith.constant 4 : index
    %c0_160 = arith.constant 0 : index
    %c0_161 = arith.constant 0 : index
    %266 = vector.load %arg5[%c4_159, %c0_160, %c0_161] : memref<8x1x32xf32, #tpu.memory_space<vmem>>, vector<1x1x32xf32>
    %267 = vector.shape_cast %266 : vector<1x1x32xf32> to vector<1x32xf32>
    %c5_162 = arith.constant 5 : index
    %c0_163 = arith.constant 0 : index
    %c0_164 = arith.constant 0 : index
    %268 = vector.load %arg5[%c5_162, %c0_163, %c0_164] : memref<8x1x32xf32, #tpu.memory_space<vmem>>, vector<1x1x32xf32>
    %269 = vector.shape_cast %268 : vector<1x1x32xf32> to vector<1x32xf32>
    %cst_165 = arith.constant dense<0.000000e+00> : vector<16xf32>
    %270 = vector.multi_reduction <add>, %265, %cst_165 [1] : vector<16x32xf32> to vector<16xf32>
    %271 = vector.shape_cast %270 : vector<16xf32> to vector<16x1xf32>
    %cst_166 = arith.constant 3.200000e+01 : f32
    %272 = vector.broadcast %cst_166 : f32 to vector<16x1xf32>
    %273 = arith.divf %271, %272 : vector<16x1xf32>
    %274 = vector.broadcast %273 : vector<16x1xf32> to vector<16x32xf32>
    %275 = arith.subf %265, %274 : vector<16x32xf32>
    %276 = arith.mulf %275, %275 : vector<16x32xf32>
    %cst_167 = arith.constant dense<0.000000e+00> : vector<16xf32>
    %277 = vector.multi_reduction <add>, %276, %cst_167 [1] : vector<16x32xf32> to vector<16xf32>
    %278 = vector.shape_cast %277 : vector<16xf32> to vector<16x1xf32>
    %cst_168 = arith.constant 0.0322580636 : f32
    %279 = vector.broadcast %cst_168 : f32 to vector<16x1xf32>
    %280 = arith.mulf %278, %279 : vector<16x1xf32>
    %281 = math.sqrt %280 : vector<16x1xf32>
    %cst_169 = arith.constant 9.99999997E-7 : f32
    %282 = vector.broadcast %cst_169 : f32 to vector<16x1xf32>
    %283 = arith.addf %281, %282 : vector<16x1xf32>
    %284 = tpu.reciprocal %283 : vector<16x1xf32> -> vector<16x1xf32>
    %285 = vector.broadcast %267 : vector<1x32xf32> to vector<16x32xf32>
    %286 = arith.mulf %285, %275 : vector<16x32xf32>
    %287 = vector.broadcast %284 : vector<16x1xf32> to vector<16x32xf32>
    %288 = arith.mulf %286, %287 : vector<16x32xf32>
    %289 = vector.broadcast %269 : vector<1x32xf32> to vector<16x32xf32>
    %290 = arith.addf %288, %289 : vector<16x32xf32>
    %cst_170 = arith.constant 0.000000e+00 : f32
    %291 = vector.broadcast %cst_170 : f32 to vector<16x32xf32>
    %c12 = arith.constant 12 : index
    %c0_171 = arith.constant 0 : index
    %c0_172 = arith.constant 0 : index
    %292 = vector.load %arg2[%c12, %c0_171, %c0_172] : memref<24x32x8xf32, #tpu.memory_space<vmem>>, vector<1x32x8xf32>
    %293 = vector.shape_cast %292 : vector<1x32x8xf32> to vector<32x8xf32>
    %cst_173 = arith.constant dense<0.000000e+00> : vector<16x8xf32>
    %294 = tpu.matmul %290, %293, %cst_173 {dimension_numbers = #tpu.dot_dimension_numbers<[1], [0], [0], [1], [0, 0, 1, 1], [], []>} : vector<16x32xf32>, vector<32x8xf32>, vector<16x8xf32> -> vector<16x8xf32>
    %c12_174 = arith.constant 12 : index
    %c0_175 = arith.constant 0 : index
    %c0_176 = arith.constant 0 : index
    %295 = vector.load %arg3[%c12_174, %c0_175, %c0_176] : memref<24x1x8xf32, #tpu.memory_space<vmem>>, vector<1x1x8xf32>
    %296 = vector.shape_cast %295 : vector<1x1x8xf32> to vector<1x8xf32>
    %297 = vector.broadcast %296 : vector<1x8xf32> to vector<16x8xf32>
    %298 = arith.addf %294, %297 : vector<16x8xf32>
    %c16 = arith.constant 16 : index
    %c0_177 = arith.constant 0 : index
    %c0_178 = arith.constant 0 : index
    %299 = vector.load %arg2[%c16, %c0_177, %c0_178] : memref<24x32x8xf32, #tpu.memory_space<vmem>>, vector<1x32x8xf32>
    %300 = vector.shape_cast %299 : vector<1x32x8xf32> to vector<32x8xf32>
    %cst_179 = arith.constant dense<0.000000e+00> : vector<16x8xf32>
    %301 = tpu.matmul %290, %300, %cst_179 {dimension_numbers = #tpu.dot_dimension_numbers<[1], [0], [0], [1], [0, 0, 1, 1], [], []>} : vector<16x32xf32>, vector<32x8xf32>, vector<16x8xf32> -> vector<16x8xf32>
    %c16_180 = arith.constant 16 : index
    %c0_181 = arith.constant 0 : index
    %c0_182 = arith.constant 0 : index
    %302 = vector.load %arg3[%c16_180, %c0_181, %c0_182] : memref<24x1x8xf32, #tpu.memory_space<vmem>>, vector<1x1x8xf32>
    %303 = vector.shape_cast %302 : vector<1x1x8xf32> to vector<1x8xf32>
    %304 = vector.broadcast %303 : vector<1x8xf32> to vector<16x8xf32>
    %305 = arith.addf %301, %304 : vector<16x8xf32>
    %c20 = arith.constant 20 : index
    %c0_183 = arith.constant 0 : index
    %c0_184 = arith.constant 0 : index
    %306 = vector.load %arg2[%c20, %c0_183, %c0_184] : memref<24x32x8xf32, #tpu.memory_space<vmem>>, vector<1x32x8xf32>
    %307 = vector.shape_cast %306 : vector<1x32x8xf32> to vector<32x8xf32>
    %cst_185 = arith.constant dense<0.000000e+00> : vector<16x8xf32>
    %308 = tpu.matmul %290, %307, %cst_185 {dimension_numbers = #tpu.dot_dimension_numbers<[1], [0], [0], [1], [0, 0, 1, 1], [], []>} : vector<16x32xf32>, vector<32x8xf32>, vector<16x8xf32> -> vector<16x8xf32>
    %c20_186 = arith.constant 20 : index
    %c0_187 = arith.constant 0 : index
    %c0_188 = arith.constant 0 : index
    %309 = vector.load %arg3[%c20_186, %c0_187, %c0_188] : memref<24x1x8xf32, #tpu.memory_space<vmem>>, vector<1x1x8xf32>
    %310 = vector.shape_cast %309 : vector<1x1x8xf32> to vector<1x8xf32>
    %311 = vector.broadcast %310 : vector<1x8xf32> to vector<16x8xf32>
    %312 = arith.addf %308, %311 : vector<16x8xf32>
    %313 = vector.shape_cast %298 : vector<16x8xf32> to vector<2x8x8xf32>
    %314 = vector.shape_cast %305 : vector<16x8xf32> to vector<2x8x8xf32>
    %315 = vector.shape_cast %312 : vector<16x8xf32> to vector<2x8x8xf32>
    "tpu.trace_start"() <{level = 10 : i32, message = "bqd,bkd->bqk"}> : () -> ()
    %cst_189 = arith.constant dense<0.000000e+00> : vector<2x8x8xf32>
    %316 = tpu.matmul %313, %314, %cst_189 {dimension_numbers = #tpu.dot_dimension_numbers<[2], [2], [1], [1], [0, 0, 0, 1, 1, 1], [0], [0]>} : vector<2x8x8xf32>, vector<2x8x8xf32>, vector<2x8x8xf32> -> vector<2x8x8xf32>
    "tpu.trace_stop"() : () -> ()
    %cst_190 = arith.constant 0.353553385 : f32
    %317 = vector.broadcast %cst_190 : f32 to vector<2x8x8xf32>
    %318 = arith.mulf %316, %317 : vector<2x8x8xf32>
    %cst_191 = arith.constant -1.000000e+09 : f32
    %319 = vector.shape_cast %4 : vector<2x1x8xi1> to vector<2x1x8xi1>
    %320 = vector.broadcast %319 : vector<2x1x8xi1> to vector<2x8x8xi1>
    %321 = vector.broadcast %cst_191 : f32 to vector<2x8x8xf32>
    %322 = arith.select %320, %318, %321 : vector<2x8x8xi1>, vector<2x8x8xf32>
    %cst_192 = arith.constant dense<0xFF800000> : vector<2x8xf32>
    %323 = vector.multi_reduction <maximumf>, %322, %cst_192 [2] : vector<2x8x8xf32> to vector<2x8xf32>
    %324 = vector.shape_cast %323 : vector<2x8xf32> to vector<2x8x1xf32>
    %325 = vector.broadcast %324 : vector<2x8x1xf32> to vector<2x8x8xf32>
    %326 = arith.subf %322, %325 : vector<2x8x8xf32>
    %327 = math.exp %326 : vector<2x8x8xf32>
    %cst_193 = arith.constant dense<0.000000e+00> : vector<2x8xf32>
    %328 = vector.multi_reduction <add>, %327, %cst_193 [2] : vector<2x8x8xf32> to vector<2x8xf32>
    %329 = vector.shape_cast %328 : vector<2x8xf32> to vector<2x8x1xf32>
    %330 = tpu.reciprocal %329 : vector<2x8x1xf32> -> vector<2x8x1xf32>
    %331 = vector.broadcast %330 : vector<2x8x1xf32> to vector<2x8x8xf32>
    %332 = arith.mulf %327, %331 : vector<2x8x8xf32>
    "tpu.trace_start"() <{level = 10 : i32, message = "bqk,bkd->bqd"}> : () -> ()
    %cst_194 = arith.constant dense<0.000000e+00> : vector<2x8x8xf32>
    %333 = tpu.matmul %332, %315, %cst_194 {dimension_numbers = #tpu.dot_dimension_numbers<[2], [1], [1], [2], [0, 0, 0, 1, 1, 2], [0], [0]>} : vector<2x8x8xf32>, vector<2x8x8xf32>, vector<2x8x8xf32> -> vector<2x8x8xf32>
    "tpu.trace_stop"() : () -> ()
    %334 = vector.shape_cast %333 : vector<2x8x8xf32> to vector<16x8xf32>
    %c4_195 = arith.constant 4 : index
    %c0_196 = arith.constant 0 : index
    %c0_197 = arith.constant 0 : index
    %335 = vector.load %arg4[%c4_195, %c0_196, %c0_197] : memref<8x8x32xf32, #tpu.memory_space<vmem>>, vector<1x8x32xf32>
    %336 = vector.shape_cast %335 : vector<1x8x32xf32> to vector<8x32xf32>
    %cst_198 = arith.constant dense<0.000000e+00> : vector<16x32xf32>
    %337 = tpu.matmul %334, %336, %cst_198 {dimension_numbers = #tpu.dot_dimension_numbers<[1], [0], [0], [1], [0, 0, 1, 1], [], []>} : vector<16x8xf32>, vector<8x32xf32>, vector<16x32xf32> -> vector<16x32xf32>
    %338 = arith.addf %291, %337 : vector<16x32xf32>
    %c13 = arith.constant 13 : index
    %c0_199 = arith.constant 0 : index
    %c0_200 = arith.constant 0 : index
    %339 = vector.load %arg2[%c13, %c0_199, %c0_200] : memref<24x32x8xf32, #tpu.memory_space<vmem>>, vector<1x32x8xf32>
    %340 = vector.shape_cast %339 : vector<1x32x8xf32> to vector<32x8xf32>
    %cst_201 = arith.constant dense<0.000000e+00> : vector<16x8xf32>
    %341 = tpu.matmul %290, %340, %cst_201 {dimension_numbers = #tpu.dot_dimension_numbers<[1], [0], [0], [1], [0, 0, 1, 1], [], []>} : vector<16x32xf32>, vector<32x8xf32>, vector<16x8xf32> -> vector<16x8xf32>
    %c13_202 = arith.constant 13 : index
    %c0_203 = arith.constant 0 : index
    %c0_204 = arith.constant 0 : index
    %342 = vector.load %arg3[%c13_202, %c0_203, %c0_204] : memref<24x1x8xf32, #tpu.memory_space<vmem>>, vector<1x1x8xf32>
    %343 = vector.shape_cast %342 : vector<1x1x8xf32> to vector<1x8xf32>
    %344 = vector.broadcast %343 : vector<1x8xf32> to vector<16x8xf32>
    %345 = arith.addf %341, %344 : vector<16x8xf32>
    %c17 = arith.constant 17 : index
    %c0_205 = arith.constant 0 : index
    %c0_206 = arith.constant 0 : index
    %346 = vector.load %arg2[%c17, %c0_205, %c0_206] : memref<24x32x8xf32, #tpu.memory_space<vmem>>, vector<1x32x8xf32>
    %347 = vector.shape_cast %346 : vector<1x32x8xf32> to vector<32x8xf32>
    %cst_207 = arith.constant dense<0.000000e+00> : vector<16x8xf32>
    %348 = tpu.matmul %290, %347, %cst_207 {dimension_numbers = #tpu.dot_dimension_numbers<[1], [0], [0], [1], [0, 0, 1, 1], [], []>} : vector<16x32xf32>, vector<32x8xf32>, vector<16x8xf32> -> vector<16x8xf32>
    %c17_208 = arith.constant 17 : index
    %c0_209 = arith.constant 0 : index
    %c0_210 = arith.constant 0 : index
    %349 = vector.load %arg3[%c17_208, %c0_209, %c0_210] : memref<24x1x8xf32, #tpu.memory_space<vmem>>, vector<1x1x8xf32>
    %350 = vector.shape_cast %349 : vector<1x1x8xf32> to vector<1x8xf32>
    %351 = vector.broadcast %350 : vector<1x8xf32> to vector<16x8xf32>
    %352 = arith.addf %348, %351 : vector<16x8xf32>
    %c21 = arith.constant 21 : index
    %c0_211 = arith.constant 0 : index
    %c0_212 = arith.constant 0 : index
    %353 = vector.load %arg2[%c21, %c0_211, %c0_212] : memref<24x32x8xf32, #tpu.memory_space<vmem>>, vector<1x32x8xf32>
    %354 = vector.shape_cast %353 : vector<1x32x8xf32> to vector<32x8xf32>
    %cst_213 = arith.constant dense<0.000000e+00> : vector<16x8xf32>
    %355 = tpu.matmul %290, %354, %cst_213 {dimension_numbers = #tpu.dot_dimension_numbers<[1], [0], [0], [1], [0, 0, 1, 1], [], []>} : vector<16x32xf32>, vector<32x8xf32>, vector<16x8xf32> -> vector<16x8xf32>
    %c21_214 = arith.constant 21 : index
    %c0_215 = arith.constant 0 : index
    %c0_216 = arith.constant 0 : index
    %356 = vector.load %arg3[%c21_214, %c0_215, %c0_216] : memref<24x1x8xf32, #tpu.memory_space<vmem>>, vector<1x1x8xf32>
    %357 = vector.shape_cast %356 : vector<1x1x8xf32> to vector<1x8xf32>
    %358 = vector.broadcast %357 : vector<1x8xf32> to vector<16x8xf32>
    %359 = arith.addf %355, %358 : vector<16x8xf32>
    %360 = vector.shape_cast %345 : vector<16x8xf32> to vector<2x8x8xf32>
    %361 = vector.shape_cast %352 : vector<16x8xf32> to vector<2x8x8xf32>
    %362 = vector.shape_cast %359 : vector<16x8xf32> to vector<2x8x8xf32>
    "tpu.trace_start"() <{level = 10 : i32, message = "bqd,bkd->bqk"}> : () -> ()
    %cst_217 = arith.constant dense<0.000000e+00> : vector<2x8x8xf32>
    %363 = tpu.matmul %360, %361, %cst_217 {dimension_numbers = #tpu.dot_dimension_numbers<[2], [2], [1], [1], [0, 0, 0, 1, 1, 1], [0], [0]>} : vector<2x8x8xf32>, vector<2x8x8xf32>, vector<2x8x8xf32> -> vector<2x8x8xf32>
    "tpu.trace_stop"() : () -> ()
    %cst_218 = arith.constant 0.353553385 : f32
    %364 = vector.broadcast %cst_218 : f32 to vector<2x8x8xf32>
    %365 = arith.mulf %363, %364 : vector<2x8x8xf32>
    %cst_219 = arith.constant -1.000000e+09 : f32
    %366 = vector.shape_cast %4 : vector<2x1x8xi1> to vector<2x1x8xi1>
    %367 = vector.broadcast %366 : vector<2x1x8xi1> to vector<2x8x8xi1>
    %368 = vector.broadcast %cst_219 : f32 to vector<2x8x8xf32>
    %369 = arith.select %367, %365, %368 : vector<2x8x8xi1>, vector<2x8x8xf32>
    %cst_220 = arith.constant dense<0xFF800000> : vector<2x8xf32>
    %370 = vector.multi_reduction <maximumf>, %369, %cst_220 [2] : vector<2x8x8xf32> to vector<2x8xf32>
    %371 = vector.shape_cast %370 : vector<2x8xf32> to vector<2x8x1xf32>
    %372 = vector.broadcast %371 : vector<2x8x1xf32> to vector<2x8x8xf32>
    %373 = arith.subf %369, %372 : vector<2x8x8xf32>
    %374 = math.exp %373 : vector<2x8x8xf32>
    %cst_221 = arith.constant dense<0.000000e+00> : vector<2x8xf32>
    %375 = vector.multi_reduction <add>, %374, %cst_221 [2] : vector<2x8x8xf32> to vector<2x8xf32>
    %376 = vector.shape_cast %375 : vector<2x8xf32> to vector<2x8x1xf32>
    %377 = tpu.reciprocal %376 : vector<2x8x1xf32> -> vector<2x8x1xf32>
    %378 = vector.broadcast %377 : vector<2x8x1xf32> to vector<2x8x8xf32>
    %379 = arith.mulf %374, %378 : vector<2x8x8xf32>
    "tpu.trace_start"() <{level = 10 : i32, message = "bqk,bkd->bqd"}> : () -> ()
    %cst_222 = arith.constant dense<0.000000e+00> : vector<2x8x8xf32>
    %380 = tpu.matmul %379, %362, %cst_222 {dimension_numbers = #tpu.dot_dimension_numbers<[2], [1], [1], [2], [0, 0, 0, 1, 1, 2], [0], [0]>} : vector<2x8x8xf32>, vector<2x8x8xf32>, vector<2x8x8xf32> -> vector<2x8x8xf32>
    "tpu.trace_stop"() : () -> ()
    %381 = vector.shape_cast %380 : vector<2x8x8xf32> to vector<16x8xf32>
    %c5_223 = arith.constant 5 : index
    %c0_224 = arith.constant 0 : index
    %c0_225 = arith.constant 0 : index
    %382 = vector.load %arg4[%c5_223, %c0_224, %c0_225] : memref<8x8x32xf32, #tpu.memory_space<vmem>>, vector<1x8x32xf32>
    %383 = vector.shape_cast %382 : vector<1x8x32xf32> to vector<8x32xf32>
    %cst_226 = arith.constant dense<0.000000e+00> : vector<16x32xf32>
    %384 = tpu.matmul %381, %383, %cst_226 {dimension_numbers = #tpu.dot_dimension_numbers<[1], [0], [0], [1], [0, 0, 1, 1], [], []>} : vector<16x8xf32>, vector<8x32xf32>, vector<16x32xf32> -> vector<16x32xf32>
    %385 = arith.addf %338, %384 : vector<16x32xf32>
    %c14 = arith.constant 14 : index
    %c0_227 = arith.constant 0 : index
    %c0_228 = arith.constant 0 : index
    %386 = vector.load %arg2[%c14, %c0_227, %c0_228] : memref<24x32x8xf32, #tpu.memory_space<vmem>>, vector<1x32x8xf32>
    %387 = vector.shape_cast %386 : vector<1x32x8xf32> to vector<32x8xf32>
    %cst_229 = arith.constant dense<0.000000e+00> : vector<16x8xf32>
    %388 = tpu.matmul %290, %387, %cst_229 {dimension_numbers = #tpu.dot_dimension_numbers<[1], [0], [0], [1], [0, 0, 1, 1], [], []>} : vector<16x32xf32>, vector<32x8xf32>, vector<16x8xf32> -> vector<16x8xf32>
    %c14_230 = arith.constant 14 : index
    %c0_231 = arith.constant 0 : index
    %c0_232 = arith.constant 0 : index
    %389 = vector.load %arg3[%c14_230, %c0_231, %c0_232] : memref<24x1x8xf32, #tpu.memory_space<vmem>>, vector<1x1x8xf32>
    %390 = vector.shape_cast %389 : vector<1x1x8xf32> to vector<1x8xf32>
    %391 = vector.broadcast %390 : vector<1x8xf32> to vector<16x8xf32>
    %392 = arith.addf %388, %391 : vector<16x8xf32>
    %c18 = arith.constant 18 : index
    %c0_233 = arith.constant 0 : index
    %c0_234 = arith.constant 0 : index
    %393 = vector.load %arg2[%c18, %c0_233, %c0_234] : memref<24x32x8xf32, #tpu.memory_space<vmem>>, vector<1x32x8xf32>
    %394 = vector.shape_cast %393 : vector<1x32x8xf32> to vector<32x8xf32>
    %cst_235 = arith.constant dense<0.000000e+00> : vector<16x8xf32>
    %395 = tpu.matmul %290, %394, %cst_235 {dimension_numbers = #tpu.dot_dimension_numbers<[1], [0], [0], [1], [0, 0, 1, 1], [], []>} : vector<16x32xf32>, vector<32x8xf32>, vector<16x8xf32> -> vector<16x8xf32>
    %c18_236 = arith.constant 18 : index
    %c0_237 = arith.constant 0 : index
    %c0_238 = arith.constant 0 : index
    %396 = vector.load %arg3[%c18_236, %c0_237, %c0_238] : memref<24x1x8xf32, #tpu.memory_space<vmem>>, vector<1x1x8xf32>
    %397 = vector.shape_cast %396 : vector<1x1x8xf32> to vector<1x8xf32>
    %398 = vector.broadcast %397 : vector<1x8xf32> to vector<16x8xf32>
    %399 = arith.addf %395, %398 : vector<16x8xf32>
    %c22 = arith.constant 22 : index
    %c0_239 = arith.constant 0 : index
    %c0_240 = arith.constant 0 : index
    %400 = vector.load %arg2[%c22, %c0_239, %c0_240] : memref<24x32x8xf32, #tpu.memory_space<vmem>>, vector<1x32x8xf32>
    %401 = vector.shape_cast %400 : vector<1x32x8xf32> to vector<32x8xf32>
    %cst_241 = arith.constant dense<0.000000e+00> : vector<16x8xf32>
    %402 = tpu.matmul %290, %401, %cst_241 {dimension_numbers = #tpu.dot_dimension_numbers<[1], [0], [0], [1], [0, 0, 1, 1], [], []>} : vector<16x32xf32>, vector<32x8xf32>, vector<16x8xf32> -> vector<16x8xf32>
    %c22_242 = arith.constant 22 : index
    %c0_243 = arith.constant 0 : index
    %c0_244 = arith.constant 0 : index
    %403 = vector.load %arg3[%c22_242, %c0_243, %c0_244] : memref<24x1x8xf32, #tpu.memory_space<vmem>>, vector<1x1x8xf32>
    %404 = vector.shape_cast %403 : vector<1x1x8xf32> to vector<1x8xf32>
    %405 = vector.broadcast %404 : vector<1x8xf32> to vector<16x8xf32>
    %406 = arith.addf %402, %405 : vector<16x8xf32>
    %407 = vector.shape_cast %392 : vector<16x8xf32> to vector<2x8x8xf32>
    %408 = vector.shape_cast %399 : vector<16x8xf32> to vector<2x8x8xf32>
    %409 = vector.shape_cast %406 : vector<16x8xf32> to vector<2x8x8xf32>
    "tpu.trace_start"() <{level = 10 : i32, message = "bqd,bkd->bqk"}> : () -> ()
    %cst_245 = arith.constant dense<0.000000e+00> : vector<2x8x8xf32>
    %410 = tpu.matmul %407, %408, %cst_245 {dimension_numbers = #tpu.dot_dimension_numbers<[2], [2], [1], [1], [0, 0, 0, 1, 1, 1], [0], [0]>} : vector<2x8x8xf32>, vector<2x8x8xf32>, vector<2x8x8xf32> -> vector<2x8x8xf32>
    "tpu.trace_stop"() : () -> ()
    %cst_246 = arith.constant 0.353553385 : f32
    %411 = vector.broadcast %cst_246 : f32 to vector<2x8x8xf32>
    %412 = arith.mulf %410, %411 : vector<2x8x8xf32>
    %cst_247 = arith.constant -1.000000e+09 : f32
    %413 = vector.shape_cast %4 : vector<2x1x8xi1> to vector<2x1x8xi1>
    %414 = vector.broadcast %413 : vector<2x1x8xi1> to vector<2x8x8xi1>
    %415 = vector.broadcast %cst_247 : f32 to vector<2x8x8xf32>
    %416 = arith.select %414, %412, %415 : vector<2x8x8xi1>, vector<2x8x8xf32>
    %cst_248 = arith.constant dense<0xFF800000> : vector<2x8xf32>
    %417 = vector.multi_reduction <maximumf>, %416, %cst_248 [2] : vector<2x8x8xf32> to vector<2x8xf32>
    %418 = vector.shape_cast %417 : vector<2x8xf32> to vector<2x8x1xf32>
    %419 = vector.broadcast %418 : vector<2x8x1xf32> to vector<2x8x8xf32>
    %420 = arith.subf %416, %419 : vector<2x8x8xf32>
    %421 = math.exp %420 : vector<2x8x8xf32>
    %cst_249 = arith.constant dense<0.000000e+00> : vector<2x8xf32>
    %422 = vector.multi_reduction <add>, %421, %cst_249 [2] : vector<2x8x8xf32> to vector<2x8xf32>
    %423 = vector.shape_cast %422 : vector<2x8xf32> to vector<2x8x1xf32>
    %424 = tpu.reciprocal %423 : vector<2x8x1xf32> -> vector<2x8x1xf32>
    %425 = vector.broadcast %424 : vector<2x8x1xf32> to vector<2x8x8xf32>
    %426 = arith.mulf %421, %425 : vector<2x8x8xf32>
    "tpu.trace_start"() <{level = 10 : i32, message = "bqk,bkd->bqd"}> : () -> ()
    %cst_250 = arith.constant dense<0.000000e+00> : vector<2x8x8xf32>
    %427 = tpu.matmul %426, %409, %cst_250 {dimension_numbers = #tpu.dot_dimension_numbers<[2], [1], [1], [2], [0, 0, 0, 1, 1, 2], [0], [0]>} : vector<2x8x8xf32>, vector<2x8x8xf32>, vector<2x8x8xf32> -> vector<2x8x8xf32>
    "tpu.trace_stop"() : () -> ()
    %428 = vector.shape_cast %427 : vector<2x8x8xf32> to vector<16x8xf32>
    %c6_251 = arith.constant 6 : index
    %c0_252 = arith.constant 0 : index
    %c0_253 = arith.constant 0 : index
    %429 = vector.load %arg4[%c6_251, %c0_252, %c0_253] : memref<8x8x32xf32, #tpu.memory_space<vmem>>, vector<1x8x32xf32>
    %430 = vector.shape_cast %429 : vector<1x8x32xf32> to vector<8x32xf32>
    %cst_254 = arith.constant dense<0.000000e+00> : vector<16x32xf32>
    %431 = tpu.matmul %428, %430, %cst_254 {dimension_numbers = #tpu.dot_dimension_numbers<[1], [0], [0], [1], [0, 0, 1, 1], [], []>} : vector<16x8xf32>, vector<8x32xf32>, vector<16x32xf32> -> vector<16x32xf32>
    %432 = arith.addf %385, %431 : vector<16x32xf32>
    %c15 = arith.constant 15 : index
    %c0_255 = arith.constant 0 : index
    %c0_256 = arith.constant 0 : index
    %433 = vector.load %arg2[%c15, %c0_255, %c0_256] : memref<24x32x8xf32, #tpu.memory_space<vmem>>, vector<1x32x8xf32>
    %434 = vector.shape_cast %433 : vector<1x32x8xf32> to vector<32x8xf32>
    %cst_257 = arith.constant dense<0.000000e+00> : vector<16x8xf32>
    %435 = tpu.matmul %290, %434, %cst_257 {dimension_numbers = #tpu.dot_dimension_numbers<[1], [0], [0], [1], [0, 0, 1, 1], [], []>} : vector<16x32xf32>, vector<32x8xf32>, vector<16x8xf32> -> vector<16x8xf32>
    %c15_258 = arith.constant 15 : index
    %c0_259 = arith.constant 0 : index
    %c0_260 = arith.constant 0 : index
    %436 = vector.load %arg3[%c15_258, %c0_259, %c0_260] : memref<24x1x8xf32, #tpu.memory_space<vmem>>, vector<1x1x8xf32>
    %437 = vector.shape_cast %436 : vector<1x1x8xf32> to vector<1x8xf32>
    %438 = vector.broadcast %437 : vector<1x8xf32> to vector<16x8xf32>
    %439 = arith.addf %435, %438 : vector<16x8xf32>
    %c19 = arith.constant 19 : index
    %c0_261 = arith.constant 0 : index
    %c0_262 = arith.constant 0 : index
    %440 = vector.load %arg2[%c19, %c0_261, %c0_262] : memref<24x32x8xf32, #tpu.memory_space<vmem>>, vector<1x32x8xf32>
    %441 = vector.shape_cast %440 : vector<1x32x8xf32> to vector<32x8xf32>
    %cst_263 = arith.constant dense<0.000000e+00> : vector<16x8xf32>
    %442 = tpu.matmul %290, %441, %cst_263 {dimension_numbers = #tpu.dot_dimension_numbers<[1], [0], [0], [1], [0, 0, 1, 1], [], []>} : vector<16x32xf32>, vector<32x8xf32>, vector<16x8xf32> -> vector<16x8xf32>
    %c19_264 = arith.constant 19 : index
    %c0_265 = arith.constant 0 : index
    %c0_266 = arith.constant 0 : index
    %443 = vector.load %arg3[%c19_264, %c0_265, %c0_266] : memref<24x1x8xf32, #tpu.memory_space<vmem>>, vector<1x1x8xf32>
    %444 = vector.shape_cast %443 : vector<1x1x8xf32> to vector<1x8xf32>
    %445 = vector.broadcast %444 : vector<1x8xf32> to vector<16x8xf32>
    %446 = arith.addf %442, %445 : vector<16x8xf32>
    %c23 = arith.constant 23 : index
    %c0_267 = arith.constant 0 : index
    %c0_268 = arith.constant 0 : index
    %447 = vector.load %arg2[%c23, %c0_267, %c0_268] : memref<24x32x8xf32, #tpu.memory_space<vmem>>, vector<1x32x8xf32>
    %448 = vector.shape_cast %447 : vector<1x32x8xf32> to vector<32x8xf32>
    %cst_269 = arith.constant dense<0.000000e+00> : vector<16x8xf32>
    %449 = tpu.matmul %290, %448, %cst_269 {dimension_numbers = #tpu.dot_dimension_numbers<[1], [0], [0], [1], [0, 0, 1, 1], [], []>} : vector<16x32xf32>, vector<32x8xf32>, vector<16x8xf32> -> vector<16x8xf32>
    %c23_270 = arith.constant 23 : index
    %c0_271 = arith.constant 0 : index
    %c0_272 = arith.constant 0 : index
    %450 = vector.load %arg3[%c23_270, %c0_271, %c0_272] : memref<24x1x8xf32, #tpu.memory_space<vmem>>, vector<1x1x8xf32>
    %451 = vector.shape_cast %450 : vector<1x1x8xf32> to vector<1x8xf32>
    %452 = vector.broadcast %451 : vector<1x8xf32> to vector<16x8xf32>
    %453 = arith.addf %449, %452 : vector<16x8xf32>
    %454 = vector.shape_cast %439 : vector<16x8xf32> to vector<2x8x8xf32>
    %455 = vector.shape_cast %446 : vector<16x8xf32> to vector<2x8x8xf32>
    %456 = vector.shape_cast %453 : vector<16x8xf32> to vector<2x8x8xf32>
    "tpu.trace_start"() <{level = 10 : i32, message = "bqd,bkd->bqk"}> : () -> ()
    %cst_273 = arith.constant dense<0.000000e+00> : vector<2x8x8xf32>
    %457 = tpu.matmul %454, %455, %cst_273 {dimension_numbers = #tpu.dot_dimension_numbers<[2], [2], [1], [1], [0, 0, 0, 1, 1, 1], [0], [0]>} : vector<2x8x8xf32>, vector<2x8x8xf32>, vector<2x8x8xf32> -> vector<2x8x8xf32>
    "tpu.trace_stop"() : () -> ()
    %cst_274 = arith.constant 0.353553385 : f32
    %458 = vector.broadcast %cst_274 : f32 to vector<2x8x8xf32>
    %459 = arith.mulf %457, %458 : vector<2x8x8xf32>
    %cst_275 = arith.constant -1.000000e+09 : f32
    %460 = vector.shape_cast %4 : vector<2x1x8xi1> to vector<2x1x8xi1>
    %461 = vector.broadcast %460 : vector<2x1x8xi1> to vector<2x8x8xi1>
    %462 = vector.broadcast %cst_275 : f32 to vector<2x8x8xf32>
    %463 = arith.select %461, %459, %462 : vector<2x8x8xi1>, vector<2x8x8xf32>
    %cst_276 = arith.constant dense<0xFF800000> : vector<2x8xf32>
    %464 = vector.multi_reduction <maximumf>, %463, %cst_276 [2] : vector<2x8x8xf32> to vector<2x8xf32>
    %465 = vector.shape_cast %464 : vector<2x8xf32> to vector<2x8x1xf32>
    %466 = vector.broadcast %465 : vector<2x8x1xf32> to vector<2x8x8xf32>
    %467 = arith.subf %463, %466 : vector<2x8x8xf32>
    %468 = math.exp %467 : vector<2x8x8xf32>
    %cst_277 = arith.constant dense<0.000000e+00> : vector<2x8xf32>
    %469 = vector.multi_reduction <add>, %468, %cst_277 [2] : vector<2x8x8xf32> to vector<2x8xf32>
    %470 = vector.shape_cast %469 : vector<2x8xf32> to vector<2x8x1xf32>
    %471 = tpu.reciprocal %470 : vector<2x8x1xf32> -> vector<2x8x1xf32>
    %472 = vector.broadcast %471 : vector<2x8x1xf32> to vector<2x8x8xf32>
    %473 = arith.mulf %468, %472 : vector<2x8x8xf32>
    "tpu.trace_start"() <{level = 10 : i32, message = "bqk,bkd->bqd"}> : () -> ()
    %cst_278 = arith.constant dense<0.000000e+00> : vector<2x8x8xf32>
    %474 = tpu.matmul %473, %456, %cst_278 {dimension_numbers = #tpu.dot_dimension_numbers<[2], [1], [1], [2], [0, 0, 0, 1, 1, 2], [0], [0]>} : vector<2x8x8xf32>, vector<2x8x8xf32>, vector<2x8x8xf32> -> vector<2x8x8xf32>
    "tpu.trace_stop"() : () -> ()
    %475 = vector.shape_cast %474 : vector<2x8x8xf32> to vector<16x8xf32>
    %c7_279 = arith.constant 7 : index
    %c0_280 = arith.constant 0 : index
    %c0_281 = arith.constant 0 : index
    %476 = vector.load %arg4[%c7_279, %c0_280, %c0_281] : memref<8x8x32xf32, #tpu.memory_space<vmem>>, vector<1x8x32xf32>
    %477 = vector.shape_cast %476 : vector<1x8x32xf32> to vector<8x32xf32>
    %cst_282 = arith.constant dense<0.000000e+00> : vector<16x32xf32>
    %478 = tpu.matmul %475, %477, %cst_282 {dimension_numbers = #tpu.dot_dimension_numbers<[1], [0], [0], [1], [0, 0, 1, 1], [], []>} : vector<16x8xf32>, vector<8x32xf32>, vector<16x32xf32> -> vector<16x32xf32>
    %479 = arith.addf %432, %478 : vector<16x32xf32>
    %480 = arith.addf %265, %479 : vector<16x32xf32>
    %c2_283 = arith.constant 2 : index
    %c0_284 = arith.constant 0 : index
    %c0_285 = arith.constant 0 : index
    %481 = vector.load %arg6[%c2_283, %c0_284, %c0_285] : memref<4x1x32xf32, #tpu.memory_space<vmem>>, vector<1x1x32xf32>
    %482 = vector.shape_cast %481 : vector<1x1x32xf32> to vector<1x32xf32>
    %483 = vector.broadcast %482 : vector<1x32xf32> to vector<16x32xf32>
    %484 = arith.addf %480, %483 : vector<16x32xf32>
    %c6_286 = arith.constant 6 : index
    %c0_287 = arith.constant 0 : index
    %c0_288 = arith.constant 0 : index
    %485 = vector.load %arg5[%c6_286, %c0_287, %c0_288] : memref<8x1x32xf32, #tpu.memory_space<vmem>>, vector<1x1x32xf32>
    %486 = vector.shape_cast %485 : vector<1x1x32xf32> to vector<1x32xf32>
    %c7_289 = arith.constant 7 : index
    %c0_290 = arith.constant 0 : index
    %c0_291 = arith.constant 0 : index
    %487 = vector.load %arg5[%c7_289, %c0_290, %c0_291] : memref<8x1x32xf32, #tpu.memory_space<vmem>>, vector<1x1x32xf32>
    %488 = vector.shape_cast %487 : vector<1x1x32xf32> to vector<1x32xf32>
    %cst_292 = arith.constant dense<0.000000e+00> : vector<16xf32>
    %489 = vector.multi_reduction <add>, %484, %cst_292 [1] : vector<16x32xf32> to vector<16xf32>
    %490 = vector.shape_cast %489 : vector<16xf32> to vector<16x1xf32>
    %cst_293 = arith.constant 3.200000e+01 : f32
    %491 = vector.broadcast %cst_293 : f32 to vector<16x1xf32>
    %492 = arith.divf %490, %491 : vector<16x1xf32>
    %493 = vector.broadcast %492 : vector<16x1xf32> to vector<16x32xf32>
    %494 = arith.subf %484, %493 : vector<16x32xf32>
    %495 = arith.mulf %494, %494 : vector<16x32xf32>
    %cst_294 = arith.constant dense<0.000000e+00> : vector<16xf32>
    %496 = vector.multi_reduction <add>, %495, %cst_294 [1] : vector<16x32xf32> to vector<16xf32>
    %497 = vector.shape_cast %496 : vector<16xf32> to vector<16x1xf32>
    %cst_295 = arith.constant 0.0322580636 : f32
    %498 = vector.broadcast %cst_295 : f32 to vector<16x1xf32>
    %499 = arith.mulf %497, %498 : vector<16x1xf32>
    %500 = math.sqrt %499 : vector<16x1xf32>
    %cst_296 = arith.constant 9.99999997E-7 : f32
    %501 = vector.broadcast %cst_296 : f32 to vector<16x1xf32>
    %502 = arith.addf %500, %501 : vector<16x1xf32>
    %503 = tpu.reciprocal %502 : vector<16x1xf32> -> vector<16x1xf32>
    %504 = vector.broadcast %486 : vector<1x32xf32> to vector<16x32xf32>
    %505 = arith.mulf %504, %494 : vector<16x32xf32>
    %506 = vector.broadcast %503 : vector<16x1xf32> to vector<16x32xf32>
    %507 = arith.mulf %505, %506 : vector<16x32xf32>
    %508 = vector.broadcast %488 : vector<1x32xf32> to vector<16x32xf32>
    %509 = arith.addf %507, %508 : vector<16x32xf32>
    %c1_297 = arith.constant 1 : index
    %c0_298 = arith.constant 0 : index
    %c0_299 = arith.constant 0 : index
    %510 = vector.load %arg7[%c1_297, %c0_298, %c0_299] : memref<2x32x64xf32, #tpu.memory_space<vmem>>, vector<1x32x64xf32>
    %511 = vector.shape_cast %510 : vector<1x32x64xf32> to vector<32x64xf32>
    %cst_300 = arith.constant dense<0.000000e+00> : vector<16x64xf32>
    %512 = tpu.matmul %509, %511, %cst_300 {dimension_numbers = #tpu.dot_dimension_numbers<[1], [0], [0], [1], [0, 0, 1, 1], [], []>} : vector<16x32xf32>, vector<32x64xf32>, vector<16x64xf32> -> vector<16x64xf32>
    %c1_301 = arith.constant 1 : index
    %c0_302 = arith.constant 0 : index
    %c0_303 = arith.constant 0 : index
    %513 = vector.load %arg8[%c1_301, %c0_302, %c0_303] : memref<2x1x64xf32, #tpu.memory_space<vmem>>, vector<1x1x64xf32>
    %514 = vector.shape_cast %513 : vector<1x1x64xf32> to vector<1x64xf32>
    %515 = vector.broadcast %514 : vector<1x64xf32> to vector<16x64xf32>
    %516 = arith.addf %512, %515 : vector<16x64xf32>
    %cst_304 = arith.constant 0.000000e+00 : f32
    %517 = vector.broadcast %cst_304 : f32 to vector<16x64xf32>
    %518 = arith.maximumf %516, %517 : vector<16x64xf32>
    %c1_305 = arith.constant 1 : index
    %c0_306 = arith.constant 0 : index
    %c0_307 = arith.constant 0 : index
    %519 = vector.load %arg9[%c1_305, %c0_306, %c0_307] : memref<2x64x32xf32, #tpu.memory_space<vmem>>, vector<1x64x32xf32>
    %520 = vector.shape_cast %519 : vector<1x64x32xf32> to vector<64x32xf32>
    %cst_308 = arith.constant dense<0.000000e+00> : vector<16x32xf32>
    %521 = tpu.matmul %518, %520, %cst_308 {dimension_numbers = #tpu.dot_dimension_numbers<[1], [0], [0], [1], [0, 0, 1, 1], [], []>} : vector<16x64xf32>, vector<64x32xf32>, vector<16x32xf32> -> vector<16x32xf32>
    %522 = arith.addf %484, %521 : vector<16x32xf32>
    %c3_309 = arith.constant 3 : index
    %c0_310 = arith.constant 0 : index
    %c0_311 = arith.constant 0 : index
    %523 = vector.load %arg6[%c3_309, %c0_310, %c0_311] : memref<4x1x32xf32, #tpu.memory_space<vmem>>, vector<1x1x32xf32>
    %524 = vector.shape_cast %523 : vector<1x1x32xf32> to vector<1x32xf32>
    %525 = vector.broadcast %524 : vector<1x32xf32> to vector<16x32xf32>
    %526 = arith.addf %522, %525 : vector<16x32xf32>
    %c0_312 = arith.constant 0 : index
    %c0_313 = arith.constant 0 : index
    %c0_314 = arith.constant 0 : index
    %527 = vector.load %arg10[%c0_312, %c0_313, %c0_314] : memref<2x1x32xf32, #tpu.memory_space<vmem>>, vector<1x1x32xf32>
    %528 = vector.shape_cast %527 : vector<1x1x32xf32> to vector<1x32xf32>
    %c1_315 = arith.constant 1 : index
    %c0_316 = arith.constant 0 : index
    %c0_317 = arith.constant 0 : index
    %529 = vector.load %arg10[%c1_315, %c0_316, %c0_317] : memref<2x1x32xf32, #tpu.memory_space<vmem>>, vector<1x1x32xf32>
    %530 = vector.shape_cast %529 : vector<1x1x32xf32> to vector<1x32xf32>
    %cst_318 = arith.constant dense<0.000000e+00> : vector<16xf32>
    %531 = vector.multi_reduction <add>, %526, %cst_318 [1] : vector<16x32xf32> to vector<16xf32>
    %532 = vector.shape_cast %531 : vector<16xf32> to vector<16x1xf32>
    %cst_319 = arith.constant 3.200000e+01 : f32
    %533 = vector.broadcast %cst_319 : f32 to vector<16x1xf32>
    %534 = arith.divf %532, %533 : vector<16x1xf32>
    %535 = vector.broadcast %534 : vector<16x1xf32> to vector<16x32xf32>
    %536 = arith.subf %526, %535 : vector<16x32xf32>
    %537 = arith.mulf %536, %536 : vector<16x32xf32>
    %cst_320 = arith.constant dense<0.000000e+00> : vector<16xf32>
    %538 = vector.multi_reduction <add>, %537, %cst_320 [1] : vector<16x32xf32> to vector<16xf32>
    %539 = vector.shape_cast %538 : vector<16xf32> to vector<16x1xf32>
    %cst_321 = arith.constant 0.0322580636 : f32
    %540 = vector.broadcast %cst_321 : f32 to vector<16x1xf32>
    %541 = arith.mulf %539, %540 : vector<16x1xf32>
    %542 = math.sqrt %541 : vector<16x1xf32>
    %cst_322 = arith.constant 9.99999997E-7 : f32
    %543 = vector.broadcast %cst_322 : f32 to vector<16x1xf32>
    %544 = arith.addf %542, %543 : vector<16x1xf32>
    %545 = tpu.reciprocal %544 : vector<16x1xf32> -> vector<16x1xf32>
    %546 = vector.broadcast %528 : vector<1x32xf32> to vector<16x32xf32>
    %547 = arith.mulf %546, %536 : vector<16x32xf32>
    %548 = vector.broadcast %545 : vector<16x1xf32> to vector<16x32xf32>
    %549 = arith.mulf %547, %548 : vector<16x32xf32>
    %550 = vector.broadcast %530 : vector<1x32xf32> to vector<16x32xf32>
    %551 = arith.addf %549, %550 : vector<16x32xf32>
    %552 = vector.shape_cast %551 : vector<16x32xf32> to vector<2x8x32xf32>
    %c0_323 = arith.constant 0 : index
    %c0_324 = arith.constant 0 : index
    %c0_325 = arith.constant 0 : index
    %553 = vector.load %arg11[%c0_323, %c0_324, %c0_325] : memref<2x8x32xf32, #tpu.memory_space<vmem>>, vector<2x8x32xf32>
    tpu.vector_store %arg11[%c0_323, %c0_324, %c0_325], %552 {strides = array<i32>} : memref<2x8x32xf32, #tpu.memory_space<vmem>>, vector<2x8x32xf32>,
    return
  }
}

</mosaic_0001>

<llo_original>
// kernel: encoder_forward.1
$region0: #{encoder_forward.1}
  #allocation0 [shape = 'u32[]', space=smem, size = 0x4, offset = 0x4, fixed_abs, tag = 'smem constant byte address 0x4 - core index']
  #allocation1 [shape = 'u32[144,128]{1,0:T(1,128)}', space=vmem, size = 0x12000, scoped, tag = 'internal scratch']
  %s0 = inlined_call_operand.vmem [shape: f32[2,8,32], index: 0, kind: input, shape index: {}]
  %s1 = inlined_call_operand.vmem [shape: f32[2,1,8], index: 1, kind: input, shape index: {}]
  %s2 = inlined_call_operand.vmem [shape: f32[24,32,8], index: 2, kind: input, shape index: {}]
  %s3 = inlined_call_operand.vmem [shape: f32[24,1,8], index: 3, kind: input, shape index: {}]
  %s4 = inlined_call_operand.vmem [shape: f32[8,8,32], index: 4, kind: input, shape index: {}]
  %s5 = inlined_call_operand.vmem [shape: f32[8,1,32], index: 5, kind: input, shape index: {}]
  %s6 = inlined_call_operand.vmem [shape: f32[4,1,32], index: 6, kind: input, shape index: {}]
  %s7 = inlined_call_operand.vmem [shape: f32[2,32,64], index: 7, kind: input, shape index: {}]
  %s8 = inlined_call_operand.vmem [shape: f32[2,1,64], index: 8, kind: input, shape index: {}]
  %s9 = inlined_call_operand.vmem [shape: f32[2,64,32], index: 9, kind: input, shape index: {}]
  %s10 = inlined_call_operand.vmem [shape: f32[2,1,32], index: 10, kind: input, shape index: {}]
  %s11 = inlined_call_operand.hbm [shape: f32[2,8,32], index: 11, kind: output, shape index: {}]
  %s12 = sld [smem:[#allocation0]]
  $region54: #{encoder_forward.1} parent=0
    _
  %s14 = ssub.s32 1, %s12
  %s15 = scalar_select 0, %s14, %s12
  $region1: #{encoder_forward.1} parent=0
    #allocation2 [shape = 'u8[8192]{0}', space=vmem, size = 0x2000, scoped, tag = 'output window, operand 0, single buffered']
    #allocation3 [shape = 's32[1]{0}', space=sflag, size = 0x4, scoped, tag = 'scoped memory for encoder_forward.1']
    %16 = vsyncpa [#allocation3], 0
    // Predicated region
    $region2: #{encoder_forward.1} parent=1 // pred_check
      _
    $region3: #{encoder_forward.1} parent=1 // pred_check_branch
      %18 = sbr.rel (0) target = $region5
    $region4: #{encoder_forward.1} parent=1 // pred_region
      _
    $region5: #{encoder_forward.1} parent=1 // pred_fallthru
      _
    // Predicated region
    $region6: #{encoder_forward.1} parent=1 // pred_check
      _
    $region7: #{encoder_forward.1} parent=1 // pred_check_branch
      %20 = sbr.rel (0) target = $region9
    $region8: #{encoder_forward.1} parent=1 // pred_region
      _
    $region9: #{encoder_forward.1} parent=1 // pred_fallthru
      _
    // Predicated region
    $region10: #{encoder_forward.1} parent=1 // pred_check
      _
    $region11: #{encoder_forward.1} parent=1 // pred_check_branch
      %22 = sbr.rel (0) target = $region13
    $region12: #{encoder_forward.1} parent=1 // pred_region
      _
    $region13: #{encoder_forward.1} parent=1 // pred_fallthru
      _
    // Predicated region
    $region14: #{encoder_forward.1} parent=1 // pred_check
      _
    $region15: #{encoder_forward.1} parent=1 // pred_check_branch
      %24 = sbr.rel (0) target = $region17
    $region16: #{encoder_forward.1} parent=1 // pred_region
      _
    $region17: #{encoder_forward.1} parent=1 // pred_fallthru
      _
    // Predicated region
    $region18: #{encoder_forward.1} parent=1 // pred_check
      _
    $region19: #{encoder_forward.1} parent=1 // pred_check_branch
      %26 = sbr.rel (0) target = $region21
    $region20: #{encoder_forward.1} parent=1 // pred_region
      _
    $region21: #{encoder_forward.1} parent=1 // pred_fallthru
      _
    // Predicated region
    $region22: #{encoder_forward.1} parent=1 // pred_check
      _
    $region23: #{encoder_forward.1} parent=1 // pred_check_branch
      %28 = sbr.rel (0) target = $region25
    $region24: #{encoder_forward.1} parent=1 // pred_region
      _
    $region25: #{encoder_forward.1} parent=1 // pred_fallthru
      _
    // Predicated region
    $region26: #{encoder_forward.1} parent=1 // pred_check
      _
    $region27: #{encoder_forward.1} parent=1 // pred_check_branch
      %30 = sbr.rel (0) target = $region29
    $region28: #{encoder_forward.1} parent=1 // pred_region
      _
    $region29: #{encoder_forward.1} parent=1 // pred_fallthru
      _
    // Predicated region
    $region30: #{encoder_forward.1} parent=1 // pred_check
      _
    $region31: #{encoder_forward.1} parent=1 // pred_check_branch
      %32 = sbr.rel (0) target = $region33
    $region32: #{encoder_forward.1} parent=1 // pred_region
      _
    $region33: #{encoder_forward.1} parent=1 // pred_fallthru
      _
    // Predicated region
    $region34: #{encoder_forward.1} parent=1 // pred_check
      _
    $region35: #{encoder_forward.1} parent=1 // pred_check_branch
      %34 = sbr.rel (0) target = $region37
    $region36: #{encoder_forward.1} parent=1 // pred_region
      _
    $region37: #{encoder_forward.1} parent=1 // pred_fallthru
      _
    // Predicated region
    $region38: #{encoder_forward.1} parent=1 // pred_check
      _
    $region39: #{encoder_forward.1} parent=1 // pred_check_branch
      %36 = sbr.rel (0) target = $region41
    $region40: #{encoder_forward.1} parent=1 // pred_region
      _
    $region41: #{encoder_forward.1} parent=1 // pred_fallthru
      _
    // Predicated region
    $region42: #{encoder_forward.1} parent=1 // pred_check
      _
    $region43: #{encoder_forward.1} parent=1 // pred_check_branch
      %38 = sbr.rel (0) target = $region45
    $region44: #{encoder_forward.1} parent=1 // pred_region
      _
    $region45: #{encoder_forward.1} parent=1 // pred_fallthru
      _
    %v39 = vld [vmem:[%s0] sm:$0xff]
    %v40 = vld [vmem:[%s0 + $0x8] sm:$0xff]
    %v41 = vld [vmem:[%s1] sm:$0x1]
    %v42 = vld [vmem:[%s1 + $0x1] sm:$0x1]
    %vm43 = vcmp.ne.f32.partialorder %v41, 0.0
    %vm44 = vcmp.ne.f32.partialorder %v42, 0.0
    %v45 = vld [vmem:[%s5] sm:$0x1]
    %s46 = scalar_lea.vmem %s5, 1
    %v47 = vld [vmem:[%s46] sm:$0x1]
    %vm48 = vcmask 261120
    %v49 = vsel %vm48, %v39, 0.0
    %50 = vadd.xlane.f32.xlu0 %v49
    %v51 = vpop.xlane.xlu0 %50
    %v52 = vsel %vm48, %v40, 0.0
    %53 = vadd.xlane.f32.xlu0 %v52
    %v54 = vpop.xlane.xlu0 %53
    %v55 = vrcp.pop 32.0
    %v56 = vmul.f32 %v51, %v55
    %v57 = vmul.f32 %v54, %v55
    %v58 = vsub.f32 %v39, %v56
    %v59 = vsub.f32 %v40, %v57
    %v60 = vmul.f32 %v58, %v58
    %v61 = vmul.f32 %v59, %v59
    %v62 = vsel %vm48, %v60, 0.0
    %63 = vadd.xlane.f32.xlu0 %v62
    %v64 = vpop.xlane.xlu0 %63
    %v65 = vsel %vm48, %v61, 0.0
    %66 = vadd.xlane.f32.xlu0 %v65
    %v67 = vpop.xlane.xlu0 %66
    %v68 = vmul.f32 %v64, 0.032258064
    %v69 = vmul.f32 %v67, 0.032258064
    %v70 = vrsqrt.pop %v68
    %v71 = vmul.f32 %v68, %v70
    %vm72 = vcmp.eq.f32.partialorder %v68, inf
    %v73 = vsel %vm72, %v68, %v71
    %vm74 = vcmp.eq.f32.partialorder %v68, 0.0
    %v75 = vand.u32 %v68, 2147483648
    %v76 = vsel %vm74, %v75, %v73
    %v77 = vrsqrt.pop %v69
    %v78 = vmul.f32 %v69, %v77
    %vm79 = vcmp.eq.f32.partialorder %v69, inf
    %v80 = vsel %vm79, %v69, %v78
    %vm81 = vcmp.eq.f32.partialorder %v69, 0.0
    %v82 = vand.u32 %v69, 2147483648
    %v83 = vsel %vm81, %v82, %v80
    %v84 = vadd.f32 %v76, 1e-06
    %v85 = vadd.f32 %v83, 1e-06
    %v86 = vrcp.pop %v84
    %v87 = vrcp.pop %v85
    %v89 = vlaneseq
    %v90 = vshrl.u32 %v89, 7
    %v91 = vsub.s32 0, %v90
    %v92 = vrot.slane %v45, %v91
    %v94 = vmul.f32 %v92, %v58
    %v95 = vmul.f32 %v92, %v59
    %v96 = vmul.f32 %v94, %v86
    %v97 = vmul.f32 %v95, %v87
    %v99 = vlaneseq
    %v100 = vshrl.u32 %v99, 7
    %v101 = vsub.s32 0, %v100
    %v102 = vrot.slane %v47, %v101
    %v104 = vadd.f32 %v96, %v102
    %v105 = vadd.f32 %v97, %v102
    %v106 = vld [vmem:[%s2] sm:$0xff]
    %v107 = vld [vmem:[%s2 + $0x8] sm:$0xff]
    %v108 = vld [vmem:[%s2 + $0x10] sm:$0xff]
    %v109 = vld [vmem:[%s2 + $0x18] sm:$0xff]
    %v110 = vld [vmem:[%s3] sm:$0x1]
    %v112 = vlaneseq
    %v113 = vshrl.u32 %v112, 7
    %v114 = vsub.s32 0, %v113
    %v115 = vrot.slane %v110, %v114
    %v118 = vsel %vm48, %v104, 0
    %v121 = vsel %vm48, %v105, 0
    %123 = vmatprep.subr.mxu0 0.0
    %124 = vmatpush1.msra.mxu0 0.0
    %125 = vmatprep.subr.mxu0 0.0
    %126 = vmatpush1.msra.mxu0 0.0
    %127 = vmatprep.subr.mxu0 0.0
    %128 = vmatpush1.msra.mxu0 0.0
    %129 = vmatprep.subr.mxu0 0.0
    %130 = vmatpush1.msra.mxu0 0.0
    %131 = vmatprep.subr.mxu0 0.0
    %132 = vmatpush1.msra.mxu0 0.0
    %133 = vmatprep.subr.mxu0 0.0
    %134 = vmatpush1.msra.mxu0 0.0
    %135 = vmatprep.subr.mxu0 0.0
    %136 = vmatpush1.msra.mxu0 0.0
    %137 = vmatprep.subr.mxu0 0.0
    %138 = vmatpush1.msra.mxu0 0.0
    %139 = vmatprep.subr.mxu0 0.0
    %140 = vmatpush1.msra.mxu0 0.0
    %141 = vmatprep.subr.mxu0 0.0
    %142 = vmatpush1.msra.mxu0 0.0
    %143 = vmatprep.subr.mxu0 0.0
    %144 = vmatpush1.msra.mxu0 0.0
    %145 = vmatprep.subr.mxu0 0.0
    %146 = vmatpush1.msra.mxu0 0.0
    %147 = vmatprep.subr.mxu0 0.0
    %148 = vmatpush1.msra.mxu0 %v109
    %149 = vmatprep.subr.mxu0 0.0
    %150 = vmatpush1.msra.mxu0 %v108
    %151 = vmatprep.subr.mxu0 0.0
    %152 = vmatpush1.msra.mxu0 %v107
    %153 = vmatprep.subr.mxu0 0.0
    %154 = vmatpush1.msra.mxu0 %v106
    %155 = vmatprep.subr.mxu0 0.0
    %156 = vmatpush2.msra.mxu0 0.0
    %157 = vmatprep.subr.mxu0 0.0
    %158 = vmatpush2.msra.mxu0 0.0
    %159 = vmatprep.subr.mxu0 0.0
    %160 = vmatpush2.msra.mxu0 0.0
    %161 = vmatprep.subr.mxu0 0.0
    %162 = vmatpush2.msra.mxu0 0.0
    %163 = vmatprep.subr.mxu0 0.0
    %164 = vmatpush2.msra.mxu0 0.0
    %165 = vmatprep.subr.mxu0 0.0
    %166 = vmatpush2.msra.mxu0 0.0
    %167 = vmatprep.subr.mxu0 0.0
    %168 = vmatpush2.msra.mxu0 0.0
    %169 = vmatprep.subr.mxu0 0.0
    %170 = vmatpush2.msra.mxu0 0.0
    %171 = vmatprep.subr.mxu0 0.0
    %172 = vmatpush2.msra.mxu0 0.0
    %173 = vmatprep.subr.mxu0 0.0
    %174 = vmatpush2.msra.mxu0 0.0
    %175 = vmatprep.subr.mxu0 0.0
    %176 = vmatpush2.msra.mxu0 0.0
    %177 = vmatprep.subr.mxu0 0.0
    %178 = vmatpush2.msra.mxu0 0.0
    %179 = vmatprep.subr.mxu0 0.0
    %180 = vmatpush2.msra.mxu0 0.0
    %181 = vmatprep.subr.mxu0 0.0
    %182 = vmatpush2.msra.mxu0 0.0
    %183 = vmatprep.subr.mxu0 0.0
    %184 = vmatpush2.msra.mxu0 0.0
    %185 = vmatprep.subr.mxu0 0.0
    %186 = vmatpush2.msra.mxu0 0.0
    %187 = vmatprep.mubr.f32.mxu0 0.0
    %188 = vmatmul.mubr.f32.gmra.mxu0 %v118
    %v189 = vpop.f32.mrf.mxu0
    %v190 = vadd.f32 %v115, %v189
    %v191 = vpop.f32.mrf.mxu0
    %192 = vmatprep.mubr.f32.mxu0 0.0
    %193 = vmatmul.mubr.f32.gmra.mxu0 %v121
    %v194 = vpop.f32.mrf.mxu0
    %v195 = vadd.f32 %v115, %v194
    %v196 = vpop.f32.mrf.mxu0
    %197 = vdwg.mxu0
    %s198 = scalar_lea.vmem %s2, 128
    %v199 = vld [vmem:[%s198] sm:$0xff]
    %v200 = vld [vmem:[%s198 + $0x8] sm:$0xff]
    %v201 = vld [vmem:[%s198 + $0x10] sm:$0xff]
    %v202 = vld [vmem:[%s198 + $0x18] sm:$0xff]
    %s203 = scalar_lea.vmem %s3, 4
    %v204 = vld [vmem:[%s203] sm:$0x1]
    %v206 = vlaneseq
    %v207 = vshrl.u32 %v206, 7
    %v208 = vsub.s32 0, %v207
    %v209 = vrot.slane %v204, %v208
    %211 = vmatprep.subr.mxu0 0.0
    %212 = vmatpush1.msra.mxu0 0.0
    %213 = vmatprep.subr.mxu0 0.0
    %214 = vmatpush1.msra.mxu0 0.0
    %215 = vmatprep.subr.mxu0 0.0
    %216 = vmatpush1.msra.mxu0 0.0
    %217 = vmatprep.subr.mxu0 0.0
    %218 = vmatpush1.msra.mxu0 0.0
    %219 = vmatprep.subr.mxu0 0.0
    %220 = vmatpush1.msra.mxu0 0.0
    %221 = vmatprep.subr.mxu0 0.0
    %222 = vmatpush1.msra.mxu0 0.0
    %223 = vmatprep.subr.mxu0 0.0
    %224 = vmatpush1.msra.mxu0 0.0
    %225 = vmatprep.subr.mxu0 0.0
    %226 = vmatpush1.msra.mxu0 0.0
    %227 = vmatprep.subr.mxu0 0.0
    %228 = vmatpush1.msra.mxu0 0.0
    %229 = vmatprep.subr.mxu0 0.0
    %230 = vmatpush1.msra.mxu0 0.0
    %231 = vmatprep.subr.mxu0 0.0
    %232 = vmatpush1.msra.mxu0 0.0
    %233 = vmatprep.subr.mxu0 0.0
    %234 = vmatpush1.msra.mxu0 0.0
    %235 = vmatprep.subr.mxu0 0.0
    %236 = vmatpush1.msra.mxu0 %v202
    %237 = vmatprep.subr.mxu0 0.0
    %238 = vmatpush1.msra.mxu0 %v201
    %239 = vmatprep.subr.mxu0 0.0
    %240 = vmatpush1.msra.mxu0 %v200
    %241 = vmatprep.subr.mxu0 0.0
    %242 = vmatpush1.msra.mxu0 %v199
    %243 = vmatprep.subr.mxu0 0.0
    %244 = vmatpush2.msra.mxu0 0.0
    %245 = vmatprep.subr.mxu0 0.0
    %246 = vmatpush2.msra.mxu0 0.0
    %247 = vmatprep.subr.mxu0 0.0
    %248 = vmatpush2.msra.mxu0 0.0
    %249 = vmatprep.subr.mxu0 0.0
    %250 = vmatpush2.msra.mxu0 0.0
    %251 = vmatprep.subr.mxu0 0.0
    %252 = vmatpush2.msra.mxu0 0.0
    %253 = vmatprep.subr.mxu0 0.0
    %254 = vmatpush2.msra.mxu0 0.0
    %255 = vmatprep.subr.mxu0 0.0
    %256 = vmatpush2.msra.mxu0 0.0
    %257 = vmatprep.subr.mxu0 0.0
    %258 = vmatpush2.msra.mxu0 0.0
    %259 = vmatprep.subr.mxu0 0.0
    %260 = vmatpush2.msra.mxu0 0.0
    %261 = vmatprep.subr.mxu0 0.0
    %262 = vmatpush2.msra.mxu0 0.0
    %263 = vmatprep.subr.mxu0 0.0
    %264 = vmatpush2.msra.mxu0 0.0
    %265 = vmatprep.subr.mxu0 0.0
    %266 = vmatpush2.msra.mxu0 0.0
    %267 = vmatprep.subr.mxu0 0.0
    %268 = vmatpush2.msra.mxu0 0.0
    %269 = vmatprep.subr.mxu0 0.0
    %270 = vmatpush2.msra.mxu0 0.0
    %271 = vmatprep.subr.mxu0 0.0
    %272 = vmatpush2.msra.mxu0 0.0
    %273 = vmatprep.subr.mxu0 0.0
    %274 = vmatpush2.msra.mxu0 0.0
    %275 = vmatprep.mubr.f32.mxu0 0.0
    %276 = vmatmul.mubr.f32.gmra.mxu0 %v118
    %v277 = vpop.f32.mrf.mxu0
    %v278 = vadd.f32 %v209, %v277
    %v279 = vpop.f32.mrf.mxu0
    %280 = vmatprep.mubr.f32.mxu0 0.0
    %281 = vmatmul.mubr.f32.gmra.mxu0 %v121
    %v282 = vpop.f32.mrf.mxu0
    %v283 = vadd.f32 %v209, %v282
    %v284 = vpop.f32.mrf.mxu0
    %285 = vdwg.mxu0
    %s286 = scalar_lea.vmem %s2, 256
    %v287 = vld [vmem:[%s286] sm:$0xff]
    %v288 = vld [vmem:[%s286 + $0x8] sm:$0xff]
    %v289 = vld [vmem:[%s286 + $0x10] sm:$0xff]
    %v290 = vld [vmem:[%s286 + $0x18] sm:$0xff]
    %s291 = scalar_lea.vmem %s3, 8
    %v292 = vld [vmem:[%s291] sm:$0x1]
    %v294 = vlaneseq
    %v295 = vshrl.u32 %v294, 7
    %v296 = vsub.s32 0, %v295
    %v297 = vrot.slane %v292, %v296
    %299 = vmatprep.subr.mxu0 0.0
    %300 = vmatpush1.msra.mxu0 0.0
    %301 = vmatprep.subr.mxu0 0.0
    %302 = vmatpush1.msra.mxu0 0.0
    %303 = vmatprep.subr.mxu0 0.0
    %304 = vmatpush1.msra.mxu0 0.0
    %305 = vmatprep.subr.mxu0 0.0
    %306 = vmatpush1.msra.mxu0 0.0
    %307 = vmatprep.subr.mxu0 0.0
    %308 = vmatpush1.msra.mxu0 0.0
    %309 = vmatprep.subr.mxu0 0.0
    %310 = vmatpush1.msra.mxu0 0.0
    %311 = vmatprep.subr.mxu0 0.0
    %312 = vmatpush1.msra.mxu0 0.0
    %313 = vmatprep.subr.mxu0 0.0
    %314 = vmatpush1.msra.mxu0 0.0
    %315 = vmatprep.subr.mxu0 0.0
    %316 = vmatpush1.msra.mxu0 0.0
    %317 = vmatprep.subr.mxu0 0.0
    %318 = vmatpush1.msra.mxu0 0.0
    %319 = vmatprep.subr.mxu0 0.0
    %320 = vmatpush1.msra.mxu0 0.0
    %321 = vmatprep.subr.mxu0 0.0
    %322 = vmatpush1.msra.mxu0 0.0
    %323 = vmatprep.subr.mxu0 0.0
    %324 = vmatpush1.msra.mxu0 %v290
    %325 = vmatprep.subr.mxu0 0.0
    %326 = vmatpush1.msra.mxu0 %v289
    %327 = vmatprep.subr.mxu0 0.0
    %328 = vmatpush1.msra.mxu0 %v288
    %329 = vmatprep.subr.mxu0 0.0
    %330 = vmatpush1.msra.mxu0 %v287
    %331 = vmatprep.subr.mxu0 0.0
    %332 = vmatpush2.msra.mxu0 0.0
    %333 = vmatprep.subr.mxu0 0.0
    %334 = vmatpush2.msra.mxu0 0.0
    %335 = vmatprep.subr.mxu0 0.0
    %336 = vmatpush2.msra.mxu0 0.0
    %337 = vmatprep.subr.mxu0 0.0
    %338 = vmatpush2.msra.mxu0 0.0
    %339 = vmatprep.subr.mxu0 0.0
    %340 = vmatpush2.msra.mxu0 0.0
    %341 = vmatprep.subr.mxu0 0.0
    %342 = vmatpush2.msra.mxu0 0.0
    %343 = vmatprep.subr.mxu0 0.0
    %344 = vmatpush2.msra.mxu0 0.0
    %345 = vmatprep.subr.mxu0 0.0
    %346 = vmatpush2.msra.mxu0 0.0
    %347 = vmatprep.subr.mxu0 0.0
    %348 = vmatpush2.msra.mxu0 0.0
    %349 = vmatprep.subr.mxu0 0.0
    %350 = vmatpush2.msra.mxu0 0.0
    %351 = vmatprep.subr.mxu0 0.0
    %352 = vmatpush2.msra.mxu0 0.0
    %353 = vmatprep.subr.mxu0 0.0
    %354 = vmatpush2.msra.mxu0 0.0
    %355 = vmatprep.subr.mxu0 0.0
    %356 = vmatpush2.msra.mxu0 0.0
    %357 = vmatprep.subr.mxu0 0.0
    %358 = vmatpush2.msra.mxu0 0.0
    %359 = vmatprep.subr.mxu0 0.0
    %360 = vmatpush2.msra.mxu0 0.0
    %361 = vmatprep.subr.mxu0 0.0
    %362 = vmatpush2.msra.mxu0 0.0
    %363 = vmatprep.mubr.f32.mxu0 0.0
    %364 = vmatmul.mubr.f32.gmra.mxu0 %v118
    %v365 = vpop.f32.mrf.mxu0
    %v366 = vadd.f32 %v297, %v365
    %v367 = vpop.f32.mrf.mxu0
    %368 = vmatprep.mubr.f32.mxu0 0.0
    %369 = vmatmul.mubr.f32.gmra.mxu0 %v121
    %v370 = vpop.f32.mrf.mxu0
    %v371 = vadd.f32 %v297, %v370
    %v372 = vpop.f32.mrf.mxu0
    %373 = vdwg.mxu0
    %vm374 = vcmask 64512
    %v376 = vsel %vm374, %v190, 0
    %v379 = vsel %vm374, %v278, 0
    %381 = vmatprep.subr.mxu0 0.0
    %382 = vmatpush1.xpose.msra.mxu0 0.0
    %383 = vmatprep.subr.mxu0 0.0
    %384 = vmatpush1.xpose.msra.mxu0 0.0
    %385 = vmatprep.subr.mxu0 0.0
    %386 = vmatpush1.xpose.msra.mxu0 0.0
    %387 = vmatprep.subr.mxu0 0.0
    %388 = vmatpush1.xpose.msra.mxu0 0.0
    %389 = vmatprep.subr.mxu0 0.0
    %390 = vmatpush1.xpose.msra.mxu0 0.0
    %391 = vmatprep.subr.mxu0 0.0
    %392 = vmatpush1.xpose.msra.mxu0 0.0
    %393 = vmatprep.subr.mxu0 0.0
    %394 = vmatpush1.xpose.msra.mxu0 0.0
    %395 = vmatprep.subr.mxu0 0.0
    %396 = vmatpush1.xpose.msra.mxu0 0.0
    %397 = vmatprep.subr.mxu0 0.0
    %398 = vmatpush1.xpose.msra.mxu0 0.0
    %399 = vmatprep.subr.mxu0 0.0
    %400 = vmatpush1.xpose.msra.mxu0 0.0
    %401 = vmatprep.subr.mxu0 0.0
    %402 = vmatpush1.xpose.msra.mxu0 0.0
    %403 = vmatprep.subr.mxu0 0.0
    %404 = vmatpush1.xpose.msra.mxu0 0.0
    %405 = vmatprep.subr.mxu0 0.0
    %406 = vmatpush1.xpose.msra.mxu0 0.0
    %407 = vmatprep.subr.mxu0 0.0
    %408 = vmatpush1.xpose.msra.mxu0 0.0
    %409 = vmatprep.subr.mxu0 0.0
    %410 = vmatpush1.xpose.msra.mxu0 0.0
    %411 = vmatprep.subr.mxu0 0.0
    %412 = vmatpush1.xpose.msra.mxu0 %v379
    %413 = vmatprep.subr.mxu0 0.0
    %414 = vmatpush2.xpose.msra.mxu0 0.0
    %415 = vmatprep.subr.mxu0 0.0
    %416 = vmatpush2.xpose.msra.mxu0 0.0
    %417 = vmatprep.subr.mxu0 0.0
    %418 = vmatpush2.xpose.msra.mxu0 0.0
    %419 = vmatprep.subr.mxu0 0.0
    %420 = vmatpush2.xpose.msra.mxu0 0.0
    %421 = vmatprep.subr.mxu0 0.0
    %422 = vmatpush2.xpose.msra.mxu0 0.0
    %423 = vmatprep.subr.mxu0 0.0
    %424 = vmatpush2.xpose.msra.mxu0 0.0
    %425 = vmatprep.subr.mxu0 0.0
    %426 = vmatpush2.xpose.msra.mxu0 0.0
    %427 = vmatprep.subr.mxu0 0.0
    %428 = vmatpush2.xpose.msra.mxu0 0.0
    %429 = vmatprep.subr.mxu0 0.0
    %430 = vmatpush2.xpose.msra.mxu0 0.0
    %431 = vmatprep.subr.mxu0 0.0
    %432 = vmatpush2.xpose.msra.mxu0 0.0
    %433 = vmatprep.subr.mxu0 0.0
    %434 = vmatpush2.xpose.msra.mxu0 0.0
    %435 = vmatprep.subr.mxu0 0.0
    %436 = vmatpush2.xpose.msra.mxu0 0.0
    %437 = vmatprep.subr.mxu0 0.0
    %438 = vmatpush2.xpose.msra.mxu0 0.0
    %439 = vmatprep.subr.mxu0 0.0
    %440 = vmatpush2.xpose.msra.mxu0 0.0
    %441 = vmatprep.subr.mxu0 0.0
    %442 = vmatpush2.xpose.msra.mxu0 0.0
    %443 = vmatprep.subr.mxu0 0.0
    %444 = vmatpush2.xpose.msra.mxu0 0.0
    %445 = vmatprep.mubr.f32.mxu0 0.0
    %446 = vmatmul.mubr.f32.gmra.mxu0 %v376
    %v447 = vpop.f32.mrf.mxu0
    %v448 = vadd.f32 0.0, %v447
    %v449 = vpop.f32.mrf.mxu0
    %450 = vdwg.mxu0
    %v452 = vsel %vm374, %v195, 0
    %v455 = vsel %vm374, %v283, 0
    %457 = vmatprep.subr.mxu0 0.0
    %458 = vmatpush1.xpose.msra.mxu0 0.0
    %459 = vmatprep.subr.mxu0 0.0
    %460 = vmatpush1.xpose.msra.mxu0 0.0
    %461 = vmatprep.subr.mxu0 0.0
    %462 = vmatpush1.xpose.msra.mxu0 0.0
    %463 = vmatprep.subr.mxu0 0.0
    %464 = vmatpush1.xpose.msra.mxu0 0.0
    %465 = vmatprep.subr.mxu0 0.0
    %466 = vmatpush1.xpose.msra.mxu0 0.0
    %467 = vmatprep.subr.mxu0 0.0
    %468 = vmatpush1.xpose.msra.mxu0 0.0
    %469 = vmatprep.subr.mxu0 0.0
    %470 = vmatpush1.xpose.msra.mxu0 0.0
    %471 = vmatprep.subr.mxu0 0.0
    %472 = vmatpush1.xpose.msra.mxu0 0.0
    %473 = vmatprep.subr.mxu0 0.0
    %474 = vmatpush1.xpose.msra.mxu0 0.0
    %475 = vmatprep.subr.mxu0 0.0
    %476 = vmatpush1.xpose.msra.mxu0 0.0
    %477 = vmatprep.subr.mxu0 0.0
    %478 = vmatpush1.xpose.msra.mxu0 0.0
    %479 = vmatprep.subr.mxu0 0.0
    %480 = vmatpush1.xpose.msra.mxu0 0.0
    %481 = vmatprep.subr.mxu0 0.0
    %482 = vmatpush1.xpose.msra.mxu0 0.0
    %483 = vmatprep.subr.mxu0 0.0
    %484 = vmatpush1.xpose.msra.mxu0 0.0
    %485 = vmatprep.subr.mxu0 0.0
    %486 = vmatpush1.xpose.msra.mxu0 0.0
    %487 = vmatprep.subr.mxu0 0.0
    %488 = vmatpush1.xpose.msra.mxu0 %v455
    %489 = vmatprep.subr.mxu0 0.0
    %490 = vmatpush2.xpose.msra.mxu0 0.0
    %491 = vmatprep.subr.mxu0 0.0
    %492 = vmatpush2.xpose.msra.mxu0 0.0
    %493 = vmatprep.subr.mxu0 0.0
    %494 = vmatpush2.xpose.msra.mxu0 0.0
    %495 = vmatprep.subr.mxu0 0.0
    %496 = vmatpush2.xpose.msra.mxu0 0.0
    %497 = vmatprep.subr.mxu0 0.0
    %498 = vmatpush2.xpose.msra.mxu0 0.0
    %499 = vmatprep.subr.mxu0 0.0
    %500 = vmatpush2.xpose.msra.mxu0 0.0
    %501 = vmatprep.subr.mxu0 0.0
    %502 = vmatpush2.xpose.msra.mxu0 0.0
    %503 = vmatprep.subr.mxu0 0.0
    %504 = vmatpush2.xpose.msra.mxu0 0.0
    %505 = vmatprep.subr.mxu0 0.0
    %506 = vmatpush2.xpose.msra.mxu0 0.0
    %507 = vmatprep.subr.mxu0 0.0
    %508 = vmatpush2.xpose.msra.mxu0 0.0
    %509 = vmatprep.subr.mxu0 0.0
    %510 = vmatpush2.xpose.msra.mxu0 0.0
    %511 = vmatprep.subr.mxu0 0.0
    %512 = vmatpush2.xpose.msra.mxu0 0.0
    %513 = vmatprep.subr.mxu0 0.0
    %514 = vmatpush2.xpose.msra.mxu0 0.0
    %515 = vmatprep.subr.mxu0 0.0
    %516 = vmatpush2.xpose.msra.mxu0 0.0
    %517 = vmatprep.subr.mxu0 0.0
    %518 = vmatpush2.xpose.msra.mxu0 0.0
    %519 = vmatprep.subr.mxu0 0.0
    %520 = vmatpush2.xpose.msra.mxu0 0.0
    %521 = vmatprep.mubr.f32.mxu0 0.0
    %522 = vmatmul.mubr.f32.gmra.mxu0 %v452
    %v523 = vpop.f32.mrf.mxu0
    %v524 = vadd.f32 0.0, %v523
    %v525 = vpop.f32.mrf.mxu0
    %526 = vdwg.mxu0
    %v527 = vmul.f32 %v448, 0.35355338
    %v528 = vmul.f32 %v524, 0.35355338
    %v529 = vsel %vm43, 1, 0
    %v530 = vsel %vm44, 1, 0
    %v531 = vlaneseq
    %v532 = vshrl.u32 %v531, 7
    %v533 = vsub.s32 0, %v532
    %v534 = vrot.slane %v529, %v533
    %v535 = vlaneseq
    %v536 = vshrl.u32 %v535, 7
    %v537 = vsub.s32 0, %v536
    %v538 = vrot.slane %v530, %v537
    %vm539 = vcmp.eq.s32.totalorder %v534, 1
    %vm540 = vcmp.eq.s32.totalorder %v538, 1
    %v541 = vsel %vm539, %v527, -1e+09
    %v542 = vsel %vm540, %v528, -1e+09
    %v543 = vsel %vm374, %v541, -inf
    %544 = vmax.xlane.f32.xlu0 %v543
    %v545 = vpop.xlane.xlu0 %544
    %v546 = vsel %vm374, %v542, -inf
    %547 = vmax.xlane.f32.xlu0 %v546
    %v548 = vpop.xlane.xlu0 %547
    %v549 = vsub.f32 %v541, %v545
    %v550 = vsub.f32 %v542, %v548
    %v551 = vmul.f32 %v549, 1.442695
    %v552 = vpow.pop %v551
    %v553 = vmul.f32 %v550, 1.442695
    %v554 = vpow.pop %v553
    %v555 = vsel %vm374, %v552, 0.0
    %556 = vadd.xlane.f32.xlu0 %v555
    %v557 = vpop.xlane.xlu0 %556
    %v558 = vsel %vm374, %v554, 0.0
    %559 = vadd.xlane.f32.xlu0 %v558
    %v560 = vpop.xlane.xlu0 %559
    %v561 = vrcp.pop %v557
    %v562 = vrcp.pop %v560
    %v563 = vmul.f32 %v552, %v561
    %v564 = vmul.f32 %v554, %v562
    %v566 = vsel %vm374, %v563, 0
    %568 = vmatprep.subr.mxu0 0.0
    %569 = vmatpush1.msra.mxu0 0.0
    %570 = vmatprep.subr.mxu0 0.0
    %571 = vmatpush1.msra.mxu0 0.0
    %572 = vmatprep.subr.mxu0 0.0
    %573 = vmatpush1.msra.mxu0 0.0
    %574 = vmatprep.subr.mxu0 0.0
    %575 = vmatpush1.msra.mxu0 0.0
    %576 = vmatprep.subr.mxu0 0.0
    %577 = vmatpush1.msra.mxu0 0.0
    %578 = vmatprep.subr.mxu0 0.0
    %579 = vmatpush1.msra.mxu0 0.0
    %580 = vmatprep.subr.mxu0 0.0
    %581 = vmatpush1.msra.mxu0 0.0
    %582 = vmatprep.subr.mxu0 0.0
    %583 = vmatpush1.msra.mxu0 0.0
    %584 = vmatprep.subr.mxu0 0.0
    %585 = vmatpush1.msra.mxu0 0.0
    %586 = vmatprep.subr.mxu0 0.0
    %587 = vmatpush1.msra.mxu0 0.0
    %588 = vmatprep.subr.mxu0 0.0
    %589 = vmatpush1.msra.mxu0 0.0
    %590 = vmatprep.subr.mxu0 0.0
    %591 = vmatpush1.msra.mxu0 0.0
    %592 = vmatprep.subr.mxu0 0.0
    %593 = vmatpush1.msra.mxu0 0.0
    %594 = vmatprep.subr.mxu0 0.0
    %595 = vmatpush1.msra.mxu0 0.0
    %596 = vmatprep.subr.mxu0 0.0
    %597 = vmatpush1.msra.mxu0 0.0
    %598 = vmatprep.subr.mxu0 0.0
    %599 = vmatpush1.msra.mxu0 %v366
    %600 = vmatprep.subr.mxu0 0.0
    %601 = vmatpush2.msra.mxu0 0.0
    %602 = vmatprep.subr.mxu0 0.0
    %603 = vmatpush2.msra.mxu0 0.0
    %604 = vmatprep.subr.mxu0 0.0
    %605 = vmatpush2.msra.mxu0 0.0
    %606 = vmatprep.subr.mxu0 0.0
    %607 = vmatpush2.msra.mxu0 0.0
    %608 = vmatprep.subr.mxu0 0.0
    %609 = vmatpush2.msra.mxu0 0.0
    %610 = vmatprep.subr.mxu0 0.0
    %611 = vmatpush2.msra.mxu0 0.0
    %612 = vmatprep.subr.mxu0 0.0
    %613 = vmatpush2.msra.mxu0 0.0
    %614 = vmatprep.subr.mxu0 0.0
    %615 = vmatpush2.msra.mxu0 0.0
    %616 = vmatprep.subr.mxu0 0.0
    %617 = vmatpush2.msra.mxu0 0.0
    %618 = vmatprep.subr.mxu0 0.0
    %619 = vmatpush2.msra.mxu0 0.0
    %620 = vmatprep.subr.mxu0 0.0
    %621 = vmatpush2.msra.mxu0 0.0
    %622 = vmatprep.subr.mxu0 0.0
    %623 = vmatpush2.msra.mxu0 0.0
    %624 = vmatprep.subr.mxu0 0.0
    %625 = vmatpush2.msra.mxu0 0.0
    %626 = vmatprep.subr.mxu0 0.0
    %627 = vmatpush2.msra.mxu0 0.0
    %628 = vmatprep.subr.mxu0 0.0
    %629 = vmatpush2.msra.mxu0 0.0
    %630 = vmatprep.subr.mxu0 0.0
    %631 = vmatpush2.msra.mxu0 0.0
    %632 = vmatprep.mubr.f32.mxu0 0.0
    %633 = vmatmul.mubr.f32.gmra.mxu0 %v566
    %v634 = vpop.f32.mrf.mxu0
    %v635 = vadd.f32 0.0, %v634
    %v636 = vpop.f32.mrf.mxu0
    %637 = vdwg.mxu0
    %v639 = vsel %vm374, %v564, 0
    %641 = vmatprep.subr.mxu0 0.0
    %642 = vmatpush1.msra.mxu0 0.0
    %643 = vmatprep.subr.mxu0 0.0
    %644 = vmatpush1.msra.mxu0 0.0
    %645 = vmatprep.subr.mxu0 0.0
    %646 = vmatpush1.msra.mxu0 0.0
    %647 = vmatprep.subr.mxu0 0.0
    %648 = vmatpush1.msra.mxu0 0.0
    %649 = vmatprep.subr.mxu0 0.0
    %650 = vmatpush1.msra.mxu0 0.0
    %651 = vmatprep.subr.mxu0 0.0
    %652 = vmatpush1.msra.mxu0 0.0
    %653 = vmatprep.subr.mxu0 0.0
    %654 = vmatpush1.msra.mxu0 0.0
    %655 = vmatprep.subr.mxu0 0.0
    %656 = vmatpush1.msra.mxu0 0.0
    %657 = vmatprep.subr.mxu0 0.0
    %658 = vmatpush1.msra.mxu0 0.0
    %659 = vmatprep.subr.mxu0 0.0
    %660 = vmatpush1.msra.mxu0 0.0
    %661 = vmatprep.subr.mxu0 0.0
    %662 = vmatpush1.msra.mxu0 0.0
    %663 = vmatprep.subr.mxu0 0.0
    %664 = vmatpush1.msra.mxu0 0.0
    %665 = vmatprep.subr.mxu0 0.0
    %666 = vmatpush1.msra.mxu0 0.0
    %667 = vmatprep.subr.mxu0 0.0
    %668 = vmatpush1.msra.mxu0 0.0
    %669 = vmatprep.subr.mxu0 0.0
    %670 = vmatpush1.msra.mxu0 0.0
    %671 = vmatprep.subr.mxu0 0.0
    %672 = vmatpush1.msra.mxu0 %v371
    %673 = vmatprep.subr.mxu0 0.0
    %674 = vmatpush2.msra.mxu0 0.0
    %675 = vmatprep.subr.mxu0 0.0
    %676 = vmatpush2.msra.mxu0 0.0
    %677 = vmatprep.subr.mxu0 0.0
    %678 = vmatpush2.msra.mxu0 0.0
    %679 = vmatprep.subr.mxu0 0.0
    %680 = vmatpush2.msra.mxu0 0.0
    %681 = vmatprep.subr.mxu0 0.0
    %682 = vmatpush2.msra.mxu0 0.0
    %683 = vmatprep.subr.mxu0 0.0
    %684 = vmatpush2.msra.mxu0 0.0
    %685 = vmatprep.subr.mxu0 0.0
    %686 = vmatpush2.msra.mxu0 0.0
    %687 = vmatprep.subr.mxu0 0.0
    %688 = vmatpush2.msra.mxu0 0.0
    %689 = vmatprep.subr.mxu0 0.0
    %690 = vmatpush2.msra.mxu0 0.0
    %691 = vmatprep.subr.mxu0 0.0
    %692 = vmatpush2.msra.mxu0 0.0
    %693 = vmatprep.subr.mxu0 0.0
    %694 = vmatpush2.msra.mxu0 0.0
    %695 = vmatprep.subr.mxu0 0.0
    %696 = vmatpush2.msra.mxu0 0.0
    %697 = vmatprep.subr.mxu0 0.0
    %698 = vmatpush2.msra.mxu0 0.0
    %699 = vmatprep.subr.mxu0 0.0
    %700 = vmatpush2.msra.mxu0 0.0
    %701 = vmatprep.subr.mxu0 0.0
    %702 = vmatpush2.msra.mxu0 0.0
    %703 = vmatprep.subr.mxu0 0.0
    %704 = vmatpush2.msra.mxu0 0.0
    %705 = vmatprep.mubr.f32.mxu0 0.0
    %706 = vmatmul.mubr.f32.gmra.mxu0 %v639
    %v707 = vpop.f32.mrf.mxu0
    %v708 = vadd.f32 0.0, %v707
    %v709 = vpop.f32.mrf.mxu0
    %710 = vdwg.mxu0
    %v711 = vld [vmem:[%s4] sm:$0xff]
    %s712 = scalar_lea.vmem %s2, 32
    %v713 = vld [vmem:[%s712] sm:$0xff]
    %v714 = vld [vmem:[%s712 + $0x8] sm:$0xff]
    %v715 = vld [vmem:[%s712 + $0x10] sm:$0xff]
    %v716 = vld [vmem:[%s712 + $0x18] sm:$0xff]
    %s717 = scalar_lea.vmem %s3, 1
    %v718 = vld [vmem:[%s717] sm:$0x1]
    %v720 = vlaneseq
    %v721 = vshrl.u32 %v720, 7
    %v722 = vsub.s32 0, %v721
    %v723 = vrot.slane %v718, %v722
    %725 = vmatprep.subr.mxu0 0.0
    %726 = vmatpush1.msra.mxu0 0.0
    %727 = vmatprep.subr.mxu0 0.0
    %728 = vmatpush1.msra.mxu0 0.0
    %729 = vmatprep.subr.mxu0 0.0
    %730 = vmatpush1.msra.mxu0 0.0
    %731 = vmatprep.subr.mxu0 0.0
    %732 = vmatpush1.msra.mxu0 0.0
    %733 = vmatprep.subr.mxu0 0.0
    %734 = vmatpush1.msra.mxu0 0.0
    %735 = vmatprep.subr.mxu0 0.0
    %736 = vmatpush1.msra.mxu0 0.0
    %737 = vmatprep.subr.mxu0 0.0
    %738 = vmatpush1.msra.mxu0 0.0
    %739 = vmatprep.subr.mxu0 0.0
    %740 = vmatpush1.msra.mxu0 0.0
    %741 = vmatprep.subr.mxu0 0.0
    %742 = vmatpush1.msra.mxu0 0.0
    %743 = vmatprep.subr.mxu0 0.0
    %744 = vmatpush1.msra.mxu0 0.0
    %745 = vmatprep.subr.mxu0 0.0
    %746 = vmatpush1.msra.mxu0 0.0
    %747 = vmatprep.subr.mxu0 0.0
    %748 = vmatpush1.msra.mxu0 0.0
    %749 = vmatprep.subr.mxu0 0.0
    %750 = vmatpush1.msra.mxu0 %v716
    %751 = vmatprep.subr.mxu0 0.0
    %752 = vmatpush1.msra.mxu0 %v715
    %753 = vmatprep.subr.mxu0 0.0
    %754 = vmatpush1.msra.mxu0 %v714
    %755 = vmatprep.subr.mxu0 0.0
    %756 = vmatpush1.msra.mxu0 %v713
    %757 = vmatprep.subr.mxu0 0.0
    %758 = vmatpush2.msra.mxu0 0.0
    %759 = vmatprep.subr.mxu0 0.0
    %760 = vmatpush2.msra.mxu0 0.0
    %761 = vmatprep.subr.mxu0 0.0
    %762 = vmatpush2.msra.mxu0 0.0
    %763 = vmatprep.subr.mxu0 0.0
    %764 = vmatpush2.msra.mxu0 0.0
    %765 = vmatprep.subr.mxu0 0.0
    %766 = vmatpush2.msra.mxu0 0.0
    %767 = vmatprep.subr.mxu0 0.0
    %768 = vmatpush2.msra.mxu0 0.0
    %769 = vmatprep.subr.mxu0 0.0
    %770 = vmatpush2.msra.mxu0 0.0
    %771 = vmatprep.subr.mxu0 0.0
    %772 = vmatpush2.msra.mxu0 0.0
    %773 = vmatprep.subr.mxu0 0.0
    %774 = vmatpush2.msra.mxu0 0.0
    %775 = vmatprep.subr.mxu0 0.0
    %776 = vmatpush2.msra.mxu0 0.0
    %777 = vmatprep.subr.mxu0 0.0
    %778 = vmatpush2.msra.mxu0 0.0
    %779 = vmatprep.subr.mxu0 0.0
    %780 = vmatpush2.msra.mxu0 0.0
    %781 = vmatprep.subr.mxu0 0.0
    %782 = vmatpush2.msra.mxu0 0.0
    %783 = vmatprep.subr.mxu0 0.0
    %784 = vmatpush2.msra.mxu0 0.0
    %785 = vmatprep.subr.mxu0 0.0
    %786 = vmatpush2.msra.mxu0 0.0
    %787 = vmatprep.subr.mxu0 0.0
    %788 = vmatpush2.msra.mxu0 0.0
    %789 = vmatprep.mubr.f32.mxu0 0.0
    %790 = vmatmul.mubr.f32.gmra.mxu0 %v118
    %v791 = vpop.f32.mrf.mxu0
    %v792 = vadd.f32 %v723, %v791
    %v793 = vpop.f32.mrf.mxu0
    %794 = vmatprep.mubr.f32.mxu0 0.0
    %795 = vmatmul.mubr.f32.gmra.mxu0 %v121
    %v796 = vpop.f32.mrf.mxu0
    %v797 = vadd.f32 %v723, %v796
    %v798 = vpop.f32.mrf.mxu0
    %799 = vdwg.mxu0
    %s800 = scalar_lea.vmem %s2, 160
    %v801 = vld [vmem:[%s800] sm:$0xff]
    %v802 = vld [vmem:[%s800 + $0x8] sm:$0xff]
    %v803 = vld [vmem:[%s800 + $0x10] sm:$0xff]
    %v804 = vld [vmem:[%s800 + $0x18] sm:$0xff]
    %s805 = scalar_lea.vmem %s3, 5
    %v806 = vld [vmem:[%s805] sm:$0x1]
    %v808 = vlaneseq
    %v809 = vshrl.u32 %v808, 7
    %v810 = vsub.s32 0, %v809
    %v811 = vrot.slane %v806, %v810
    %813 = vmatprep.subr.mxu0 0.0
    %814 = vmatpush1.msra.mxu0 0.0
    %815 = vmatprep.subr.mxu0 0.0
    %816 = vmatpush1.msra.mxu0 0.0
    %817 = vmatprep.subr.mxu0 0.0
    %818 = vmatpush1.msra.mxu0 0.0
    %819 = vmatprep.subr.mxu0 0.0
    %820 = vmatpush1.msra.mxu0 0.0
    %821 = vmatprep.subr.mxu0 0.0
    %822 = vmatpush1.msra.mxu0 0.0
    %823 = vmatprep.subr.mxu0 0.0
    %824 = vmatpush1.msra.mxu0 0.0
    %825 = vmatprep.subr.mxu0 0.0
    %826 = vmatpush1.msra.mxu0 0.0
    %827 = vmatprep.subr.mxu0 0.0
    %828 = vmatpush1.msra.mxu0 0.0
    %829 = vmatprep.subr.mxu0 0.0
    %830 = vmatpush1.msra.mxu0 0.0
    %831 = vmatprep.subr.mxu0 0.0
    %832 = vmatpush1.msra.mxu0 0.0
    %833 = vmatprep.subr.mxu0 0.0
    %834 = vmatpush1.msra.mxu0 0.0
    %835 = vmatprep.subr.mxu0 0.0
    %836 = vmatpush1.msra.mxu0 0.0
    %837 = vmatprep.subr.mxu0 0.0
    %838 = vmatpush1.msra.mxu0 %v804
    %839 = vmatprep.subr.mxu0 0.0
    %840 = vmatpush1.msra.mxu0 %v803
    %841 = vmatprep.subr.mxu0 0.0
    %842 = vmatpush1.msra.mxu0 %v802
    %843 = vmatprep.subr.mxu0 0.0
    %844 = vmatpush1.msra.mxu0 %v801
    %845 = vmatprep.subr.mxu0 0.0
    %846 = vmatpush2.msra.mxu0 0.0
    %847 = vmatprep.subr.mxu0 0.0
    %848 = vmatpush2.msra.mxu0 0.0
    %849 = vmatprep.subr.mxu0 0.0
    %850 = vmatpush2.msra.mxu0 0.0
    %851 = vmatprep.subr.mxu0 0.0
    %852 = vmatpush2.msra.mxu0 0.0
    %853 = vmatprep.subr.mxu0 0.0
    %854 = vmatpush2.msra.mxu0 0.0
    %855 = vmatprep.subr.mxu0 0.0
    %856 = vmatpush2.msra.mxu0 0.0
    %857 = vmatprep.subr.mxu0 0.0
    %858 = vmatpush2.msra.mxu0 0.0
    %859 = vmatprep.subr.mxu0 0.0
    %860 = vmatpush2.msra.mxu0 0.0
    %861 = vmatprep.subr.mxu0 0.0
    %862 = vmatpush2.msra.mxu0 0.0
    %863 = vmatprep.subr.mxu0 0.0
    %864 = vmatpush2.msra.mxu0 0.0
    %865 = vmatprep.subr.mxu0 0.0
    %866 = vmatpush2.msra.mxu0 0.0
    %867 = vmatprep.subr.mxu0 0.0
    %868 = vmatpush2.msra.mxu0 0.0
    %869 = vmatprep.subr.mxu0 0.0
    %870 = vmatpush2.msra.mxu0 0.0
    %871 = vmatprep.subr.mxu0 0.0
    %872 = vmatpush2.msra.mxu0 0.0
    %873 = vmatprep.subr.mxu0 0.0
    %874 = vmatpush2.msra.mxu0 0.0
    %875 = vmatprep.subr.mxu0 0.0
    %876 = vmatpush2.msra.mxu0 0.0
    %877 = vmatprep.mubr.f32.mxu0 0.0
    %878 = vmatmul.mubr.f32.gmra.mxu0 %v118
    %v879 = vpop.f32.mrf.mxu0
    %v880 = vadd.f32 %v811, %v879
    %v881 = vpop.f32.mrf.mxu0
    %882 = vmatprep.mubr.f32.mxu0 0.0
    %883 = vmatmul.mubr.f32.gmra.mxu0 %v121
    %v884 = vpop.f32.mrf.mxu0
    %v885 = vadd.f32 %v811, %v884
    %v886 = vpop.f32.mrf.mxu0
    %887 = vdwg.mxu0
    %s888 = scalar_lea.vmem %s2, 288
    %v889 = vld [vmem:[%s888] sm:$0xff]
    %v890 = vld [vmem:[%s888 + $0x8] sm:$0xff]
    %v891 = vld [vmem:[%s888 + $0x10] sm:$0xff]
    %v892 = vld [vmem:[%s888 + $0x18] sm:$0xff]
    %s893 = scalar_lea.vmem %s3, 9
    %v894 = vld [vmem:[%s893] sm:$0x1]
    %v896 = vlaneseq
    %v897 = vshrl.u32 %v896, 7
    %v898 = vsub.s32 0, %v897
    %v899 = vrot.slane %v894, %v898
    %901 = vmatprep.subr.mxu0 0.0
    %902 = vmatpush1.msra.mxu0 0.0
    %903 = vmatprep.subr.mxu0 0.0
    %904 = vmatpush1.msra.mxu0 0.0
    %905 = vmatprep.subr.mxu0 0.0
    %906 = vmatpush1.msra.mxu0 0.0
    %907 = vmatprep.subr.mxu0 0.0
    %908 = vmatpush1.msra.mxu0 0.0
    %909 = vmatprep.subr.mxu0 0.0
    %910 = vmatpush1.msra.mxu0 0.0
    %911 = vmatprep.subr.mxu0 0.0
    %912 = vmatpush1.msra.mxu0 0.0
    %913 = vmatprep.subr.mxu0 0.0
    %914 = vmatpush1.msra.mxu0 0.0
    %915 = vmatprep.subr.mxu0 0.0
    %916 = vmatpush1.msra.mxu0 0.0
    %917 = vmatprep.subr.mxu0 0.0
    %918 = vmatpush1.msra.mxu0 0.0
    %919 = vmatprep.subr.mxu0 0.0
    %920 = vmatpush1.msra.mxu0 0.0
    %921 = vmatprep.subr.mxu0 0.0
    %922 = vmatpush1.msra.mxu0 0.0
    %923 = vmatprep.subr.mxu0 0.0
    %924 = vmatpush1.msra.mxu0 0.0
    %925 = vmatprep.subr.mxu0 0.0
    %926 = vmatpush1.msra.mxu0 %v892
    %927 = vmatprep.subr.mxu0 0.0
    %928 = vmatpush1.msra.mxu0 %v891
    %929 = vmatprep.subr.mxu0 0.0
    %930 = vmatpush1.msra.mxu0 %v890
    %931 = vmatprep.subr.mxu0 0.0
    %932 = vmatpush1.msra.mxu0 %v889
    %933 = vmatprep.subr.mxu0 0.0
    %934 = vmatpush2.msra.mxu0 0.0
    %935 = vmatprep.subr.mxu0 0.0
    %936 = vmatpush2.msra.mxu0 0.0
    %937 = vmatprep.subr.mxu0 0.0
    %938 = vmatpush2.msra.mxu0 0.0
    %939 = vmatprep.subr.mxu0 0.0
    %940 = vmatpush2.msra.mxu0 0.0
    %941 = vmatprep.subr.mxu0 0.0
    %942 = vmatpush2.msra.mxu0 0.0
    %943 = vmatprep.subr.mxu0 0.0
    %944 = vmatpush2.msra.mxu0 0.0
    %945 = vmatprep.subr.mxu0 0.0
    %946 = vmatpush2.msra.mxu0 0.0
    %947 = vmatprep.subr.mxu0 0.0
    %948 = vmatpush2.msra.mxu0 0.0
    %949 = vmatprep.subr.mxu0 0.0
    %950 = vmatpush2.msra.mxu0 0.0
    %951 = vmatprep.subr.mxu0 0.0
    %952 = vmatpush2.msra.mxu0 0.0
    %953 = vmatprep.subr.mxu0 0.0
    %954 = vmatpush2.msra.mxu0 0.0
    %955 = vmatprep.subr.mxu0 0.0
    %956 = vmatpush2.msra.mxu0 0.0
    %957 = vmatprep.subr.mxu0 0.0
    %958 = vmatpush2.msra.mxu0 0.0
    %959 = vmatprep.subr.mxu0 0.0
    %960 = vmatpush2.msra.mxu0 0.0
    %961 = vmatprep.subr.mxu0 0.0
    %962 = vmatpush2.msra.mxu0 0.0
    %963 = vmatprep.subr.mxu0 0.0
    %964 = vmatpush2.msra.mxu0 0.0
    %965 = vmatprep.mubr.f32.mxu0 0.0
    %966 = vmatmul.mubr.f32.gmra.mxu0 %v118
    %v967 = vpop.f32.mrf.mxu0
    %v968 = vadd.f32 %v899, %v967
    %v969 = vpop.f32.mrf.mxu0
    %970 = vmatprep.mubr.f32.mxu0 0.0
    %971 = vmatmul.mubr.f32.gmra.mxu0 %v121
    %v972 = vpop.f32.mrf.mxu0
    %v973 = vadd.f32 %v899, %v972
    %v974 = vpop.f32.mrf.mxu0
    %975 = vdwg.mxu0
    %v977 = vsel %vm374, %v792, 0
    %v980 = vsel %vm374, %v880, 0
    %982 = vmatprep.subr.mxu0 0.0
    %983 = vmatpush1.xpose.msra.mxu0 0.0
    %984 = vmatprep.subr.mxu0 0.0
    %985 = vmatpush1.xpose.msra.mxu0 0.0
    %986 = vmatprep.subr.mxu0 0.0
    %987 = vmatpush1.xpose.msra.mxu0 0.0
    %988 = vmatprep.subr.mxu0 0.0
    %989 = vmatpush1.xpose.msra.mxu0 0.0
    %990 = vmatprep.subr.mxu0 0.0
    %991 = vmatpush1.xpose.msra.mxu0 0.0
    %992 = vmatprep.subr.mxu0 0.0
    %993 = vmatpush1.xpose.msra.mxu0 0.0
    %994 = vmatprep.subr.mxu0 0.0
    %995 = vmatpush1.xpose.msra.mxu0 0.0
    %996 = vmatprep.subr.mxu0 0.0
    %997 = vmatpush1.xpose.msra.mxu0 0.0
    %998 = vmatprep.subr.mxu0 0.0
    %999 = vmatpush1.xpose.msra.mxu0 0.0
    %1000 = vmatprep.subr.mxu0 0.0
    %1001 = vmatpush1.xpose.msra.mxu0 0.0
    %1002 = vmatprep.subr.mxu0 0.0
    %1003 = vmatpush1.xpose.msra.mxu0 0.0
    %1004 = vmatprep.subr.mxu0 0.0
    %1005 = vmatpush1.xpose.msra.mxu0 0.0
    %1006 = vmatprep.subr.mxu0 0.0
    %1007 = vmatpush1.xpose.msra.mxu0 0.0
    %1008 = vmatprep.subr.mxu0 0.0
    %1009 = vmatpush1.xpose.msra.mxu0 0.0
    %1010 = vmatprep.subr.mxu0 0.0
    %1011 = vmatpush1.xpose.msra.mxu0 0.0
    %1012 = vmatprep.subr.mxu0 0.0
    %1013 = vmatpush1.xpose.msra.mxu0 %v980
    %1014 = vmatprep.subr.mxu0 0.0
    %1015 = vmatpush2.xpose.msra.mxu0 0.0
    %1016 = vmatprep.subr.mxu0 0.0
    %1017 = vmatpush2.xpose.msra.mxu0 0.0
    %1018 = vmatprep.subr.mxu0 0.0
    %1019 = vmatpush2.xpose.msra.mxu0 0.0
    %1020 = vmatprep.subr.mxu0 0.0
    %1021 = vmatpush2.xpose.msra.mxu0 0.0
    %1022 = vmatprep.subr.mxu0 0.0
    %1023 = vmatpush2.xpose.msra.mxu0 0.0
    %1024 = vmatprep.subr.mxu0 0.0
    %1025 = vmatpush2.xpose.msra.mxu0 0.0
    %1026 = vmatprep.subr.mxu0 0.0
    %1027 = vmatpush2.xpose.msra.mxu0 0.0
    %1028 = vmatprep.subr.mxu0 0.0
    %1029 = vmatpush2.xpose.msra.mxu0 0.0
    %1030 = vmatprep.subr.mxu0 0.0
    %1031 = vmatpush2.xpose.msra.mxu0 0.0
    %1032 = vmatprep.subr.mxu0 0.0
    %1033 = vmatpush2.xpose.msra.mxu0 0.0
    %1034 = vmatprep.subr.mxu0 0.0
    %1035 = vmatpush2.xpose.msra.mxu0 0.0
    %1036 = vmatprep.subr.mxu0 0.0
    %1037 = vmatpush2.xpose.msra.mxu0 0.0
    %1038 = vmatprep.subr.mxu0 0.0
    %1039 = vmatpush2.xpose.msra.mxu0 0.0
    %1040 = vmatprep.subr.mxu0 0.0
    %1041 = vmatpush2.xpose.msra.mxu0 0.0
    %1042 = vmatprep.subr.mxu0 0.0
    %1043 = vmatpush2.xpose.msra.mxu0 0.0
    %1044 = vmatprep.subr.mxu0 0.0
    %1045 = vmatpush2.xpose.msra.mxu0 0.0
    %1046 = vmatprep.mubr.f32.mxu0 0.0
    %1047 = vmatmul.mubr.f32.gmra.mxu0 %v977
    %v1048 = vpop.f32.mrf.mxu0
    %v1049 = vadd.f32 0.0, %v1048
    %v1050 = vpop.f32.mrf.mxu0
    %1051 = vdwg.mxu0
    %v1053 = vsel %vm374, %v797, 0
    %v1056 = vsel %vm374, %v885, 0
    %1058 = vmatprep.subr.mxu0 0.0
    %1059 = vmatpush1.xpose.msra.mxu0 0.0
    %1060 = vmatprep.subr.mxu0 0.0
    %1061 = vmatpush1.xpose.msra.mxu0 0.0
    %1062 = vmatprep.subr.mxu0 0.0
    %1063 = vmatpush1.xpose.msra.mxu0 0.0
    %1064 = vmatprep.subr.mxu0 0.0
    %1065 = vmatpush1.xpose.msra.mxu0 0.0
    %1066 = vmatprep.subr.mxu0 0.0
    %1067 = vmatpush1.xpose.msra.mxu0 0.0
    %1068 = vmatprep.subr.mxu0 0.0
    %1069 = vmatpush1.xpose.msra.mxu0 0.0
    %1070 = vmatprep.subr.mxu0 0.0
    %1071 = vmatpush1.xpose.msra.mxu0 0.0
    %1072 = vmatprep.subr.mxu0 0.0
    %1073 = vmatpush1.xpose.msra.mxu0 0.0
    %1074 = vmatprep.subr.mxu0 0.0
    %1075 = vmatpush1.xpose.msra.mxu0 0.0
    %1076 = vmatprep.subr.mxu0 0.0
    %1077 = vmatpush1.xpose.msra.mxu0 0.0
    %1078 = vmatprep.subr.mxu0 0.0
    %1079 = vmatpush1.xpose.msra.mxu0 0.0
    %1080 = vmatprep.subr.mxu0 0.0
    %1081 = vmatpush1.xpose.msra.mxu0 0.0
    %1082 = vmatprep.subr.mxu0 0.0
    %1083 = vmatpush1.xpose.msra.mxu0 0.0
    %1084 = vmatprep.subr.mxu0 0.0
    %1085 = vmatpush1.xpose.msra.mxu0 0.0
    %1086 = vmatprep.subr.mxu0 0.0
    %1087 = vmatpush1.xpose.msra.mxu0 0.0
    %1088 = vmatprep.subr.mxu0 0.0
    %1089 = vmatpush1.xpose.msra.mxu0 %v1056
    %1090 = vmatprep.subr.mxu0 0.0
    %1091 = vmatpush2.xpose.msra.mxu0 0.0
    %1092 = vmatprep.subr.mxu0 0.0
    %1093 = vmatpush2.xpose.msra.mxu0 0.0
    %1094 = vmatprep.subr.mxu0 0.0
    %1095 = vmatpush2.xpose.msra.mxu0 0.0
    %1096 = vmatprep.subr.mxu0 0.0
    %1097 = vmatpush2.xpose.msra.mxu0 0.0
    %1098 = vmatprep.subr.mxu0 0.0
    %1099 = vmatpush2.xpose.msra.mxu0 0.0
    %1100 = vmatprep.subr.mxu0 0.0
    %1101 = vmatpush2.xpose.msra.mxu0 0.0
    %1102 = vmatprep.subr.mxu0 0.0
    %1103 = vmatpush2.xpose.msra.mxu0 0.0
    %1104 = vmatprep.subr.mxu0 0.0
    %1105 = vmatpush2.xpose.msra.mxu0 0.0
    %1106 = vmatprep.subr.mxu0 0.0
    %1107 = vmatpush2.xpose.msra.mxu0 0.0
    %1108 = vmatprep.subr.mxu0 0.0
    %1109 = vmatpush2.xpose.msra.mxu0 0.0
    %1110 = vmatprep.subr.mxu0 0.0
    %1111 = vmatpush2.xpose.msra.mxu0 0.0
    %1112 = vmatprep.subr.mxu0 0.0
    %1113 = vmatpush2.xpose.msra.mxu0 0.0
    %1114 = vmatprep.subr.mxu0 0.0
    %1115 = vmatpush2.xpose.msra.mxu0 0.0
    %1116 = vmatprep.subr.mxu0 0.0
    %1117 = vmatpush2.xpose.msra.mxu0 0.0
    %1118 = vmatprep.subr.mxu0 0.0
    %1119 = vmatpush2.xpose.msra.mxu0 0.0
    %1120 = vmatprep.subr.mxu0 0.0
    %1121 = vmatpush2.xpose.msra.mxu0 0.0
    %1122 = vmatprep.mubr.f32.mxu0 0.0
    %1123 = vmatmul.mubr.f32.gmra.mxu0 %v1053
    %v1124 = vpop.f32.mrf.mxu0
    %v1125 = vadd.f32 0.0, %v1124
    %v1126 = vpop.f32.mrf.mxu0
    %1127 = vdwg.mxu0
    %v1128 = vmul.f32 %v1049, 0.35355338
    %v1129 = vmul.f32 %v1125, 0.35355338
    %v1130 = vsel %vm539, %v1128, -1e+09
    %v1131 = vsel %vm540, %v1129, -1e+09
    %v1132 = vsel %vm374, %v1130, -inf
    %1133 = vmax.xlane.f32.xlu0 %v1132
    %v1134 = vpop.xlane.xlu0 %1133
    %v1135 = vsel %vm374, %v1131, -inf
    %1136 = vmax.xlane.f32.xlu0 %v1135
    %v1137 = vpop.xlane.xlu0 %1136
    %v1138 = vsub.f32 %v1130, %v1134
    %v1139 = vsub.f32 %v1131, %v1137
    %v1140 = vmul.f32 %v1138, 1.442695
    %v1141 = vpow.pop %v1140
    %v1142 = vmul.f32 %v1139, 1.442695
    %v1143 = vpow.pop %v1142
    %v1144 = vsel %vm374, %v1141, 0.0
    %1145 = vadd.xlane.f32.xlu0 %v1144
    %v1146 = vpop.xlane.xlu0 %1145
    %v1147 = vsel %vm374, %v1143, 0.0
    %1148 = vadd.xlane.f32.xlu0 %v1147
    %v1149 = vpop.xlane.xlu0 %1148
    %v1150 = vrcp.pop %v1146
    %v1151 = vrcp.pop %v1149
    %v1152 = vmul.f32 %v1141, %v1150
    %v1153 = vmul.f32 %v1143, %v1151
    %v1155 = vsel %vm374, %v1152, 0
    %1157 = vmatprep.subr.mxu0 0.0
    %1158 = vmatpush1.msra.mxu0 0.0
    %1159 = vmatprep.subr.mxu0 0.0
    %1160 = vmatpush1.msra.mxu0 0.0
    %1161 = vmatprep.subr.mxu0 0.0
    %1162 = vmatpush1.msra.mxu0 0.0
    %1163 = vmatprep.subr.mxu0 0.0
    %1164 = vmatpush1.msra.mxu0 0.0
    %1165 = vmatprep.subr.mxu0 0.0
    %1166 = vmatpush1.msra.mxu0 0.0
    %1167 = vmatprep.subr.mxu0 0.0
    %1168 = vmatpush1.msra.mxu0 0.0
    %1169 = vmatprep.subr.mxu0 0.0
    %1170 = vmatpush1.msra.mxu0 0.0
    %1171 = vmatprep.subr.mxu0 0.0
    %1172 = vmatpush1.msra.mxu0 0.0
    %1173 = vmatprep.subr.mxu0 0.0
    %1174 = vmatpush1.msra.mxu0 0.0
    %1175 = vmatprep.subr.mxu0 0.0
    %1176 = vmatpush1.msra.mxu0 0.0
    %1177 = vmatprep.subr.mxu0 0.0
    %1178 = vmatpush1.msra.mxu0 0.0
    %1179 = vmatprep.subr.mxu0 0.0
    %1180 = vmatpush1.msra.mxu0 0.0
    %1181 = vmatprep.subr.mxu0 0.0
    %1182 = vmatpush1.msra.mxu0 0.0
    %1183 = vmatprep.subr.mxu0 0.0
    %1184 = vmatpush1.msra.mxu0 0.0
    %1185 = vmatprep.subr.mxu0 0.0
    %1186 = vmatpush1.msra.mxu0 0.0
    %1187 = vmatprep.subr.mxu0 0.0
    %1188 = vmatpush1.msra.mxu0 %v968
    %1189 = vmatprep.subr.mxu0 0.0
    %1190 = vmatpush2.msra.mxu0 0.0
    %1191 = vmatprep.subr.mxu0 0.0
    %1192 = vmatpush2.msra.mxu0 0.0
    %1193 = vmatprep.subr.mxu0 0.0
    %1194 = vmatpush2.msra.mxu0 0.0
    %1195 = vmatprep.subr.mxu0 0.0
    %1196 = vmatpush2.msra.mxu0 0.0
    %1197 = vmatprep.subr.mxu0 0.0
    %1198 = vmatpush2.msra.mxu0 0.0
    %1199 = vmatprep.subr.mxu0 0.0
    %1200 = vmatpush2.msra.mxu0 0.0
    %1201 = vmatprep.subr.mxu0 0.0
    %1202 = vmatpush2.msra.mxu0 0.0
    %1203 = vmatprep.subr.mxu0 0.0
    %1204 = vmatpush2.msra.mxu0 0.0
    %1205 = vmatprep.subr.mxu0 0.0
    %1206 = vmatpush2.msra.mxu0 0.0
    %1207 = vmatprep.subr.mxu0 0.0
    %1208 = vmatpush2.msra.mxu0 0.0
    %1209 = vmatprep.subr.mxu0 0.0
    %1210 = vmatpush2.msra.mxu0 0.0
    %1211 = vmatprep.subr.mxu0 0.0
    %1212 = vmatpush2.msra.mxu0 0.0
    %1213 = vmatprep.subr.mxu0 0.0
    %1214 = vmatpush2.msra.mxu0 0.0
    %1215 = vmatprep.subr.mxu0 0.0
    %1216 = vmatpush2.msra.mxu0 0.0
    %1217 = vmatprep.subr.mxu0 0.0
    %1218 = vmatpush2.msra.mxu0 0.0
    %1219 = vmatprep.subr.mxu0 0.0
    %1220 = vmatpush2.msra.mxu0 0.0
    %1221 = vmatprep.mubr.f32.mxu0 0.0
    %1222 = vmatmul.mubr.f32.gmra.mxu0 %v1155
    %v1223 = vpop.f32.mrf.mxu0
    %v1224 = vadd.f32 0.0, %v1223
    %v1225 = vpop.f32.mrf.mxu0
    %1226 = vdwg.mxu0
    %v1228 = vsel %vm374, %v1153, 0
    %1230 = vmatprep.subr.mxu0 0.0
    %1231 = vmatpush1.msra.mxu0 0.0
    %1232 = vmatprep.subr.mxu0 0.0
    %1233 = vmatpush1.msra.mxu0 0.0
    %1234 = vmatprep.subr.mxu0 0.0
    %1235 = vmatpush1.msra.mxu0 0.0
    %1236 = vmatprep.subr.mxu0 0.0
    %1237 = vmatpush1.msra.mxu0 0.0
    %1238 = vmatprep.subr.mxu0 0.0
    %1239 = vmatpush1.msra.mxu0 0.0
    %1240 = vmatprep.subr.mxu0 0.0
    %1241 = vmatpush1.msra.mxu0 0.0
    %1242 = vmatprep.subr.mxu0 0.0
    %1243 = vmatpush1.msra.mxu0 0.0
    %1244 = vmatprep.subr.mxu0 0.0
    %1245 = vmatpush1.msra.mxu0 0.0
    %1246 = vmatprep.subr.mxu0 0.0
    %1247 = vmatpush1.msra.mxu0 0.0
    %1248 = vmatprep.subr.mxu0 0.0
    %1249 = vmatpush1.msra.mxu0 0.0
    %1250 = vmatprep.subr.mxu0 0.0
    %1251 = vmatpush1.msra.mxu0 0.0
    %1252 = vmatprep.subr.mxu0 0.0
    %1253 = vmatpush1.msra.mxu0 0.0
    %1254 = vmatprep.subr.mxu0 0.0
    %1255 = vmatpush1.msra.mxu0 0.0
    %1256 = vmatprep.subr.mxu0 0.0
    %1257 = vmatpush1.msra.mxu0 0.0
    %1258 = vmatprep.subr.mxu0 0.0
    %1259 = vmatpush1.msra.mxu0 0.0
    %1260 = vmatprep.subr.mxu0 0.0
    %1261 = vmatpush1.msra.mxu0 %v973
    %1262 = vmatprep.subr.mxu0 0.0
    %1263 = vmatpush2.msra.mxu0 0.0
    %1264 = vmatprep.subr.mxu0 0.0
    %1265 = vmatpush2.msra.mxu0 0.0
    %1266 = vmatprep.subr.mxu0 0.0
    %1267 = vmatpush2.msra.mxu0 0.0
    %1268 = vmatprep.subr.mxu0 0.0
    %1269 = vmatpush2.msra.mxu0 0.0
    %1270 = vmatprep.subr.mxu0 0.0
    %1271 = vmatpush2.msra.mxu0 0.0
    %1272 = vmatprep.subr.mxu0 0.0
    %1273 = vmatpush2.msra.mxu0 0.0
    %1274 = vmatprep.subr.mxu0 0.0
    %1275 = vmatpush2.msra.mxu0 0.0
    %1276 = vmatprep.subr.mxu0 0.0
    %1277 = vmatpush2.msra.mxu0 0.0
    %1278 = vmatprep.subr.mxu0 0.0
    %1279 = vmatpush2.msra.mxu0 0.0
    %1280 = vmatprep.subr.mxu0 0.0
    %1281 = vmatpush2.msra.mxu0 0.0
    %1282 = vmatprep.subr.mxu0 0.0
    %1283 = vmatpush2.msra.mxu0 0.0
    %1284 = vmatprep.subr.mxu0 0.0
    %1285 = vmatpush2.msra.mxu0 0.0
    %1286 = vmatprep.subr.mxu0 0.0
    %1287 = vmatpush2.msra.mxu0 0.0
    %1288 = vmatprep.subr.mxu0 0.0
    %1289 = vmatpush2.msra.mxu0 0.0
    %1290 = vmatprep.subr.mxu0 0.0
    %1291 = vmatpush2.msra.mxu0 0.0
    %1292 = vmatprep.subr.mxu0 0.0
    %1293 = vmatpush2.msra.mxu0 0.0
    %1294 = vmatprep.mubr.f32.mxu0 0.0
    %1295 = vmatmul.mubr.f32.gmra.mxu0 %v1228
    %v1296 = vpop.f32.mrf.mxu0
    %v1297 = vadd.f32 0.0, %v1296
    %v1298 = vpop.f32.mrf.mxu0
    %1299 = vdwg.mxu0
    %s1300 = scalar_lea.vmem %s4, 8
    %v1301 = vld [vmem:[%s1300] sm:$0xff]
    %v1303 = vsel %vm374, %v1224, 0
    %v1306 = vsel %vm374, %v1297, 0
    %1308 = vmatprep.subr.mxu0 0.0
    %1309 = vmatpush1.msra.mxu0 0.0
    %1310 = vmatprep.subr.mxu0 0.0
    %1311 = vmatpush1.msra.mxu0 0.0
    %1312 = vmatprep.subr.mxu0 0.0
    %1313 = vmatpush1.msra.mxu0 0.0
    %1314 = vmatprep.subr.mxu0 0.0
    %1315 = vmatpush1.msra.mxu0 0.0
    %1316 = vmatprep.subr.mxu0 0.0
    %1317 = vmatpush1.msra.mxu0 0.0
    %1318 = vmatprep.subr.mxu0 0.0
    %1319 = vmatpush1.msra.mxu0 0.0
    %1320 = vmatprep.subr.mxu0 0.0
    %1321 = vmatpush1.msra.mxu0 0.0
    %1322 = vmatprep.subr.mxu0 0.0
    %1323 = vmatpush1.msra.mxu0 0.0
    %1324 = vmatprep.subr.mxu0 0.0
    %1325 = vmatpush1.msra.mxu0 0.0
    %1326 = vmatprep.subr.mxu0 0.0
    %1327 = vmatpush1.msra.mxu0 0.0
    %1328 = vmatprep.subr.mxu0 0.0
    %1329 = vmatpush1.msra.mxu0 0.0
    %1330 = vmatprep.subr.mxu0 0.0
    %1331 = vmatpush1.msra.mxu0 0.0
    %1332 = vmatprep.subr.mxu0 0.0
    %1333 = vmatpush1.msra.mxu0 0.0
    %1334 = vmatprep.subr.mxu0 0.0
    %1335 = vmatpush1.msra.mxu0 0.0
    %1336 = vmatprep.subr.mxu0 0.0
    %1337 = vmatpush1.msra.mxu0 0.0
    %1338 = vmatprep.subr.mxu0 0.0
    %1339 = vmatpush1.msra.mxu0 %v1301
    %1340 = vmatprep.subr.mxu0 0.0
    %1341 = vmatpush2.msra.mxu0 0.0
    %1342 = vmatprep.subr.mxu0 0.0
    %1343 = vmatpush2.msra.mxu0 0.0
    %1344 = vmatprep.subr.mxu0 0.0
    %1345 = vmatpush2.msra.mxu0 0.0
    %1346 = vmatprep.subr.mxu0 0.0
    %1347 = vmatpush2.msra.mxu0 0.0
    %1348 = vmatprep.subr.mxu0 0.0
    %1349 = vmatpush2.msra.mxu0 0.0
    %1350 = vmatprep.subr.mxu0 0.0
    %1351 = vmatpush2.msra.mxu0 0.0
    %1352 = vmatprep.subr.mxu0 0.0
    %1353 = vmatpush2.msra.mxu0 0.0
    %1354 = vmatprep.subr.mxu0 0.0
    %1355 = vmatpush2.msra.mxu0 0.0
    %1356 = vmatprep.subr.mxu0 0.0
    %1357 = vmatpush2.msra.mxu0 0.0
    %1358 = vmatprep.subr.mxu0 0.0
    %1359 = vmatpush2.msra.mxu0 0.0
    %1360 = vmatprep.subr.mxu0 0.0
    %1361 = vmatpush2.msra.mxu0 0.0
    %1362 = vmatprep.subr.mxu0 0.0
    %1363 = vmatpush2.msra.mxu0 0.0
    %1364 = vmatprep.subr.mxu0 0.0
    %1365 = vmatpush2.msra.mxu0 0.0
    %1366 = vmatprep.subr.mxu0 0.0
    %1367 = vmatpush2.msra.mxu0 0.0
    %1368 = vmatprep.subr.mxu0 0.0
    %1369 = vmatpush2.msra.mxu0 0.0
    %1370 = vmatprep.subr.mxu0 0.0
    %1371 = vmatpush2.msra.mxu0 0.0
    %1372 = vmatprep.mubr.f32.mxu0 0.0
    %1373 = vmatmul.mubr.f32.gmra.mxu0 %v1303
    %v1374 = vpop.f32.mrf.mxu0
    %v1375 = vadd.f32 0.0, %v1374
    %v1376 = vpop.f32.mrf.mxu0
    %1377 = vmatprep.mubr.f32.mxu0 0.0
    %1378 = vmatmul.mubr.f32.gmra.mxu0 %v1306
    %v1379 = vpop.f32.mrf.mxu0
    %v1380 = vadd.f32 0.0, %v1379
    %v1381 = vpop.f32.mrf.mxu0
    %1382 = vdwg.mxu0
    %v1384 = vsel %vm374, %v635, 0
    %v1387 = vsel %vm374, %v708, 0
    %1389 = vmatprep.subr.mxu0 0.0
    %1390 = vmatpush1.msra.mxu0 0.0
    %1391 = vmatprep.subr.mxu0 0.0
    %1392 = vmatpush1.msra.mxu0 0.0
    %1393 = vmatprep.subr.mxu0 0.0
    %1394 = vmatpush1.msra.mxu0 0.0
    %1395 = vmatprep.subr.mxu0 0.0
    %1396 = vmatpush1.msra.mxu0 0.0
    %1397 = vmatprep.subr.mxu0 0.0
    %1398 = vmatpush1.msra.mxu0 0.0
    %1399 = vmatprep.subr.mxu0 0.0
    %1400 = vmatpush1.msra.mxu0 0.0
    %1401 = vmatprep.subr.mxu0 0.0
    %1402 = vmatpush1.msra.mxu0 0.0
    %1403 = vmatprep.subr.mxu0 0.0
    %1404 = vmatpush1.msra.mxu0 0.0
    %1405 = vmatprep.subr.mxu0 0.0
    %1406 = vmatpush1.msra.mxu0 0.0
    %1407 = vmatprep.subr.mxu0 0.0
    %1408 = vmatpush1.msra.mxu0 0.0
    %1409 = vmatprep.subr.mxu0 0.0
    %1410 = vmatpush1.msra.mxu0 0.0
    %1411 = vmatprep.subr.mxu0 0.0
    %1412 = vmatpush1.msra.mxu0 0.0
    %1413 = vmatprep.subr.mxu0 0.0
    %1414 = vmatpush1.msra.mxu0 0.0
    %1415 = vmatprep.subr.mxu0 0.0
    %1416 = vmatpush1.msra.mxu0 0.0
    %1417 = vmatprep.subr.mxu0 0.0
    %1418 = vmatpush1.msra.mxu0 0.0
    %1419 = vmatprep.subr.mxu0 0.0
    %1420 = vmatpush1.msra.mxu0 %v711
    %1421 = vmatprep.subr.mxu0 0.0
    %1422 = vmatpush2.msra.mxu0 0.0
    %1423 = vmatprep.subr.mxu0 0.0
    %1424 = vmatpush2.msra.mxu0 0.0
    %1425 = vmatprep.subr.mxu0 0.0
    %1426 = vmatpush2.msra.mxu0 0.0
    %1427 = vmatprep.subr.mxu0 0.0
    %1428 = vmatpush2.msra.mxu0 0.0
    %1429 = vmatprep.subr.mxu0 0.0
    %1430 = vmatpush2.msra.mxu0 0.0
    %1431 = vmatprep.subr.mxu0 0.0
    %1432 = vmatpush2.msra.mxu0 0.0
    %1433 = vmatprep.subr.mxu0 0.0
    %1434 = vmatpush2.msra.mxu0 0.0
    %1435 = vmatprep.subr.mxu0 0.0
    %1436 = vmatpush2.msra.mxu0 0.0
    %1437 = vmatprep.subr.mxu0 0.0
    %1438 = vmatpush2.msra.mxu0 0.0
    %1439 = vmatprep.subr.mxu0 0.0
    %1440 = vmatpush2.msra.mxu0 0.0
    %1441 = vmatprep.subr.mxu0 0.0
    %1442 = vmatpush2.msra.mxu0 0.0
    %1443 = vmatprep.subr.mxu0 0.0
    %1444 = vmatpush2.msra.mxu0 0.0
    %1445 = vmatprep.subr.mxu0 0.0
    %1446 = vmatpush2.msra.mxu0 0.0
    %1447 = vmatprep.subr.mxu0 0.0
    %1448 = vmatpush2.msra.mxu0 0.0
    %1449 = vmatprep.subr.mxu0 0.0
    %1450 = vmatpush2.msra.mxu0 0.0
    %1451 = vmatprep.subr.mxu0 0.0
    %1452 = vmatpush2.msra.mxu0 0.0
    %1453 = vmatprep.mubr.f32.mxu0 0.0
    %1454 = vmatmul.mubr.f32.gmra.mxu0 %v1384
    %v1455 = vpop.f32.mrf.mxu0
    %v1456 = vadd.f32 %v1375, %v1455
    %v1457 = vpop.f32.mrf.mxu0
    %1458 = vmatprep.mubr.f32.mxu0 0.0
    %1459 = vmatmul.mubr.f32.gmra.mxu0 %v1387
    %v1460 = vpop.f32.mrf.mxu0
    %v1461 = vadd.f32 %v1380, %v1460
    %v1462 = vpop.f32.mrf.mxu0
    %1463 = vdwg.mxu0
    %s1464 = scalar_lea.vmem %s2, 64
    %v1465 = vld [vmem:[%s1464] sm:$0xff]
    %v1466 = vld [vmem:[%s1464 + $0x8] sm:$0xff]
    %v1467 = vld [vmem:[%s1464 + $0x10] sm:$0xff]
    %v1468 = vld [vmem:[%s1464 + $0x18] sm:$0xff]
    %s1469 = scalar_lea.vmem %s3, 2
    %v1470 = vld [vmem:[%s1469] sm:$0x1]
    %v1472 = vlaneseq
    %v1473 = vshrl.u32 %v1472, 7
    %v1474 = vsub.s32 0, %v1473
    %v1475 = vrot.slane %v1470, %v1474
    %1477 = vmatprep.subr.mxu0 0.0
    %1478 = vmatpush1.msra.mxu0 0.0
    %1479 = vmatprep.subr.mxu0 0.0
    %1480 = vmatpush1.msra.mxu0 0.0
    %1481 = vmatprep.subr.mxu0 0.0
    %1482 = vmatpush1.msra.mxu0 0.0
    %1483 = vmatprep.subr.mxu0 0.0
    %1484 = vmatpush1.msra.mxu0 0.0
    %1485 = vmatprep.subr.mxu0 0.0
    %1486 = vmatpush1.msra.mxu0 0.0
    %1487 = vmatprep.subr.mxu0 0.0
    %1488 = vmatpush1.msra.mxu0 0.0
    %1489 = vmatprep.subr.mxu0 0.0
    %1490 = vmatpush1.msra.mxu0 0.0
    %1491 = vmatprep.subr.mxu0 0.0
    %1492 = vmatpush1.msra.mxu0 0.0
    %1493 = vmatprep.subr.mxu0 0.0
    %1494 = vmatpush1.msra.mxu0 0.0
    %1495 = vmatprep.subr.mxu0 0.0
    %1496 = vmatpush1.msra.mxu0 0.0
    %1497 = vmatprep.subr.mxu0 0.0
    %1498 = vmatpush1.msra.mxu0 0.0
    %1499 = vmatprep.subr.mxu0 0.0
    %1500 = vmatpush1.msra.mxu0 0.0
    %1501 = vmatprep.subr.mxu0 0.0
    %1502 = vmatpush1.msra.mxu0 %v1468
    %1503 = vmatprep.subr.mxu0 0.0
    %1504 = vmatpush1.msra.mxu0 %v1467
    %1505 = vmatprep.subr.mxu0 0.0
    %1506 = vmatpush1.msra.mxu0 %v1466
    %1507 = vmatprep.subr.mxu0 0.0
    %1508 = vmatpush1.msra.mxu0 %v1465
    %1509 = vmatprep.subr.mxu0 0.0
    %1510 = vmatpush2.msra.mxu0 0.0
    %1511 = vmatprep.subr.mxu0 0.0
    %1512 = vmatpush2.msra.mxu0 0.0
    %1513 = vmatprep.subr.mxu0 0.0
    %1514 = vmatpush2.msra.mxu0 0.0
    %1515 = vmatprep.subr.mxu0 0.0
    %1516 = vmatpush2.msra.mxu0 0.0
    %1517 = vmatprep.subr.mxu0 0.0
    %1518 = vmatpush2.msra.mxu0 0.0
    %1519 = vmatprep.subr.mxu0 0.0
    %1520 = vmatpush2.msra.mxu0 0.0
    %1521 = vmatprep.subr.mxu0 0.0
    %1522 = vmatpush2.msra.mxu0 0.0
    %1523 = vmatprep.subr.mxu0 0.0
    %1524 = vmatpush2.msra.mxu0 0.0
    %1525 = vmatprep.subr.mxu0 0.0
    %1526 = vmatpush2.msra.mxu0 0.0
    %1527 = vmatprep.subr.mxu0 0.0
    %1528 = vmatpush2.msra.mxu0 0.0
    %1529 = vmatprep.subr.mxu0 0.0
    %1530 = vmatpush2.msra.mxu0 0.0
    %1531 = vmatprep.subr.mxu0 0.0
    %1532 = vmatpush2.msra.mxu0 0.0
    %1533 = vmatprep.subr.mxu0 0.0
    %1534 = vmatpush2.msra.mxu0 0.0
    %1535 = vmatprep.subr.mxu0 0.0
    %1536 = vmatpush2.msra.mxu0 0.0
    %1537 = vmatprep.subr.mxu0 0.0
    %1538 = vmatpush2.msra.mxu0 0.0
    %1539 = vmatprep.subr.mxu0 0.0
    %1540 = vmatpush2.msra.mxu0 0.0
    %1541 = vmatprep.mubr.f32.mxu0 0.0
    %1542 = vmatmul.mubr.f32.gmra.mxu0 %v118
    %v1543 = vpop.f32.mrf.mxu0
    %v1544 = vadd.f32 %v1475, %v1543
    %v1545 = vpop.f32.mrf.mxu0
    %1546 = vmatprep.mubr.f32.mxu0 0.0
    %1547 = vmatmul.mubr.f32.gmra.mxu0 %v121
    %v1548 = vpop.f32.mrf.mxu0
    %v1549 = vadd.f32 %v1475, %v1548
    %v1550 = vpop.f32.mrf.mxu0
    %1551 = vdwg.mxu0
    %s1552 = scalar_lea.vmem %s2, 192
    %v1553 = vld [vmem:[%s1552] sm:$0xff]
    %v1554 = vld [vmem:[%s1552 + $0x8] sm:$0xff]
    %v1555 = vld [vmem:[%s1552 + $0x10] sm:$0xff]
    %v1556 = vld [vmem:[%s1552 + $0x18] sm:$0xff]
    %s1557 = scalar_lea.vmem %s3, 6
    %v1558 = vld [vmem:[%s1557] sm:$0x1]
    %v1560 = vlaneseq
    %v1561 = vshrl.u32 %v1560, 7
    %v1562 = vsub.s32 0, %v1561
    %v1563 = vrot.slane %v1558, %v1562
    %1565 = vmatprep.subr.mxu0 0.0
    %1566 = vmatpush1.msra.mxu0 0.0
    %1567 = vmatprep.subr.mxu0 0.0
    %1568 = vmatpush1.msra.mxu0 0.0
    %1569 = vmatprep.subr.mxu0 0.0
    %1570 = vmatpush1.msra.mxu0 0.0
    %1571 = vmatprep.subr.mxu0 0.0
    %1572 = vmatpush1.msra.mxu0 0.0
    %1573 = vmatprep.subr.mxu0 0.0
    %1574 = vmatpush1.msra.mxu0 0.0
    %1575 = vmatprep.subr.mxu0 0.0
    %1576 = vmatpush1.msra.mxu0 0.0
    %1577 = vmatprep.subr.mxu0 0.0
    %1578 = vmatpush1.msra.mxu0 0.0
    %1579 = vmatprep.subr.mxu0 0.0
    %1580 = vmatpush1.msra.mxu0 0.0
    %1581 = vmatprep.subr.mxu0 0.0
    %1582 = vmatpush1.msra.mxu0 0.0
    %1583 = vmatprep.subr.mxu0 0.0
    %1584 = vmatpush1.msra.mxu0 0.0
    %1585 = vmatprep.subr.mxu0 0.0
    %1586 = vmatpush1.msra.mxu0 0.0
    %1587 = vmatprep.subr.mxu0 0.0
    %1588 = vmatpush1.msra.mxu0 0.0
    %1589 = vmatprep.subr.mxu0 0.0
    %1590 = vmatpush1.msra.mxu0 %v1556
    %1591 = vmatprep.subr.mxu0 0.0
    %1592 = vmatpush1.msra.mxu0 %v1555
    %1593 = vmatprep.subr.mxu0 0.0
    %1594 = vmatpush1.msra.mxu0 %v1554
    %1595 = vmatprep.subr.mxu0 0.0
    %1596 = vmatpush1.msra.mxu0 %v1553
    %1597 = vmatprep.subr.mxu0 0.0
    %1598 = vmatpush2.msra.mxu0 0.0
    %1599 = vmatprep.subr.mxu0 0.0
    %1600 = vmatpush2.msra.mxu0 0.0
    %1601 = vmatprep.subr.mxu0 0.0
    %1602 = vmatpush2.msra.mxu0 0.0
    %1603 = vmatprep.subr.mxu0 0.0
    %1604 = vmatpush2.msra.mxu0 0.0
    %1605 = vmatprep.subr.mxu0 0.0
    %1606 = vmatpush2.msra.mxu0 0.0
    %1607 = vmatprep.subr.mxu0 0.0
    %1608 = vmatpush2.msra.mxu0 0.0
    %1609 = vmatprep.subr.mxu0 0.0
    %1610 = vmatpush2.msra.mxu0 0.0
    %1611 = vmatprep.subr.mxu0 0.0
    %1612 = vmatpush2.msra.mxu0 0.0
    %1613 = vmatprep.subr.mxu0 0.0
    %1614 = vmatpush2.msra.mxu0 0.0
    %1615 = vmatprep.subr.mxu0 0.0
    %1616 = vmatpush2.msra.mxu0 0.0
    %1617 = vmatprep.subr.mxu0 0.0
    %1618 = vmatpush2.msra.mxu0 0.0
    %1619 = vmatprep.subr.mxu0 0.0
    %1620 = vmatpush2.msra.mxu0 0.0
    %1621 = vmatprep.subr.mxu0 0.0
    %1622 = vmatpush2.msra.mxu0 0.0
    %1623 = vmatprep.subr.mxu0 0.0
    %1624 = vmatpush2.msra.mxu0 0.0
    %1625 = vmatprep.subr.mxu0 0.0
    %1626 = vmatpush2.msra.mxu0 0.0
    %1627 = vmatprep.subr.mxu0 0.0
    %1628 = vmatpush2.msra.mxu0 0.0
    %1629 = vmatprep.mubr.f32.mxu0 0.0
    %1630 = vmatmul.mubr.f32.gmra.mxu0 %v118
    %v1631 = vpop.f32.mrf.mxu0
    %v1632 = vadd.f32 %v1563, %v1631
    %v1633 = vpop.f32.mrf.mxu0
    %1634 = vmatprep.mubr.f32.mxu0 0.0
    %1635 = vmatmul.mubr.f32.gmra.mxu0 %v121
    %v1636 = vpop.f32.mrf.mxu0
    %v1637 = vadd.f32 %v1563, %v1636
    %v1638 = vpop.f32.mrf.mxu0
    %1639 = vdwg.mxu0
    %s1640 = scalar_lea.vmem %s2, 320
    %v1641 = vld [vmem:[%s1640] sm:$0xff]
    %v1642 = vld [vmem:[%s1640 + $0x8] sm:$0xff]
    %v1643 = vld [vmem:[%s1640 + $0x10] sm:$0xff]
    %v1644 = vld [vmem:[%s1640 + $0x18] sm:$0xff]
    %s1645 = scalar_lea.vmem %s3, 10
    %v1646 = vld [vmem:[%s1645] sm:$0x1]
    %v1648 = vlaneseq
    %v1649 = vshrl.u32 %v1648, 7
    %v1650 = vsub.s32 0, %v1649
    %v1651 = vrot.slane %v1646, %v1650
    %1653 = vmatprep.subr.mxu0 0.0
    %1654 = vmatpush1.msra.mxu0 0.0
    %1655 = vmatprep.subr.mxu0 0.0
    %1656 = vmatpush1.msra.mxu0 0.0
    %1657 = vmatprep.subr.mxu0 0.0
    %1658 = vmatpush1.msra.mxu0 0.0
    %1659 = vmatprep.subr.mxu0 0.0
    %1660 = vmatpush1.msra.mxu0 0.0
    %1661 = vmatprep.subr.mxu0 0.0
    %1662 = vmatpush1.msra.mxu0 0.0
    %1663 = vmatprep.subr.mxu0 0.0
    %1664 = vmatpush1.msra.mxu0 0.0
    %1665 = vmatprep.subr.mxu0 0.0
    %1666 = vmatpush1.msra.mxu0 0.0
    %1667 = vmatprep.subr.mxu0 0.0
    %1668 = vmatpush1.msra.mxu0 0.0
    %1669 = vmatprep.subr.mxu0 0.0
    %1670 = vmatpush1.msra.mxu0 0.0
    %1671 = vmatprep.subr.mxu0 0.0
    %1672 = vmatpush1.msra.mxu0 0.0
    %1673 = vmatprep.subr.mxu0 0.0
    %1674 = vmatpush1.msra.mxu0 0.0
    %1675 = vmatprep.subr.mxu0 0.0
    %1676 = vmatpush1.msra.mxu0 0.0
    %1677 = vmatprep.subr.mxu0 0.0
    %1678 = vmatpush1.msra.mxu0 %v1644
    %1679 = vmatprep.subr.mxu0 0.0
    %1680 = vmatpush1.msra.mxu0 %v1643
    %1681 = vmatprep.subr.mxu0 0.0
    %1682 = vmatpush1.msra.mxu0 %v1642
    %1683 = vmatprep.subr.mxu0 0.0
    %1684 = vmatpush1.msra.mxu0 %v1641
    %1685 = vmatprep.subr.mxu0 0.0
    %1686 = vmatpush2.msra.mxu0 0.0
    %1687 = vmatprep.subr.mxu0 0.0
    %1688 = vmatpush2.msra.mxu0 0.0
    %1689 = vmatprep.subr.mxu0 0.0
    %1690 = vmatpush2.msra.mxu0 0.0
    %1691 = vmatprep.subr.mxu0 0.0
    %1692 = vmatpush2.msra.mxu0 0.0
    %1693 = vmatprep.subr.mxu0 0.0
    %1694 = vmatpush2.msra.mxu0 0.0
    %1695 = vmatprep.subr.mxu0 0.0
    %1696 = vmatpush2.msra.mxu0 0.0
    %1697 = vmatprep.subr.mxu0 0.0
    %1698 = vmatpush2.msra.mxu0 0.0
    %1699 = vmatprep.subr.mxu0 0.0
    %1700 = vmatpush2.msra.mxu0 0.0
    %1701 = vmatprep.subr.mxu0 0.0
    %1702 = vmatpush2.msra.mxu0 0.0
    %1703 = vmatprep.subr.mxu0 0.0
    %1704 = vmatpush2.msra.mxu0 0.0
    %1705 = vmatprep.subr.mxu0 0.0
    %1706 = vmatpush2.msra.mxu0 0.0
    %1707 = vmatprep.subr.mxu0 0.0
    %1708 = vmatpush2.msra.mxu0 0.0
    %1709 = vmatprep.subr.mxu0 0.0
    %1710 = vmatpush2.msra.mxu0 0.0
    %1711 = vmatprep.subr.mxu0 0.0
    %1712 = vmatpush2.msra.mxu0 0.0
    %1713 = vmatprep.subr.mxu0 0.0
    %1714 = vmatpush2.msra.mxu0 0.0
    %1715 = vmatprep.subr.mxu0 0.0
    %1716 = vmatpush2.msra.mxu0 0.0
    %1717 = vmatprep.mubr.f32.mxu0 0.0
    %1718 = vmatmul.mubr.f32.gmra.mxu0 %v118
    %v1719 = vpop.f32.mrf.mxu0
    %v1720 = vadd.f32 %v1651, %v1719
    %v1721 = vpop.f32.mrf.mxu0
    %1722 = vmatprep.mubr.f32.mxu0 0.0
    %1723 = vmatmul.mubr.f32.gmra.mxu0 %v121
    %v1724 = vpop.f32.mrf.mxu0
    %v1725 = vadd.f32 %v1651, %v1724
    %v1726 = vpop.f32.mrf.mxu0
    %1727 = vdwg.mxu0
    %v1729 = vsel %vm374, %v1544, 0
    %v1732 = vsel %vm374, %v1632, 0
    %1734 = vmatprep.subr.mxu0 0.0
    %1735 = vmatpush1.xpose.msra.mxu0 0.0
    %1736 = vmatprep.subr.mxu0 0.0
    %1737 = vmatpush1.xpose.msra.mxu0 0.0
    %1738 = vmatprep.subr.mxu0 0.0
    %1739 = vmatpush1.xpose.msra.mxu0 0.0
    %1740 = vmatprep.subr.mxu0 0.0
    %1741 = vmatpush1.xpose.msra.mxu0 0.0
    %1742 = vmatprep.subr.mxu0 0.0
    %1743 = vmatpush1.xpose.msra.mxu0 0.0
    %1744 = vmatprep.subr.mxu0 0.0
    %1745 = vmatpush1.xpose.msra.mxu0 0.0
    %1746 = vmatprep.subr.mxu0 0.0
    %1747 = vmatpush1.xpose.msra.mxu0 0.0
    %1748 = vmatprep.subr.mxu0 0.0
    %1749 = vmatpush1.xpose.msra.mxu0 0.0
    %1750 = vmatprep.subr.mxu0 0.0
    %1751 = vmatpush1.xpose.msra.mxu0 0.0
    %1752 = vmatprep.subr.mxu0 0.0
    %1753 = vmatpush1.xpose.msra.mxu0 0.0
    %1754 = vmatprep.subr.mxu0 0.0
    %1755 = vmatpush1.xpose.msra.mxu0 0.0
    %1756 = vmatprep.subr.mxu0 0.0
    %1757 = vmatpush1.xpose.msra.mxu0 0.0
    %1758 = vmatprep.subr.mxu0 0.0
    %1759 = vmatpush1.xpose.msra.mxu0 0.0
    %1760 = vmatprep.subr.mxu0 0.0
    %1761 = vmatpush1.xpose.msra.mxu0 0.0
    %1762 = vmatprep.subr.mxu0 0.0
    %1763 = vmatpush1.xpose.msra.mxu0 0.0
    %1764 = vmatprep.subr.mxu0 0.0
    %1765 = vmatpush1.xpose.msra.mxu0 %v1732
    %1766 = vmatprep.subr.mxu0 0.0
    %1767 = vmatpush2.xpose.msra.mxu0 0.0
    %1768 = vmatprep.subr.mxu0 0.0
    %1769 = vmatpush2.xpose.msra.mxu0 0.0
    %1770 = vmatprep.subr.mxu0 0.0
    %1771 = vmatpush2.xpose.msra.mxu0 0.0
    %1772 = vmatprep.subr.mxu0 0.0
    %1773 = vmatpush2.xpose.msra.mxu0 0.0
    %1774 = vmatprep.subr.mxu0 0.0
    %1775 = vmatpush2.xpose.msra.mxu0 0.0
    %1776 = vmatprep.subr.mxu0 0.0
    %1777 = vmatpush2.xpose.msra.mxu0 0.0
    %1778 = vmatprep.subr.mxu0 0.0
    %1779 = vmatpush2.xpose.msra.mxu0 0.0
    %1780 = vmatprep.subr.mxu0 0.0
    %1781 = vmatpush2.xpose.msra.mxu0 0.0
    %1782 = vmatprep.subr.mxu0 0.0
    %1783 = vmatpush2.xpose.msra.mxu0 0.0
    %1784 = vmatprep.subr.mxu0 0.0
    %1785 = vmatpush2.xpose.msra.mxu0 0.0
    %1786 = vmatprep.subr.mxu0 0.0
    %1787 = vmatpush2.xpose.msra.mxu0 0.0
    %1788 = vmatprep.subr.mxu0 0.0
    %1789 = vmatpush2.xpose.msra.mxu0 0.0
    %1790 = vmatprep.subr.mxu0 0.0
    %1791 = vmatpush2.xpose.msra.mxu0 0.0
    %1792 = vmatprep.subr.mxu0 0.0
    %1793 = vmatpush2.xpose.msra.mxu0 0.0
    %1794 = vmatprep.subr.mxu0 0.0
    %1795 = vmatpush2.xpose.msra.mxu0 0.0
    %1796 = vmatprep.subr.mxu0 0.0
    %1797 = vmatpush2.xpose.msra.mxu0 0.0
    %1798 = vmatprep.mubr.f32.mxu0 0.0
    %1799 = vmatmul.mubr.f32.gmra.mxu0 %v1729
    %v1800 = vpop.f32.mrf.mxu0
    %v1801 = vadd.f32 0.0, %v1800
    %v1802 = vpop.f32.mrf.mxu0
    %1803 = vdwg.mxu0
    %v1805 = vsel %vm374, %v1549, 0
    %v1808 = vsel %vm374, %v1637, 0
    %1810 = vmatprep.subr.mxu0 0.0
    %1811 = vmatpush1.xpose.msra.mxu0 0.0
    %1812 = vmatprep.subr.mxu0 0.0
    %1813 = vmatpush1.xpose.msra.mxu0 0.0
    %1814 = vmatprep.subr.mxu0 0.0
    %1815 = vmatpush1.xpose.msra.mxu0 0.0
    %1816 = vmatprep.subr.mxu0 0.0
    %1817 = vmatpush1.xpose.msra.mxu0 0.0
    %1818 = vmatprep.subr.mxu0 0.0
    %1819 = vmatpush1.xpose.msra.mxu0 0.0
    %1820 = vmatprep.subr.mxu0 0.0
    %1821 = vmatpush1.xpose.msra.mxu0 0.0
    %1822 = vmatprep.subr.mxu0 0.0
    %1823 = vmatpush1.xpose.msra.mxu0 0.0
    %1824 = vmatprep.subr.mxu0 0.0
    %1825 = vmatpush1.xpose.msra.mxu0 0.0
    %1826 = vmatprep.subr.mxu0 0.0
    %1827 = vmatpush1.xpose.msra.mxu0 0.0
    %1828 = vmatprep.subr.mxu0 0.0
    %1829 = vmatpush1.xpose.msra.mxu0 0.0
    %1830 = vmatprep.subr.mxu0 0.0
    %1831 = vmatpush1.xpose.msra.mxu0 0.0
    %1832 = vmatprep.subr.mxu0 0.0
    %1833 = vmatpush1.xpose.msra.mxu0 0.0
    %1834 = vmatprep.subr.mxu0 0.0
    %1835 = vmatpush1.xpose.msra.mxu0 0.0
    %1836 = vmatprep.subr.mxu0 0.0
    %1837 = vmatpush1.xpose.msra.mxu0 0.0
    %1838 = vmatprep.subr.mxu0 0.0
    %1839 = vmatpush1.xpose.msra.mxu0 0.0
    %1840 = vmatprep.subr.mxu0 0.0
    %1841 = vmatpush1.xpose.msra.mxu0 %v1808
    %1842 = vmatprep.subr.mxu0 0.0
    %1843 = vmatpush2.xpose.msra.mxu0 0.0
    %1844 = vmatprep.subr.mxu0 0.0
    %1845 = vmatpush2.xpose.msra.mxu0 0.0
    %1846 = vmatprep.subr.mxu0 0.0
    %1847 = vmatpush2.xpose.msra.mxu0 0.0
    %1848 = vmatprep.subr.mxu0 0.0
    %1849 = vmatpush2.xpose.msra.mxu0 0.0
    %1850 = vmatprep.subr.mxu0 0.0
    %1851 = vmatpush2.xpose.msra.mxu0 0.0
    %1852 = vmatprep.subr.mxu0 0.0
    %1853 = vmatpush2.xpose.msra.mxu0 0.0
    %1854 = vmatprep.subr.mxu0 0.0
    %1855 = vmatpush2.xpose.msra.mxu0 0.0
    %1856 = vmatprep.subr.mxu0 0.0
    %1857 = vmatpush2.xpose.msra.mxu0 0.0
    %1858 = vmatprep.subr.mxu0 0.0
    %1859 = vmatpush2.xpose.msra.mxu0 0.0
    %1860 = vmatprep.subr.mxu0 0.0
    %1861 = vmatpush2.xpose.msra.mxu0 0.0
    %1862 = vmatprep.subr.mxu0 0.0
    %1863 = vmatpush2.xpose.msra.mxu0 0.0
    %1864 = vmatprep.subr.mxu0 0.0
    %1865 = vmatpush2.xpose.msra.mxu0 0.0
    %1866 = vmatprep.subr.mxu0 0.0
    %1867 = vmatpush2.xpose.msra.mxu0 0.0
    %1868 = vmatprep.subr.mxu0 0.0
    %1869 = vmatpush2.xpose.msra.mxu0 0.0
    %1870 = vmatprep.subr.mxu0 0.0
    %1871 = vmatpush2.xpose.msra.mxu0 0.0
    %1872 = vmatprep.subr.mxu0 0.0
    %1873 = vmatpush2.xpose.msra.mxu0 0.0
    %1874 = vmatprep.mubr.f32.mxu0 0.0
    %1875 = vmatmul.mubr.f32.gmra.mxu0 %v1805
    %v1876 = vpop.f32.mrf.mxu0
    %v1877 = vadd.f32 0.0, %v1876
    %v1878 = vpop.f32.mrf.mxu0
    %1879 = vdwg.mxu0
    %v1880 = vmul.f32 %v1801, 0.35355338
    %v1881 = vmul.f32 %v1877, 0.35355338
    %v1882 = vsel %vm539, %v1880, -1e+09
    %v1883 = vsel %vm540, %v1881, -1e+09
    %v1884 = vsel %vm374, %v1882, -inf
    %1885 = vmax.xlane.f32.xlu0 %v1884
    %v1886 = vpop.xlane.xlu0 %1885
    %v1887 = vsel %vm374, %v1883, -inf
    %1888 = vmax.xlane.f32.xlu0 %v1887
    %v1889 = vpop.xlane.xlu0 %1888
    %v1890 = vsub.f32 %v1882, %v1886
    %v1891 = vsub.f32 %v1883, %v1889
    %v1892 = vmul.f32 %v1890, 1.442695
    %v1893 = vpow.pop %v1892
    %v1894 = vmul.f32 %v1891, 1.442695
    %v1895 = vpow.pop %v1894
    %v1896 = vsel %vm374, %v1893, 0.0
    %1897 = vadd.xlane.f32.xlu0 %v1896
    %v1898 = vpop.xlane.xlu0 %1897
    %v1899 = vsel %vm374, %v1895, 0.0
    %1900 = vadd.xlane.f32.xlu0 %v1899
    %v1901 = vpop.xlane.xlu0 %1900
    %v1902 = vrcp.pop %v1898
    %v1903 = vrcp.pop %v1901
    %v1904 = vmul.f32 %v1893, %v1902
    %v1905 = vmul.f32 %v1895, %v1903
    %v1907 = vsel %vm374, %v1904, 0
    %1909 = vmatprep.subr.mxu0 0.0
    %1910 = vmatpush1.msra.mxu0 0.0
    %1911 = vmatprep.subr.mxu0 0.0
    %1912 = vmatpush1.msra.mxu0 0.0
    %1913 = vmatprep.subr.mxu0 0.0
    %1914 = vmatpush1.msra.mxu0 0.0
    %1915 = vmatprep.subr.mxu0 0.0
    %1916 = vmatpush1.msra.mxu0 0.0
    %1917 = vmatprep.subr.mxu0 0.0
    %1918 = vmatpush1.msra.mxu0 0.0
    %1919 = vmatprep.subr.mxu0 0.0
    %1920 = vmatpush1.msra.mxu0 0.0
    %1921 = vmatprep.subr.mxu0 0.0
    %1922 = vmatpush1.msra.mxu0 0.0
    %1923 = vmatprep.subr.mxu0 0.0
    %1924 = vmatpush1.msra.mxu0 0.0
    %1925 = vmatprep.subr.mxu0 0.0
    %1926 = vmatpush1.msra.mxu0 0.0
    %1927 = vmatprep.subr.mxu0 0.0
    %1928 = vmatpush1.msra.mxu0 0.0
    %1929 = vmatprep.subr.mxu0 0.0
    %1930 = vmatpush1.msra.mxu0 0.0
    %1931 = vmatprep.subr.mxu0 0.0
    %1932 = vmatpush1.msra.mxu0 0.0
    %1933 = vmatprep.subr.mxu0 0.0
    %1934 = vmatpush1.msra.mxu0 0.0
    %1935 = vmatprep.subr.mxu0 0.0
    %1936 = vmatpush1.msra.mxu0 0.0
    %1937 = vmatprep.subr.mxu0 0.0
    %1938 = vmatpush1.msra.mxu0 0.0
    %1939 = vmatprep.subr.mxu0 0.0
    %1940 = vmatpush1.msra.mxu0 %v1720
    %1941 = vmatprep.subr.mxu0 0.0
    %1942 = vmatpush2.msra.mxu0 0.0
    %1943 = vmatprep.subr.mxu0 0.0
    %1944 = vmatpush2.msra.mxu0 0.0
    %1945 = vmatprep.subr.mxu0 0.0
    %1946 = vmatpush2.msra.mxu0 0.0
    %1947 = vmatprep.subr.mxu0 0.0
    %1948 = vmatpush2.msra.mxu0 0.0
    %1949 = vmatprep.subr.mxu0 0.0
    %1950 = vmatpush2.msra.mxu0 0.0
    %1951 = vmatprep.subr.mxu0 0.0
    %1952 = vmatpush2.msra.mxu0 0.0
    %1953 = vmatprep.subr.mxu0 0.0
    %1954 = vmatpush2.msra.mxu0 0.0
    %1955 = vmatprep.subr.mxu0 0.0
    %1956 = vmatpush2.msra.mxu0 0.0
    %1957 = vmatprep.subr.mxu0 0.0
    %1958 = vmatpush2.msra.mxu0 0.0
    %1959 = vmatprep.subr.mxu0 0.0
    %1960 = vmatpush2.msra.mxu0 0.0
    %1961 = vmatprep.subr.mxu0 0.0
    %1962 = vmatpush2.msra.mxu0 0.0
    %1963 = vmatprep.subr.mxu0 0.0
    %1964 = vmatpush2.msra.mxu0 0.0
    %1965 = vmatprep.subr.mxu0 0.0
    %1966 = vmatpush2.msra.mxu0 0.0
    %1967 = vmatprep.subr.mxu0 0.0
    %1968 = vmatpush2.msra.mxu0 0.0
    %1969 = vmatprep.subr.mxu0 0.0
    %1970 = vmatpush2.msra.mxu0 0.0
    %1971 = vmatprep.subr.mxu0 0.0
    %1972 = vmatpush2.msra.mxu0 0.0
    %1973 = vmatprep.mubr.f32.mxu0 0.0
    %1974 = vmatmul.mubr.f32.gmra.mxu0 %v1907
    %v1975 = vpop.f32.mrf.mxu0
    %v1976 = vadd.f32 0.0, %v1975
    %v1977 = vpop.f32.mrf.mxu0
    %1978 = vdwg.mxu0
    %v1980 = vsel %vm374, %v1905, 0
    %1982 = vmatprep.subr.mxu0 0.0
    %1983 = vmatpush1.msra.mxu0 0.0
    %1984 = vmatprep.subr.mxu0 0.0
    %1985 = vmatpush1.msra.mxu0 0.0
    %1986 = vmatprep.subr.mxu0 0.0
    %1987 = vmatpush1.msra.mxu0 0.0
    %1988 = vmatprep.subr.mxu0 0.0
    %1989 = vmatpush1.msra.mxu0 0.0
    %1990 = vmatprep.subr.mxu0 0.0
    %1991 = vmatpush1.msra.mxu0 0.0
    %1992 = vmatprep.subr.mxu0 0.0
    %1993 = vmatpush1.msra.mxu0 0.0
    %1994 = vmatprep.subr.mxu0 0.0
    %1995 = vmatpush1.msra.mxu0 0.0
    %1996 = vmatprep.subr.mxu0 0.0
    %1997 = vmatpush1.msra.mxu0 0.0
    %1998 = vmatprep.subr.mxu0 0.0
    %1999 = vmatpush1.msra.mxu0 0.0
    %2000 = vmatprep.subr.mxu0 0.0
    %2001 = vmatpush1.msra.mxu0 0.0
    %2002 = vmatprep.subr.mxu0 0.0
    %2003 = vmatpush1.msra.mxu0 0.0
    %2004 = vmatprep.subr.mxu0 0.0
    %2005 = vmatpush1.msra.mxu0 0.0
    %2006 = vmatprep.subr.mxu0 0.0
    %2007 = vmatpush1.msra.mxu0 0.0
    %2008 = vmatprep.subr.mxu0 0.0
    %2009 = vmatpush1.msra.mxu0 0.0
    %2010 = vmatprep.subr.mxu0 0.0
    %2011 = vmatpush1.msra.mxu0 0.0
    %2012 = vmatprep.subr.mxu0 0.0
    %2013 = vmatpush1.msra.mxu0 %v1725
    %2014 = vmatprep.subr.mxu0 0.0
    %2015 = vmatpush2.msra.mxu0 0.0
    %2016 = vmatprep.subr.mxu0 0.0
    %2017 = vmatpush2.msra.mxu0 0.0
    %2018 = vmatprep.subr.mxu0 0.0
    %2019 = vmatpush2.msra.mxu0 0.0
    %2020 = vmatprep.subr.mxu0 0.0
    %2021 = vmatpush2.msra.mxu0 0.0
    %2022 = vmatprep.subr.mxu0 0.0
    %2023 = vmatpush2.msra.mxu0 0.0
    %2024 = vmatprep.subr.mxu0 0.0
    %2025 = vmatpush2.msra.mxu0 0.0
    %2026 = vmatprep.subr.mxu0 0.0
    %2027 = vmatpush2.msra.mxu0 0.0
    %2028 = vmatprep.subr.mxu0 0.0
    %2029 = vmatpush2.msra.mxu0 0.0
    %2030 = vmatprep.subr.mxu0 0.0
    %2031 = vmatpush2.msra.mxu0 0.0
    %2032 = vmatprep.subr.mxu0 0.0
    %2033 = vmatpush2.msra.mxu0 0.0
    %2034 = vmatprep.subr.mxu0 0.0
    %2035 = vmatpush2.msra.mxu0 0.0
    %2036 = vmatprep.subr.mxu0 0.0
    %2037 = vmatpush2.msra.mxu0 0.0
    %2038 = vmatprep.subr.mxu0 0.0
    %2039 = vmatpush2.msra.mxu0 0.0
    %2040 = vmatprep.subr.mxu0 0.0
    %2041 = vmatpush2.msra.mxu0 0.0
    %2042 = vmatprep.subr.mxu0 0.0
    %2043 = vmatpush2.msra.mxu0 0.0
    %2044 = vmatprep.subr.mxu0 0.0
    %2045 = vmatpush2.msra.mxu0 0.0
    %2046 = vmatprep.mubr.f32.mxu0 0.0
    %2047 = vmatmul.mubr.f32.gmra.mxu0 %v1980
    %v2048 = vpop.f32.mrf.mxu0
    %v2049 = vadd.f32 0.0, %v2048
    %v2050 = vpop.f32.mrf.mxu0
    %2051 = vdwg.mxu0
    %s2052 = scalar_lea.vmem %s4, 16
    %v2053 = vld [vmem:[%s2052] sm:$0xff]
    %v2055 = vsel %vm374, %v1976, 0
    %v2058 = vsel %vm374, %v2049, 0
    %2060 = vmatprep.subr.mxu0 0.0
    %2061 = vmatpush1.msra.mxu0 0.0
    %2062 = vmatprep.subr.mxu0 0.0
    %2063 = vmatpush1.msra.mxu0 0.0
    %2064 = vmatprep.subr.mxu0 0.0
    %2065 = vmatpush1.msra.mxu0 0.0
    %2066 = vmatprep.subr.mxu0 0.0
    %2067 = vmatpush1.msra.mxu0 0.0
    %2068 = vmatprep.subr.mxu0 0.0
    %2069 = vmatpush1.msra.mxu0 0.0
    %2070 = vmatprep.subr.mxu0 0.0
    %2071 = vmatpush1.msra.mxu0 0.0
    %2072 = vmatprep.subr.mxu0 0.0
    %2073 = vmatpush1.msra.mxu0 0.0
    %2074 = vmatprep.subr.mxu0 0.0
    %2075 = vmatpush1.msra.mxu0 0.0
    %2076 = vmatprep.subr.mxu0 0.0
    %2077 = vmatpush1.msra.mxu0 0.0
    %2078 = vmatprep.subr.mxu0 0.0
    %2079 = vmatpush1.msra.mxu0 0.0
    %2080 = vmatprep.subr.mxu0 0.0
    %2081 = vmatpush1.msra.mxu0 0.0
    %2082 = vmatprep.subr.mxu0 0.0
    %2083 = vmatpush1.msra.mxu0 0.0
    %2084 = vmatprep.subr.mxu0 0.0
    %2085 = vmatpush1.msra.mxu0 0.0
    %2086 = vmatprep.subr.mxu0 0.0
    %2087 = vmatpush1.msra.mxu0 0.0
    %2088 = vmatprep.subr.mxu0 0.0
    %2089 = vmatpush1.msra.mxu0 0.0
    %2090 = vmatprep.subr.mxu0 0.0
    %2091 = vmatpush1.msra.mxu0 %v2053
    %2092 = vmatprep.subr.mxu0 0.0
    %2093 = vmatpush2.msra.mxu0 0.0
    %2094 = vmatprep.subr.mxu0 0.0
    %2095 = vmatpush2.msra.mxu0 0.0
    %2096 = vmatprep.subr.mxu0 0.0
    %2097 = vmatpush2.msra.mxu0 0.0
    %2098 = vmatprep.subr.mxu0 0.0
    %2099 = vmatpush2.msra.mxu0 0.0
    %2100 = vmatprep.subr.mxu0 0.0
    %2101 = vmatpush2.msra.mxu0 0.0
    %2102 = vmatprep.subr.mxu0 0.0
    %2103 = vmatpush2.msra.mxu0 0.0
    %2104 = vmatprep.subr.mxu0 0.0
    %2105 = vmatpush2.msra.mxu0 0.0
    %2106 = vmatprep.subr.mxu0 0.0
    %2107 = vmatpush2.msra.mxu0 0.0
    %2108 = vmatprep.subr.mxu0 0.0
    %2109 = vmatpush2.msra.mxu0 0.0
    %2110 = vmatprep.subr.mxu0 0.0
    %2111 = vmatpush2.msra.mxu0 0.0
    %2112 = vmatprep.subr.mxu0 0.0
    %2113 = vmatpush2.msra.mxu0 0.0
    %2114 = vmatprep.subr.mxu0 0.0
    %2115 = vmatpush2.msra.mxu0 0.0
    %2116 = vmatprep.subr.mxu0 0.0
    %2117 = vmatpush2.msra.mxu0 0.0
    %2118 = vmatprep.subr.mxu0 0.0
    %2119 = vmatpush2.msra.mxu0 0.0
    %2120 = vmatprep.subr.mxu0 0.0
    %2121 = vmatpush2.msra.mxu0 0.0
    %2122 = vmatprep.subr.mxu0 0.0
    %2123 = vmatpush2.msra.mxu0 0.0
    %2124 = vmatprep.mubr.f32.mxu0 0.0
    %2125 = vmatmul.mubr.f32.gmra.mxu0 %v2055
    %v2126 = vpop.f32.mrf.mxu0
    %v2127 = vadd.f32 0.0, %v2126
    %v2128 = vpop.f32.mrf.mxu0
    %2129 = vmatprep.mubr.f32.mxu0 0.0
    %2130 = vmatmul.mubr.f32.gmra.mxu0 %v2058
    %v2131 = vpop.f32.mrf.mxu0
    %v2132 = vadd.f32 0.0, %v2131
    %v2133 = vpop.f32.mrf.mxu0
    %2134 = vdwg.mxu0
    %v2135 = vadd.f32 %v1456, %v2127
    %v2136 = vadd.f32 %v1461, %v2132
    %s2137 = scalar_lea.vmem %s2, 96
    %v2138 = vld [vmem:[%s2137] sm:$0xff]
    %v2139 = vld [vmem:[%s2137 + $0x8] sm:$0xff]
    %v2140 = vld [vmem:[%s2137 + $0x10] sm:$0xff]
    %v2141 = vld [vmem:[%s2137 + $0x18] sm:$0xff]
    %s2142 = scalar_lea.vmem %s3, 3
    %v2143 = vld [vmem:[%s2142] sm:$0x1]
    %v2145 = vlaneseq
    %v2146 = vshrl.u32 %v2145, 7
    %v2147 = vsub.s32 0, %v2146
    %v2148 = vrot.slane %v2143, %v2147
    %2150 = vmatprep.subr.mxu0 0.0
    %2151 = vmatpush1.msra.mxu0 0.0
    %2152 = vmatprep.subr.mxu0 0.0
    %2153 = vmatpush1.msra.mxu0 0.0
    %2154 = vmatprep.subr.mxu0 0.0
    %2155 = vmatpush1.msra.mxu0 0.0
    %2156 = vmatprep.subr.mxu0 0.0
    %2157 = vmatpush1.msra.mxu0 0.0
    %2158 = vmatprep.subr.mxu0 0.0
    %2159 = vmatpush1.msra.mxu0 0.0
    %2160 = vmatprep.subr.mxu0 0.0
    %2161 = vmatpush1.msra.mxu0 0.0
    %2162 = vmatprep.subr.mxu0 0.0
    %2163 = vmatpush1.msra.mxu0 0.0
    %2164 = vmatprep.subr.mxu0 0.0
    %2165 = vmatpush1.msra.mxu0 0.0
    %2166 = vmatprep.subr.mxu0 0.0
    %2167 = vmatpush1.msra.mxu0 0.0
    %2168 = vmatprep.subr.mxu0 0.0
    %2169 = vmatpush1.msra.mxu0 0.0
    %2170 = vmatprep.subr.mxu0 0.0
    %2171 = vmatpush1.msra.mxu0 0.0
    %2172 = vmatprep.subr.mxu0 0.0
    %2173 = vmatpush1.msra.mxu0 0.0
    %2174 = vmatprep.subr.mxu0 0.0
    %2175 = vmatpush1.msra.mxu0 %v2141
    %2176 = vmatprep.subr.mxu0 0.0
    %2177 = vmatpush1.msra.mxu0 %v2140
    %2178 = vmatprep.subr.mxu0 0.0
    %2179 = vmatpush1.msra.mxu0 %v2139
    %2180 = vmatprep.subr.mxu0 0.0
    %2181 = vmatpush1.msra.mxu0 %v2138
    %2182 = vmatprep.subr.mxu0 0.0
    %2183 = vmatpush2.msra.mxu0 0.0
    %2184 = vmatprep.subr.mxu0 0.0
    %2185 = vmatpush2.msra.mxu0 0.0
    %2186 = vmatprep.subr.mxu0 0.0
    %2187 = vmatpush2.msra.mxu0 0.0
    %2188 = vmatprep.subr.mxu0 0.0
    %2189 = vmatpush2.msra.mxu0 0.0
    %2190 = vmatprep.subr.mxu0 0.0
    %2191 = vmatpush2.msra.mxu0 0.0
    %2192 = vmatprep.subr.mxu0 0.0
    %2193 = vmatpush2.msra.mxu0 0.0
    %2194 = vmatprep.subr.mxu0 0.0
    %2195 = vmatpush2.msra.mxu0 0.0
    %2196 = vmatprep.subr.mxu0 0.0
    %2197 = vmatpush2.msra.mxu0 0.0
    %2198 = vmatprep.subr.mxu0 0.0
    %2199 = vmatpush2.msra.mxu0 0.0
    %2200 = vmatprep.subr.mxu0 0.0
    %2201 = vmatpush2.msra.mxu0 0.0
    %2202 = vmatprep.subr.mxu0 0.0
    %2203 = vmatpush2.msra.mxu0 0.0
    %2204 = vmatprep.subr.mxu0 0.0
    %2205 = vmatpush2.msra.mxu0 0.0
    %2206 = vmatprep.subr.mxu0 0.0
    %2207 = vmatpush2.msra.mxu0 0.0
    %2208 = vmatprep.subr.mxu0 0.0
    %2209 = vmatpush2.msra.mxu0 0.0
    %2210 = vmatprep.subr.mxu0 0.0
    %2211 = vmatpush2.msra.mxu0 0.0
    %2212 = vmatprep.subr.mxu0 0.0
    %2213 = vmatpush2.msra.mxu0 0.0
    %2214 = vmatprep.mubr.f32.mxu0 0.0
    %2215 = vmatmul.mubr.f32.gmra.mxu0 %v118
    %v2216 = vpop.f32.mrf.mxu0
    %v2217 = vadd.f32 %v2148, %v2216
    %v2218 = vpop.f32.mrf.mxu0
    %2219 = vmatprep.mubr.f32.mxu0 0.0
    %2220 = vmatmul.mubr.f32.gmra.mxu0 %v121
    %v2221 = vpop.f32.mrf.mxu0
    %v2222 = vadd.f32 %v2148, %v2221
    %v2223 = vpop.f32.mrf.mxu0
    %2224 = vdwg.mxu0
    %s2225 = scalar_lea.vmem %s2, 224
    %v2226 = vld [vmem:[%s2225] sm:$0xff]
    %v2227 = vld [vmem:[%s2225 + $0x8] sm:$0xff]
    %v2228 = vld [vmem:[%s2225 + $0x10] sm:$0xff]
    %v2229 = vld [vmem:[%s2225 + $0x18] sm:$0xff]
    %s2230 = scalar_lea.vmem %s3, 7
    %v2231 = vld [vmem:[%s2230] sm:$0x1]
    %v2233 = vlaneseq
    %v2234 = vshrl.u32 %v2233, 7
    %v2235 = vsub.s32 0, %v2234
    %v2236 = vrot.slane %v2231, %v2235
    %2238 = vmatprep.subr.mxu0 0.0
    %2239 = vmatpush1.msra.mxu0 0.0
    %2240 = vmatprep.subr.mxu0 0.0
    %2241 = vmatpush1.msra.mxu0 0.0
    %2242 = vmatprep.subr.mxu0 0.0
    %2243 = vmatpush1.msra.mxu0 0.0
    %2244 = vmatprep.subr.mxu0 0.0
    %2245 = vmatpush1.msra.mxu0 0.0
    %2246 = vmatprep.subr.mxu0 0.0
    %2247 = vmatpush1.msra.mxu0 0.0
    %2248 = vmatprep.subr.mxu0 0.0
    %2249 = vmatpush1.msra.mxu0 0.0
    %2250 = vmatprep.subr.mxu0 0.0
    %2251 = vmatpush1.msra.mxu0 0.0
    %2252 = vmatprep.subr.mxu0 0.0
    %2253 = vmatpush1.msra.mxu0 0.0
    %2254 = vmatprep.subr.mxu0 0.0
    %2255 = vmatpush1.msra.mxu0 0.0
    %2256 = vmatprep.subr.mxu0 0.0
    %2257 = vmatpush1.msra.mxu0 0.0
    %2258 = vmatprep.subr.mxu0 0.0
    %2259 = vmatpush1.msra.mxu0 0.0
    %2260 = vmatprep.subr.mxu0 0.0
    %2261 = vmatpush1.msra.mxu0 0.0
    %2262 = vmatprep.subr.mxu0 0.0
    %2263 = vmatpush1.msra.mxu0 %v2229
    %2264 = vmatprep.subr.mxu0 0.0
    %2265 = vmatpush1.msra.mxu0 %v2228
    %2266 = vmatprep.subr.mxu0 0.0
    %2267 = vmatpush1.msra.mxu0 %v2227
    %2268 = vmatprep.subr.mxu0 0.0
    %2269 = vmatpush1.msra.mxu0 %v2226
    %2270 = vmatprep.subr.mxu0 0.0
    %2271 = vmatpush2.msra.mxu0 0.0
    %2272 = vmatprep.subr.mxu0 0.0
    %2273 = vmatpush2.msra.mxu0 0.0
    %2274 = vmatprep.subr.mxu0 0.0
    %2275 = vmatpush2.msra.mxu0 0.0
    %2276 = vmatprep.subr.mxu0 0.0
    %2277 = vmatpush2.msra.mxu0 0.0
    %2278 = vmatprep.subr.mxu0 0.0
    %2279 = vmatpush2.msra.mxu0 0.0
    %2280 = vmatprep.subr.mxu0 0.0
    %2281 = vmatpush2.msra.mxu0 0.0
    %2282 = vmatprep.subr.mxu0 0.0
    %2283 = vmatpush2.msra.mxu0 0.0
    %2284 = vmatprep.subr.mxu0 0.0
    %2285 = vmatpush2.msra.mxu0 0.0
    %2286 = vmatprep.subr.mxu0 0.0
    %2287 = vmatpush2.msra.mxu0 0.0
    %2288 = vmatprep.subr.mxu0 0.0
    %2289 = vmatpush2.msra.mxu0 0.0
    %2290 = vmatprep.subr.mxu0 0.0
    %2291 = vmatpush2.msra.mxu0 0.0
    %2292 = vmatprep.subr.mxu0 0.0
    %2293 = vmatpush2.msra.mxu0 0.0
    %2294 = vmatprep.subr.mxu0 0.0
    %2295 = vmatpush2.msra.mxu0 0.0
    %2296 = vmatprep.subr.mxu0 0.0
    %2297 = vmatpush2.msra.mxu0 0.0
    %2298 = vmatprep.subr.mxu0 0.0
    %2299 = vmatpush2.msra.mxu0 0.0
    %2300 = vmatprep.subr.mxu0 0.0
    %2301 = vmatpush2.msra.mxu0 0.0
    %2302 = vmatprep.mubr.f32.mxu0 0.0
    %2303 = vmatmul.mubr.f32.gmra.mxu0 %v118
    %v2304 = vpop.f32.mrf.mxu0
    %v2305 = vadd.f32 %v2236, %v2304
    %v2306 = vpop.f32.mrf.mxu0
    %2307 = vmatprep.mubr.f32.mxu0 0.0
    %2308 = vmatmul.mubr.f32.gmra.mxu0 %v121
    %v2309 = vpop.f32.mrf.mxu0
    %v2310 = vadd.f32 %v2236, %v2309
    %v2311 = vpop.f32.mrf.mxu0
    %2312 = vdwg.mxu0
    %s2313 = scalar_lea.vmem %s2, 352
    %v2314 = vld [vmem:[%s2313] sm:$0xff]
    %v2315 = vld [vmem:[%s2313 + $0x8] sm:$0xff]
    %v2316 = vld [vmem:[%s2313 + $0x10] sm:$0xff]
    %v2317 = vld [vmem:[%s2313 + $0x18] sm:$0xff]
    %s2318 = scalar_lea.vmem %s3, 11
    %v2319 = vld [vmem:[%s2318] sm:$0x1]
    %v2321 = vlaneseq
    %v2322 = vshrl.u32 %v2321, 7
    %v2323 = vsub.s32 0, %v2322
    %v2324 = vrot.slane %v2319, %v2323
    %2326 = vmatprep.subr.mxu0 0.0
    %2327 = vmatpush1.msra.mxu0 0.0
    %2328 = vmatprep.subr.mxu0 0.0
    %2329 = vmatpush1.msra.mxu0 0.0
    %2330 = vmatprep.subr.mxu0 0.0
    %2331 = vmatpush1.msra.mxu0 0.0
    %2332 = vmatprep.subr.mxu0 0.0
    %2333 = vmatpush1.msra.mxu0 0.0
    %2334 = vmatprep.subr.mxu0 0.0
    %2335 = vmatpush1.msra.mxu0 0.0
    %2336 = vmatprep.subr.mxu0 0.0
    %2337 = vmatpush1.msra.mxu0 0.0
    %2338 = vmatprep.subr.mxu0 0.0
    %2339 = vmatpush1.msra.mxu0 0.0
    %2340 = vmatprep.subr.mxu0 0.0
    %2341 = vmatpush1.msra.mxu0 0.0
    %2342 = vmatprep.subr.mxu0 0.0
    %2343 = vmatpush1.msra.mxu0 0.0
    %2344 = vmatprep.subr.mxu0 0.0
    %2345 = vmatpush1.msra.mxu0 0.0
    %2346 = vmatprep.subr.mxu0 0.0
    %2347 = vmatpush1.msra.mxu0 0.0
    %2348 = vmatprep.subr.mxu0 0.0
    %2349 = vmatpush1.msra.mxu0 0.0
    %2350 = vmatprep.subr.mxu0 0.0
    %2351 = vmatpush1.msra.mxu0 %v2317
    %2352 = vmatprep.subr.mxu0 0.0
    %2353 = vmatpush1.msra.mxu0 %v2316
    %2354 = vmatprep.subr.mxu0 0.0
    %2355 = vmatpush1.msra.mxu0 %v2315
    %2356 = vmatprep.subr.mxu0 0.0
    %2357 = vmatpush1.msra.mxu0 %v2314
    %2358 = vmatprep.subr.mxu0 0.0
    %2359 = vmatpush2.msra.mxu0 0.0
    %2360 = vmatprep.subr.mxu0 0.0
    %2361 = vmatpush2.msra.mxu0 0.0
    %2362 = vmatprep.subr.mxu0 0.0
    %2363 = vmatpush2.msra.mxu0 0.0
    %2364 = vmatprep.subr.mxu0 0.0
    %2365 = vmatpush2.msra.mxu0 0.0
    %2366 = vmatprep.subr.mxu0 0.0
    %2367 = vmatpush2.msra.mxu0 0.0
    %2368 = vmatprep.subr.mxu0 0.0
    %2369 = vmatpush2.msra.mxu0 0.0
    %2370 = vmatprep.subr.mxu0 0.0
    %2371 = vmatpush2.msra.mxu0 0.0
    %2372 = vmatprep.subr.mxu0 0.0
    %2373 = vmatpush2.msra.mxu0 0.0
    %2374 = vmatprep.subr.mxu0 0.0
    %2375 = vmatpush2.msra.mxu0 0.0
    %2376 = vmatprep.subr.mxu0 0.0
    %2377 = vmatpush2.msra.mxu0 0.0
    %2378 = vmatprep.subr.mxu0 0.0
    %2379 = vmatpush2.msra.mxu0 0.0
    %2380 = vmatprep.subr.mxu0 0.0
    %2381 = vmatpush2.msra.mxu0 0.0
    %2382 = vmatprep.subr.mxu0 0.0
    %2383 = vmatpush2.msra.mxu0 0.0
    %2384 = vmatprep.subr.mxu0 0.0
    %2385 = vmatpush2.msra.mxu0 0.0
    %2386 = vmatprep.subr.mxu0 0.0
    %2387 = vmatpush2.msra.mxu0 0.0
    %2388 = vmatprep.subr.mxu0 0.0
    %2389 = vmatpush2.msra.mxu0 0.0
    %2390 = vmatprep.mubr.f32.mxu0 0.0
    %2391 = vmatmul.mubr.f32.gmra.mxu0 %v118
    %v2392 = vpop.f32.mrf.mxu0
    %v2393 = vadd.f32 %v2324, %v2392
    %v2394 = vpop.f32.mrf.mxu0
    %2395 = vmatprep.mubr.f32.mxu0 0.0
    %2396 = vmatmul.mubr.f32.gmra.mxu0 %v121
    %v2397 = vpop.f32.mrf.mxu0
    %v2398 = vadd.f32 %v2324, %v2397
    %v2399 = vpop.f32.mrf.mxu0
    %2400 = vdwg.mxu0
    %v2402 = vsel %vm374, %v2217, 0
    %v2405 = vsel %vm374, %v2305, 0
    %2407 = vmatprep.subr.mxu0 0.0
    %2408 = vmatpush1.xpose.msra.mxu0 0.0
    %2409 = vmatprep.subr.mxu0 0.0
    %2410 = vmatpush1.xpose.msra.mxu0 0.0
    %2411 = vmatprep.subr.mxu0 0.0
    %2412 = vmatpush1.xpose.msra.mxu0 0.0
    %2413 = vmatprep.subr.mxu0 0.0
    %2414 = vmatpush1.xpose.msra.mxu0 0.0
    %2415 = vmatprep.subr.mxu0 0.0
    %2416 = vmatpush1.xpose.msra.mxu0 0.0
    %2417 = vmatprep.subr.mxu0 0.0
    %2418 = vmatpush1.xpose.msra.mxu0 0.0
    %2419 = vmatprep.subr.mxu0 0.0
    %2420 = vmatpush1.xpose.msra.mxu0 0.0
    %2421 = vmatprep.subr.mxu0 0.0
    %2422 = vmatpush1.xpose.msra.mxu0 0.0
    %2423 = vmatprep.subr.mxu0 0.0
    %2424 = vmatpush1.xpose.msra.mxu0 0.0
    %2425 = vmatprep.subr.mxu0 0.0
    %2426 = vmatpush1.xpose.msra.mxu0 0.0
    %2427 = vmatprep.subr.mxu0 0.0
    %2428 = vmatpush1.xpose.msra.mxu0 0.0
    %2429 = vmatprep.subr.mxu0 0.0
    %2430 = vmatpush1.xpose.msra.mxu0 0.0
    %2431 = vmatprep.subr.mxu0 0.0
    %2432 = vmatpush1.xpose.msra.mxu0 0.0
    %2433 = vmatprep.subr.mxu0 0.0
    %2434 = vmatpush1.xpose.msra.mxu0 0.0
    %2435 = vmatprep.subr.mxu0 0.0
    %2436 = vmatpush1.xpose.msra.mxu0 0.0
    %2437 = vmatprep.subr.mxu0 0.0
    %2438 = vmatpush1.xpose.msra.mxu0 %v2405
    %2439 = vmatprep.subr.mxu0 0.0
    %2440 = vmatpush2.xpose.msra.mxu0 0.0
    %2441 = vmatprep.subr.mxu0 0.0
    %2442 = vmatpush2.xpose.msra.mxu0 0.0
    %2443 = vmatprep.subr.mxu0 0.0
    %2444 = vmatpush2.xpose.msra.mxu0 0.0
    %2445 = vmatprep.subr.mxu0 0.0
    %2446 = vmatpush2.xpose.msra.mxu0 0.0
    %2447 = vmatprep.subr.mxu0 0.0
    %2448 = vmatpush2.xpose.msra.mxu0 0.0
    %2449 = vmatprep.subr.mxu0 0.0
    %2450 = vmatpush2.xpose.msra.mxu0 0.0
    %2451 = vmatprep.subr.mxu0 0.0
    %2452 = vmatpush2.xpose.msra.mxu0 0.0
    %2453 = vmatprep.subr.mxu0 0.0
    %2454 = vmatpush2.xpose.msra.mxu0 0.0
    %2455 = vmatprep.subr.mxu0 0.0
    %2456 = vmatpush2.xpose.msra.mxu0 0.0
    %2457 = vmatprep.subr.mxu0 0.0
    %2458 = vmatpush2.xpose.msra.mxu0 0.0
    %2459 = vmatprep.subr.mxu0 0.0
    %2460 = vmatpush2.xpose.msra.mxu0 0.0
    %2461 = vmatprep.subr.mxu0 0.0
    %2462 = vmatpush2.xpose.msra.mxu0 0.0
    %2463 = vmatprep.subr.mxu0 0.0
    %2464 = vmatpush2.xpose.msra.mxu0 0.0
    %2465 = vmatprep.subr.mxu0 0.0
    %2466 = vmatpush2.xpose.msra.mxu0 0.0
    %2467 = vmatprep.subr.mxu0 0.0
    %2468 = vmatpush2.xpose.msra.mxu0 0.0
    %2469 = vmatprep.subr.mxu0 0.0
    %2470 = vmatpush2.xpose.msra.mxu0 0.0
    %2471 = vmatprep.mubr.f32.mxu0 0.0
    %2472 = vmatmul.mubr.f32.gmra.mxu0 %v2402
    %v2473 = vpop.f32.mrf.mxu0
    %v2474 = vadd.f32 0.0, %v2473
    %v2475 = vpop.f32.mrf.mxu0
    %2476 = vdwg.mxu0
    %v2478 = vsel %vm374, %v2222, 0
    %v2481 = vsel %vm374, %v2310, 0
    %2483 = vmatprep.subr.mxu0 0.0
    %2484 = vmatpush1.xpose.msra.mxu0 0.0
    %2485 = vmatprep.subr.mxu0 0.0
    %2486 = vmatpush1.xpose.msra.mxu0 0.0
    %2487 = vmatprep.subr.mxu0 0.0
    %2488 = vmatpush1.xpose.msra.mxu0 0.0
    %2489 = vmatprep.subr.mxu0 0.0
    %2490 = vmatpush1.xpose.msra.mxu0 0.0
    %2491 = vmatprep.subr.mxu0 0.0
    %2492 = vmatpush1.xpose.msra.mxu0 0.0
    %2493 = vmatprep.subr.mxu0 0.0
    %2494 = vmatpush1.xpose.msra.mxu0 0.0
    %2495 = vmatprep.subr.mxu0 0.0
    %2496 = vmatpush1.xpose.msra.mxu0 0.0
    %2497 = vmatprep.subr.mxu0 0.0
    %2498 = vmatpush1.xpose.msra.mxu0 0.0
    %2499 = vmatprep.subr.mxu0 0.0
    %2500 = vmatpush1.xpose.msra.mxu0 0.0
    %2501 = vmatprep.subr.mxu0 0.0
    %2502 = vmatpush1.xpose.msra.mxu0 0.0
    %2503 = vmatprep.subr.mxu0 0.0
    %2504 = vmatpush1.xpose.msra.mxu0 0.0
    %2505 = vmatprep.subr.mxu0 0.0
    %2506 = vmatpush1.xpose.msra.mxu0 0.0
    %2507 = vmatprep.subr.mxu0 0.0
    %2508 = vmatpush1.xpose.msra.mxu0 0.0
    %2509 = vmatprep.subr.mxu0 0.0
    %2510 = vmatpush1.xpose.msra.mxu0 0.0
    %2511 = vmatprep.subr.mxu0 0.0
    %2512 = vmatpush1.xpose.msra.mxu0 0.0
    %2513 = vmatprep.subr.mxu0 0.0
    %2514 = vmatpush1.xpose.msra.mxu0 %v2481
    %2515 = vmatprep.subr.mxu0 0.0
    %2516 = vmatpush2.xpose.msra.mxu0 0.0
    %2517 = vmatprep.subr.mxu0 0.0
    %2518 = vmatpush2.xpose.msra.mxu0 0.0
    %2519 = vmatprep.subr.mxu0 0.0
    %2520 = vmatpush2.xpose.msra.mxu0 0.0
    %2521 = vmatprep.subr.mxu0 0.0
    %2522 = vmatpush2.xpose.msra.mxu0 0.0
    %2523 = vmatprep.subr.mxu0 0.0
    %2524 = vmatpush2.xpose.msra.mxu0 0.0
    %2525 = vmatprep.subr.mxu0 0.0
    %2526 = vmatpush2.xpose.msra.mxu0 0.0
    %2527 = vmatprep.subr.mxu0 0.0
    %2528 = vmatpush2.xpose.msra.mxu0 0.0
    %2529 = vmatprep.subr.mxu0 0.0
    %2530 = vmatpush2.xpose.msra.mxu0 0.0
    %2531 = vmatprep.subr.mxu0 0.0
    %2532 = vmatpush2.xpose.msra.mxu0 0.0
    %2533 = vmatprep.subr.mxu0 0.0
    %2534 = vmatpush2.xpose.msra.mxu0 0.0
    %2535 = vmatprep.subr.mxu0 0.0
    %2536 = vmatpush2.xpose.msra.mxu0 0.0
    %2537 = vmatprep.subr.mxu0 0.0
    %2538 = vmatpush2.xpose.msra.mxu0 0.0
    %2539 = vmatprep.subr.mxu0 0.0
    %2540 = vmatpush2.xpose.msra.mxu0 0.0
    %2541 = vmatprep.subr.mxu0 0.0
    %2542 = vmatpush2.xpose.msra.mxu0 0.0
    %2543 = vmatprep.subr.mxu0 0.0
    %2544 = vmatpush2.xpose.msra.mxu0 0.0
    %2545 = vmatprep.subr.mxu0 0.0
    %2546 = vmatpush2.xpose.msra.mxu0 0.0
    %2547 = vmatprep.mubr.f32.mxu0 0.0
    %2548 = vmatmul.mubr.f32.gmra.mxu0 %v2478
    %v2549 = vpop.f32.mrf.mxu0
    %v2550 = vadd.f32 0.0, %v2549
    %v2551 = vpop.f32.mrf.mxu0
    %2552 = vdwg.mxu0
    %v2553 = vmul.f32 %v2474, 0.35355338
    %v2554 = vmul.f32 %v2550, 0.35355338
    %v2555 = vsel %vm539, %v2553, -1e+09
    %v2556 = vsel %vm540, %v2554, -1e+09
    %v2557 = vsel %vm374, %v2555, -inf
    %2558 = vmax.xlane.f32.xlu0 %v2557
    %v2559 = vpop.xlane.xlu0 %2558
    %v2560 = vsel %vm374, %v2556, -inf
    %2561 = vmax.xlane.f32.xlu0 %v2560
    %v2562 = vpop.xlane.xlu0 %2561
    %v2563 = vsub.f32 %v2555, %v2559
    %v2564 = vsub.f32 %v2556, %v2562
    %v2565 = vmul.f32 %v2563, 1.442695
    %v2566 = vpow.pop %v2565
    %v2567 = vmul.f32 %v2564, 1.442695
    %v2568 = vpow.pop %v2567
    %v2569 = vsel %vm374, %v2566, 0.0
    %2570 = vadd.xlane.f32.xlu0 %v2569
    %v2571 = vpop.xlane.xlu0 %2570
    %v2572 = vsel %vm374, %v2568, 0.0
    %2573 = vadd.xlane.f32.xlu0 %v2572
    %v2574 = vpop.xlane.xlu0 %2573
    %v2575 = vrcp.pop %v2571
    %v2576 = vrcp.pop %v2574
    %v2577 = vmul.f32 %v2566, %v2575
    %v2578 = vmul.f32 %v2568, %v2576
    %v2580 = vsel %vm374, %v2577, 0
    %2582 = vmatprep.subr.mxu0 0.0
    %2583 = vmatpush1.msra.mxu0 0.0
    %2584 = vmatprep.subr.mxu0 0.0
    %2585 = vmatpush1.msra.mxu0 0.0
    %2586 = vmatprep.subr.mxu0 0.0
    %2587 = vmatpush1.msra.mxu0 0.0
    %2588 = vmatprep.subr.mxu0 0.0
    %2589 = vmatpush1.msra.mxu0 0.0
    %2590 = vmatprep.subr.mxu0 0.0
    %2591 = vmatpush1.msra.mxu0 0.0
    %2592 = vmatprep.subr.mxu0 0.0
    %2593 = vmatpush1.msra.mxu0 0.0
    %2594 = vmatprep.subr.mxu0 0.0
    %2595 = vmatpush1.msra.mxu0 0.0
    %2596 = vmatprep.subr.mxu0 0.0
    %2597 = vmatpush1.msra.mxu0 0.0
    %2598 = vmatprep.subr.mxu0 0.0
    %2599 = vmatpush1.msra.mxu0 0.0
    %2600 = vmatprep.subr.mxu0 0.0
    %2601 = vmatpush1.msra.mxu0 0.0
    %2602 = vmatprep.subr.mxu0 0.0
    %2603 = vmatpush1.msra.mxu0 0.0
    %2604 = vmatprep.subr.mxu0 0.0
    %2605 = vmatpush1.msra.mxu0 0.0
    %2606 = vmatprep.subr.mxu0 0.0
    %2607 = vmatpush1.msra.mxu0 0.0
    %2608 = vmatprep.subr.mxu0 0.0
    %2609 = vmatpush1.msra.mxu0 0.0
    %2610 = vmatprep.subr.mxu0 0.0
    %2611 = vmatpush1.msra.mxu0 0.0
    %2612 = vmatprep.subr.mxu0 0.0
    %2613 = vmatpush1.msra.mxu0 %v2393
    %2614 = vmatprep.subr.mxu0 0.0
    %2615 = vmatpush2.msra.mxu0 0.0
    %2616 = vmatprep.subr.mxu0 0.0
    %2617 = vmatpush2.msra.mxu0 0.0
    %2618 = vmatprep.subr.mxu0 0.0
    %2619 = vmatpush2.msra.mxu0 0.0
    %2620 = vmatprep.subr.mxu0 0.0
    %2621 = vmatpush2.msra.mxu0 0.0
    %2622 = vmatprep.subr.mxu0 0.0
    %2623 = vmatpush2.msra.mxu0 0.0
    %2624 = vmatprep.subr.mxu0 0.0
    %2625 = vmatpush2.msra.mxu0 0.0
    %2626 = vmatprep.subr.mxu0 0.0
    %2627 = vmatpush2.msra.mxu0 0.0
    %2628 = vmatprep.subr.mxu0 0.0
    %2629 = vmatpush2.msra.mxu0 0.0
    %2630 = vmatprep.subr.mxu0 0.0
    %2631 = vmatpush2.msra.mxu0 0.0
    %2632 = vmatprep.subr.mxu0 0.0
    %2633 = vmatpush2.msra.mxu0 0.0
    %2634 = vmatprep.subr.mxu0 0.0
    %2635 = vmatpush2.msra.mxu0 0.0
    %2636 = vmatprep.subr.mxu0 0.0
    %2637 = vmatpush2.msra.mxu0 0.0
    %2638 = vmatprep.subr.mxu0 0.0
    %2639 = vmatpush2.msra.mxu0 0.0
    %2640 = vmatprep.subr.mxu0 0.0
    %2641 = vmatpush2.msra.mxu0 0.0
    %2642 = vmatprep.subr.mxu0 0.0
    %2643 = vmatpush2.msra.mxu0 0.0
    %2644 = vmatprep.subr.mxu0 0.0
    %2645 = vmatpush2.msra.mxu0 0.0
    %2646 = vmatprep.mubr.f32.mxu0 0.0
    %2647 = vmatmul.mubr.f32.gmra.mxu0 %v2580
    %v2648 = vpop.f32.mrf.mxu0
    %v2649 = vadd.f32 0.0, %v2648
    %v2650 = vpop.f32.mrf.mxu0
    %2651 = vdwg.mxu0
    %v2653 = vsel %vm374, %v2578, 0
    %2655 = vmatprep.subr.mxu0 0.0
    %2656 = vmatpush1.msra.mxu0 0.0
    %2657 = vmatprep.subr.mxu0 0.0
    %2658 = vmatpush1.msra.mxu0 0.0
    %2659 = vmatprep.subr.mxu0 0.0
    %2660 = vmatpush1.msra.mxu0 0.0
    %2661 = vmatprep.subr.mxu0 0.0
    %2662 = vmatpush1.msra.mxu0 0.0
    %2663 = vmatprep.subr.mxu0 0.0
    %2664 = vmatpush1.msra.mxu0 0.0
    %2665 = vmatprep.subr.mxu0 0.0
    %2666 = vmatpush1.msra.mxu0 0.0
    %2667 = vmatprep.subr.mxu0 0.0
    %2668 = vmatpush1.msra.mxu0 0.0
    %2669 = vmatprep.subr.mxu0 0.0
    %2670 = vmatpush1.msra.mxu0 0.0
    %2671 = vmatprep.subr.mxu0 0.0
    %2672 = vmatpush1.msra.mxu0 0.0
    %2673 = vmatprep.subr.mxu0 0.0
    %2674 = vmatpush1.msra.mxu0 0.0
    %2675 = vmatprep.subr.mxu0 0.0
    %2676 = vmatpush1.msra.mxu0 0.0
    %2677 = vmatprep.subr.mxu0 0.0
    %2678 = vmatpush1.msra.mxu0 0.0
    %2679 = vmatprep.subr.mxu0 0.0
    %2680 = vmatpush1.msra.mxu0 0.0
    %2681 = vmatprep.subr.mxu0 0.0
    %2682 = vmatpush1.msra.mxu0 0.0
    %2683 = vmatprep.subr.mxu0 0.0
    %2684 = vmatpush1.msra.mxu0 0.0
    %2685 = vmatprep.subr.mxu0 0.0
    %2686 = vmatpush1.msra.mxu0 %v2398
    %2687 = vmatprep.subr.mxu0 0.0
    %2688 = vmatpush2.msra.mxu0 0.0
    %2689 = vmatprep.subr.mxu0 0.0
    %2690 = vmatpush2.msra.mxu0 0.0
    %2691 = vmatprep.subr.mxu0 0.0
    %2692 = vmatpush2.msra.mxu0 0.0
    %2693 = vmatprep.subr.mxu0 0.0
    %2694 = vmatpush2.msra.mxu0 0.0
    %2695 = vmatprep.subr.mxu0 0.0
    %2696 = vmatpush2.msra.mxu0 0.0
    %2697 = vmatprep.subr.mxu0 0.0
    %2698 = vmatpush2.msra.mxu0 0.0
    %2699 = vmatprep.subr.mxu0 0.0
    %2700 = vmatpush2.msra.mxu0 0.0
    %2701 = vmatprep.subr.mxu0 0.0
    %2702 = vmatpush2.msra.mxu0 0.0
    %2703 = vmatprep.subr.mxu0 0.0
    %2704 = vmatpush2.msra.mxu0 0.0
    %2705 = vmatprep.subr.mxu0 0.0
    %2706 = vmatpush2.msra.mxu0 0.0
    %2707 = vmatprep.subr.mxu0 0.0
    %2708 = vmatpush2.msra.mxu0 0.0
    %2709 = vmatprep.subr.mxu0 0.0
    %2710 = vmatpush2.msra.mxu0 0.0
    %2711 = vmatprep.subr.mxu0 0.0
    %2712 = vmatpush2.msra.mxu0 0.0
    %2713 = vmatprep.subr.mxu0 0.0
    %2714 = vmatpush2.msra.mxu0 0.0
    %2715 = vmatprep.subr.mxu0 0.0
    %2716 = vmatpush2.msra.mxu0 0.0
    %2717 = vmatprep.subr.mxu0 0.0
    %2718 = vmatpush2.msra.mxu0 0.0
    %2719 = vmatprep.mubr.f32.mxu0 0.0
    %2720 = vmatmul.mubr.f32.gmra.mxu0 %v2653
    %v2721 = vpop.f32.mrf.mxu0
    %v2722 = vadd.f32 0.0, %v2721
    %v2723 = vpop.f32.mrf.mxu0
    %2724 = vdwg.mxu0
    %s2725 = scalar_lea.vmem %s4, 24
    %v2726 = vld [vmem:[%s2725] sm:$0xff]
    %v2728 = vsel %vm374, %v2649, 0
    %v2731 = vsel %vm374, %v2722, 0
    %2733 = vmatprep.subr.mxu0 0.0
    %2734 = vmatpush1.msra.mxu0 0.0
    %2735 = vmatprep.subr.mxu0 0.0
    %2736 = vmatpush1.msra.mxu0 0.0
    %2737 = vmatprep.subr.mxu0 0.0
    %2738 = vmatpush1.msra.mxu0 0.0
    %2739 = vmatprep.subr.mxu0 0.0
    %2740 = vmatpush1.msra.mxu0 0.0
    %2741 = vmatprep.subr.mxu0 0.0
    %2742 = vmatpush1.msra.mxu0 0.0
    %2743 = vmatprep.subr.mxu0 0.0
    %2744 = vmatpush1.msra.mxu0 0.0
    %2745 = vmatprep.subr.mxu0 0.0
    %2746 = vmatpush1.msra.mxu0 0.0
    %2747 = vmatprep.subr.mxu0 0.0
    %2748 = vmatpush1.msra.mxu0 0.0
    %2749 = vmatprep.subr.mxu0 0.0
    %2750 = vmatpush1.msra.mxu0 0.0
    %2751 = vmatprep.subr.mxu0 0.0
    %2752 = vmatpush1.msra.mxu0 0.0
    %2753 = vmatprep.subr.mxu0 0.0
    %2754 = vmatpush1.msra.mxu0 0.0
    %2755 = vmatprep.subr.mxu0 0.0
    %2756 = vmatpush1.msra.mxu0 0.0
    %2757 = vmatprep.subr.mxu0 0.0
    %2758 = vmatpush1.msra.mxu0 0.0
    %2759 = vmatprep.subr.mxu0 0.0
    %2760 = vmatpush1.msra.mxu0 0.0
    %2761 = vmatprep.subr.mxu0 0.0
    %2762 = vmatpush1.msra.mxu0 0.0
    %2763 = vmatprep.subr.mxu0 0.0
    %2764 = vmatpush1.msra.mxu0 %v2726
    %2765 = vmatprep.subr.mxu0 0.0
    %2766 = vmatpush2.msra.mxu0 0.0
    %2767 = vmatprep.subr.mxu0 0.0
    %2768 = vmatpush2.msra.mxu0 0.0
    %2769 = vmatprep.subr.mxu0 0.0
    %2770 = vmatpush2.msra.mxu0 0.0
    %2771 = vmatprep.subr.mxu0 0.0
    %2772 = vmatpush2.msra.mxu0 0.0
    %2773 = vmatprep.subr.mxu0 0.0
    %2774 = vmatpush2.msra.mxu0 0.0
    %2775 = vmatprep.subr.mxu0 0.0
    %2776 = vmatpush2.msra.mxu0 0.0
    %2777 = vmatprep.subr.mxu0 0.0
    %2778 = vmatpush2.msra.mxu0 0.0
    %2779 = vmatprep.subr.mxu0 0.0
    %2780 = vmatpush2.msra.mxu0 0.0
    %2781 = vmatprep.subr.mxu0 0.0
    %2782 = vmatpush2.msra.mxu0 0.0
    %2783 = vmatprep.subr.mxu0 0.0
    %2784 = vmatpush2.msra.mxu0 0.0
    %2785 = vmatprep.subr.mxu0 0.0
    %2786 = vmatpush2.msra.mxu0 0.0
    %2787 = vmatprep.subr.mxu0 0.0
    %2788 = vmatpush2.msra.mxu0 0.0
    %2789 = vmatprep.subr.mxu0 0.0
    %2790 = vmatpush2.msra.mxu0 0.0
    %2791 = vmatprep.subr.mxu0 0.0
    %2792 = vmatpush2.msra.mxu0 0.0
    %2793 = vmatprep.subr.mxu0 0.0
    %2794 = vmatpush2.msra.mxu0 0.0
    %2795 = vmatprep.subr.mxu0 0.0
    %2796 = vmatpush2.msra.mxu0 0.0
    %2797 = vmatprep.mubr.f32.mxu0 0.0
    %2798 = vmatmul.mubr.f32.gmra.mxu0 %v2728
    %v2799 = vpop.f32.mrf.mxu0
    %v2800 = vadd.f32 0.0, %v2799
    %v2801 = vpop.f32.mrf.mxu0
    %2802 = vmatprep.mubr.f32.mxu0 0.0
    %2803 = vmatmul.mubr.f32.gmra.mxu0 %v2731
    %v2804 = vpop.f32.mrf.mxu0
    %v2805 = vadd.f32 0.0, %v2804
    %v2806 = vpop.f32.mrf.mxu0
    %2807 = vdwg.mxu0
    %v2808 = vadd.f32 %v2135, %v2800
    %v2809 = vadd.f32 %v2136, %v2805
    %v2810 = vadd.f32 %v39, %v2808
    %v2811 = vadd.f32 %v40, %v2809
    %v2812 = vld [vmem:[%s6] sm:$0x1]
    %v2814 = vlaneseq
    %v2815 = vshrl.u32 %v2814, 7
    %v2816 = vsub.s32 0, %v2815
    %v2817 = vrot.slane %v2812, %v2816
    %v2819 = vadd.f32 %v2810, %v2817
    %v2820 = vadd.f32 %v2811, %v2817
    %s2821 = scalar_lea.vmem %s5, 2
    %v2822 = vld [vmem:[%s2821] sm:$0x1]
    %s2823 = scalar_lea.vmem %s5, 3
    %v2824 = vld [vmem:[%s2823] sm:$0x1]
    %v2825 = vsel %vm48, %v2819, 0.0
    %2826 = vadd.xlane.f32.xlu0 %v2825
    %v2827 = vpop.xlane.xlu0 %2826
    %v2828 = vsel %vm48, %v2820, 0.0
    %2829 = vadd.xlane.f32.xlu0 %v2828
    %v2830 = vpop.xlane.xlu0 %2829
    %v2831 = vmul.f32 %v2827, %v55
    %v2832 = vmul.f32 %v2830, %v55
    %v2833 = vsub.f32 %v2819, %v2831
    %v2834 = vsub.f32 %v2820, %v2832
    %v2835 = vmul.f32 %v2833, %v2833
    %v2836 = vmul.f32 %v2834, %v2834
    %v2837 = vsel %vm48, %v2835, 0.0
    %2838 = vadd.xlane.f32.xlu0 %v2837
    %v2839 = vpop.xlane.xlu0 %2838
    %v2840 = vsel %vm48, %v2836, 0.0
    %2841 = vadd.xlane.f32.xlu0 %v2840
    %v2842 = vpop.xlane.xlu0 %2841
    %v2843 = vmul.f32 %v2839, 0.032258064
    %v2844 = vmul.f32 %v2842, 0.032258064
    %v2845 = vrsqrt.pop %v2843
    %v2846 = vmul.f32 %v2843, %v2845
    %vm2847 = vcmp.eq.f32.partialorder %v2843, inf
    %v2848 = vsel %vm2847, %v2843, %v2846
    %vm2849 = vcmp.eq.f32.partialorder %v2843, 0.0
    %v2850 = vand.u32 %v2843, 2147483648
    %v2851 = vsel %vm2849, %v2850, %v2848
    %v2852 = vrsqrt.pop %v2844
    %v2853 = vmul.f32 %v2844, %v2852
    %vm2854 = vcmp.eq.f32.partialorder %v2844, inf
    %v2855 = vsel %vm2854, %v2844, %v2853
    %vm2856 = vcmp.eq.f32.partialorder %v2844, 0.0
    %v2857 = vand.u32 %v2844, 2147483648
    %v2858 = vsel %vm2856, %v2857, %v2855
    %v2859 = vadd.f32 %v2851, 1e-06
    %v2860 = vadd.f32 %v2858, 1e-06
    %v2861 = vrcp.pop %v2859
    %v2862 = vrcp.pop %v2860
    %v2864 = vlaneseq
    %v2865 = vshrl.u32 %v2864, 7
    %v2866 = vsub.s32 0, %v2865
    %v2867 = vrot.slane %v2822, %v2866
    %v2869 = vmul.f32 %v2867, %v2833
    %v2870 = vmul.f32 %v2867, %v2834
    %v2871 = vmul.f32 %v2869, %v2861
    %v2872 = vmul.f32 %v2870, %v2862
    %v2874 = vlaneseq
    %v2875 = vshrl.u32 %v2874, 7
    %v2876 = vsub.s32 0, %v2875
    %v2877 = vrot.slane %v2824, %v2876
    %v2879 = vadd.f32 %v2871, %v2877
    %v2880 = vadd.f32 %v2872, %v2877
    %v2881 = vld [vmem:[%s7] sm:$0xff]
    %v2882 = vld [vmem:[%s7 + $0x8] sm:$0xff]
    %v2883 = vld [vmem:[%s7 + $0x10] sm:$0xff]
    %v2884 = vld [vmem:[%s7 + $0x18] sm:$0xff]
    %v2885 = vld [vmem:[%s8] sm:$0x1]
    %v2887 = vlaneseq
    %v2888 = vshrl.u32 %v2887, 7
    %v2889 = vsub.s32 0, %v2888
    %v2890 = vrot.slane %v2885, %v2889
    %v2893 = vsel %vm48, %v2879, 0
    %v2896 = vsel %vm48, %v2880, 0
    %2898 = vmatprep.subr.mxu0 0.0
    %2899 = vmatpush1.msra.mxu0 0.0
    %2900 = vmatprep.subr.mxu0 0.0
    %2901 = vmatpush1.msra.mxu0 0.0
    %2902 = vmatprep.subr.mxu0 0.0
    %2903 = vmatpush1.msra.mxu0 0.0
    %2904 = vmatprep.subr.mxu0 0.0
    %2905 = vmatpush1.msra.mxu0 0.0
    %2906 = vmatprep.subr.mxu0 0.0
    %2907 = vmatpush1.msra.mxu0 0.0
    %2908 = vmatprep.subr.mxu0 0.0
    %2909 = vmatpush1.msra.mxu0 0.0
    %2910 = vmatprep.subr.mxu0 0.0
    %2911 = vmatpush1.msra.mxu0 0.0
    %2912 = vmatprep.subr.mxu0 0.0
    %2913 = vmatpush1.msra.mxu0 0.0
    %2914 = vmatprep.subr.mxu0 0.0
    %2915 = vmatpush1.msra.mxu0 0.0
    %2916 = vmatprep.subr.mxu0 0.0
    %2917 = vmatpush1.msra.mxu0 0.0
    %2918 = vmatprep.subr.mxu0 0.0
    %2919 = vmatpush1.msra.mxu0 0.0
    %2920 = vmatprep.subr.mxu0 0.0
    %2921 = vmatpush1.msra.mxu0 0.0
    %2922 = vmatprep.subr.mxu0 0.0
    %2923 = vmatpush1.msra.mxu0 %v2884
    %2924 = vmatprep.subr.mxu0 0.0
    %2925 = vmatpush1.msra.mxu0 %v2883
    %2926 = vmatprep.subr.mxu0 0.0
    %2927 = vmatpush1.msra.mxu0 %v2882
    %2928 = vmatprep.subr.mxu0 0.0
    %2929 = vmatpush1.msra.mxu0 %v2881
    %2930 = vmatprep.subr.mxu0 0.0
    %2931 = vmatpush2.msra.mxu0 0.0
    %2932 = vmatprep.subr.mxu0 0.0
    %2933 = vmatpush2.msra.mxu0 0.0
    %2934 = vmatprep.subr.mxu0 0.0
    %2935 = vmatpush2.msra.mxu0 0.0
    %2936 = vmatprep.subr.mxu0 0.0
    %2937 = vmatpush2.msra.mxu0 0.0
    %2938 = vmatprep.subr.mxu0 0.0
    %2939 = vmatpush2.msra.mxu0 0.0
    %2940 = vmatprep.subr.mxu0 0.0
    %2941 = vmatpush2.msra.mxu0 0.0
    %2942 = vmatprep.subr.mxu0 0.0
    %2943 = vmatpush2.msra.mxu0 0.0
    %2944 = vmatprep.subr.mxu0 0.0
    %2945 = vmatpush2.msra.mxu0 0.0
    %2946 = vmatprep.subr.mxu0 0.0
    %2947 = vmatpush2.msra.mxu0 0.0
    %2948 = vmatprep.subr.mxu0 0.0
    %2949 = vmatpush2.msra.mxu0 0.0
    %2950 = vmatprep.subr.mxu0 0.0
    %2951 = vmatpush2.msra.mxu0 0.0
    %2952 = vmatprep.subr.mxu0 0.0
    %2953 = vmatpush2.msra.mxu0 0.0
    %2954 = vmatprep.subr.mxu0 0.0
    %2955 = vmatpush2.msra.mxu0 0.0
    %2956 = vmatprep.subr.mxu0 0.0
    %2957 = vmatpush2.msra.mxu0 0.0
    %2958 = vmatprep.subr.mxu0 0.0
    %2959 = vmatpush2.msra.mxu0 0.0
    %2960 = vmatprep.subr.mxu0 0.0
    %2961 = vmatpush2.msra.mxu0 0.0
    %2962 = vmatprep.mubr.f32.mxu0 0.0
    %2963 = vmatmul.mubr.f32.gmra.mxu0 %v2893
    %v2964 = vpop.f32.mrf.mxu0
    %v2965 = vadd.f32 %v2890, %v2964
    %v2966 = vpop.f32.mrf.mxu0
    %2967 = vmatprep.mubr.f32.mxu0 0.0
    %2968 = vmatmul.mubr.f32.gmra.mxu0 %v2896
    %v2969 = vpop.f32.mrf.mxu0
    %v2970 = vadd.f32 %v2890, %v2969
    %v2971 = vpop.f32.mrf.mxu0
    %2972 = vdwg.mxu0
    %v2973 = vmax.f32 %v2965, 0.0
    %v2974 = vmax.f32 %v2970, 0.0
    %v2975 = vld [vmem:[%s9] sm:$0xff]
    %v2976 = vld [vmem:[%s9 + $0x8] sm:$0xff]
    %v2977 = vld [vmem:[%s9 + $0x10] sm:$0xff]
    %v2978 = vld [vmem:[%s9 + $0x18] sm:$0xff]
    %v2979 = vld [vmem:[%s9 + $0x20] sm:$0xff]
    %v2980 = vld [vmem:[%s9 + $0x28] sm:$0xff]
    %v2981 = vld [vmem:[%s9 + $0x30] sm:$0xff]
    %v2982 = vld [vmem:[%s9 + $0x38] sm:$0xff]
    %vm2983 = vcmask 523264
    %v2985 = vsel %vm2983, %v2973, 0
    %v2988 = vsel %vm2983, %v2974, 0
    %2990 = vmatprep.subr.mxu0 0.0
    %2991 = vmatpush1.msra.mxu0 0.0
    %2992 = vmatprep.subr.mxu0 0.0
    %2993 = vmatpush1.msra.mxu0 0.0
    %2994 = vmatprep.subr.mxu0 0.0
    %2995 = vmatpush1.msra.mxu0 0.0
    %2996 = vmatprep.subr.mxu0 0.0
    %2997 = vmatpush1.msra.mxu0 0.0
    %2998 = vmatprep.subr.mxu0 0.0
    %2999 = vmatpush1.msra.mxu0 0.0
    %3000 = vmatprep.subr.mxu0 0.0
    %3001 = vmatpush1.msra.mxu0 0.0
    %3002 = vmatprep.subr.mxu0 0.0
    %3003 = vmatpush1.msra.mxu0 0.0
    %3004 = vmatprep.subr.mxu0 0.0
    %3005 = vmatpush1.msra.mxu0 0.0
    %3006 = vmatprep.subr.mxu0 0.0
    %3007 = vmatpush1.msra.mxu0 %v2982
    %3008 = vmatprep.subr.mxu0 0.0
    %3009 = vmatpush1.msra.mxu0 %v2981
    %3010 = vmatprep.subr.mxu0 0.0
    %3011 = vmatpush1.msra.mxu0 %v2980
    %3012 = vmatprep.subr.mxu0 0.0
    %3013 = vmatpush1.msra.mxu0 %v2979
    %3014 = vmatprep.subr.mxu0 0.0
    %3015 = vmatpush1.msra.mxu0 %v2978
    %3016 = vmatprep.subr.mxu0 0.0
    %3017 = vmatpush1.msra.mxu0 %v2977
    %3018 = vmatprep.subr.mxu0 0.0
    %3019 = vmatpush1.msra.mxu0 %v2976
    %3020 = vmatprep.subr.mxu0 0.0
    %3021 = vmatpush1.msra.mxu0 %v2975
    %3022 = vmatprep.subr.mxu0 0.0
    %3023 = vmatpush2.msra.mxu0 0.0
    %3024 = vmatprep.subr.mxu0 0.0
    %3025 = vmatpush2.msra.mxu0 0.0
    %3026 = vmatprep.subr.mxu0 0.0
    %3027 = vmatpush2.msra.mxu0 0.0
    %3028 = vmatprep.subr.mxu0 0.0
    %3029 = vmatpush2.msra.mxu0 0.0
    %3030 = vmatprep.subr.mxu0 0.0
    %3031 = vmatpush2.msra.mxu0 0.0
    %3032 = vmatprep.subr.mxu0 0.0
    %3033 = vmatpush2.msra.mxu0 0.0
    %3034 = vmatprep.subr.mxu0 0.0
    %3035 = vmatpush2.msra.mxu0 0.0
    %3036 = vmatprep.subr.mxu0 0.0
    %3037 = vmatpush2.msra.mxu0 0.0
    %3038 = vmatprep.subr.mxu0 0.0
    %3039 = vmatpush2.msra.mxu0 0.0
    %3040 = vmatprep.subr.mxu0 0.0
    %3041 = vmatpush2.msra.mxu0 0.0
    %3042 = vmatprep.subr.mxu0 0.0
    %3043 = vmatpush2.msra.mxu0 0.0
    %3044 = vmatprep.subr.mxu0 0.0
    %3045 = vmatpush2.msra.mxu0 0.0
    %3046 = vmatprep.subr.mxu0 0.0
    %3047 = vmatpush2.msra.mxu0 0.0
    %3048 = vmatprep.subr.mxu0 0.0
    %3049 = vmatpush2.msra.mxu0 0.0
    %3050 = vmatprep.subr.mxu0 0.0
    %3051 = vmatpush2.msra.mxu0 0.0
    %3052 = vmatprep.subr.mxu0 0.0
    %3053 = vmatpush2.msra.mxu0 0.0
    %3054 = vmatprep.mubr.f32.mxu0 0.0
    %3055 = vmatmul.mubr.f32.gmra.mxu0 %v2985
    %v3056 = vpop.f32.mrf.mxu0
    %v3057 = vadd.f32 0.0, %v3056
    %v3058 = vpop.f32.mrf.mxu0
    %3059 = vmatprep.mubr.f32.mxu0 0.0
    %3060 = vmatmul.mubr.f32.gmra.mxu0 %v2988
    %v3061 = vpop.f32.mrf.mxu0
    %v3062 = vadd.f32 0.0, %v3061
    %v3063 = vpop.f32.mrf.mxu0
    %3064 = vdwg.mxu0
    %v3065 = vadd.f32 %v2819, %v3057
    %v3066 = vadd.f32 %v2820, %v3062
    %s3067 = scalar_lea.vmem %s6, 1
    %v3068 = vld [vmem:[%s3067] sm:$0x1]
    %v3070 = vlaneseq
    %v3071 = vshrl.u32 %v3070, 7
    %v3072 = vsub.s32 0, %v3071
    %v3073 = vrot.slane %v3068, %v3072
    %v3075 = vadd.f32 %v3065, %v3073
    %v3076 = vadd.f32 %v3066, %v3073
    %s3077 = scalar_lea.vmem %s5, 4
    %v3078 = vld [vmem:[%s3077] sm:$0x1]
    %s3079 = scalar_lea.vmem %s5, 5
    %v3080 = vld [vmem:[%s3079] sm:$0x1]
    %v3081 = vsel %vm48, %v3075, 0.0
    %3082 = vadd.xlane.f32.xlu0 %v3081
    %v3083 = vpop.xlane.xlu0 %3082
    %v3084 = vsel %vm48, %v3076, 0.0
    %3085 = vadd.xlane.f32.xlu0 %v3084
    %v3086 = vpop.xlane.xlu0 %3085
    %v3087 = vmul.f32 %v3083, %v55
    %v3088 = vmul.f32 %v3086, %v55
    %v3089 = vsub.f32 %v3075, %v3087
    %v3090 = vsub.f32 %v3076, %v3088
    %v3091 = vmul.f32 %v3089, %v3089
    %v3092 = vmul.f32 %v3090, %v3090
    %v3093 = vsel %vm48, %v3091, 0.0
    %3094 = vadd.xlane.f32.xlu0 %v3093
    %v3095 = vpop.xlane.xlu0 %3094
    %v3096 = vsel %vm48, %v3092, 0.0
    %3097 = vadd.xlane.f32.xlu0 %v3096
    %v3098 = vpop.xlane.xlu0 %3097
    %v3099 = vmul.f32 %v3095, 0.032258064
    %v3100 = vmul.f32 %v3098, 0.032258064
    %v3101 = vrsqrt.pop %v3099
    %v3102 = vmul.f32 %v3099, %v3101
    %vm3103 = vcmp.eq.f32.partialorder %v3099, inf
    %v3104 = vsel %vm3103, %v3099, %v3102
    %vm3105 = vcmp.eq.f32.partialorder %v3099, 0.0
    %v3106 = vand.u32 %v3099, 2147483648
    %v3107 = vsel %vm3105, %v3106, %v3104
    %v3108 = vrsqrt.pop %v3100
    %v3109 = vmul.f32 %v3100, %v3108
    %vm3110 = vcmp.eq.f32.partialorder %v3100, inf
    %v3111 = vsel %vm3110, %v3100, %v3109
    %vm3112 = vcmp.eq.f32.partialorder %v3100, 0.0
    %v3113 = vand.u32 %v3100, 2147483648
    %v3114 = vsel %vm3112, %v3113, %v3111
    %v3115 = vadd.f32 %v3107, 1e-06
    %v3116 = vadd.f32 %v3114, 1e-06
    %v3117 = vrcp.pop %v3115
    %v3118 = vrcp.pop %v3116
    %v3120 = vlaneseq
    %v3121 = vshrl.u32 %v3120, 7
    %v3122 = vsub.s32 0, %v3121
    %v3123 = vrot.slane %v3078, %v3122
    %v3125 = vmul.f32 %v3123, %v3089
    %v3126 = vmul.f32 %v3123, %v3090
    %v3127 = vmul.f32 %v3125, %v3117
    %v3128 = vmul.f32 %v3126, %v3118
    %v3130 = vlaneseq
    %v3131 = vshrl.u32 %v3130, 7
    %v3132 = vsub.s32 0, %v3131
    %v3133 = vrot.slane %v3080, %v3132
    %v3135 = vadd.f32 %v3127, %v3133
    %v3136 = vadd.f32 %v3128, %v3133
    %s3137 = scalar_lea.vmem %s2, 384
    %v3138 = vld [vmem:[%s3137] sm:$0xff]
    %v3139 = vld [vmem:[%s3137 + $0x8] sm:$0xff]
    %v3140 = vld [vmem:[%s3137 + $0x10] sm:$0xff]
    %v3141 = vld [vmem:[%s3137 + $0x18] sm:$0xff]
    %s3142 = scalar_lea.vmem %s3, 12
    %v3143 = vld [vmem:[%s3142] sm:$0x1]
    %v3145 = vlaneseq
    %v3146 = vshrl.u32 %v3145, 7
    %v3147 = vsub.s32 0, %v3146
    %v3148 = vrot.slane %v3143, %v3147
    %v3151 = vsel %vm48, %v3135, 0
    %v3154 = vsel %vm48, %v3136, 0
    %3156 = vmatprep.subr.mxu0 0.0
    %3157 = vmatpush1.msra.mxu0 0.0
    %3158 = vmatprep.subr.mxu0 0.0
    %3159 = vmatpush1.msra.mxu0 0.0
    %3160 = vmatprep.subr.mxu0 0.0
    %3161 = vmatpush1.msra.mxu0 0.0
    %3162 = vmatprep.subr.mxu0 0.0
    %3163 = vmatpush1.msra.mxu0 0.0
    %3164 = vmatprep.subr.mxu0 0.0
    %3165 = vmatpush1.msra.mxu0 0.0
    %3166 = vmatprep.subr.mxu0 0.0
    %3167 = vmatpush1.msra.mxu0 0.0
    %3168 = vmatprep.subr.mxu0 0.0
    %3169 = vmatpush1.msra.mxu0 0.0
    %3170 = vmatprep.subr.mxu0 0.0
    %3171 = vmatpush1.msra.mxu0 0.0
    %3172 = vmatprep.subr.mxu0 0.0
    %3173 = vmatpush1.msra.mxu0 0.0
    %3174 = vmatprep.subr.mxu0 0.0
    %3175 = vmatpush1.msra.mxu0 0.0
    %3176 = vmatprep.subr.mxu0 0.0
    %3177 = vmatpush1.msra.mxu0 0.0
    %3178 = vmatprep.subr.mxu0 0.0
    %3179 = vmatpush1.msra.mxu0 0.0
    %3180 = vmatprep.subr.mxu0 0.0
    %3181 = vmatpush1.msra.mxu0 %v3141
    %3182 = vmatprep.subr.mxu0 0.0
    %3183 = vmatpush1.msra.mxu0 %v3140
    %3184 = vmatprep.subr.mxu0 0.0
    %3185 = vmatpush1.msra.mxu0 %v3139
    %3186 = vmatprep.subr.mxu0 0.0
    %3187 = vmatpush1.msra.mxu0 %v3138
    %3188 = vmatprep.subr.mxu0 0.0
    %3189 = vmatpush2.msra.mxu0 0.0
    %3190 = vmatprep.subr.mxu0 0.0
    %3191 = vmatpush2.msra.mxu0 0.0
    %3192 = vmatprep.subr.mxu0 0.0
    %3193 = vmatpush2.msra.mxu0 0.0
    %3194 = vmatprep.subr.mxu0 0.0
    %3195 = vmatpush2.msra.mxu0 0.0
    %3196 = vmatprep.subr.mxu0 0.0
    %3197 = vmatpush2.msra.mxu0 0.0
    %3198 = vmatprep.subr.mxu0 0.0
    %3199 = vmatpush2.msra.mxu0 0.0
    %3200 = vmatprep.subr.mxu0 0.0
    %3201 = vmatpush2.msra.mxu0 0.0
    %3202 = vmatprep.subr.mxu0 0.0
    %3203 = vmatpush2.msra.mxu0 0.0
    %3204 = vmatprep.subr.mxu0 0.0
    %3205 = vmatpush2.msra.mxu0 0.0
    %3206 = vmatprep.subr.mxu0 0.0
    %3207 = vmatpush2.msra.mxu0 0.0
    %3208 = vmatprep.subr.mxu0 0.0
    %3209 = vmatpush2.msra.mxu0 0.0
    %3210 = vmatprep.subr.mxu0 0.0
    %3211 = vmatpush2.msra.mxu0 0.0
    %3212 = vmatprep.subr.mxu0 0.0
    %3213 = vmatpush2.msra.mxu0 0.0
    %3214 = vmatprep.subr.mxu0 0.0
    %3215 = vmatpush2.msra.mxu0 0.0
    %3216 = vmatprep.subr.mxu0 0.0
    %3217 = vmatpush2.msra.mxu0 0.0
    %3218 = vmatprep.subr.mxu0 0.0
    %3219 = vmatpush2.msra.mxu0 0.0
    %3220 = vmatprep.mubr.f32.mxu0 0.0
    %3221 = vmatmul.mubr.f32.gmra.mxu0 %v3151
    %v3222 = vpop.f32.mrf.mxu0
    %v3223 = vadd.f32 %v3148, %v3222
    %v3224 = vpop.f32.mrf.mxu0
    %3225 = vmatprep.mubr.f32.mxu0 0.0
    %3226 = vmatmul.mubr.f32.gmra.mxu0 %v3154
    %v3227 = vpop.f32.mrf.mxu0
    %v3228 = vadd.f32 %v3148, %v3227
    %v3229 = vpop.f32.mrf.mxu0
    %3230 = vdwg.mxu0
    %s3231 = scalar_lea.vmem %s2, 512
    %v3232 = vld [vmem:[%s3231] sm:$0xff]
    %v3233 = vld [vmem:[%s3231 + $0x8] sm:$0xff]
    %v3234 = vld [vmem:[%s3231 + $0x10] sm:$0xff]
    %v3235 = vld [vmem:[%s3231 + $0x18] sm:$0xff]
    %s3236 = scalar_lea.vmem %s3, 16
    %v3237 = vld [vmem:[%s3236] sm:$0x1]
    %v3239 = vlaneseq
    %v3240 = vshrl.u32 %v3239, 7
    %v3241 = vsub.s32 0, %v3240
    %v3242 = vrot.slane %v3237, %v3241
    %3244 = vmatprep.subr.mxu0 0.0
    %3245 = vmatpush1.msra.mxu0 0.0
    %3246 = vmatprep.subr.mxu0 0.0
    %3247 = vmatpush1.msra.mxu0 0.0
    %3248 = vmatprep.subr.mxu0 0.0
    %3249 = vmatpush1.msra.mxu0 0.0
    %3250 = vmatprep.subr.mxu0 0.0
    %3251 = vmatpush1.msra.mxu0 0.0
    %3252 = vmatprep.subr.mxu0 0.0
    %3253 = vmatpush1.msra.mxu0 0.0
    %3254 = vmatprep.subr.mxu0 0.0
    %3255 = vmatpush1.msra.mxu0 0.0
    %3256 = vmatprep.subr.mxu0 0.0
    %3257 = vmatpush1.msra.mxu0 0.0
    %3258 = vmatprep.subr.mxu0 0.0
    %3259 = vmatpush1.msra.mxu0 0.0
    %3260 = vmatprep.subr.mxu0 0.0
    %3261 = vmatpush1.msra.mxu0 0.0
    %3262 = vmatprep.subr.mxu0 0.0
    %3263 = vmatpush1.msra.mxu0 0.0
    %3264 = vmatprep.subr.mxu0 0.0
    %3265 = vmatpush1.msra.mxu0 0.0
    %3266 = vmatprep.subr.mxu0 0.0
    %3267 = vmatpush1.msra.mxu0 0.0
    %3268 = vmatprep.subr.mxu0 0.0
    %3269 = vmatpush1.msra.mxu0 %v3235
    %3270 = vmatprep.subr.mxu0 0.0
    %3271 = vmatpush1.msra.mxu0 %v3234
    %3272 = vmatprep.subr.mxu0 0.0
    %3273 = vmatpush1.msra.mxu0 %v3233
    %3274 = vmatprep.subr.mxu0 0.0
    %3275 = vmatpush1.msra.mxu0 %v3232
    %3276 = vmatprep.subr.mxu0 0.0
    %3277 = vmatpush2.msra.mxu0 0.0
    %3278 = vmatprep.subr.mxu0 0.0
    %3279 = vmatpush2.msra.mxu0 0.0
    %3280 = vmatprep.subr.mxu0 0.0
    %3281 = vmatpush2.msra.mxu0 0.0
    %3282 = vmatprep.subr.mxu0 0.0
    %3283 = vmatpush2.msra.mxu0 0.0
    %3284 = vmatprep.subr.mxu0 0.0
    %3285 = vmatpush2.msra.mxu0 0.0
    %3286 = vmatprep.subr.mxu0 0.0
    %3287 = vmatpush2.msra.mxu0 0.0
    %3288 = vmatprep.subr.mxu0 0.0
    %3289 = vmatpush2.msra.mxu0 0.0
    %3290 = vmatprep.subr.mxu0 0.0
    %3291 = vmatpush2.msra.mxu0 0.0
    %3292 = vmatprep.subr.mxu0 0.0
    %3293 = vmatpush2.msra.mxu0 0.0
    %3294 = vmatprep.subr.mxu0 0.0
    %3295 = vmatpush2.msra.mxu0 0.0
    %3296 = vmatprep.subr.mxu0 0.0
    %3297 = vmatpush2.msra.mxu0 0.0
    %3298 = vmatprep.subr.mxu0 0.0
    %3299 = vmatpush2.msra.mxu0 0.0
    %3300 = vmatprep.subr.mxu0 0.0
    %3301 = vmatpush2.msra.mxu0 0.0
    %3302 = vmatprep.subr.mxu0 0.0
    %3303 = vmatpush2.msra.mxu0 0.0
    %3304 = vmatprep.subr.mxu0 0.0
    %3305 = vmatpush2.msra.mxu0 0.0
    %3306 = vmatprep.subr.mxu0 0.0
    %3307 = vmatpush2.msra.mxu0 0.0
    %3308 = vmatprep.mubr.f32.mxu0 0.0
    %3309 = vmatmul.mubr.f32.gmra.mxu0 %v3151
    %v3310 = vpop.f32.mrf.mxu0
    %v3311 = vadd.f32 %v3242, %v3310
    %v3312 = vpop.f32.mrf.mxu0
    %3313 = vmatprep.mubr.f32.mxu0 0.0
    %3314 = vmatmul.mubr.f32.gmra.mxu0 %v3154
    %v3315 = vpop.f32.mrf.mxu0
    %v3316 = vadd.f32 %v3242, %v3315
    %v3317 = vpop.f32.mrf.mxu0
    %3318 = vdwg.mxu0
    %s3319 = scalar_lea.vmem %s2, 640
    %v3320 = vld [vmem:[%s3319] sm:$0xff]
    %v3321 = vld [vmem:[%s3319 + $0x8] sm:$0xff]
    %v3322 = vld [vmem:[%s3319 + $0x10] sm:$0xff]
    %v3323 = vld [vmem:[%s3319 + $0x18] sm:$0xff]
    %s3324 = scalar_lea.vmem %s3, 20
    %v3325 = vld [vmem:[%s3324] sm:$0x1]
    %v3327 = vlaneseq
    %v3328 = vshrl.u32 %v3327, 7
    %v3329 = vsub.s32 0, %v3328
    %v3330 = vrot.slane %v3325, %v3329
    %3332 = vmatprep.subr.mxu0 0.0
    %3333 = vmatpush1.msra.mxu0 0.0
    %3334 = vmatprep.subr.mxu0 0.0
    %3335 = vmatpush1.msra.mxu0 0.0
    %3336 = vmatprep.subr.mxu0 0.0
    %3337 = vmatpush1.msra.mxu0 0.0
    %3338 = vmatprep.subr.mxu0 0.0
    %3339 = vmatpush1.msra.mxu0 0.0
    %3340 = vmatprep.subr.mxu0 0.0
    %3341 = vmatpush1.msra.mxu0 0.0
    %3342 = vmatprep.subr.mxu0 0.0
    %3343 = vmatpush1.msra.mxu0 0.0
    %3344 = vmatprep.subr.mxu0 0.0
    %3345 = vmatpush1.msra.mxu0 0.0
    %3346 = vmatprep.subr.mxu0 0.0
    %3347 = vmatpush1.msra.mxu0 0.0
    %3348 = vmatprep.subr.mxu0 0.0
    %3349 = vmatpush1.msra.mxu0 0.0
    %3350 = vmatprep.subr.mxu0 0.0
    %3351 = vmatpush1.msra.mxu0 0.0
    %3352 = vmatprep.subr.mxu0 0.0
    %3353 = vmatpush1.msra.mxu0 0.0
    %3354 = vmatprep.subr.mxu0 0.0
    %3355 = vmatpush1.msra.mxu0 0.0
    %3356 = vmatprep.subr.mxu0 0.0
    %3357 = vmatpush1.msra.mxu0 %v3323
    %3358 = vmatprep.subr.mxu0 0.0
    %3359 = vmatpush1.msra.mxu0 %v3322
    %3360 = vmatprep.subr.mxu0 0.0
    %3361 = vmatpush1.msra.mxu0 %v3321
    %3362 = vmatprep.subr.mxu0 0.0
    %3363 = vmatpush1.msra.mxu0 %v3320
    %3364 = vmatprep.subr.mxu0 0.0
    %3365 = vmatpush2.msra.mxu0 0.0
    %3366 = vmatprep.subr.mxu0 0.0
    %3367 = vmatpush2.msra.mxu0 0.0
    %3368 = vmatprep.subr.mxu0 0.0
    %3369 = vmatpush2.msra.mxu0 0.0
    %3370 = vmatprep.subr.mxu0 0.0
    %3371 = vmatpush2.msra.mxu0 0.0
    %3372 = vmatprep.subr.mxu0 0.0
    %3373 = vmatpush2.msra.mxu0 0.0
    %3374 = vmatprep.subr.mxu0 0.0
    %3375 = vmatpush2.msra.mxu0 0.0
    %3376 = vmatprep.subr.mxu0 0.0
    %3377 = vmatpush2.msra.mxu0 0.0
    %3378 = vmatprep.subr.mxu0 0.0
    %3379 = vmatpush2.msra.mxu0 0.0
    %3380 = vmatprep.subr.mxu0 0.0
    %3381 = vmatpush2.msra.mxu0 0.0
    %3382 = vmatprep.subr.mxu0 0.0
    %3383 = vmatpush2.msra.mxu0 0.0
    %3384 = vmatprep.subr.mxu0 0.0
    %3385 = vmatpush2.msra.mxu0 0.0
    %3386 = vmatprep.subr.mxu0 0.0
    %3387 = vmatpush2.msra.mxu0 0.0
    %3388 = vmatprep.subr.mxu0 0.0
    %3389 = vmatpush2.msra.mxu0 0.0
    %3390 = vmatprep.subr.mxu0 0.0
    %3391 = vmatpush2.msra.mxu0 0.0
    %3392 = vmatprep.subr.mxu0 0.0
    %3393 = vmatpush2.msra.mxu0 0.0
    %3394 = vmatprep.subr.mxu0 0.0
    %3395 = vmatpush2.msra.mxu0 0.0
    %3396 = vmatprep.mubr.f32.mxu0 0.0
    %3397 = vmatmul.mubr.f32.gmra.mxu0 %v3151
    %v3398 = vpop.f32.mrf.mxu0
    %v3399 = vadd.f32 %v3330, %v3398
    %v3400 = vpop.f32.mrf.mxu0
    %3401 = vmatprep.mubr.f32.mxu0 0.0
    %3402 = vmatmul.mubr.f32.gmra.mxu0 %v3154
    %v3403 = vpop.f32.mrf.mxu0
    %v3404 = vadd.f32 %v3330, %v3403
    %v3405 = vpop.f32.mrf.mxu0
    %3406 = vdwg.mxu0
    %v3408 = vsel %vm374, %v3223, 0
    %v3411 = vsel %vm374, %v3311, 0
    %3413 = vmatprep.subr.mxu0 0.0
    %3414 = vmatpush1.xpose.msra.mxu0 0.0
    %3415 = vmatprep.subr.mxu0 0.0
    %3416 = vmatpush1.xpose.msra.mxu0 0.0
    %3417 = vmatprep.subr.mxu0 0.0
    %3418 = vmatpush1.xpose.msra.mxu0 0.0
    %3419 = vmatprep.subr.mxu0 0.0
    %3420 = vmatpush1.xpose.msra.mxu0 0.0
    %3421 = vmatprep.subr.mxu0 0.0
    %3422 = vmatpush1.xpose.msra.mxu0 0.0
    %3423 = vmatprep.subr.mxu0 0.0
    %3424 = vmatpush1.xpose.msra.mxu0 0.0
    %3425 = vmatprep.subr.mxu0 0.0
    %3426 = vmatpush1.xpose.msra.mxu0 0.0
    %3427 = vmatprep.subr.mxu0 0.0
    %3428 = vmatpush1.xpose.msra.mxu0 0.0
    %3429 = vmatprep.subr.mxu0 0.0
    %3430 = vmatpush1.xpose.msra.mxu0 0.0
    %3431 = vmatprep.subr.mxu0 0.0
    %3432 = vmatpush1.xpose.msra.mxu0 0.0
    %3433 = vmatprep.subr.mxu0 0.0
    %3434 = vmatpush1.xpose.msra.mxu0 0.0
    %3435 = vmatprep.subr.mxu0 0.0
    %3436 = vmatpush1.xpose.msra.mxu0 0.0
    %3437 = vmatprep.subr.mxu0 0.0
    %3438 = vmatpush1.xpose.msra.mxu0 0.0
    %3439 = vmatprep.subr.mxu0 0.0
    %3440 = vmatpush1.xpose.msra.mxu0 0.0
    %3441 = vmatprep.subr.mxu0 0.0
    %3442 = vmatpush1.xpose.msra.mxu0 0.0
    %3443 = vmatprep.subr.mxu0 0.0
    %3444 = vmatpush1.xpose.msra.mxu0 %v3411
    %3445 = vmatprep.subr.mxu0 0.0
    %3446 = vmatpush2.xpose.msra.mxu0 0.0
    %3447 = vmatprep.subr.mxu0 0.0
    %3448 = vmatpush2.xpose.msra.mxu0 0.0
    %3449 = vmatprep.subr.mxu0 0.0
    %3450 = vmatpush2.xpose.msra.mxu0 0.0
    %3451 = vmatprep.subr.mxu0 0.0
    %3452 = vmatpush2.xpose.msra.mxu0 0.0
    %3453 = vmatprep.subr.mxu0 0.0
    %3454 = vmatpush2.xpose.msra.mxu0 0.0
    %3455 = vmatprep.subr.mxu0 0.0
    %3456 = vmatpush2.xpose.msra.mxu0 0.0
    %3457 = vmatprep.subr.mxu0 0.0
    %3458 = vmatpush2.xpose.msra.mxu0 0.0
    %3459 = vmatprep.subr.mxu0 0.0
    %3460 = vmatpush2.xpose.msra.mxu0 0.0
    %3461 = vmatprep.subr.mxu0 0.0
    %3462 = vmatpush2.xpose.msra.mxu0 0.0
    %3463 = vmatprep.subr.mxu0 0.0
    %3464 = vmatpush2.xpose.msra.mxu0 0.0
    %3465 = vmatprep.subr.mxu0 0.0
    %3466 = vmatpush2.xpose.msra.mxu0 0.0
    %3467 = vmatprep.subr.mxu0 0.0
    %3468 = vmatpush2.xpose.msra.mxu0 0.0
    %3469 = vmatprep.subr.mxu0 0.0
    %3470 = vmatpush2.xpose.msra.mxu0 0.0
    %3471 = vmatprep.subr.mxu0 0.0
    %3472 = vmatpush2.xpose.msra.mxu0 0.0
    %3473 = vmatprep.subr.mxu0 0.0
    %3474 = vmatpush2.xpose.msra.mxu0 0.0
    %3475 = vmatprep.subr.mxu0 0.0
    %3476 = vmatpush2.xpose.msra.mxu0 0.0
    %3477 = vmatprep.mubr.f32.mxu0 0.0
    %3478 = vmatmul.mubr.f32.gmra.mxu0 %v3408
    %v3479 = vpop.f32.mrf.mxu0
    %v3480 = vadd.f32 0.0, %v3479
    %v3481 = vpop.f32.mrf.mxu0
    %3482 = vdwg.mxu0
    %v3484 = vsel %vm374, %v3228, 0
    %v3487 = vsel %vm374, %v3316, 0
    %3489 = vmatprep.subr.mxu0 0.0
    %3490 = vmatpush1.xpose.msra.mxu0 0.0
    %3491 = vmatprep.subr.mxu0 0.0
    %3492 = vmatpush1.xpose.msra.mxu0 0.0
    %3493 = vmatprep.subr.mxu0 0.0
    %3494 = vmatpush1.xpose.msra.mxu0 0.0
    %3495 = vmatprep.subr.mxu0 0.0
    %3496 = vmatpush1.xpose.msra.mxu0 0.0
    %3497 = vmatprep.subr.mxu0 0.0
    %3498 = vmatpush1.xpose.msra.mxu0 0.0
    %3499 = vmatprep.subr.mxu0 0.0
    %3500 = vmatpush1.xpose.msra.mxu0 0.0
    %3501 = vmatprep.subr.mxu0 0.0
    %3502 = vmatpush1.xpose.msra.mxu0 0.0
    %3503 = vmatprep.subr.mxu0 0.0
    %3504 = vmatpush1.xpose.msra.mxu0 0.0
    %3505 = vmatprep.subr.mxu0 0.0
    %3506 = vmatpush1.xpose.msra.mxu0 0.0
    %3507 = vmatprep.subr.mxu0 0.0
    %3508 = vmatpush1.xpose.msra.mxu0 0.0
    %3509 = vmatprep.subr.mxu0 0.0
    %3510 = vmatpush1.xpose.msra.mxu0 0.0
    %3511 = vmatprep.subr.mxu0 0.0
    %3512 = vmatpush1.xpose.msra.mxu0 0.0
    %3513 = vmatprep.subr.mxu0 0.0
    %3514 = vmatpush1.xpose.msra.mxu0 0.0
    %3515 = vmatprep.subr.mxu0 0.0
    %3516 = vmatpush1.xpose.msra.mxu0 0.0
    %3517 = vmatprep.subr.mxu0 0.0
    %3518 = vmatpush1.xpose.msra.mxu0 0.0
    %3519 = vmatprep.subr.mxu0 0.0
    %3520 = vmatpush1.xpose.msra.mxu0 %v3487
    %3521 = vmatprep.subr.mxu0 0.0
    %3522 = vmatpush2.xpose.msra.mxu0 0.0
    %3523 = vmatprep.subr.mxu0 0.0
    %3524 = vmatpush2.xpose.msra.mxu0 0.0
    %3525 = vmatprep.subr.mxu0 0.0
    %3526 = vmatpush2.xpose.msra.mxu0 0.0
    %3527 = vmatprep.subr.mxu0 0.0
    %3528 = vmatpush2.xpose.msra.mxu0 0.0
    %3529 = vmatprep.subr.mxu0 0.0
    %3530 = vmatpush2.xpose.msra.mxu0 0.0
    %3531 = vmatprep.subr.mxu0 0.0
    %3532 = vmatpush2.xpose.msra.mxu0 0.0
    %3533 = vmatprep.subr.mxu0 0.0
    %3534 = vmatpush2.xpose.msra.mxu0 0.0
    %3535 = vmatprep.subr.mxu0 0.0
    %3536 = vmatpush2.xpose.msra.mxu0 0.0
    %3537 = vmatprep.subr.mxu0 0.0
    %3538 = vmatpush2.xpose.msra.mxu0 0.0
    %3539 = vmatprep.subr.mxu0 0.0
    %3540 = vmatpush2.xpose.msra.mxu0 0.0
    %3541 = vmatprep.subr.mxu0 0.0
    %3542 = vmatpush2.xpose.msra.mxu0 0.0
    %3543 = vmatprep.subr.mxu0 0.0
    %3544 = vmatpush2.xpose.msra.mxu0 0.0
    %3545 = vmatprep.subr.mxu0 0.0
    %3546 = vmatpush2.xpose.msra.mxu0 0.0
    %3547 = vmatprep.subr.mxu0 0.0
    %3548 = vmatpush2.xpose.msra.mxu0 0.0
    %3549 = vmatprep.subr.mxu0 0.0
    %3550 = vmatpush2.xpose.msra.mxu0 0.0
    %3551 = vmatprep.subr.mxu0 0.0
    %3552 = vmatpush2.xpose.msra.mxu0 0.0
    %3553 = vmatprep.mubr.f32.mxu0 0.0
    %3554 = vmatmul.mubr.f32.gmra.mxu0 %v3484
    %v3555 = vpop.f32.mrf.mxu0
    %v3556 = vadd.f32 0.0, %v3555
    %v3557 = vpop.f32.mrf.mxu0
    %3558 = vdwg.mxu0
    %v3559 = vmul.f32 %v3480, 0.35355338
    %v3560 = vmul.f32 %v3556, 0.35355338
    %v3561 = vsel %vm539, %v3559, -1e+09
    %v3562 = vsel %vm540, %v3560, -1e+09
    %v3563 = vsel %vm374, %v3561, -inf
    %3564 = vmax.xlane.f32.xlu0 %v3563
    %v3565 = vpop.xlane.xlu0 %3564
    %v3566 = vsel %vm374, %v3562, -inf
    %3567 = vmax.xlane.f32.xlu0 %v3566
    %v3568 = vpop.xlane.xlu0 %3567
    %v3569 = vsub.f32 %v3561, %v3565
    %v3570 = vsub.f32 %v3562, %v3568
    %v3571 = vmul.f32 %v3569, 1.442695
    %v3572 = vpow.pop %v3571
    %v3573 = vmul.f32 %v3570, 1.442695
    %v3574 = vpow.pop %v3573
    %v3575 = vsel %vm374, %v3572, 0.0
    %3576 = vadd.xlane.f32.xlu0 %v3575
    %v3577 = vpop.xlane.xlu0 %3576
    %v3578 = vsel %vm374, %v3574, 0.0
    %3579 = vadd.xlane.f32.xlu0 %v3578
    %v3580 = vpop.xlane.xlu0 %3579
    %v3581 = vrcp.pop %v3577
    %v3582 = vrcp.pop %v3580
    %v3583 = vmul.f32 %v3572, %v3581
    %v3584 = vmul.f32 %v3574, %v3582
    %v3586 = vsel %vm374, %v3583, 0
    %3588 = vmatprep.subr.mxu0 0.0
    %3589 = vmatpush1.msra.mxu0 0.0
    %3590 = vmatprep.subr.mxu0 0.0
    %3591 = vmatpush1.msra.mxu0 0.0
    %3592 = vmatprep.subr.mxu0 0.0
    %3593 = vmatpush1.msra.mxu0 0.0
    %3594 = vmatprep.subr.mxu0 0.0
    %3595 = vmatpush1.msra.mxu0 0.0
    %3596 = vmatprep.subr.mxu0 0.0
    %3597 = vmatpush1.msra.mxu0 0.0
    %3598 = vmatprep.subr.mxu0 0.0
    %3599 = vmatpush1.msra.mxu0 0.0
    %3600 = vmatprep.subr.mxu0 0.0
    %3601 = vmatpush1.msra.mxu0 0.0
    %3602 = vmatprep.subr.mxu0 0.0
    %3603 = vmatpush1.msra.mxu0 0.0
    %3604 = vmatprep.subr.mxu0 0.0
    %3605 = vmatpush1.msra.mxu0 0.0
    %3606 = vmatprep.subr.mxu0 0.0
    %3607 = vmatpush1.msra.mxu0 0.0
    %3608 = vmatprep.subr.mxu0 0.0
    %3609 = vmatpush1.msra.mxu0 0.0
    %3610 = vmatprep.subr.mxu0 0.0
    %3611 = vmatpush1.msra.mxu0 0.0
    %3612 = vmatprep.subr.mxu0 0.0
    %3613 = vmatpush1.msra.mxu0 0.0
    %3614 = vmatprep.subr.mxu0 0.0
    %3615 = vmatpush1.msra.mxu0 0.0
    %3616 = vmatprep.subr.mxu0 0.0
    %3617 = vmatpush1.msra.mxu0 0.0
    %3618 = vmatprep.subr.mxu0 0.0
    %3619 = vmatpush1.msra.mxu0 %v3399
    %3620 = vmatprep.subr.mxu0 0.0
    %3621 = vmatpush2.msra.mxu0 0.0
    %3622 = vmatprep.subr.mxu0 0.0
    %3623 = vmatpush2.msra.mxu0 0.0
    %3624 = vmatprep.subr.mxu0 0.0
    %3625 = vmatpush2.msra.mxu0 0.0
    %3626 = vmatprep.subr.mxu0 0.0
    %3627 = vmatpush2.msra.mxu0 0.0
    %3628 = vmatprep.subr.mxu0 0.0
    %3629 = vmatpush2.msra.mxu0 0.0
    %3630 = vmatprep.subr.mxu0 0.0
    %3631 = vmatpush2.msra.mxu0 0.0
    %3632 = vmatprep.subr.mxu0 0.0
    %3633 = vmatpush2.msra.mxu0 0.0
    %3634 = vmatprep.subr.mxu0 0.0
    %3635 = vmatpush2.msra.mxu0 0.0
    %3636 = vmatprep.subr.mxu0 0.0
    %3637 = vmatpush2.msra.mxu0 0.0
    %3638 = vmatprep.subr.mxu0 0.0
    %3639 = vmatpush2.msra.mxu0 0.0
    %3640 = vmatprep.subr.mxu0 0.0
    %3641 = vmatpush2.msra.mxu0 0.0
    %3642 = vmatprep.subr.mxu0 0.0
    %3643 = vmatpush2.msra.mxu0 0.0
    %3644 = vmatprep.subr.mxu0 0.0
    %3645 = vmatpush2.msra.mxu0 0.0
    %3646 = vmatprep.subr.mxu0 0.0
    %3647 = vmatpush2.msra.mxu0 0.0
    %3648 = vmatprep.subr.mxu0 0.0
    %3649 = vmatpush2.msra.mxu0 0.0
    %3650 = vmatprep.subr.mxu0 0.0
    %3651 = vmatpush2.msra.mxu0 0.0
    %3652 = vmatprep.mubr.f32.mxu0 0.0
    %3653 = vmatmul.mubr.f32.gmra.mxu0 %v3586
    %v3654 = vpop.f32.mrf.mxu0
    %v3655 = vadd.f32 0.0, %v3654
    %v3656 = vpop.f32.mrf.mxu0
    %3657 = vdwg.mxu0
    %v3659 = vsel %vm374, %v3584, 0
    %3661 = vmatprep.subr.mxu0 0.0
    %3662 = vmatpush1.msra.mxu0 0.0
    %3663 = vmatprep.subr.mxu0 0.0
    %3664 = vmatpush1.msra.mxu0 0.0
    %3665 = vmatprep.subr.mxu0 0.0
    %3666 = vmatpush1.msra.mxu0 0.0
    %3667 = vmatprep.subr.mxu0 0.0
    %3668 = vmatpush1.msra.mxu0 0.0
    %3669 = vmatprep.subr.mxu0 0.0
    %3670 = vmatpush1.msra.mxu0 0.0
    %3671 = vmatprep.subr.mxu0 0.0
    %3672 = vmatpush1.msra.mxu0 0.0
    %3673 = vmatprep.subr.mxu0 0.0
    %3674 = vmatpush1.msra.mxu0 0.0
    %3675 = vmatprep.subr.mxu0 0.0
    %3676 = vmatpush1.msra.mxu0 0.0
    %3677 = vmatprep.subr.mxu0 0.0
    %3678 = vmatpush1.msra.mxu0 0.0
    %3679 = vmatprep.subr.mxu0 0.0
    %3680 = vmatpush1.msra.mxu0 0.0
    %3681 = vmatprep.subr.mxu0 0.0
    %3682 = vmatpush1.msra.mxu0 0.0
    %3683 = vmatprep.subr.mxu0 0.0
    %3684 = vmatpush1.msra.mxu0 0.0
    %3685 = vmatprep.subr.mxu0 0.0
    %3686 = vmatpush1.msra.mxu0 0.0
    %3687 = vmatprep.subr.mxu0 0.0
    %3688 = vmatpush1.msra.mxu0 0.0
    %3689 = vmatprep.subr.mxu0 0.0
    %3690 = vmatpush1.msra.mxu0 0.0
    %3691 = vmatprep.subr.mxu0 0.0
    %3692 = vmatpush1.msra.mxu0 %v3404
    %3693 = vmatprep.subr.mxu0 0.0
    %3694 = vmatpush2.msra.mxu0 0.0
    %3695 = vmatprep.subr.mxu0 0.0
    %3696 = vmatpush2.msra.mxu0 0.0
    %3697 = vmatprep.subr.mxu0 0.0
    %3698 = vmatpush2.msra.mxu0 0.0
    %3699 = vmatprep.subr.mxu0 0.0
    %3700 = vmatpush2.msra.mxu0 0.0
    %3701 = vmatprep.subr.mxu0 0.0
    %3702 = vmatpush2.msra.mxu0 0.0
    %3703 = vmatprep.subr.mxu0 0.0
    %3704 = vmatpush2.msra.mxu0 0.0
    %3705 = vmatprep.subr.mxu0 0.0
    %3706 = vmatpush2.msra.mxu0 0.0
    %3707 = vmatprep.subr.mxu0 0.0
    %3708 = vmatpush2.msra.mxu0 0.0
    %3709 = vmatprep.subr.mxu0 0.0
    %3710 = vmatpush2.msra.mxu0 0.0
    %3711 = vmatprep.subr.mxu0 0.0
    %3712 = vmatpush2.msra.mxu0 0.0
    %3713 = vmatprep.subr.mxu0 0.0
    %3714 = vmatpush2.msra.mxu0 0.0
    %3715 = vmatprep.subr.mxu0 0.0
    %3716 = vmatpush2.msra.mxu0 0.0
    %3717 = vmatprep.subr.mxu0 0.0
    %3718 = vmatpush2.msra.mxu0 0.0
    %3719 = vmatprep.subr.mxu0 0.0
    %3720 = vmatpush2.msra.mxu0 0.0
    %3721 = vmatprep.subr.mxu0 0.0
    %3722 = vmatpush2.msra.mxu0 0.0
    %3723 = vmatprep.subr.mxu0 0.0
    %3724 = vmatpush2.msra.mxu0 0.0
    %3725 = vmatprep.mubr.f32.mxu0 0.0
    %3726 = vmatmul.mubr.f32.gmra.mxu0 %v3659
    %v3727 = vpop.f32.mrf.mxu0
    %v3728 = vadd.f32 0.0, %v3727
    %v3729 = vpop.f32.mrf.mxu0
    %3730 = vdwg.mxu0
    %s3731 = scalar_lea.vmem %s4, 32
    %v3732 = vld [vmem:[%s3731] sm:$0xff]
    %s3733 = scalar_lea.vmem %s2, 416
    %v3734 = vld [vmem:[%s3733] sm:$0xff]
    %v3735 = vld [vmem:[%s3733 + $0x8] sm:$0xff]
    %v3736 = vld [vmem:[%s3733 + $0x10] sm:$0xff]
    %v3737 = vld [vmem:[%s3733 + $0x18] sm:$0xff]
    %s3738 = scalar_lea.vmem %s3, 13
    %v3739 = vld [vmem:[%s3738] sm:$0x1]
    %v3741 = vlaneseq
    %v3742 = vshrl.u32 %v3741, 7
    %v3743 = vsub.s32 0, %v3742
    %v3744 = vrot.slane %v3739, %v3743
    %3746 = vmatprep.subr.mxu0 0.0
    %3747 = vmatpush1.msra.mxu0 0.0
    %3748 = vmatprep.subr.mxu0 0.0
    %3749 = vmatpush1.msra.mxu0 0.0
    %3750 = vmatprep.subr.mxu0 0.0
    %3751 = vmatpush1.msra.mxu0 0.0
    %3752 = vmatprep.subr.mxu0 0.0
    %3753 = vmatpush1.msra.mxu0 0.0
    %3754 = vmatprep.subr.mxu0 0.0
    %3755 = vmatpush1.msra.mxu0 0.0
    %3756 = vmatprep.subr.mxu0 0.0
    %3757 = vmatpush1.msra.mxu0 0.0
    %3758 = vmatprep.subr.mxu0 0.0
    %3759 = vmatpush1.msra.mxu0 0.0
    %3760 = vmatprep.subr.mxu0 0.0
    %3761 = vmatpush1.msra.mxu0 0.0
    %3762 = vmatprep.subr.mxu0 0.0
    %3763 = vmatpush1.msra.mxu0 0.0
    %3764 = vmatprep.subr.mxu0 0.0
    %3765 = vmatpush1.msra.mxu0 0.0
    %3766 = vmatprep.subr.mxu0 0.0
    %3767 = vmatpush1.msra.mxu0 0.0
    %3768 = vmatprep.subr.mxu0 0.0
    %3769 = vmatpush1.msra.mxu0 0.0
    %3770 = vmatprep.subr.mxu0 0.0
    %3771 = vmatpush1.msra.mxu0 %v3737
    %3772 = vmatprep.subr.mxu0 0.0
    %3773 = vmatpush1.msra.mxu0 %v3736
    %3774 = vmatprep.subr.mxu0 0.0
    %3775 = vmatpush1.msra.mxu0 %v3735
    %3776 = vmatprep.subr.mxu0 0.0
    %3777 = vmatpush1.msra.mxu0 %v3734
    %3778 = vmatprep.subr.mxu0 0.0
    %3779 = vmatpush2.msra.mxu0 0.0
    %3780 = vmatprep.subr.mxu0 0.0
    %3781 = vmatpush2.msra.mxu0 0.0
    %3782 = vmatprep.subr.mxu0 0.0
    %3783 = vmatpush2.msra.mxu0 0.0
    %3784 = vmatprep.subr.mxu0 0.0
    %3785 = vmatpush2.msra.mxu0 0.0
    %3786 = vmatprep.subr.mxu0 0.0
    %3787 = vmatpush2.msra.mxu0 0.0
    %3788 = vmatprep.subr.mxu0 0.0
    %3789 = vmatpush2.msra.mxu0 0.0
    %3790 = vmatprep.subr.mxu0 0.0
    %3791 = vmatpush2.msra.mxu0 0.0
    %3792 = vmatprep.subr.mxu0 0.0
    %3793 = vmatpush2.msra.mxu0 0.0
    %3794 = vmatprep.subr.mxu0 0.0
    %3795 = vmatpush2.msra.mxu0 0.0
    %3796 = vmatprep.subr.mxu0 0.0
    %3797 = vmatpush2.msra.mxu0 0.0
    %3798 = vmatprep.subr.mxu0 0.0
    %3799 = vmatpush2.msra.mxu0 0.0
    %3800 = vmatprep.subr.mxu0 0.0
    %3801 = vmatpush2.msra.mxu0 0.0
    %3802 = vmatprep.subr.mxu0 0.0
    %3803 = vmatpush2.msra.mxu0 0.0
    %3804 = vmatprep.subr.mxu0 0.0
    %3805 = vmatpush2.msra.mxu0 0.0
    %3806 = vmatprep.subr.mxu0 0.0
    %3807 = vmatpush2.msra.mxu0 0.0
    %3808 = vmatprep.subr.mxu0 0.0
    %3809 = vmatpush2.msra.mxu0 0.0
    %3810 = vmatprep.mubr.f32.mxu0 0.0
    %3811 = vmatmul.mubr.f32.gmra.mxu0 %v3151
    %v3812 = vpop.f32.mrf.mxu0
    %v3813 = vadd.f32 %v3744, %v3812
    %v3814 = vpop.f32.mrf.mxu0
    %3815 = vmatprep.mubr.f32.mxu0 0.0
    %3816 = vmatmul.mubr.f32.gmra.mxu0 %v3154
    %v3817 = vpop.f32.mrf.mxu0
    %v3818 = vadd.f32 %v3744, %v3817
    %v3819 = vpop.f32.mrf.mxu0
    %3820 = vdwg.mxu0
    %s3821 = scalar_lea.vmem %s2, 544
    %v3822 = vld [vmem:[%s3821] sm:$0xff]
    %v3823 = vld [vmem:[%s3821 + $0x8] sm:$0xff]
    %v3824 = vld [vmem:[%s3821 + $0x10] sm:$0xff]
    %v3825 = vld [vmem:[%s3821 + $0x18] sm:$0xff]
    %s3826 = scalar_lea.vmem %s3, 17
    %v3827 = vld [vmem:[%s3826] sm:$0x1]
    %v3829 = vlaneseq
    %v3830 = vshrl.u32 %v3829, 7
    %v3831 = vsub.s32 0, %v3830
    %v3832 = vrot.slane %v3827, %v3831
    %3834 = vmatprep.subr.mxu0 0.0
    %3835 = vmatpush1.msra.mxu0 0.0
    %3836 = vmatprep.subr.mxu0 0.0
    %3837 = vmatpush1.msra.mxu0 0.0
    %3838 = vmatprep.subr.mxu0 0.0
    %3839 = vmatpush1.msra.mxu0 0.0
    %3840 = vmatprep.subr.mxu0 0.0
    %3841 = vmatpush1.msra.mxu0 0.0
    %3842 = vmatprep.subr.mxu0 0.0
    %3843 = vmatpush1.msra.mxu0 0.0
    %3844 = vmatprep.subr.mxu0 0.0
    %3845 = vmatpush1.msra.mxu0 0.0
    %3846 = vmatprep.subr.mxu0 0.0
    %3847 = vmatpush1.msra.mxu0 0.0
    %3848 = vmatprep.subr.mxu0 0.0
    %3849 = vmatpush1.msra.mxu0 0.0
    %3850 = vmatprep.subr.mxu0 0.0
    %3851 = vmatpush1.msra.mxu0 0.0
    %3852 = vmatprep.subr.mxu0 0.0
    %3853 = vmatpush1.msra.mxu0 0.0
    %3854 = vmatprep.subr.mxu0 0.0
    %3855 = vmatpush1.msra.mxu0 0.0
    %3856 = vmatprep.subr.mxu0 0.0
    %3857 = vmatpush1.msra.mxu0 0.0
    %3858 = vmatprep.subr.mxu0 0.0
    %3859 = vmatpush1.msra.mxu0 %v3825
    %3860 = vmatprep.subr.mxu0 0.0
    %3861 = vmatpush1.msra.mxu0 %v3824
    %3862 = vmatprep.subr.mxu0 0.0
    %3863 = vmatpush1.msra.mxu0 %v3823
    %3864 = vmatprep.subr.mxu0 0.0
    %3865 = vmatpush1.msra.mxu0 %v3822
    %3866 = vmatprep.subr.mxu0 0.0
    %3867 = vmatpush2.msra.mxu0 0.0
    %3868 = vmatprep.subr.mxu0 0.0
    %3869 = vmatpush2.msra.mxu0 0.0
    %3870 = vmatprep.subr.mxu0 0.0
    %3871 = vmatpush2.msra.mxu0 0.0
    %3872 = vmatprep.subr.mxu0 0.0
    %3873 = vmatpush2.msra.mxu0 0.0
    %3874 = vmatprep.subr.mxu0 0.0
    %3875 = vmatpush2.msra.mxu0 0.0
    %3876 = vmatprep.subr.mxu0 0.0
    %3877 = vmatpush2.msra.mxu0 0.0
    %3878 = vmatprep.subr.mxu0 0.0
    %3879 = vmatpush2.msra.mxu0 0.0
    %3880 = vmatprep.subr.mxu0 0.0
    %3881 = vmatpush2.msra.mxu0 0.0
    %3882 = vmatprep.subr.mxu0 0.0
    %3883 = vmatpush2.msra.mxu0 0.0
    %3884 = vmatprep.subr.mxu0 0.0
    %3885 = vmatpush2.msra.mxu0 0.0
    %3886 = vmatprep.subr.mxu0 0.0
    %3887 = vmatpush2.msra.mxu0 0.0
    %3888 = vmatprep.subr.mxu0 0.0
    %3889 = vmatpush2.msra.mxu0 0.0
    %3890 = vmatprep.subr.mxu0 0.0
    %3891 = vmatpush2.msra.mxu0 0.0
    %3892 = vmatprep.subr.mxu0 0.0
    %3893 = vmatpush2.msra.mxu0 0.0
    %3894 = vmatprep.subr.mxu0 0.0
    %3895 = vmatpush2.msra.mxu0 0.0
    %3896 = vmatprep.subr.mxu0 0.0
    %3897 = vmatpush2.msra.mxu0 0.0
    %3898 = vmatprep.mubr.f32.mxu0 0.0
    %3899 = vmatmul.mubr.f32.gmra.mxu0 %v3151
    %v3900 = vpop.f32.mrf.mxu0
    %v3901 = vadd.f32 %v3832, %v3900
    %v3902 = vpop.f32.mrf.mxu0
    %3903 = vmatprep.mubr.f32.mxu0 0.0
    %3904 = vmatmul.mubr.f32.gmra.mxu0 %v3154
    %v3905 = vpop.f32.mrf.mxu0
    %v3906 = vadd.f32 %v3832, %v3905
    %v3907 = vpop.f32.mrf.mxu0
    %3908 = vdwg.mxu0
    %s3909 = scalar_lea.vmem %s2, 672
    %v3910 = vld [vmem:[%s3909] sm:$0xff]
    %v3911 = vld [vmem:[%s3909 + $0x8] sm:$0xff]
    %v3912 = vld [vmem:[%s3909 + $0x10] sm:$0xff]
    %v3913 = vld [vmem:[%s3909 + $0x18] sm:$0xff]
    %s3914 = scalar_lea.vmem %s3, 21
    %v3915 = vld [vmem:[%s3914] sm:$0x1]
    %v3917 = vlaneseq
    %v3918 = vshrl.u32 %v3917, 7
    %v3919 = vsub.s32 0, %v3918
    %v3920 = vrot.slane %v3915, %v3919
    %3922 = vmatprep.subr.mxu0 0.0
    %3923 = vmatpush1.msra.mxu0 0.0
    %3924 = vmatprep.subr.mxu0 0.0
    %3925 = vmatpush1.msra.mxu0 0.0
    %3926 = vmatprep.subr.mxu0 0.0
    %3927 = vmatpush1.msra.mxu0 0.0
    %3928 = vmatprep.subr.mxu0 0.0
    %3929 = vmatpush1.msra.mxu0 0.0
    %3930 = vmatprep.subr.mxu0 0.0
    %3931 = vmatpush1.msra.mxu0 0.0
    %3932 = vmatprep.subr.mxu0 0.0
    %3933 = vmatpush1.msra.mxu0 0.0
    %3934 = vmatprep.subr.mxu0 0.0
    %3935 = vmatpush1.msra.mxu0 0.0
    %3936 = vmatprep.subr.mxu0 0.0
    %3937 = vmatpush1.msra.mxu0 0.0
    %3938 = vmatprep.subr.mxu0 0.0
    %3939 = vmatpush1.msra.mxu0 0.0
    %3940 = vmatprep.subr.mxu0 0.0
    %3941 = vmatpush1.msra.mxu0 0.0
    %3942 = vmatprep.subr.mxu0 0.0
    %3943 = vmatpush1.msra.mxu0 0.0
    %3944 = vmatprep.subr.mxu0 0.0
    %3945 = vmatpush1.msra.mxu0 0.0
    %3946 = vmatprep.subr.mxu0 0.0
    %3947 = vmatpush1.msra.mxu0 %v3913
    %3948 = vmatprep.subr.mxu0 0.0
    %3949 = vmatpush1.msra.mxu0 %v3912
    %3950 = vmatprep.subr.mxu0 0.0
    %3951 = vmatpush1.msra.mxu0 %v3911
    %3952 = vmatprep.subr.mxu0 0.0
    %3953 = vmatpush1.msra.mxu0 %v3910
    %3954 = vmatprep.subr.mxu0 0.0
    %3955 = vmatpush2.msra.mxu0 0.0
    %3956 = vmatprep.subr.mxu0 0.0
    %3957 = vmatpush2.msra.mxu0 0.0
    %3958 = vmatprep.subr.mxu0 0.0
    %3959 = vmatpush2.msra.mxu0 0.0
    %3960 = vmatprep.subr.mxu0 0.0
    %3961 = vmatpush2.msra.mxu0 0.0
    %3962 = vmatprep.subr.mxu0 0.0
    %3963 = vmatpush2.msra.mxu0 0.0
    %3964 = vmatprep.subr.mxu0 0.0
    %3965 = vmatpush2.msra.mxu0 0.0
    %3966 = vmatprep.subr.mxu0 0.0
    %3967 = vmatpush2.msra.mxu0 0.0
    %3968 = vmatprep.subr.mxu0 0.0
    %3969 = vmatpush2.msra.mxu0 0.0
    %3970 = vmatprep.subr.mxu0 0.0
    %3971 = vmatpush2.msra.mxu0 0.0
    %3972 = vmatprep.subr.mxu0 0.0
    %3973 = vmatpush2.msra.mxu0 0.0
    %3974 = vmatprep.subr.mxu0 0.0
    %3975 = vmatpush2.msra.mxu0 0.0
    %3976 = vmatprep.subr.mxu0 0.0
    %3977 = vmatpush2.msra.mxu0 0.0
    %3978 = vmatprep.subr.mxu0 0.0
    %3979 = vmatpush2.msra.mxu0 0.0
    %3980 = vmatprep.subr.mxu0 0.0
    %3981 = vmatpush2.msra.mxu0 0.0
    %3982 = vmatprep.subr.mxu0 0.0
    %3983 = vmatpush2.msra.mxu0 0.0
    %3984 = vmatprep.subr.mxu0 0.0
    %3985 = vmatpush2.msra.mxu0 0.0
    %3986 = vmatprep.mubr.f32.mxu0 0.0
    %3987 = vmatmul.mubr.f32.gmra.mxu0 %v3151
    %v3988 = vpop.f32.mrf.mxu0
    %v3989 = vadd.f32 %v3920, %v3988
    %v3990 = vpop.f32.mrf.mxu0
    %3991 = vmatprep.mubr.f32.mxu0 0.0
    %3992 = vmatmul.mubr.f32.gmra.mxu0 %v3154
    %v3993 = vpop.f32.mrf.mxu0
    %v3994 = vadd.f32 %v3920, %v3993
    %v3995 = vpop.f32.mrf.mxu0
    %3996 = vdwg.mxu0
    %v3998 = vsel %vm374, %v3813, 0
    %v4001 = vsel %vm374, %v3901, 0
    %4003 = vmatprep.subr.mxu0 0.0
    %4004 = vmatpush1.xpose.msra.mxu0 0.0
    %4005 = vmatprep.subr.mxu0 0.0
    %4006 = vmatpush1.xpose.msra.mxu0 0.0
    %4007 = vmatprep.subr.mxu0 0.0
    %4008 = vmatpush1.xpose.msra.mxu0 0.0
    %4009 = vmatprep.subr.mxu0 0.0
    %4010 = vmatpush1.xpose.msra.mxu0 0.0
    %4011 = vmatprep.subr.mxu0 0.0
    %4012 = vmatpush1.xpose.msra.mxu0 0.0
    %4013 = vmatprep.subr.mxu0 0.0
    %4014 = vmatpush1.xpose.msra.mxu0 0.0
    %4015 = vmatprep.subr.mxu0 0.0
    %4016 = vmatpush1.xpose.msra.mxu0 0.0
    %4017 = vmatprep.subr.mxu0 0.0
    %4018 = vmatpush1.xpose.msra.mxu0 0.0
    %4019 = vmatprep.subr.mxu0 0.0
    %4020 = vmatpush1.xpose.msra.mxu0 0.0
    %4021 = vmatprep.subr.mxu0 0.0
    %4022 = vmatpush1.xpose.msra.mxu0 0.0
    %4023 = vmatprep.subr.mxu0 0.0
    %4024 = vmatpush1.xpose.msra.mxu0 0.0
    %4025 = vmatprep.subr.mxu0 0.0
    %4026 = vmatpush1.xpose.msra.mxu0 0.0
    %4027 = vmatprep.subr.mxu0 0.0
    %4028 = vmatpush1.xpose.msra.mxu0 0.0
    %4029 = vmatprep.subr.mxu0 0.0
    %4030 = vmatpush1.xpose.msra.mxu0 0.0
    %4031 = vmatprep.subr.mxu0 0.0
    %4032 = vmatpush1.xpose.msra.mxu0 0.0
    %4033 = vmatprep.subr.mxu0 0.0
    %4034 = vmatpush1.xpose.msra.mxu0 %v4001
    %4035 = vmatprep.subr.mxu0 0.0
    %4036 = vmatpush2.xpose.msra.mxu0 0.0
    %4037 = vmatprep.subr.mxu0 0.0
    %4038 = vmatpush2.xpose.msra.mxu0 0.0
    %4039 = vmatprep.subr.mxu0 0.0
    %4040 = vmatpush2.xpose.msra.mxu0 0.0
    %4041 = vmatprep.subr.mxu0 0.0
    %4042 = vmatpush2.xpose.msra.mxu0 0.0
    %4043 = vmatprep.subr.mxu0 0.0
    %4044 = vmatpush2.xpose.msra.mxu0 0.0
    %4045 = vmatprep.subr.mxu0 0.0
    %4046 = vmatpush2.xpose.msra.mxu0 0.0
    %4047 = vmatprep.subr.mxu0 0.0
    %4048 = vmatpush2.xpose.msra.mxu0 0.0
    %4049 = vmatprep.subr.mxu0 0.0
    %4050 = vmatpush2.xpose.msra.mxu0 0.0
    %4051 = vmatprep.subr.mxu0 0.0
    %4052 = vmatpush2.xpose.msra.mxu0 0.0
    %4053 = vmatprep.subr.mxu0 0.0
    %4054 = vmatpush2.xpose.msra.mxu0 0.0
    %4055 = vmatprep.subr.mxu0 0.0
    %4056 = vmatpush2.xpose.msra.mxu0 0.0
    %4057 = vmatprep.subr.mxu0 0.0
    %4058 = vmatpush2.xpose.msra.mxu0 0.0
    %4059 = vmatprep.subr.mxu0 0.0
    %4060 = vmatpush2.xpose.msra.mxu0 0.0
    %4061 = vmatprep.subr.mxu0 0.0
    %4062 = vmatpush2.xpose.msra.mxu0 0.0
    %4063 = vmatprep.subr.mxu0 0.0
    %4064 = vmatpush2.xpose.msra.mxu0 0.0
    %4065 = vmatprep.subr.mxu0 0.0
    %4066 = vmatpush2.xpose.msra.mxu0 0.0
    %4067 = vmatprep.mubr.f32.mxu0 0.0
    %4068 = vmatmul.mubr.f32.gmra.mxu0 %v3998
    %v4069 = vpop.f32.mrf.mxu0
    %v4070 = vadd.f32 0.0, %v4069
    %v4071 = vpop.f32.mrf.mxu0
    %4072 = vdwg.mxu0
    %v4074 = vsel %vm374, %v3818, 0
    %v4077 = vsel %vm374, %v3906, 0
    %4079 = vmatprep.subr.mxu0 0.0
    %4080 = vmatpush1.xpose.msra.mxu0 0.0
    %4081 = vmatprep.subr.mxu0 0.0
    %4082 = vmatpush1.xpose.msra.mxu0 0.0
    %4083 = vmatprep.subr.mxu0 0.0
    %4084 = vmatpush1.xpose.msra.mxu0 0.0
    %4085 = vmatprep.subr.mxu0 0.0
    %4086 = vmatpush1.xpose.msra.mxu0 0.0
    %4087 = vmatprep.subr.mxu0 0.0
    %4088 = vmatpush1.xpose.msra.mxu0 0.0
    %4089 = vmatprep.subr.mxu0 0.0
    %4090 = vmatpush1.xpose.msra.mxu0 0.0
    %4091 = vmatprep.subr.mxu0 0.0
    %4092 = vmatpush1.xpose.msra.mxu0 0.0
    %4093 = vmatprep.subr.mxu0 0.0
    %4094 = vmatpush1.xpose.msra.mxu0 0.0
    %4095 = vmatprep.subr.mxu0 0.0
    %4096 = vmatpush1.xpose.msra.mxu0 0.0
    %4097 = vmatprep.subr.mxu0 0.0
    %4098 = vmatpush1.xpose.msra.mxu0 0.0
    %4099 = vmatprep.subr.mxu0 0.0
    %4100 = vmatpush1.xpose.msra.mxu0 0.0
    %4101 = vmatprep.subr.mxu0 0.0
    %4102 = vmatpush1.xpose.msra.mxu0 0.0
    %4103 = vmatprep.subr.mxu0 0.0
    %4104 = vmatpush1.xpose.msra.mxu0 0.0
    %4105 = vmatprep.subr.mxu0 0.0
    %4106 = vmatpush1.xpose.msra.mxu0 0.0
    %4107 = vmatprep.subr.mxu0 0.0
    %4108 = vmatpush1.xpose.msra.mxu0 0.0
    %4109 = vmatprep.subr.mxu0 0.0
    %4110 = vmatpush1.xpose.msra.mxu0 %v4077
    %4111 = vmatprep.subr.mxu0 0.0
    %4112 = vmatpush2.xpose.msra.mxu0 0.0
    %4113 = vmatprep.subr.mxu0 0.0
    %4114 = vmatpush2.xpose.msra.mxu0 0.0
    %4115 = vmatprep.subr.mxu0 0.0
    %4116 = vmatpush2.xpose.msra.mxu0 0.0
    %4117 = vmatprep.subr.mxu0 0.0
    %4118 = vmatpush2.xpose.msra.mxu0 0.0
    %4119 = vmatprep.subr.mxu0 0.0
    %4120 = vmatpush2.xpose.msra.mxu0 0.0
    %4121 = vmatprep.subr.mxu0 0.0
    %4122 = vmatpush2.xpose.msra.mxu0 0.0
    %4123 = vmatprep.subr.mxu0 0.0
    %4124 = vmatpush2.xpose.msra.mxu0 0.0
    %4125 = vmatprep.subr.mxu0 0.0
    %4126 = vmatpush2.xpose.msra.mxu0 0.0
    %4127 = vmatprep.subr.mxu0 0.0
    %4128 = vmatpush2.xpose.msra.mxu0 0.0
    %4129 = vmatprep.subr.mxu0 0.0
    %4130 = vmatpush2.xpose.msra.mxu0 0.0
    %4131 = vmatprep.subr.mxu0 0.0
    %4132 = vmatpush2.xpose.msra.mxu0 0.0
    %4133 = vmatprep.subr.mxu0 0.0
    %4134 = vmatpush2.xpose.msra.mxu0 0.0
    %4135 = vmatprep.subr.mxu0 0.0
    %4136 = vmatpush2.xpose.msra.mxu0 0.0
    %4137 = vmatprep.subr.mxu0 0.0
    %4138 = vmatpush2.xpose.msra.mxu0 0.0
    %4139 = vmatprep.subr.mxu0 0.0
    %4140 = vmatpush2.xpose.msra.mxu0 0.0
    %4141 = vmatprep.subr.mxu0 0.0
    %4142 = vmatpush2.xpose.msra.mxu0 0.0
    %4143 = vmatprep.mubr.f32.mxu0 0.0
    %4144 = vmatmul.mubr.f32.gmra.mxu0 %v4074
    %v4145 = vpop.f32.mrf.mxu0
    %v4146 = vadd.f32 0.0, %v4145
    %v4147 = vpop.f32.mrf.mxu0
    %4148 = vdwg.mxu0
    %v4149 = vmul.f32 %v4070, 0.35355338
    %v4150 = vmul.f32 %v4146, 0.35355338
    %v4151 = vsel %vm539, %v4149, -1e+09
    %v4152 = vsel %vm540, %v4150, -1e+09
    %v4153 = vsel %vm374, %v4151, -inf
    %4154 = vmax.xlane.f32.xlu0 %v4153
    %v4155 = vpop.xlane.xlu0 %4154
    %v4156 = vsel %vm374, %v4152, -inf
    %4157 = vmax.xlane.f32.xlu0 %v4156
    %v4158 = vpop.xlane.xlu0 %4157
    %v4159 = vsub.f32 %v4151, %v4155
    %v4160 = vsub.f32 %v4152, %v4158
    %v4161 = vmul.f32 %v4159, 1.442695
    %v4162 = vpow.pop %v4161
    %v4163 = vmul.f32 %v4160, 1.442695
    %v4164 = vpow.pop %v4163
    %v4165 = vsel %vm374, %v4162, 0.0
    %4166 = vadd.xlane.f32.xlu0 %v4165
    %v4167 = vpop.xlane.xlu0 %4166
    %v4168 = vsel %vm374, %v4164, 0.0
    %4169 = vadd.xlane.f32.xlu0 %v4168
    %v4170 = vpop.xlane.xlu0 %4169
    %v4171 = vrcp.pop %v4167
    %v4172 = vrcp.pop %v4170
    %v4173 = vmul.f32 %v4162, %v4171
    %v4174 = vmul.f32 %v4164, %v4172
    %v4176 = vsel %vm374, %v4173, 0
    %4178 = vmatprep.subr.mxu0 0.0
    %4179 = vmatpush1.msra.mxu0 0.0
    %4180 = vmatprep.subr.mxu0 0.0
    %4181 = vmatpush1.msra.mxu0 0.0
    %4182 = vmatprep.subr.mxu0 0.0
    %4183 = vmatpush1.msra.mxu0 0.0
    %4184 = vmatprep.subr.mxu0 0.0
    %4185 = vmatpush1.msra.mxu0 0.0
    %4186 = vmatprep.subr.mxu0 0.0
    %4187 = vmatpush1.msra.mxu0 0.0
    %4188 = vmatprep.subr.mxu0 0.0
    %4189 = vmatpush1.msra.mxu0 0.0
    %4190 = vmatprep.subr.mxu0 0.0
    %4191 = vmatpush1.msra.mxu0 0.0
    %4192 = vmatprep.subr.mxu0 0.0
    %4193 = vmatpush1.msra.mxu0 0.0
    %4194 = vmatprep.subr.mxu0 0.0
    %4195 = vmatpush1.msra.mxu0 0.0
    %4196 = vmatprep.subr.mxu0 0.0
    %4197 = vmatpush1.msra.mxu0 0.0
    %4198 = vmatprep.subr.mxu0 0.0
    %4199 = vmatpush1.msra.mxu0 0.0
    %4200 = vmatprep.subr.mxu0 0.0
    %4201 = vmatpush1.msra.mxu0 0.0
    %4202 = vmatprep.subr.mxu0 0.0
    %4203 = vmatpush1.msra.mxu0 0.0
    %4204 = vmatprep.subr.mxu0 0.0
    %4205 = vmatpush1.msra.mxu0 0.0
    %4206 = vmatprep.subr.mxu0 0.0
    %4207 = vmatpush1.msra.mxu0 0.0
    %4208 = vmatprep.subr.mxu0 0.0
    %4209 = vmatpush1.msra.mxu0 %v3989
    %4210 = vmatprep.subr.mxu0 0.0
    %4211 = vmatpush2.msra.mxu0 0.0
    %4212 = vmatprep.subr.mxu0 0.0
    %4213 = vmatpush2.msra.mxu0 0.0
    %4214 = vmatprep.subr.mxu0 0.0
    %4215 = vmatpush2.msra.mxu0 0.0
    %4216 = vmatprep.subr.mxu0 0.0
    %4217 = vmatpush2.msra.mxu0 0.0
    %4218 = vmatprep.subr.mxu0 0.0
    %4219 = vmatpush2.msra.mxu0 0.0
    %4220 = vmatprep.subr.mxu0 0.0
    %4221 = vmatpush2.msra.mxu0 0.0
    %4222 = vmatprep.subr.mxu0 0.0
    %4223 = vmatpush2.msra.mxu0 0.0
    %4224 = vmatprep.subr.mxu0 0.0
    %4225 = vmatpush2.msra.mxu0 0.0
    %4226 = vmatprep.subr.mxu0 0.0
    %4227 = vmatpush2.msra.mxu0 0.0
    %4228 = vmatprep.subr.mxu0 0.0
    %4229 = vmatpush2.msra.mxu0 0.0
    %4230 = vmatprep.subr.mxu0 0.0
    %4231 = vmatpush2.msra.mxu0 0.0
    %4232 = vmatprep.subr.mxu0 0.0
    %4233 = vmatpush2.msra.mxu0 0.0
    %4234 = vmatprep.subr.mxu0 0.0
    %4235 = vmatpush2.msra.mxu0 0.0
    %4236 = vmatprep.subr.mxu0 0.0
    %4237 = vmatpush2.msra.mxu0 0.0
    %4238 = vmatprep.subr.mxu0 0.0
    %4239 = vmatpush2.msra.mxu0 0.0
    %4240 = vmatprep.subr.mxu0 0.0
    %4241 = vmatpush2.msra.mxu0 0.0
    %4242 = vmatprep.mubr.f32.mxu0 0.0
    %4243 = vmatmul.mubr.f32.gmra.mxu0 %v4176
    %v4244 = vpop.f32.mrf.mxu0
    %v4245 = vadd.f32 0.0, %v4244
    %v4246 = vpop.f32.mrf.mxu0
    %4247 = vdwg.mxu0
    %v4249 = vsel %vm374, %v4174, 0
    %4251 = vmatprep.subr.mxu0 0.0
    %4252 = vmatpush1.msra.mxu0 0.0
    %4253 = vmatprep.subr.mxu0 0.0
    %4254 = vmatpush1.msra.mxu0 0.0
    %4255 = vmatprep.subr.mxu0 0.0
    %4256 = vmatpush1.msra.mxu0 0.0
    %4257 = vmatprep.subr.mxu0 0.0
    %4258 = vmatpush1.msra.mxu0 0.0
    %4259 = vmatprep.subr.mxu0 0.0
    %4260 = vmatpush1.msra.mxu0 0.0
    %4261 = vmatprep.subr.mxu0 0.0
    %4262 = vmatpush1.msra.mxu0 0.0
    %4263 = vmatprep.subr.mxu0 0.0
    %4264 = vmatpush1.msra.mxu0 0.0
    %4265 = vmatprep.subr.mxu0 0.0
    %4266 = vmatpush1.msra.mxu0 0.0
    %4267 = vmatprep.subr.mxu0 0.0
    %4268 = vmatpush1.msra.mxu0 0.0
    %4269 = vmatprep.subr.mxu0 0.0
    %4270 = vmatpush1.msra.mxu0 0.0
    %4271 = vmatprep.subr.mxu0 0.0
    %4272 = vmatpush1.msra.mxu0 0.0
    %4273 = vmatprep.subr.mxu0 0.0
    %4274 = vmatpush1.msra.mxu0 0.0
    %4275 = vmatprep.subr.mxu0 0.0
    %4276 = vmatpush1.msra.mxu0 0.0
    %4277 = vmatprep.subr.mxu0 0.0
    %4278 = vmatpush1.msra.mxu0 0.0
    %4279 = vmatprep.subr.mxu0 0.0
    %4280 = vmatpush1.msra.mxu0 0.0
    %4281 = vmatprep.subr.mxu0 0.0
    %4282 = vmatpush1.msra.mxu0 %v3994
    %4283 = vmatprep.subr.mxu0 0.0
    %4284 = vmatpush2.msra.mxu0 0.0
    %4285 = vmatprep.subr.mxu0 0.0
    %4286 = vmatpush2.msra.mxu0 0.0
    %4287 = vmatprep.subr.mxu0 0.0
    %4288 = vmatpush2.msra.mxu0 0.0
    %4289 = vmatprep.subr.mxu0 0.0
    %4290 = vmatpush2.msra.mxu0 0.0
    %4291 = vmatprep.subr.mxu0 0.0
    %4292 = vmatpush2.msra.mxu0 0.0
    %4293 = vmatprep.subr.mxu0 0.0
    %4294 = vmatpush2.msra.mxu0 0.0
    %4295 = vmatprep.subr.mxu0 0.0
    %4296 = vmatpush2.msra.mxu0 0.0
    %4297 = vmatprep.subr.mxu0 0.0
    %4298 = vmatpush2.msra.mxu0 0.0
    %4299 = vmatprep.subr.mxu0 0.0
    %4300 = vmatpush2.msra.mxu0 0.0
    %4301 = vmatprep.subr.mxu0 0.0
    %4302 = vmatpush2.msra.mxu0 0.0
    %4303 = vmatprep.subr.mxu0 0.0
    %4304 = vmatpush2.msra.mxu0 0.0
    %4305 = vmatprep.subr.mxu0 0.0
    %4306 = vmatpush2.msra.mxu0 0.0
    %4307 = vmatprep.subr.mxu0 0.0
    %4308 = vmatpush2.msra.mxu0 0.0
    %4309 = vmatprep.subr.mxu0 0.0
    %4310 = vmatpush2.msra.mxu0 0.0
    %4311 = vmatprep.subr.mxu0 0.0
    %4312 = vmatpush2.msra.mxu0 0.0
    %4313 = vmatprep.subr.mxu0 0.0
    %4314 = vmatpush2.msra.mxu0 0.0
    %4315 = vmatprep.mubr.f32.mxu0 0.0
    %4316 = vmatmul.mubr.f32.gmra.mxu0 %v4249
    %v4317 = vpop.f32.mrf.mxu0
    %v4318 = vadd.f32 0.0, %v4317
    %v4319 = vpop.f32.mrf.mxu0
    %4320 = vdwg.mxu0
    %s4321 = scalar_lea.vmem %s4, 40
    %v4322 = vld [vmem:[%s4321] sm:$0xff]
    %v4324 = vsel %vm374, %v4245, 0
    %v4327 = vsel %vm374, %v4318, 0
    %4329 = vmatprep.subr.mxu0 0.0
    %4330 = vmatpush1.msra.mxu0 0.0
    %4331 = vmatprep.subr.mxu0 0.0
    %4332 = vmatpush1.msra.mxu0 0.0
    %4333 = vmatprep.subr.mxu0 0.0
    %4334 = vmatpush1.msra.mxu0 0.0
    %4335 = vmatprep.subr.mxu0 0.0
    %4336 = vmatpush1.msra.mxu0 0.0
    %4337 = vmatprep.subr.mxu0 0.0
    %4338 = vmatpush1.msra.mxu0 0.0
    %4339 = vmatprep.subr.mxu0 0.0
    %4340 = vmatpush1.msra.mxu0 0.0
    %4341 = vmatprep.subr.mxu0 0.0
    %4342 = vmatpush1.msra.mxu0 0.0
    %4343 = vmatprep.subr.mxu0 0.0
    %4344 = vmatpush1.msra.mxu0 0.0
    %4345 = vmatprep.subr.mxu0 0.0
    %4346 = vmatpush1.msra.mxu0 0.0
    %4347 = vmatprep.subr.mxu0 0.0
    %4348 = vmatpush1.msra.mxu0 0.0
    %4349 = vmatprep.subr.mxu0 0.0
    %4350 = vmatpush1.msra.mxu0 0.0
    %4351 = vmatprep.subr.mxu0 0.0
    %4352 = vmatpush1.msra.mxu0 0.0
    %4353 = vmatprep.subr.mxu0 0.0
    %4354 = vmatpush1.msra.mxu0 0.0
    %4355 = vmatprep.subr.mxu0 0.0
    %4356 = vmatpush1.msra.mxu0 0.0
    %4357 = vmatprep.subr.mxu0 0.0
    %4358 = vmatpush1.msra.mxu0 0.0
    %4359 = vmatprep.subr.mxu0 0.0
    %4360 = vmatpush1.msra.mxu0 %v4322
    %4361 = vmatprep.subr.mxu0 0.0
    %4362 = vmatpush2.msra.mxu0 0.0
    %4363 = vmatprep.subr.mxu0 0.0
    %4364 = vmatpush2.msra.mxu0 0.0
    %4365 = vmatprep.subr.mxu0 0.0
    %4366 = vmatpush2.msra.mxu0 0.0
    %4367 = vmatprep.subr.mxu0 0.0
    %4368 = vmatpush2.msra.mxu0 0.0
    %4369 = vmatprep.subr.mxu0 0.0
    %4370 = vmatpush2.msra.mxu0 0.0
    %4371 = vmatprep.subr.mxu0 0.0
    %4372 = vmatpush2.msra.mxu0 0.0
    %4373 = vmatprep.subr.mxu0 0.0
    %4374 = vmatpush2.msra.mxu0 0.0
    %4375 = vmatprep.subr.mxu0 0.0
    %4376 = vmatpush2.msra.mxu0 0.0
    %4377 = vmatprep.subr.mxu0 0.0
    %4378 = vmatpush2.msra.mxu0 0.0
    %4379 = vmatprep.subr.mxu0 0.0
    %4380 = vmatpush2.msra.mxu0 0.0
    %4381 = vmatprep.subr.mxu0 0.0
    %4382 = vmatpush2.msra.mxu0 0.0
    %4383 = vmatprep.subr.mxu0 0.0
    %4384 = vmatpush2.msra.mxu0 0.0
    %4385 = vmatprep.subr.mxu0 0.0
    %4386 = vmatpush2.msra.mxu0 0.0
    %4387 = vmatprep.subr.mxu0 0.0
    %4388 = vmatpush2.msra.mxu0 0.0
    %4389 = vmatprep.subr.mxu0 0.0
    %4390 = vmatpush2.msra.mxu0 0.0
    %4391 = vmatprep.subr.mxu0 0.0
    %4392 = vmatpush2.msra.mxu0 0.0
    %4393 = vmatprep.mubr.f32.mxu0 0.0
    %4394 = vmatmul.mubr.f32.gmra.mxu0 %v4324
    %v4395 = vpop.f32.mrf.mxu0
    %v4396 = vadd.f32 0.0, %v4395
    %v4397 = vpop.f32.mrf.mxu0
    %4398 = vmatprep.mubr.f32.mxu0 0.0
    %4399 = vmatmul.mubr.f32.gmra.mxu0 %v4327
    %v4400 = vpop.f32.mrf.mxu0
    %v4401 = vadd.f32 0.0, %v4400
    %v4402 = vpop.f32.mrf.mxu0
    %4403 = vdwg.mxu0
    %v4405 = vsel %vm374, %v3655, 0
    %v4408 = vsel %vm374, %v3728, 0
    %4410 = vmatprep.subr.mxu0 0.0
    %4411 = vmatpush1.msra.mxu0 0.0
    %4412 = vmatprep.subr.mxu0 0.0
    %4413 = vmatpush1.msra.mxu0 0.0
    %4414 = vmatprep.subr.mxu0 0.0
    %4415 = vmatpush1.msra.mxu0 0.0
    %4416 = vmatprep.subr.mxu0 0.0
    %4417 = vmatpush1.msra.mxu0 0.0
    %4418 = vmatprep.subr.mxu0 0.0
    %4419 = vmatpush1.msra.mxu0 0.0
    %4420 = vmatprep.subr.mxu0 0.0
    %4421 = vmatpush1.msra.mxu0 0.0
    %4422 = vmatprep.subr.mxu0 0.0
    %4423 = vmatpush1.msra.mxu0 0.0
    %4424 = vmatprep.subr.mxu0 0.0
    %4425 = vmatpush1.msra.mxu0 0.0
    %4426 = vmatprep.subr.mxu0 0.0
    %4427 = vmatpush1.msra.mxu0 0.0
    %4428 = vmatprep.subr.mxu0 0.0
    %4429 = vmatpush1.msra.mxu0 0.0
    %4430 = vmatprep.subr.mxu0 0.0
    %4431 = vmatpush1.msra.mxu0 0.0
    %4432 = vmatprep.subr.mxu0 0.0
    %4433 = vmatpush1.msra.mxu0 0.0
    %4434 = vmatprep.subr.mxu0 0.0
    %4435 = vmatpush1.msra.mxu0 0.0
    %4436 = vmatprep.subr.mxu0 0.0
    %4437 = vmatpush1.msra.mxu0 0.0
    %4438 = vmatprep.subr.mxu0 0.0
    %4439 = vmatpush1.msra.mxu0 0.0
    %4440 = vmatprep.subr.mxu0 0.0
    %4441 = vmatpush1.msra.mxu0 %v3732
    %4442 = vmatprep.subr.mxu0 0.0
    %4443 = vmatpush2.msra.mxu0 0.0
    %4444 = vmatprep.subr.mxu0 0.0
    %4445 = vmatpush2.msra.mxu0 0.0
    %4446 = vmatprep.subr.mxu0 0.0
    %4447 = vmatpush2.msra.mxu0 0.0
    %4448 = vmatprep.subr.mxu0 0.0
    %4449 = vmatpush2.msra.mxu0 0.0
    %4450 = vmatprep.subr.mxu0 0.0
    %4451 = vmatpush2.msra.mxu0 0.0
    %4452 = vmatprep.subr.mxu0 0.0
    %4453 = vmatpush2.msra.mxu0 0.0
    %4454 = vmatprep.subr.mxu0 0.0
    %4455 = vmatpush2.msra.mxu0 0.0
    %4456 = vmatprep.subr.mxu0 0.0
    %4457 = vmatpush2.msra.mxu0 0.0
    %4458 = vmatprep.subr.mxu0 0.0
    %4459 = vmatpush2.msra.mxu0 0.0
    %4460 = vmatprep.subr.mxu0 0.0
    %4461 = vmatpush2.msra.mxu0 0.0
    %4462 = vmatprep.subr.mxu0 0.0
    %4463 = vmatpush2.msra.mxu0 0.0
    %4464 = vmatprep.subr.mxu0 0.0
    %4465 = vmatpush2.msra.mxu0 0.0
    %4466 = vmatprep.subr.mxu0 0.0
    %4467 = vmatpush2.msra.mxu0 0.0
    %4468 = vmatprep.subr.mxu0 0.0
    %4469 = vmatpush2.msra.mxu0 0.0
    %4470 = vmatprep.subr.mxu0 0.0
    %4471 = vmatpush2.msra.mxu0 0.0
    %4472 = vmatprep.subr.mxu0 0.0
    %4473 = vmatpush2.msra.mxu0 0.0
    %4474 = vmatprep.mubr.f32.mxu0 0.0
    %4475 = vmatmul.mubr.f32.gmra.mxu0 %v4405
    %v4476 = vpop.f32.mrf.mxu0
    %v4477 = vadd.f32 %v4396, %v4476
    %v4478 = vpop.f32.mrf.mxu0
    %4479 = vmatprep.mubr.f32.mxu0 0.0
    %4480 = vmatmul.mubr.f32.gmra.mxu0 %v4408
    %v4481 = vpop.f32.mrf.mxu0
    %v4482 = vadd.f32 %v4401, %v4481
    %v4483 = vpop.f32.mrf.mxu0
    %4484 = vdwg.mxu0
    %s4485 = scalar_lea.vmem %s2, 448
    %v4486 = vld [vmem:[%s4485] sm:$0xff]
    %v4487 = vld [vmem:[%s4485 + $0x8] sm:$0xff]
    %v4488 = vld [vmem:[%s4485 + $0x10] sm:$0xff]
    %v4489 = vld [vmem:[%s4485 + $0x18] sm:$0xff]
    %s4490 = scalar_lea.vmem %s3, 14
    %v4491 = vld [vmem:[%s4490] sm:$0x1]
    %v4493 = vlaneseq
    %v4494 = vshrl.u32 %v4493, 7
    %v4495 = vsub.s32 0, %v4494
    %v4496 = vrot.slane %v4491, %v4495
    %4498 = vmatprep.subr.mxu0 0.0
    %4499 = vmatpush1.msra.mxu0 0.0
    %4500 = vmatprep.subr.mxu0 0.0
    %4501 = vmatpush1.msra.mxu0 0.0
    %4502 = vmatprep.subr.mxu0 0.0
    %4503 = vmatpush1.msra.mxu0 0.0
    %4504 = vmatprep.subr.mxu0 0.0
    %4505 = vmatpush1.msra.mxu0 0.0
    %4506 = vmatprep.subr.mxu0 0.0
    %4507 = vmatpush1.msra.mxu0 0.0
    %4508 = vmatprep.subr.mxu0 0.0
    %4509 = vmatpush1.msra.mxu0 0.0
    %4510 = vmatprep.subr.mxu0 0.0
    %4511 = vmatpush1.msra.mxu0 0.0
    %4512 = vmatprep.subr.mxu0 0.0
    %4513 = vmatpush1.msra.mxu0 0.0
    %4514 = vmatprep.subr.mxu0 0.0
    %4515 = vmatpush1.msra.mxu0 0.0
    %4516 = vmatprep.subr.mxu0 0.0
    %4517 = vmatpush1.msra.mxu0 0.0
    %4518 = vmatprep.subr.mxu0 0.0
    %4519 = vmatpush1.msra.mxu0 0.0
    %4520 = vmatprep.subr.mxu0 0.0
    %4521 = vmatpush1.msra.mxu0 0.0
    %4522 = vmatprep.subr.mxu0 0.0
    %4523 = vmatpush1.msra.mxu0 %v4489
    %4524 = vmatprep.subr.mxu0 0.0
    %4525 = vmatpush1.msra.mxu0 %v4488
    %4526 = vmatprep.subr.mxu0 0.0
    %4527 = vmatpush1.msra.mxu0 %v4487
    %4528 = vmatprep.subr.mxu0 0.0
    %4529 = vmatpush1.msra.mxu0 %v4486
    %4530 = vmatprep.subr.mxu0 0.0
    %4531 = vmatpush2.msra.mxu0 0.0
    %4532 = vmatprep.subr.mxu0 0.0
    %4533 = vmatpush2.msra.mxu0 0.0
    %4534 = vmatprep.subr.mxu0 0.0
    %4535 = vmatpush2.msra.mxu0 0.0
    %4536 = vmatprep.subr.mxu0 0.0
    %4537 = vmatpush2.msra.mxu0 0.0
    %4538 = vmatprep.subr.mxu0 0.0
    %4539 = vmatpush2.msra.mxu0 0.0
    %4540 = vmatprep.subr.mxu0 0.0
    %4541 = vmatpush2.msra.mxu0 0.0
    %4542 = vmatprep.subr.mxu0 0.0
    %4543 = vmatpush2.msra.mxu0 0.0
    %4544 = vmatprep.subr.mxu0 0.0
    %4545 = vmatpush2.msra.mxu0 0.0
    %4546 = vmatprep.subr.mxu0 0.0
    %4547 = vmatpush2.msra.mxu0 0.0
    %4548 = vmatprep.subr.mxu0 0.0
    %4549 = vmatpush2.msra.mxu0 0.0
    %4550 = vmatprep.subr.mxu0 0.0
    %4551 = vmatpush2.msra.mxu0 0.0
    %4552 = vmatprep.subr.mxu0 0.0
    %4553 = vmatpush2.msra.mxu0 0.0
    %4554 = vmatprep.subr.mxu0 0.0
    %4555 = vmatpush2.msra.mxu0 0.0
    %4556 = vmatprep.subr.mxu0 0.0
    %4557 = vmatpush2.msra.mxu0 0.0
    %4558 = vmatprep.subr.mxu0 0.0
    %4559 = vmatpush2.msra.mxu0 0.0
    %4560 = vmatprep.subr.mxu0 0.0
    %4561 = vmatpush2.msra.mxu0 0.0
    %4562 = vmatprep.mubr.f32.mxu0 0.0
    %4563 = vmatmul.mubr.f32.gmra.mxu0 %v3151
    %v4564 = vpop.f32.mrf.mxu0
    %v4565 = vadd.f32 %v4496, %v4564
    %v4566 = vpop.f32.mrf.mxu0
    %4567 = vmatprep.mubr.f32.mxu0 0.0
    %4568 = vmatmul.mubr.f32.gmra.mxu0 %v3154
    %v4569 = vpop.f32.mrf.mxu0
    %v4570 = vadd.f32 %v4496, %v4569
    %v4571 = vpop.f32.mrf.mxu0
    %4572 = vdwg.mxu0
    %s4573 = scalar_lea.vmem %s2, 576
    %v4574 = vld [vmem:[%s4573] sm:$0xff]
    %v4575 = vld [vmem:[%s4573 + $0x8] sm:$0xff]
    %v4576 = vld [vmem:[%s4573 + $0x10] sm:$0xff]
    %v4577 = vld [vmem:[%s4573 + $0x18] sm:$0xff]
    %s4578 = scalar_lea.vmem %s3, 18
    %v4579 = vld [vmem:[%s4578] sm:$0x1]
    %v4581 = vlaneseq
    %v4582 = vshrl.u32 %v4581, 7
    %v4583 = vsub.s32 0, %v4582
    %v4584 = vrot.slane %v4579, %v4583
    %4586 = vmatprep.subr.mxu0 0.0
    %4587 = vmatpush1.msra.mxu0 0.0
    %4588 = vmatprep.subr.mxu0 0.0
    %4589 = vmatpush1.msra.mxu0 0.0
    %4590 = vmatprep.subr.mxu0 0.0
    %4591 = vmatpush1.msra.mxu0 0.0
    %4592 = vmatprep.subr.mxu0 0.0
    %4593 = vmatpush1.msra.mxu0 0.0
    %4594 = vmatprep.subr.mxu0 0.0
    %4595 = vmatpush1.msra.mxu0 0.0
    %4596 = vmatprep.subr.mxu0 0.0
    %4597 = vmatpush1.msra.mxu0 0.0
    %4598 = vmatprep.subr.mxu0 0.0
    %4599 = vmatpush1.msra.mxu0 0.0
    %4600 = vmatprep.subr.mxu0 0.0
    %4601 = vmatpush1.msra.mxu0 0.0
    %4602 = vmatprep.subr.mxu0 0.0
    %4603 = vmatpush1.msra.mxu0 0.0
    %4604 = vmatprep.subr.mxu0 0.0
    %4605 = vmatpush1.msra.mxu0 0.0
    %4606 = vmatprep.subr.mxu0 0.0
    %4607 = vmatpush1.msra.mxu0 0.0
    %4608 = vmatprep.subr.mxu0 0.0
    %4609 = vmatpush1.msra.mxu0 0.0
    %4610 = vmatprep.subr.mxu0 0.0
    %4611 = vmatpush1.msra.mxu0 %v4577
    %4612 = vmatprep.subr.mxu0 0.0
    %4613 = vmatpush1.msra.mxu0 %v4576
    %4614 = vmatprep.subr.mxu0 0.0
    %4615 = vmatpush1.msra.mxu0 %v4575
    %4616 = vmatprep.subr.mxu0 0.0
    %4617 = vmatpush1.msra.mxu0 %v4574
    %4618 = vmatprep.subr.mxu0 0.0
    %4619 = vmatpush2.msra.mxu0 0.0
    %4620 = vmatprep.subr.mxu0 0.0
    %4621 = vmatpush2.msra.mxu0 0.0
    %4622 = vmatprep.subr.mxu0 0.0
    %4623 = vmatpush2.msra.mxu0 0.0
    %4624 = vmatprep.subr.mxu0 0.0
    %4625 = vmatpush2.msra.mxu0 0.0
    %4626 = vmatprep.subr.mxu0 0.0
    %4627 = vmatpush2.msra.mxu0 0.0
    %4628 = vmatprep.subr.mxu0 0.0
    %4629 = vmatpush2.msra.mxu0 0.0
    %4630 = vmatprep.subr.mxu0 0.0
    %4631 = vmatpush2.msra.mxu0 0.0
    %4632 = vmatprep.subr.mxu0 0.0
    %4633 = vmatpush2.msra.mxu0 0.0
    %4634 = vmatprep.subr.mxu0 0.0
    %4635 = vmatpush2.msra.mxu0 0.0
    %4636 = vmatprep.subr.mxu0 0.0
    %4637 = vmatpush2.msra.mxu0 0.0
    %4638 = vmatprep.subr.mxu0 0.0
    %4639 = vmatpush2.msra.mxu0 0.0
    %4640 = vmatprep.subr.mxu0 0.0
    %4641 = vmatpush2.msra.mxu0 0.0
    %4642 = vmatprep.subr.mxu0 0.0
    %4643 = vmatpush2.msra.mxu0 0.0
    %4644 = vmatprep.subr.mxu0 0.0
    %4645 = vmatpush2.msra.mxu0 0.0
    %4646 = vmatprep.subr.mxu0 0.0
    %4647 = vmatpush2.msra.mxu0 0.0
    %4648 = vmatprep.subr.mxu0 0.0
    %4649 = vmatpush2.msra.mxu0 0.0
    %4650 = vmatprep.mubr.f32.mxu0 0.0
    %4651 = vmatmul.mubr.f32.gmra.mxu0 %v3151
    %v4652 = vpop.f32.mrf.mxu0
    %v4653 = vadd.f32 %v4584, %v4652
    %v4654 = vpop.f32.mrf.mxu0
    %4655 = vmatprep.mubr.f32.mxu0 0.0
    %4656 = vmatmul.mubr.f32.gmra.mxu0 %v3154
    %v4657 = vpop.f32.mrf.mxu0
    %v4658 = vadd.f32 %v4584, %v4657
    %v4659 = vpop.f32.mrf.mxu0
    %4660 = vdwg.mxu0
    %s4661 = scalar_lea.vmem %s2, 704
    %v4662 = vld [vmem:[%s4661] sm:$0xff]
    %v4663 = vld [vmem:[%s4661 + $0x8] sm:$0xff]
    %v4664 = vld [vmem:[%s4661 + $0x10] sm:$0xff]
    %v4665 = vld [vmem:[%s4661 + $0x18] sm:$0xff]
    %s4666 = scalar_lea.vmem %s3, 22
    %v4667 = vld [vmem:[%s4666] sm:$0x1]
    %v4669 = vlaneseq
    %v4670 = vshrl.u32 %v4669, 7
    %v4671 = vsub.s32 0, %v4670
    %v4672 = vrot.slane %v4667, %v4671
    %4674 = vmatprep.subr.mxu0 0.0
    %4675 = vmatpush1.msra.mxu0 0.0
    %4676 = vmatprep.subr.mxu0 0.0
    %4677 = vmatpush1.msra.mxu0 0.0
    %4678 = vmatprep.subr.mxu0 0.0
    %4679 = vmatpush1.msra.mxu0 0.0
    %4680 = vmatprep.subr.mxu0 0.0
    %4681 = vmatpush1.msra.mxu0 0.0
    %4682 = vmatprep.subr.mxu0 0.0
    %4683 = vmatpush1.msra.mxu0 0.0
    %4684 = vmatprep.subr.mxu0 0.0
    %4685 = vmatpush1.msra.mxu0 0.0
    %4686 = vmatprep.subr.mxu0 0.0
    %4687 = vmatpush1.msra.mxu0 0.0
    %4688 = vmatprep.subr.mxu0 0.0
    %4689 = vmatpush1.msra.mxu0 0.0
    %4690 = vmatprep.subr.mxu0 0.0
    %4691 = vmatpush1.msra.mxu0 0.0
    %4692 = vmatprep.subr.mxu0 0.0
    %4693 = vmatpush1.msra.mxu0 0.0
    %4694 = vmatprep.subr.mxu0 0.0
    %4695 = vmatpush1.msra.mxu0 0.0
    %4696 = vmatprep.subr.mxu0 0.0
    %4697 = vmatpush1.msra.mxu0 0.0
    %4698 = vmatprep.subr.mxu0 0.0
    %4699 = vmatpush1.msra.mxu0 %v4665
    %4700 = vmatprep.subr.mxu0 0.0
    %4701 = vmatpush1.msra.mxu0 %v4664
    %4702 = vmatprep.subr.mxu0 0.0
    %4703 = vmatpush1.msra.mxu0 %v4663
    %4704 = vmatprep.subr.mxu0 0.0
    %4705 = vmatpush1.msra.mxu0 %v4662
    %4706 = vmatprep.subr.mxu0 0.0
    %4707 = vmatpush2.msra.mxu0 0.0
    %4708 = vmatprep.subr.mxu0 0.0
    %4709 = vmatpush2.msra.mxu0 0.0
    %4710 = vmatprep.subr.mxu0 0.0
    %4711 = vmatpush2.msra.mxu0 0.0
    %4712 = vmatprep.subr.mxu0 0.0
    %4713 = vmatpush2.msra.mxu0 0.0
    %4714 = vmatprep.subr.mxu0 0.0
    %4715 = vmatpush2.msra.mxu0 0.0
    %4716 = vmatprep.subr.mxu0 0.0
    %4717 = vmatpush2.msra.mxu0 0.0
    %4718 = vmatprep.subr.mxu0 0.0
    %4719 = vmatpush2.msra.mxu0 0.0
    %4720 = vmatprep.subr.mxu0 0.0
    %4721 = vmatpush2.msra.mxu0 0.0
    %4722 = vmatprep.subr.mxu0 0.0
    %4723 = vmatpush2.msra.mxu0 0.0
    %4724 = vmatprep.subr.mxu0 0.0
    %4725 = vmatpush2.msra.mxu0 0.0
    %4726 = vmatprep.subr.mxu0 0.0
    %4727 = vmatpush2.msra.mxu0 0.0
    %4728 = vmatprep.subr.mxu0 0.0
    %4729 = vmatpush2.msra.mxu0 0.0
    %4730 = vmatprep.subr.mxu0 0.0
    %4731 = vmatpush2.msra.mxu0 0.0
    %4732 = vmatprep.subr.mxu0 0.0
    %4733 = vmatpush2.msra.mxu0 0.0
    %4734 = vmatprep.subr.mxu0 0.0
    %4735 = vmatpush2.msra.mxu0 0.0
    %4736 = vmatprep.subr.mxu0 0.0
    %4737 = vmatpush2.msra.mxu0 0.0
    %4738 = vmatprep.mubr.f32.mxu0 0.0
    %4739 = vmatmul.mubr.f32.gmra.mxu0 %v3151
    %v4740 = vpop.f32.mrf.mxu0
    %v4741 = vadd.f32 %v4672, %v4740
    %v4742 = vpop.f32.mrf.mxu0
    %4743 = vmatprep.mubr.f32.mxu0 0.0
    %4744 = vmatmul.mubr.f32.gmra.mxu0 %v3154
    %v4745 = vpop.f32.mrf.mxu0
    %v4746 = vadd.f32 %v4672, %v4745
    %v4747 = vpop.f32.mrf.mxu0
    %4748 = vdwg.mxu0
    %v4750 = vsel %vm374, %v4565, 0
    %v4753 = vsel %vm374, %v4653, 0
    %4755 = vmatprep.subr.mxu0 0.0
    %4756 = vmatpush1.xpose.msra.mxu0 0.0
    %4757 = vmatprep.subr.mxu0 0.0
    %4758 = vmatpush1.xpose.msra.mxu0 0.0
    %4759 = vmatprep.subr.mxu0 0.0
    %4760 = vmatpush1.xpose.msra.mxu0 0.0
    %4761 = vmatprep.subr.mxu0 0.0
    %4762 = vmatpush1.xpose.msra.mxu0 0.0
    %4763 = vmatprep.subr.mxu0 0.0
    %4764 = vmatpush1.xpose.msra.mxu0 0.0
    %4765 = vmatprep.subr.mxu0 0.0
    %4766 = vmatpush1.xpose.msra.mxu0 0.0
    %4767 = vmatprep.subr.mxu0 0.0
    %4768 = vmatpush1.xpose.msra.mxu0 0.0
    %4769 = vmatprep.subr.mxu0 0.0
    %4770 = vmatpush1.xpose.msra.mxu0 0.0
    %4771 = vmatprep.subr.mxu0 0.0
    %4772 = vmatpush1.xpose.msra.mxu0 0.0
    %4773 = vmatprep.subr.mxu0 0.0
    %4774 = vmatpush1.xpose.msra.mxu0 0.0
    %4775 = vmatprep.subr.mxu0 0.0
    %4776 = vmatpush1.xpose.msra.mxu0 0.0
    %4777 = vmatprep.subr.mxu0 0.0
    %4778 = vmatpush1.xpose.msra.mxu0 0.0
    %4779 = vmatprep.subr.mxu0 0.0
    %4780 = vmatpush1.xpose.msra.mxu0 0.0
    %4781 = vmatprep.subr.mxu0 0.0
    %4782 = vmatpush1.xpose.msra.mxu0 0.0
    %4783 = vmatprep.subr.mxu0 0.0
    %4784 = vmatpush1.xpose.msra.mxu0 0.0
    %4785 = vmatprep.subr.mxu0 0.0
    %4786 = vmatpush1.xpose.msra.mxu0 %v4753
    %4787 = vmatprep.subr.mxu0 0.0
    %4788 = vmatpush2.xpose.msra.mxu0 0.0
    %4789 = vmatprep.subr.mxu0 0.0
    %4790 = vmatpush2.xpose.msra.mxu0 0.0
    %4791 = vmatprep.subr.mxu0 0.0
    %4792 = vmatpush2.xpose.msra.mxu0 0.0
    %4793 = vmatprep.subr.mxu0 0.0
    %4794 = vmatpush2.xpose.msra.mxu0 0.0
    %4795 = vmatprep.subr.mxu0 0.0
    %4796 = vmatpush2.xpose.msra.mxu0 0.0
    %4797 = vmatprep.subr.mxu0 0.0
    %4798 = vmatpush2.xpose.msra.mxu0 0.0
    %4799 = vmatprep.subr.mxu0 0.0
    %4800 = vmatpush2.xpose.msra.mxu0 0.0
    %4801 = vmatprep.subr.mxu0 0.0
    %4802 = vmatpush2.xpose.msra.mxu0 0.0
    %4803 = vmatprep.subr.mxu0 0.0
    %4804 = vmatpush2.xpose.msra.mxu0 0.0
    %4805 = vmatprep.subr.mxu0 0.0
    %4806 = vmatpush2.xpose.msra.mxu0 0.0
    %4807 = vmatprep.subr.mxu0 0.0
    %4808 = vmatpush2.xpose.msra.mxu0 0.0
    %4809 = vmatprep.subr.mxu0 0.0
    %4810 = vmatpush2.xpose.msra.mxu0 0.0
    %4811 = vmatprep.subr.mxu0 0.0
    %4812 = vmatpush2.xpose.msra.mxu0 0.0
    %4813 = vmatprep.subr.mxu0 0.0
    %4814 = vmatpush2.xpose.msra.mxu0 0.0
    %4815 = vmatprep.subr.mxu0 0.0
    %4816 = vmatpush2.xpose.msra.mxu0 0.0
    %4817 = vmatprep.subr.mxu0 0.0
    %4818 = vmatpush2.xpose.msra.mxu0 0.0
    %4819 = vmatprep.mubr.f32.mxu0 0.0
    %4820 = vmatmul.mubr.f32.gmra.mxu0 %v4750
    %v4821 = vpop.f32.mrf.mxu0
    %v4822 = vadd.f32 0.0, %v4821
    %v4823 = vpop.f32.mrf.mxu0
    %4824 = vdwg.mxu0
    %v4826 = vsel %vm374, %v4570, 0
    %v4829 = vsel %vm374, %v4658, 0
    %4831 = vmatprep.subr.mxu0 0.0
    %4832 = vmatpush1.xpose.msra.mxu0 0.0
    %4833 = vmatprep.subr.mxu0 0.0
    %4834 = vmatpush1.xpose.msra.mxu0 0.0
    %4835 = vmatprep.subr.mxu0 0.0
    %4836 = vmatpush1.xpose.msra.mxu0 0.0
    %4837 = vmatprep.subr.mxu0 0.0
    %4838 = vmatpush1.xpose.msra.mxu0 0.0
    %4839 = vmatprep.subr.mxu0 0.0
    %4840 = vmatpush1.xpose.msra.mxu0 0.0
    %4841 = vmatprep.subr.mxu0 0.0
    %4842 = vmatpush1.xpose.msra.mxu0 0.0
    %4843 = vmatprep.subr.mxu0 0.0
    %4844 = vmatpush1.xpose.msra.mxu0 0.0
    %4845 = vmatprep.subr.mxu0 0.0
    %4846 = vmatpush1.xpose.msra.mxu0 0.0
    %4847 = vmatprep.subr.mxu0 0.0
    %4848 = vmatpush1.xpose.msra.mxu0 0.0
    %4849 = vmatprep.subr.mxu0 0.0
    %4850 = vmatpush1.xpose.msra.mxu0 0.0
    %4851 = vmatprep.subr.mxu0 0.0
    %4852 = vmatpush1.xpose.msra.mxu0 0.0
    %4853 = vmatprep.subr.mxu0 0.0
    %4854 = vmatpush1.xpose.msra.mxu0 0.0
    %4855 = vmatprep.subr.mxu0 0.0
    %4856 = vmatpush1.xpose.msra.mxu0 0.0
    %4857 = vmatprep.subr.mxu0 0.0
    %4858 = vmatpush1.xpose.msra.mxu0 0.0
    %4859 = vmatprep.subr.mxu0 0.0
    %4860 = vmatpush1.xpose.msra.mxu0 0.0
    %4861 = vmatprep.subr.mxu0 0.0
    %4862 = vmatpush1.xpose.msra.mxu0 %v4829
    %4863 = vmatprep.subr.mxu0 0.0
    %4864 = vmatpush2.xpose.msra.mxu0 0.0
    %4865 = vmatprep.subr.mxu0 0.0
    %4866 = vmatpush2.xpose.msra.mxu0 0.0
    %4867 = vmatprep.subr.mxu0 0.0
    %4868 = vmatpush2.xpose.msra.mxu0 0.0
    %4869 = vmatprep.subr.mxu0 0.0
    %4870 = vmatpush2.xpose.msra.mxu0 0.0
    %4871 = vmatprep.subr.mxu0 0.0
    %4872 = vmatpush2.xpose.msra.mxu0 0.0
    %4873 = vmatprep.subr.mxu0 0.0
    %4874 = vmatpush2.xpose.msra.mxu0 0.0
    %4875 = vmatprep.subr.mxu0 0.0
    %4876 = vmatpush2.xpose.msra.mxu0 0.0
    %4877 = vmatprep.subr.mxu0 0.0
    %4878 = vmatpush2.xpose.msra.mxu0 0.0
    %4879 = vmatprep.subr.mxu0 0.0
    %4880 = vmatpush2.xpose.msra.mxu0 0.0
    %4881 = vmatprep.subr.mxu0 0.0
    %4882 = vmatpush2.xpose.msra.mxu0 0.0
    %4883 = vmatprep.subr.mxu0 0.0
    %4884 = vmatpush2.xpose.msra.mxu0 0.0
    %4885 = vmatprep.subr.mxu0 0.0
    %4886 = vmatpush2.xpose.msra.mxu0 0.0
    %4887 = vmatprep.subr.mxu0 0.0
    %4888 = vmatpush2.xpose.msra.mxu0 0.0
    %4889 = vmatprep.subr.mxu0 0.0
    %4890 = vmatpush2.xpose.msra.mxu0 0.0
    %4891 = vmatprep.subr.mxu0 0.0
    %4892 = vmatpush2.xpose.msra.mxu0 0.0
    %4893 = vmatprep.subr.mxu0 0.0
    %4894 = vmatpush2.xpose.msra.mxu0 0.0
    %4895 = vmatprep.mubr.f32.mxu0 0.0
    %4896 = vmatmul.mubr.f32.gmra.mxu0 %v4826
    %v4897 = vpop.f32.mrf.mxu0
    %v4898 = vadd.f32 0.0, %v4897
    %v4899 = vpop.f32.mrf.mxu0
    %4900 = vdwg.mxu0
    %v4901 = vmul.f32 %v4822, 0.35355338
    %v4902 = vmul.f32 %v4898, 0.35355338
    %v4903 = vsel %vm539, %v4901, -1e+09
    %v4904 = vsel %vm540, %v4902, -1e+09
    %v4905 = vsel %vm374, %v4903, -inf
    %4906 = vmax.xlane.f32.xlu0 %v4905
    %v4907 = vpop.xlane.xlu0 %4906
    %v4908 = vsel %vm374, %v4904, -inf
    %4909 = vmax.xlane.f32.xlu0 %v4908
    %v4910 = vpop.xlane.xlu0 %4909
    %v4911 = vsub.f32 %v4903, %v4907
    %v4912 = vsub.f32 %v4904, %v4910
    %v4913 = vmul.f32 %v4911, 1.442695
    %v4914 = vpow.pop %v4913
    %v4915 = vmul.f32 %v4912, 1.442695
    %v4916 = vpow.pop %v4915
    %v4917 = vsel %vm374, %v4914, 0.0
    %4918 = vadd.xlane.f32.xlu0 %v4917
    %v4919 = vpop.xlane.xlu0 %4918
    %v4920 = vsel %vm374, %v4916, 0.0
    %4921 = vadd.xlane.f32.xlu0 %v4920
    %v4922 = vpop.xlane.xlu0 %4921
    %v4923 = vrcp.pop %v4919
    %v4924 = vrcp.pop %v4922
    %v4925 = vmul.f32 %v4914, %v4923
    %v4926 = vmul.f32 %v4916, %v4924
    %v4928 = vsel %vm374, %v4925, 0
    %4930 = vmatprep.subr.mxu0 0.0
    %4931 = vmatpush1.msra.mxu0 0.0
    %4932 = vmatprep.subr.mxu0 0.0
    %4933 = vmatpush1.msra.mxu0 0.0
    %4934 = vmatprep.subr.mxu0 0.0
    %4935 = vmatpush1.msra.mxu0 0.0
    %4936 = vmatprep.subr.mxu0 0.0
    %4937 = vmatpush1.msra.mxu0 0.0
    %4938 = vmatprep.subr.mxu0 0.0
    %4939 = vmatpush1.msra.mxu0 0.0
    %4940 = vmatprep.subr.mxu0 0.0
    %4941 = vmatpush1.msra.mxu0 0.0
    %4942 = vmatprep.subr.mxu0 0.0
    %4943 = vmatpush1.msra.mxu0 0.0
    %4944 = vmatprep.subr.mxu0 0.0
    %4945 = vmatpush1.msra.mxu0 0.0
    %4946 = vmatprep.subr.mxu0 0.0
    %4947 = vmatpush1.msra.mxu0 0.0
    %4948 = vmatprep.subr.mxu0 0.0
    %4949 = vmatpush1.msra.mxu0 0.0
    %4950 = vmatprep.subr.mxu0 0.0
    %4951 = vmatpush1.msra.mxu0 0.0
    %4952 = vmatprep.subr.mxu0 0.0
    %4953 = vmatpush1.msra.mxu0 0.0
    %4954 = vmatprep.subr.mxu0 0.0
    %4955 = vmatpush1.msra.mxu0 0.0
    %4956 = vmatprep.subr.mxu0 0.0
    %4957 = vmatpush1.msra.mxu0 0.0
    %4958 = vmatprep.subr.mxu0 0.0
    %4959 = vmatpush1.msra.mxu0 0.0
    %4960 = vmatprep.subr.mxu0 0.0
    %4961 = vmatpush1.msra.mxu0 %v4741
    %4962 = vmatprep.subr.mxu0 0.0
    %4963 = vmatpush2.msra.mxu0 0.0
    %4964 = vmatprep.subr.mxu0 0.0
    %4965 = vmatpush2.msra.mxu0 0.0
    %4966 = vmatprep.subr.mxu0 0.0
    %4967 = vmatpush2.msra.mxu0 0.0
    %4968 = vmatprep.subr.mxu0 0.0
    %4969 = vmatpush2.msra.mxu0 0.0
    %4970 = vmatprep.subr.mxu0 0.0
    %4971 = vmatpush2.msra.mxu0 0.0
    %4972 = vmatprep.subr.mxu0 0.0
    %4973 = vmatpush2.msra.mxu0 0.0
    %4974 = vmatprep.subr.mxu0 0.0
    %4975 = vmatpush2.msra.mxu0 0.0
    %4976 = vmatprep.subr.mxu0 0.0
    %4977 = vmatpush2.msra.mxu0 0.0
    %4978 = vmatprep.subr.mxu0 0.0
    %4979 = vmatpush2.msra.mxu0 0.0
    %4980 = vmatprep.subr.mxu0 0.0
    %4981 = vmatpush2.msra.mxu0 0.0
    %4982 = vmatprep.subr.mxu0 0.0
    %4983 = vmatpush2.msra.mxu0 0.0
    %4984 = vmatprep.subr.mxu0 0.0
    %4985 = vmatpush2.msra.mxu0 0.0
    %4986 = vmatprep.subr.mxu0 0.0
    %4987 = vmatpush2.msra.mxu0 0.0
    %4988 = vmatprep.subr.mxu0 0.0
    %4989 = vmatpush2.msra.mxu0 0.0
    %4990 = vmatprep.subr.mxu0 0.0
    %4991 = vmatpush2.msra.mxu0 0.0
    %4992 = vmatprep.subr.mxu0 0.0
    %4993 = vmatpush2.msra.mxu0 0.0
    %4994 = vmatprep.mubr.f32.mxu0 0.0
    %4995 = vmatmul.mubr.f32.gmra.mxu0 %v4928
    %v4996 = vpop.f32.mrf.mxu0
    %v4997 = vadd.f32 0.0, %v4996
    %v4998 = vpop.f32.mrf.mxu0
    %4999 = vdwg.mxu0
    %v5001 = vsel %vm374, %v4926, 0
    %5003 = vmatprep.subr.mxu0 0.0
    %5004 = vmatpush1.msra.mxu0 0.0
    %5005 = vmatprep.subr.mxu0 0.0
    %5006 = vmatpush1.msra.mxu0 0.0
    %5007 = vmatprep.subr.mxu0 0.0
    %5008 = vmatpush1.msra.mxu0 0.0
    %5009 = vmatprep.subr.mxu0 0.0
    %5010 = vmatpush1.msra.mxu0 0.0
    %5011 = vmatprep.subr.mxu0 0.0
    %5012 = vmatpush1.msra.mxu0 0.0
    %5013 = vmatprep.subr.mxu0 0.0
    %5014 = vmatpush1.msra.mxu0 0.0
    %5015 = vmatprep.subr.mxu0 0.0
    %5016 = vmatpush1.msra.mxu0 0.0
    %5017 = vmatprep.subr.mxu0 0.0
    %5018 = vmatpush1.msra.mxu0 0.0
    %5019 = vmatprep.subr.mxu0 0.0
    %5020 = vmatpush1.msra.mxu0 0.0
    %5021 = vmatprep.subr.mxu0 0.0
    %5022 = vmatpush1.msra.mxu0 0.0
    %5023 = vmatprep.subr.mxu0 0.0
    %5024 = vmatpush1.msra.mxu0 0.0
    %5025 = vmatprep.subr.mxu0 0.0
    %5026 = vmatpush1.msra.mxu0 0.0
    %5027 = vmatprep.subr.mxu0 0.0
    %5028 = vmatpush1.msra.mxu0 0.0
    %5029 = vmatprep.subr.mxu0 0.0
    %5030 = vmatpush1.msra.mxu0 0.0
    %5031 = vmatprep.subr.mxu0 0.0
    %5032 = vmatpush1.msra.mxu0 0.0
    %5033 = vmatprep.subr.mxu0 0.0
    %5034 = vmatpush1.msra.mxu0 %v4746
    %5035 = vmatprep.subr.mxu0 0.0
    %5036 = vmatpush2.msra.mxu0 0.0
    %5037 = vmatprep.subr.mxu0 0.0
    %5038 = vmatpush2.msra.mxu0 0.0
    %5039 = vmatprep.subr.mxu0 0.0
    %5040 = vmatpush2.msra.mxu0 0.0
    %5041 = vmatprep.subr.mxu0 0.0
    %5042 = vmatpush2.msra.mxu0 0.0
    %5043 = vmatprep.subr.mxu0 0.0
    %5044 = vmatpush2.msra.mxu0 0.0
    %5045 = vmatprep.subr.mxu0 0.0
    %5046 = vmatpush2.msra.mxu0 0.0
    %5047 = vmatprep.subr.mxu0 0.0
    %5048 = vmatpush2.msra.mxu0 0.0
    %5049 = vmatprep.subr.mxu0 0.0
    %5050 = vmatpush2.msra.mxu0 0.0
    %5051 = vmatprep.subr.mxu0 0.0
    %5052 = vmatpush2.msra.mxu0 0.0
    %5053 = vmatprep.subr.mxu0 0.0
    %5054 = vmatpush2.msra.mxu0 0.0
    %5055 = vmatprep.subr.mxu0 0.0
    %5056 = vmatpush2.msra.mxu0 0.0
    %5057 = vmatprep.subr.mxu0 0.0
    %5058 = vmatpush2.msra.mxu0 0.0
    %5059 = vmatprep.subr.mxu0 0.0
    %5060 = vmatpush2.msra.mxu0 0.0
    %5061 = vmatprep.subr.mxu0 0.0
    %5062 = vmatpush2.msra.mxu0 0.0
    %5063 = vmatprep.subr.mxu0 0.0
    %5064 = vmatpush2.msra.mxu0 0.0
    %5065 = vmatprep.subr.mxu0 0.0
    %5066 = vmatpush2.msra.mxu0 0.0
    %5067 = vmatprep.mubr.f32.mxu0 0.0
    %5068 = vmatmul.mubr.f32.gmra.mxu0 %v5001
    %v5069 = vpop.f32.mrf.mxu0
    %v5070 = vadd.f32 0.0, %v5069
    %v5071 = vpop.f32.mrf.mxu0
    %5072 = vdwg.mxu0
    %s5073 = scalar_lea.vmem %s4, 48
    %v5074 = vld [vmem:[%s5073] sm:$0xff]
    %v5076 = vsel %vm374, %v4997, 0
    %v5079 = vsel %vm374, %v5070, 0
    %5081 = vmatprep.subr.mxu0 0.0
    %5082 = vmatpush1.msra.mxu0 0.0
    %5083 = vmatprep.subr.mxu0 0.0
    %5084 = vmatpush1.msra.mxu0 0.0
    %5085 = vmatprep.subr.mxu0 0.0
    %5086 = vmatpush1.msra.mxu0 0.0
    %5087 = vmatprep.subr.mxu0 0.0
    %5088 = vmatpush1.msra.mxu0 0.0
    %5089 = vmatprep.subr.mxu0 0.0
    %5090 = vmatpush1.msra.mxu0 0.0
    %5091 = vmatprep.subr.mxu0 0.0
    %5092 = vmatpush1.msra.mxu0 0.0
    %5093 = vmatprep.subr.mxu0 0.0
    %5094 = vmatpush1.msra.mxu0 0.0
    %5095 = vmatprep.subr.mxu0 0.0
    %5096 = vmatpush1.msra.mxu0 0.0
    %5097 = vmatprep.subr.mxu0 0.0
    %5098 = vmatpush1.msra.mxu0 0.0
    %5099 = vmatprep.subr.mxu0 0.0
    %5100 = vmatpush1.msra.mxu0 0.0
    %5101 = vmatprep.subr.mxu0 0.0
    %5102 = vmatpush1.msra.mxu0 0.0
    %5103 = vmatprep.subr.mxu0 0.0
    %5104 = vmatpush1.msra.mxu0 0.0
    %5105 = vmatprep.subr.mxu0 0.0
    %5106 = vmatpush1.msra.mxu0 0.0
    %5107 = vmatprep.subr.mxu0 0.0
    %5108 = vmatpush1.msra.mxu0 0.0
    %5109 = vmatprep.subr.mxu0 0.0
    %5110 = vmatpush1.msra.mxu0 0.0
    %5111 = vmatprep.subr.mxu0 0.0
    %5112 = vmatpush1.msra.mxu0 %v5074
    %5113 = vmatprep.subr.mxu0 0.0
    %5114 = vmatpush2.msra.mxu0 0.0
    %5115 = vmatprep.subr.mxu0 0.0
    %5116 = vmatpush2.msra.mxu0 0.0
    %5117 = vmatprep.subr.mxu0 0.0
    %5118 = vmatpush2.msra.mxu0 0.0
    %5119 = vmatprep.subr.mxu0 0.0
    %5120 = vmatpush2.msra.mxu0 0.0
    %5121 = vmatprep.subr.mxu0 0.0
    %5122 = vmatpush2.msra.mxu0 0.0
    %5123 = vmatprep.subr.mxu0 0.0
    %5124 = vmatpush2.msra.mxu0 0.0
    %5125 = vmatprep.subr.mxu0 0.0
    %5126 = vmatpush2.msra.mxu0 0.0
    %5127 = vmatprep.subr.mxu0 0.0
    %5128 = vmatpush2.msra.mxu0 0.0
    %5129 = vmatprep.subr.mxu0 0.0
    %5130 = vmatpush2.msra.mxu0 0.0
    %5131 = vmatprep.subr.mxu0 0.0
    %5132 = vmatpush2.msra.mxu0 0.0
    %5133 = vmatprep.subr.mxu0 0.0
    %5134 = vmatpush2.msra.mxu0 0.0
    %5135 = vmatprep.subr.mxu0 0.0
    %5136 = vmatpush2.msra.mxu0 0.0
    %5137 = vmatprep.subr.mxu0 0.0
    %5138 = vmatpush2.msra.mxu0 0.0
    %5139 = vmatprep.subr.mxu0 0.0
    %5140 = vmatpush2.msra.mxu0 0.0
    %5141 = vmatprep.subr.mxu0 0.0
    %5142 = vmatpush2.msra.mxu0 0.0
    %5143 = vmatprep.subr.mxu0 0.0
    %5144 = vmatpush2.msra.mxu0 0.0
    %5145 = vmatprep.mubr.f32.mxu0 0.0
    %5146 = vmatmul.mubr.f32.gmra.mxu0 %v5076
    %v5147 = vpop.f32.mrf.mxu0
    %v5148 = vadd.f32 0.0, %v5147
    %v5149 = vpop.f32.mrf.mxu0
    %5150 = vmatprep.mubr.f32.mxu0 0.0
    %5151 = vmatmul.mubr.f32.gmra.mxu0 %v5079
    %v5152 = vpop.f32.mrf.mxu0
    %v5153 = vadd.f32 0.0, %v5152
    %v5154 = vpop.f32.mrf.mxu0
    %5155 = vdwg.mxu0
    %v5156 = vadd.f32 %v4477, %v5148
    %v5157 = vadd.f32 %v4482, %v5153
    %s5158 = scalar_lea.vmem %s2, 480
    %v5159 = vld [vmem:[%s5158] sm:$0xff]
    %v5160 = vld [vmem:[%s5158 + $0x8] sm:$0xff]
    %v5161 = vld [vmem:[%s5158 + $0x10] sm:$0xff]
    %v5162 = vld [vmem:[%s5158 + $0x18] sm:$0xff]
    %s5163 = scalar_lea.vmem %s3, 15
    %v5164 = vld [vmem:[%s5163] sm:$0x1]
    %v5166 = vlaneseq
    %v5167 = vshrl.u32 %v5166, 7
    %v5168 = vsub.s32 0, %v5167
    %v5169 = vrot.slane %v5164, %v5168
    %5171 = vmatprep.subr.mxu0 0.0
    %5172 = vmatpush1.msra.mxu0 0.0
    %5173 = vmatprep.subr.mxu0 0.0
    %5174 = vmatpush1.msra.mxu0 0.0
    %5175 = vmatprep.subr.mxu0 0.0
    %5176 = vmatpush1.msra.mxu0 0.0
    %5177 = vmatprep.subr.mxu0 0.0
    %5178 = vmatpush1.msra.mxu0 0.0
    %5179 = vmatprep.subr.mxu0 0.0
    %5180 = vmatpush1.msra.mxu0 0.0
    %5181 = vmatprep.subr.mxu0 0.0
    %5182 = vmatpush1.msra.mxu0 0.0
    %5183 = vmatprep.subr.mxu0 0.0
    %5184 = vmatpush1.msra.mxu0 0.0
    %5185 = vmatprep.subr.mxu0 0.0
    %5186 = vmatpush1.msra.mxu0 0.0
    %5187 = vmatprep.subr.mxu0 0.0
    %5188 = vmatpush1.msra.mxu0 0.0
    %5189 = vmatprep.subr.mxu0 0.0
    %5190 = vmatpush1.msra.mxu0 0.0
    %5191 = vmatprep.subr.mxu0 0.0
    %5192 = vmatpush1.msra.mxu0 0.0
    %5193 = vmatprep.subr.mxu0 0.0
    %5194 = vmatpush1.msra.mxu0 0.0
    %5195 = vmatprep.subr.mxu0 0.0
    %5196 = vmatpush1.msra.mxu0 %v5162
    %5197 = vmatprep.subr.mxu0 0.0
    %5198 = vmatpush1.msra.mxu0 %v5161
    %5199 = vmatprep.subr.mxu0 0.0
    %5200 = vmatpush1.msra.mxu0 %v5160
    %5201 = vmatprep.subr.mxu0 0.0
    %5202 = vmatpush1.msra.mxu0 %v5159
    %5203 = vmatprep.subr.mxu0 0.0
    %5204 = vmatpush2.msra.mxu0 0.0
    %5205 = vmatprep.subr.mxu0 0.0
    %5206 = vmatpush2.msra.mxu0 0.0
    %5207 = vmatprep.subr.mxu0 0.0
    %5208 = vmatpush2.msra.mxu0 0.0
    %5209 = vmatprep.subr.mxu0 0.0
    %5210 = vmatpush2.msra.mxu0 0.0
    %5211 = vmatprep.subr.mxu0 0.0
    %5212 = vmatpush2.msra.mxu0 0.0
    %5213 = vmatprep.subr.mxu0 0.0
    %5214 = vmatpush2.msra.mxu0 0.0
    %5215 = vmatprep.subr.mxu0 0.0
    %5216 = vmatpush2.msra.mxu0 0.0
    %5217 = vmatprep.subr.mxu0 0.0
    %5218 = vmatpush2.msra.mxu0 0.0
    %5219 = vmatprep.subr.mxu0 0.0
    %5220 = vmatpush2.msra.mxu0 0.0
    %5221 = vmatprep.subr.mxu0 0.0
    %5222 = vmatpush2.msra.mxu0 0.0
    %5223 = vmatprep.subr.mxu0 0.0
    %5224 = vmatpush2.msra.mxu0 0.0
    %5225 = vmatprep.subr.mxu0 0.0
    %5226 = vmatpush2.msra.mxu0 0.0
    %5227 = vmatprep.subr.mxu0 0.0
    %5228 = vmatpush2.msra.mxu0 0.0
    %5229 = vmatprep.subr.mxu0 0.0
    %5230 = vmatpush2.msra.mxu0 0.0
    %5231 = vmatprep.subr.mxu0 0.0
    %5232 = vmatpush2.msra.mxu0 0.0
    %5233 = vmatprep.subr.mxu0 0.0
    %5234 = vmatpush2.msra.mxu0 0.0
    %5235 = vmatprep.mubr.f32.mxu0 0.0
    %5236 = vmatmul.mubr.f32.gmra.mxu0 %v3151
    %v5237 = vpop.f32.mrf.mxu0
    %v5238 = vadd.f32 %v5169, %v5237
    %v5239 = vpop.f32.mrf.mxu0
    %5240 = vmatprep.mubr.f32.mxu0 0.0
    %5241 = vmatmul.mubr.f32.gmra.mxu0 %v3154
    %v5242 = vpop.f32.mrf.mxu0
    %v5243 = vadd.f32 %v5169, %v5242
    %v5244 = vpop.f32.mrf.mxu0
    %5245 = vdwg.mxu0
    %s5246 = scalar_lea.vmem %s2, 608
    %v5247 = vld [vmem:[%s5246] sm:$0xff]
    %v5248 = vld [vmem:[%s5246 + $0x8] sm:$0xff]
    %v5249 = vld [vmem:[%s5246 + $0x10] sm:$0xff]
    %v5250 = vld [vmem:[%s5246 + $0x18] sm:$0xff]
    %s5251 = scalar_lea.vmem %s3, 19
    %v5252 = vld [vmem:[%s5251] sm:$0x1]
    %v5254 = vlaneseq
    %v5255 = vshrl.u32 %v5254, 7
    %v5256 = vsub.s32 0, %v5255
    %v5257 = vrot.slane %v5252, %v5256
    %5259 = vmatprep.subr.mxu0 0.0
    %5260 = vmatpush1.msra.mxu0 0.0
    %5261 = vmatprep.subr.mxu0 0.0
    %5262 = vmatpush1.msra.mxu0 0.0
    %5263 = vmatprep.subr.mxu0 0.0
    %5264 = vmatpush1.msra.mxu0 0.0
    %5265 = vmatprep.subr.mxu0 0.0
    %5266 = vmatpush1.msra.mxu0 0.0
    %5267 = vmatprep.subr.mxu0 0.0
    %5268 = vmatpush1.msra.mxu0 0.0
    %5269 = vmatprep.subr.mxu0 0.0
    %5270 = vmatpush1.msra.mxu0 0.0
    %5271 = vmatprep.subr.mxu0 0.0
    %5272 = vmatpush1.msra.mxu0 0.0
    %5273 = vmatprep.subr.mxu0 0.0
    %5274 = vmatpush1.msra.mxu0 0.0
    %5275 = vmatprep.subr.mxu0 0.0
    %5276 = vmatpush1.msra.mxu0 0.0
    %5277 = vmatprep.subr.mxu0 0.0
    %5278 = vmatpush1.msra.mxu0 0.0
    %5279 = vmatprep.subr.mxu0 0.0
    %5280 = vmatpush1.msra.mxu0 0.0
    %5281 = vmatprep.subr.mxu0 0.0
    %5282 = vmatpush1.msra.mxu0 0.0
    %5283 = vmatprep.subr.mxu0 0.0
    %5284 = vmatpush1.msra.mxu0 %v5250
    %5285 = vmatprep.subr.mxu0 0.0
    %5286 = vmatpush1.msra.mxu0 %v5249
    %5287 = vmatprep.subr.mxu0 0.0
    %5288 = vmatpush1.msra.mxu0 %v5248
    %5289 = vmatprep.subr.mxu0 0.0
    %5290 = vmatpush1.msra.mxu0 %v5247
    %5291 = vmatprep.subr.mxu0 0.0
    %5292 = vmatpush2.msra.mxu0 0.0
    %5293 = vmatprep.subr.mxu0 0.0
    %5294 = vmatpush2.msra.mxu0 0.0
    %5295 = vmatprep.subr.mxu0 0.0
    %5296 = vmatpush2.msra.mxu0 0.0
    %5297 = vmatprep.subr.mxu0 0.0
    %5298 = vmatpush2.msra.mxu0 0.0
    %5299 = vmatprep.subr.mxu0 0.0
    %5300 = vmatpush2.msra.mxu0 0.0
    %5301 = vmatprep.subr.mxu0 0.0
    %5302 = vmatpush2.msra.mxu0 0.0
    %5303 = vmatprep.subr.mxu0 0.0
    %5304 = vmatpush2.msra.mxu0 0.0
    %5305 = vmatprep.subr.mxu0 0.0
    %5306 = vmatpush2.msra.mxu0 0.0
    %5307 = vmatprep.subr.mxu0 0.0
    %5308 = vmatpush2.msra.mxu0 0.0
    %5309 = vmatprep.subr.mxu0 0.0
    %5310 = vmatpush2.msra.mxu0 0.0
    %5311 = vmatprep.subr.mxu0 0.0
    %5312 = vmatpush2.msra.mxu0 0.0
    %5313 = vmatprep.subr.mxu0 0.0
    %5314 = vmatpush2.msra.mxu0 0.0
    %5315 = vmatprep.subr.mxu0 0.0
    %5316 = vmatpush2.msra.mxu0 0.0
    %5317 = vmatprep.subr.mxu0 0.0
    %5318 = vmatpush2.msra.mxu0 0.0
    %5319 = vmatprep.subr.mxu0 0.0
    %5320 = vmatpush2.msra.mxu0 0.0
    %5321 = vmatprep.subr.mxu0 0.0
    %5322 = vmatpush2.msra.mxu0 0.0
    %5323 = vmatprep.mubr.f32.mxu0 0.0
    %5324 = vmatmul.mubr.f32.gmra.mxu0 %v3151
    %v5325 = vpop.f32.mrf.mxu0
    %v5326 = vadd.f32 %v5257, %v5325
    %v5327 = vpop.f32.mrf.mxu0
    %5328 = vmatprep.mubr.f32.mxu0 0.0
    %5329 = vmatmul.mubr.f32.gmra.mxu0 %v3154
    %v5330 = vpop.f32.mrf.mxu0
    %v5331 = vadd.f32 %v5257, %v5330
    %v5332 = vpop.f32.mrf.mxu0
    %5333 = vdwg.mxu0
    %s5334 = scalar_lea.vmem %s2, 736
    %v5335 = vld [vmem:[%s5334] sm:$0xff]
    %v5336 = vld [vmem:[%s5334 + $0x8] sm:$0xff]
    %v5337 = vld [vmem:[%s5334 + $0x10] sm:$0xff]
    %v5338 = vld [vmem:[%s5334 + $0x18] sm:$0xff]
    %s5339 = scalar_lea.vmem %s3, 23
    %v5340 = vld [vmem:[%s5339] sm:$0x1]
    %v5342 = vlaneseq
    %v5343 = vshrl.u32 %v5342, 7
    %v5344 = vsub.s32 0, %v5343
    %v5345 = vrot.slane %v5340, %v5344
    %5347 = vmatprep.subr.mxu0 0.0
    %5348 = vmatpush1.msra.mxu0 0.0
    %5349 = vmatprep.subr.mxu0 0.0
    %5350 = vmatpush1.msra.mxu0 0.0
    %5351 = vmatprep.subr.mxu0 0.0
    %5352 = vmatpush1.msra.mxu0 0.0
    %5353 = vmatprep.subr.mxu0 0.0
    %5354 = vmatpush1.msra.mxu0 0.0
    %5355 = vmatprep.subr.mxu0 0.0
    %5356 = vmatpush1.msra.mxu0 0.0
    %5357 = vmatprep.subr.mxu0 0.0
    %5358 = vmatpush1.msra.mxu0 0.0
    %5359 = vmatprep.subr.mxu0 0.0
    %5360 = vmatpush1.msra.mxu0 0.0
    %5361 = vmatprep.subr.mxu0 0.0
    %5362 = vmatpush1.msra.mxu0 0.0
    %5363 = vmatprep.subr.mxu0 0.0
    %5364 = vmatpush1.msra.mxu0 0.0
    %5365 = vmatprep.subr.mxu0 0.0
    %5366 = vmatpush1.msra.mxu0 0.0
    %5367 = vmatprep.subr.mxu0 0.0
    %5368 = vmatpush1.msra.mxu0 0.0
    %5369 = vmatprep.subr.mxu0 0.0
    %5370 = vmatpush1.msra.mxu0 0.0
    %5371 = vmatprep.subr.mxu0 0.0
    %5372 = vmatpush1.msra.mxu0 %v5338
    %5373 = vmatprep.subr.mxu0 0.0
    %5374 = vmatpush1.msra.mxu0 %v5337
    %5375 = vmatprep.subr.mxu0 0.0
    %5376 = vmatpush1.msra.mxu0 %v5336
    %5377 = vmatprep.subr.mxu0 0.0
    %5378 = vmatpush1.msra.mxu0 %v5335
    %5379 = vmatprep.subr.mxu0 0.0
    %5380 = vmatpush2.msra.mxu0 0.0
    %5381 = vmatprep.subr.mxu0 0.0
    %5382 = vmatpush2.msra.mxu0 0.0
    %5383 = vmatprep.subr.mxu0 0.0
    %5384 = vmatpush2.msra.mxu0 0.0
    %5385 = vmatprep.subr.mxu0 0.0
    %5386 = vmatpush2.msra.mxu0 0.0
    %5387 = vmatprep.subr.mxu0 0.0
    %5388 = vmatpush2.msra.mxu0 0.0
    %5389 = vmatprep.subr.mxu0 0.0
    %5390 = vmatpush2.msra.mxu0 0.0
    %5391 = vmatprep.subr.mxu0 0.0
    %5392 = vmatpush2.msra.mxu0 0.0
    %5393 = vmatprep.subr.mxu0 0.0
    %5394 = vmatpush2.msra.mxu0 0.0
    %5395 = vmatprep.subr.mxu0 0.0
    %5396 = vmatpush2.msra.mxu0 0.0
    %5397 = vmatprep.subr.mxu0 0.0
    %5398 = vmatpush2.msra.mxu0 0.0
    %5399 = vmatprep.subr.mxu0 0.0
    %5400 = vmatpush2.msra.mxu0 0.0
    %5401 = vmatprep.subr.mxu0 0.0
    %5402 = vmatpush2.msra.mxu0 0.0
    %5403 = vmatprep.subr.mxu0 0.0
    %5404 = vmatpush2.msra.mxu0 0.0
    %5405 = vmatprep.subr.mxu0 0.0
    %5406 = vmatpush2.msra.mxu0 0.0
    %5407 = vmatprep.subr.mxu0 0.0
    %5408 = vmatpush2.msra.mxu0 0.0
    %5409 = vmatprep.subr.mxu0 0.0
    %5410 = vmatpush2.msra.mxu0 0.0
    %5411 = vmatprep.mubr.f32.mxu0 0.0
    %5412 = vmatmul.mubr.f32.gmra.mxu0 %v3151
    %v5413 = vpop.f32.mrf.mxu0
    %v5414 = vadd.f32 %v5345, %v5413
    %v5415 = vpop.f32.mrf.mxu0
    %5416 = vmatprep.mubr.f32.mxu0 0.0
    %5417 = vmatmul.mubr.f32.gmra.mxu0 %v3154
    %v5418 = vpop.f32.mrf.mxu0
    %v5419 = vadd.f32 %v5345, %v5418
    %v5420 = vpop.f32.mrf.mxu0
    %5421 = vdwg.mxu0
    %v5423 = vsel %vm374, %v5238, 0
    %v5426 = vsel %vm374, %v5326, 0
    %5428 = vmatprep.subr.mxu0 0.0
    %5429 = vmatpush1.xpose.msra.mxu0 0.0
    %5430 = vmatprep.subr.mxu0 0.0
    %5431 = vmatpush1.xpose.msra.mxu0 0.0
    %5432 = vmatprep.subr.mxu0 0.0
    %5433 = vmatpush1.xpose.msra.mxu0 0.0
    %5434 = vmatprep.subr.mxu0 0.0
    %5435 = vmatpush1.xpose.msra.mxu0 0.0
    %5436 = vmatprep.subr.mxu0 0.0
    %5437 = vmatpush1.xpose.msra.mxu0 0.0
    %5438 = vmatprep.subr.mxu0 0.0
    %5439 = vmatpush1.xpose.msra.mxu0 0.0
    %5440 = vmatprep.subr.mxu0 0.0
    %5441 = vmatpush1.xpose.msra.mxu0 0.0
    %5442 = vmatprep.subr.mxu0 0.0
    %5443 = vmatpush1.xpose.msra.mxu0 0.0
    %5444 = vmatprep.subr.mxu0 0.0
    %5445 = vmatpush1.xpose.msra.mxu0 0.0
    %5446 = vmatprep.subr.mxu0 0.0
    %5447 = vmatpush1.xpose.msra.mxu0 0.0
    %5448 = vmatprep.subr.mxu0 0.0
    %5449 = vmatpush1.xpose.msra.mxu0 0.0
    %5450 = vmatprep.subr.mxu0 0.0
    %5451 = vmatpush1.xpose.msra.mxu0 0.0
    %5452 = vmatprep.subr.mxu0 0.0
    %5453 = vmatpush1.xpose.msra.mxu0 0.0
    %5454 = vmatprep.subr.mxu0 0.0
    %5455 = vmatpush1.xpose.msra.mxu0 0.0
    %5456 = vmatprep.subr.mxu0 0.0
    %5457 = vmatpush1.xpose.msra.mxu0 0.0
    %5458 = vmatprep.subr.mxu0 0.0
    %5459 = vmatpush1.xpose.msra.mxu0 %v5426
    %5460 = vmatprep.subr.mxu0 0.0
    %5461 = vmatpush2.xpose.msra.mxu0 0.0
    %5462 = vmatprep.subr.mxu0 0.0
    %5463 = vmatpush2.xpose.msra.mxu0 0.0
    %5464 = vmatprep.subr.mxu0 0.0
    %5465 = vmatpush2.xpose.msra.mxu0 0.0
    %5466 = vmatprep.subr.mxu0 0.0
    %5467 = vmatpush2.xpose.msra.mxu0 0.0
    %5468 = vmatprep.subr.mxu0 0.0
    %5469 = vmatpush2.xpose.msra.mxu0 0.0
    %5470 = vmatprep.subr.mxu0 0.0
    %5471 = vmatpush2.xpose.msra.mxu0 0.0
    %5472 = vmatprep.subr.mxu0 0.0
    %5473 = vmatpush2.xpose.msra.mxu0 0.0
    %5474 = vmatprep.subr.mxu0 0.0
    %5475 = vmatpush2.xpose.msra.mxu0 0.0
    %5476 = vmatprep.subr.mxu0 0.0
    %5477 = vmatpush2.xpose.msra.mxu0 0.0
    %5478 = vmatprep.subr.mxu0 0.0
    %5479 = vmatpush2.xpose.msra.mxu0 0.0
    %5480 = vmatprep.subr.mxu0 0.0
    %5481 = vmatpush2.xpose.msra.mxu0 0.0
    %5482 = vmatprep.subr.mxu0 0.0
    %5483 = vmatpush2.xpose.msra.mxu0 0.0
    %5484 = vmatprep.subr.mxu0 0.0
    %5485 = vmatpush2.xpose.msra.mxu0 0.0
    %5486 = vmatprep.subr.mxu0 0.0
    %5487 = vmatpush2.xpose.msra.mxu0 0.0
    %5488 = vmatprep.subr.mxu0 0.0
    %5489 = vmatpush2.xpose.msra.mxu0 0.0
    %5490 = vmatprep.subr.mxu0 0.0
    %5491 = vmatpush2.xpose.msra.mxu0 0.0
    %5492 = vmatprep.mubr.f32.mxu0 0.0
    %5493 = vmatmul.mubr.f32.gmra.mxu0 %v5423
    %v5494 = vpop.f32.mrf.mxu0
    %v5495 = vadd.f32 0.0, %v5494
    %v5496 = vpop.f32.mrf.mxu0
    %5497 = vdwg.mxu0
    %v5499 = vsel %vm374, %v5243, 0
    %v5502 = vsel %vm374, %v5331, 0
    %5504 = vmatprep.subr.mxu0 0.0
    %5505 = vmatpush1.xpose.msra.mxu0 0.0
    %5506 = vmatprep.subr.mxu0 0.0
    %5507 = vmatpush1.xpose.msra.mxu0 0.0
    %5508 = vmatprep.subr.mxu0 0.0
    %5509 = vmatpush1.xpose.msra.mxu0 0.0
    %5510 = vmatprep.subr.mxu0 0.0
    %5511 = vmatpush1.xpose.msra.mxu0 0.0
    %5512 = vmatprep.subr.mxu0 0.0
    %5513 = vmatpush1.xpose.msra.mxu0 0.0
    %5514 = vmatprep.subr.mxu0 0.0
    %5515 = vmatpush1.xpose.msra.mxu0 0.0
    %5516 = vmatprep.subr.mxu0 0.0
    %5517 = vmatpush1.xpose.msra.mxu0 0.0
    %5518 = vmatprep.subr.mxu0 0.0
    %5519 = vmatpush1.xpose.msra.mxu0 0.0
    %5520 = vmatprep.subr.mxu0 0.0
    %5521 = vmatpush1.xpose.msra.mxu0 0.0
    %5522 = vmatprep.subr.mxu0 0.0
    %5523 = vmatpush1.xpose.msra.mxu0 0.0
    %5524 = vmatprep.subr.mxu0 0.0
    %5525 = vmatpush1.xpose.msra.mxu0 0.0
    %5526 = vmatprep.subr.mxu0 0.0
    %5527 = vmatpush1.xpose.msra.mxu0 0.0
    %5528 = vmatprep.subr.mxu0 0.0
    %5529 = vmatpush1.xpose.msra.mxu0 0.0
    %5530 = vmatprep.subr.mxu0 0.0
    %5531 = vmatpush1.xpose.msra.mxu0 0.0
    %5532 = vmatprep.subr.mxu0 0.0
    %5533 = vmatpush1.xpose.msra.mxu0 0.0
    %5534 = vmatprep.subr.mxu0 0.0
    %5535 = vmatpush1.xpose.msra.mxu0 %v5502
    %5536 = vmatprep.subr.mxu0 0.0
    %5537 = vmatpush2.xpose.msra.mxu0 0.0
    %5538 = vmatprep.subr.mxu0 0.0
    %5539 = vmatpush2.xpose.msra.mxu0 0.0
    %5540 = vmatprep.subr.mxu0 0.0
    %5541 = vmatpush2.xpose.msra.mxu0 0.0
    %5542 = vmatprep.subr.mxu0 0.0
    %5543 = vmatpush2.xpose.msra.mxu0 0.0
    %5544 = vmatprep.subr.mxu0 0.0
    %5545 = vmatpush2.xpose.msra.mxu0 0.0
    %5546 = vmatprep.subr.mxu0 0.0
    %5547 = vmatpush2.xpose.msra.mxu0 0.0
    %5548 = vmatprep.subr.mxu0 0.0
    %5549 = vmatpush2.xpose.msra.mxu0 0.0
    %5550 = vmatprep.subr.mxu0 0.0
    %5551 = vmatpush2.xpose.msra.mxu0 0.0
    %5552 = vmatprep.subr.mxu0 0.0
    %5553 = vmatpush2.xpose.msra.mxu0 0.0
    %5554 = vmatprep.subr.mxu0 0.0
    %5555 = vmatpush2.xpose.msra.mxu0 0.0
    %5556 = vmatprep.subr.mxu0 0.0
    %5557 = vmatpush2.xpose.msra.mxu0 0.0
    %5558 = vmatprep.subr.mxu0 0.0
    %5559 = vmatpush2.xpose.msra.mxu0 0.0
    %5560 = vmatprep.subr.mxu0 0.0
    %5561 = vmatpush2.xpose.msra.mxu0 0.0
    %5562 = vmatprep.subr.mxu0 0.0
    %5563 = vmatpush2.xpose.msra.mxu0 0.0
    %5564 = vmatprep.subr.mxu0 0.0
    %5565 = vmatpush2.xpose.msra.mxu0 0.0
    %5566 = vmatprep.subr.mxu0 0.0
    %5567 = vmatpush2.xpose.msra.mxu0 0.0
    %5568 = vmatprep.mubr.f32.mxu0 0.0
    %5569 = vmatmul.mubr.f32.gmra.mxu0 %v5499
    %v5570 = vpop.f32.mrf.mxu0
    %v5571 = vadd.f32 0.0, %v5570
    %v5572 = vpop.f32.mrf.mxu0
    %5573 = vdwg.mxu0
    %v5574 = vmul.f32 %v5495, 0.35355338
    %v5575 = vmul.f32 %v5571, 0.35355338
    %v5576 = vsel %vm539, %v5574, -1e+09
    %v5577 = vsel %vm540, %v5575, -1e+09
    %v5578 = vsel %vm374, %v5576, -inf
    %5579 = vmax.xlane.f32.xlu0 %v5578
    %v5580 = vpop.xlane.xlu0 %5579
    %v5581 = vsel %vm374, %v5577, -inf
    %5582 = vmax.xlane.f32.xlu0 %v5581
    %v5583 = vpop.xlane.xlu0 %5582
    %v5584 = vsub.f32 %v5576, %v5580
    %v5585 = vsub.f32 %v5577, %v5583
    %v5586 = vmul.f32 %v5584, 1.442695
    %v5587 = vpow.pop %v5586
    %v5588 = vmul.f32 %v5585, 1.442695
    %v5589 = vpow.pop %v5588
    %v5590 = vsel %vm374, %v5587, 0.0
    %5591 = vadd.xlane.f32.xlu0 %v5590
    %v5592 = vpop.xlane.xlu0 %5591
    %v5593 = vsel %vm374, %v5589, 0.0
    %5594 = vadd.xlane.f32.xlu0 %v5593
    %v5595 = vpop.xlane.xlu0 %5594
    %v5596 = vrcp.pop %v5592
    %v5597 = vrcp.pop %v5595
    %v5598 = vmul.f32 %v5587, %v5596
    %v5599 = vmul.f32 %v5589, %v5597
    %v5601 = vsel %vm374, %v5598, 0
    %5603 = vmatprep.subr.mxu0 0.0
    %5604 = vmatpush1.msra.mxu0 0.0
    %5605 = vmatprep.subr.mxu0 0.0
    %5606 = vmatpush1.msra.mxu0 0.0
    %5607 = vmatprep.subr.mxu0 0.0
    %5608 = vmatpush1.msra.mxu0 0.0
    %5609 = vmatprep.subr.mxu0 0.0
    %5610 = vmatpush1.msra.mxu0 0.0
    %5611 = vmatprep.subr.mxu0 0.0
    %5612 = vmatpush1.msra.mxu0 0.0
    %5613 = vmatprep.subr.mxu0 0.0
    %5614 = vmatpush1.msra.mxu0 0.0
    %5615 = vmatprep.subr.mxu0 0.0
    %5616 = vmatpush1.msra.mxu0 0.0
    %5617 = vmatprep.subr.mxu0 0.0
    %5618 = vmatpush1.msra.mxu0 0.0
    %5619 = vmatprep.subr.mxu0 0.0
    %5620 = vmatpush1.msra.mxu0 0.0
    %5621 = vmatprep.subr.mxu0 0.0
    %5622 = vmatpush1.msra.mxu0 0.0
    %5623 = vmatprep.subr.mxu0 0.0
    %5624 = vmatpush1.msra.mxu0 0.0
    %5625 = vmatprep.subr.mxu0 0.0
    %5626 = vmatpush1.msra.mxu0 0.0
    %5627 = vmatprep.subr.mxu0 0.0
    %5628 = vmatpush1.msra.mxu0 0.0
    %5629 = vmatprep.subr.mxu0 0.0
    %5630 = vmatpush1.msra.mxu0 0.0
    %5631 = vmatprep.subr.mxu0 0.0
    %5632 = vmatpush1.msra.mxu0 0.0
    %5633 = vmatprep.subr.mxu0 0.0
    %5634 = vmatpush1.msra.mxu0 %v5414
    %5635 = vmatprep.subr.mxu0 0.0
    %5636 = vmatpush2.msra.mxu0 0.0
    %5637 = vmatprep.subr.mxu0 0.0
    %5638 = vmatpush2.msra.mxu0 0.0
    %5639 = vmatprep.subr.mxu0 0.0
    %5640 = vmatpush2.msra.mxu0 0.0
    %5641 = vmatprep.subr.mxu0 0.0
    %5642 = vmatpush2.msra.mxu0 0.0
    %5643 = vmatprep.subr.mxu0 0.0
    %5644 = vmatpush2.msra.mxu0 0.0
    %5645 = vmatprep.subr.mxu0 0.0
    %5646 = vmatpush2.msra.mxu0 0.0
    %5647 = vmatprep.subr.mxu0 0.0
    %5648 = vmatpush2.msra.mxu0 0.0
    %5649 = vmatprep.subr.mxu0 0.0
    %5650 = vmatpush2.msra.mxu0 0.0
    %5651 = vmatprep.subr.mxu0 0.0
    %5652 = vmatpush2.msra.mxu0 0.0
    %5653 = vmatprep.subr.mxu0 0.0
    %5654 = vmatpush2.msra.mxu0 0.0
    %5655 = vmatprep.subr.mxu0 0.0
    %5656 = vmatpush2.msra.mxu0 0.0
    %5657 = vmatprep.subr.mxu0 0.0
    %5658 = vmatpush2.msra.mxu0 0.0
    %5659 = vmatprep.subr.mxu0 0.0
    %5660 = vmatpush2.msra.mxu0 0.0
    %5661 = vmatprep.subr.mxu0 0.0
    %5662 = vmatpush2.msra.mxu0 0.0
    %5663 = vmatprep.subr.mxu0 0.0
    %5664 = vmatpush2.msra.mxu0 0.0
    %5665 = vmatprep.subr.mxu0 0.0
    %5666 = vmatpush2.msra.mxu0 0.0
    %5667 = vmatprep.mubr.f32.mxu0 0.0
    %5668 = vmatmul.mubr.f32.gmra.mxu0 %v5601
    %v5669 = vpop.f32.mrf.mxu0
    %v5670 = vadd.f32 0.0, %v5669
    %v5671 = vpop.f32.mrf.mxu0
    %5672 = vdwg.mxu0
    %v5674 = vsel %vm374, %v5599, 0
    %5676 = vmatprep.subr.mxu0 0.0
    %5677 = vmatpush1.msra.mxu0 0.0
    %5678 = vmatprep.subr.mxu0 0.0
    %5679 = vmatpush1.msra.mxu0 0.0
    %5680 = vmatprep.subr.mxu0 0.0
    %5681 = vmatpush1.msra.mxu0 0.0
    %5682 = vmatprep.subr.mxu0 0.0
    %5683 = vmatpush1.msra.mxu0 0.0
    %5684 = vmatprep.subr.mxu0 0.0
    %5685 = vmatpush1.msra.mxu0 0.0
    %5686 = vmatprep.subr.mxu0 0.0
    %5687 = vmatpush1.msra.mxu0 0.0
    %5688 = vmatprep.subr.mxu0 0.0
    %5689 = vmatpush1.msra.mxu0 0.0
    %5690 = vmatprep.subr.mxu0 0.0
    %5691 = vmatpush1.msra.mxu0 0.0
    %5692 = vmatprep.subr.mxu0 0.0
    %5693 = vmatpush1.msra.mxu0 0.0
    %5694 = vmatprep.subr.mxu0 0.0
    %5695 = vmatpush1.msra.mxu0 0.0
    %5696 = vmatprep.subr.mxu0 0.0
    %5697 = vmatpush1.msra.mxu0 0.0
    %5698 = vmatprep.subr.mxu0 0.0
    %5699 = vmatpush1.msra.mxu0 0.0
    %5700 = vmatprep.subr.mxu0 0.0
    %5701 = vmatpush1.msra.mxu0 0.0
    %5702 = vmatprep.subr.mxu0 0.0
    %5703 = vmatpush1.msra.mxu0 0.0
    %5704 = vmatprep.subr.mxu0 0.0
    %5705 = vmatpush1.msra.mxu0 0.0
    %5706 = vmatprep.subr.mxu0 0.0
    %5707 = vmatpush1.msra.mxu0 %v5419
    %5708 = vmatprep.subr.mxu0 0.0
    %5709 = vmatpush2.msra.mxu0 0.0
    %5710 = vmatprep.subr.mxu0 0.0
    %5711 = vmatpush2.msra.mxu0 0.0
    %5712 = vmatprep.subr.mxu0 0.0
    %5713 = vmatpush2.msra.mxu0 0.0
    %5714 = vmatprep.subr.mxu0 0.0
    %5715 = vmatpush2.msra.mxu0 0.0
    %5716 = vmatprep.subr.mxu0 0.0
    %5717 = vmatpush2.msra.mxu0 0.0
    %5718 = vmatprep.subr.mxu0 0.0
    %5719 = vmatpush2.msra.mxu0 0.0
    %5720 = vmatprep.subr.mxu0 0.0
    %5721 = vmatpush2.msra.mxu0 0.0
    %5722 = vmatprep.subr.mxu0 0.0
    %5723 = vmatpush2.msra.mxu0 0.0
    %5724 = vmatprep.subr.mxu0 0.0
    %5725 = vmatpush2.msra.mxu0 0.0
    %5726 = vmatprep.subr.mxu0 0.0
    %5727 = vmatpush2.msra.mxu0 0.0
    %5728 = vmatprep.subr.mxu0 0.0
    %5729 = vmatpush2.msra.mxu0 0.0
    %5730 = vmatprep.subr.mxu0 0.0
    %5731 = vmatpush2.msra.mxu0 0.0
    %5732 = vmatprep.subr.mxu0 0.0
    %5733 = vmatpush2.msra.mxu0 0.0
    %5734 = vmatprep.subr.mxu0 0.0
    %5735 = vmatpush2.msra.mxu0 0.0
    %5736 = vmatprep.subr.mxu0 0.0
    %5737 = vmatpush2.msra.mxu0 0.0
    %5738 = vmatprep.subr.mxu0 0.0
    %5739 = vmatpush2.msra.mxu0 0.0
    %5740 = vmatprep.mubr.f32.mxu0 0.0
    %5741 = vmatmul.mubr.f32.gmra.mxu0 %v5674
    %v5742 = vpop.f32.mrf.mxu0
    %v5743 = vadd.f32 0.0, %v5742
    %v5744 = vpop.f32.mrf.mxu0
    %5745 = vdwg.mxu0
    %s5746 = scalar_lea.vmem %s4, 56
    %v5747 = vld [vmem:[%s5746] sm:$0xff]
    %v5749 = vsel %vm374, %v5670, 0
    %v5752 = vsel %vm374, %v5743, 0
    %5754 = vmatprep.subr.mxu0 0.0
    %5755 = vmatpush1.msra.mxu0 0.0
    %5756 = vmatprep.subr.mxu0 0.0
    %5757 = vmatpush1.msra.mxu0 0.0
    %5758 = vmatprep.subr.mxu0 0.0
    %5759 = vmatpush1.msra.mxu0 0.0
    %5760 = vmatprep.subr.mxu0 0.0
    %5761 = vmatpush1.msra.mxu0 0.0
    %5762 = vmatprep.subr.mxu0 0.0
    %5763 = vmatpush1.msra.mxu0 0.0
    %5764 = vmatprep.subr.mxu0 0.0
    %5765 = vmatpush1.msra.mxu0 0.0
    %5766 = vmatprep.subr.mxu0 0.0
    %5767 = vmatpush1.msra.mxu0 0.0
    %5768 = vmatprep.subr.mxu0 0.0
    %5769 = vmatpush1.msra.mxu0 0.0
    %5770 = vmatprep.subr.mxu0 0.0
    %5771 = vmatpush1.msra.mxu0 0.0
    %5772 = vmatprep.subr.mxu0 0.0
    %5773 = vmatpush1.msra.mxu0 0.0
    %5774 = vmatprep.subr.mxu0 0.0
    %5775 = vmatpush1.msra.mxu0 0.0
    %5776 = vmatprep.subr.mxu0 0.0
    %5777 = vmatpush1.msra.mxu0 0.0
    %5778 = vmatprep.subr.mxu0 0.0
    %5779 = vmatpush1.msra.mxu0 0.0
    %5780 = vmatprep.subr.mxu0 0.0
    %5781 = vmatpush1.msra.mxu0 0.0
    %5782 = vmatprep.subr.mxu0 0.0
    %5783 = vmatpush1.msra.mxu0 0.0
    %5784 = vmatprep.subr.mxu0 0.0
    %5785 = vmatpush1.msra.mxu0 %v5747
    %5786 = vmatprep.subr.mxu0 0.0
    %5787 = vmatpush2.msra.mxu0 0.0
    %5788 = vmatprep.subr.mxu0 0.0
    %5789 = vmatpush2.msra.mxu0 0.0
    %5790 = vmatprep.subr.mxu0 0.0
    %5791 = vmatpush2.msra.mxu0 0.0
    %5792 = vmatprep.subr.mxu0 0.0
    %5793 = vmatpush2.msra.mxu0 0.0
    %5794 = vmatprep.subr.mxu0 0.0
    %5795 = vmatpush2.msra.mxu0 0.0
    %5796 = vmatprep.subr.mxu0 0.0
    %5797 = vmatpush2.msra.mxu0 0.0
    %5798 = vmatprep.subr.mxu0 0.0
    %5799 = vmatpush2.msra.mxu0 0.0
    %5800 = vmatprep.subr.mxu0 0.0
    %5801 = vmatpush2.msra.mxu0 0.0
    %5802 = vmatprep.subr.mxu0 0.0
    %5803 = vmatpush2.msra.mxu0 0.0
    %5804 = vmatprep.subr.mxu0 0.0
    %5805 = vmatpush2.msra.mxu0 0.0
    %5806 = vmatprep.subr.mxu0 0.0
    %5807 = vmatpush2.msra.mxu0 0.0
    %5808 = vmatprep.subr.mxu0 0.0
    %5809 = vmatpush2.msra.mxu0 0.0
    %5810 = vmatprep.subr.mxu0 0.0
    %5811 = vmatpush2.msra.mxu0 0.0
    %5812 = vmatprep.subr.mxu0 0.0
    %5813 = vmatpush2.msra.mxu0 0.0
    %5814 = vmatprep.subr.mxu0 0.0
    %5815 = vmatpush2.msra.mxu0 0.0
    %5816 = vmatprep.subr.mxu0 0.0
    %5817 = vmatpush2.msra.mxu0 0.0
    %5818 = vmatprep.mubr.f32.mxu0 0.0
    %5819 = vmatmul.mubr.f32.gmra.mxu0 %v5749
    %v5820 = vpop.f32.mrf.mxu0
    %v5821 = vadd.f32 0.0, %v5820
    %v5822 = vpop.f32.mrf.mxu0
    %5823 = vmatprep.mubr.f32.mxu0 0.0
    %5824 = vmatmul.mubr.f32.gmra.mxu0 %v5752
    %v5825 = vpop.f32.mrf.mxu0
    %v5826 = vadd.f32 0.0, %v5825
    %v5827 = vpop.f32.mrf.mxu0
    %5828 = vdwg.mxu0
    %v5829 = vadd.f32 %v5156, %v5821
    %v5830 = vadd.f32 %v5157, %v5826
    %v5831 = vadd.f32 %v3075, %v5829
    %v5832 = vadd.f32 %v3076, %v5830
    %s5833 = scalar_lea.vmem %s6, 2
    %v5834 = vld [vmem:[%s5833] sm:$0x1]
    %v5836 = vlaneseq
    %v5837 = vshrl.u32 %v5836, 7
    %v5838 = vsub.s32 0, %v5837
    %v5839 = vrot.slane %v5834, %v5838
    %v5841 = vadd.f32 %v5831, %v5839
    %v5842 = vadd.f32 %v5832, %v5839
    %s5843 = scalar_lea.vmem %s5, 6
    %v5844 = vld [vmem:[%s5843] sm:$0x1]
    %s5845 = scalar_lea.vmem %s5, 7
    %v5846 = vld [vmem:[%s5845] sm:$0x1]
    %v5847 = vsel %vm48, %v5841, 0.0
    %5848 = vadd.xlane.f32.xlu0 %v5847
    %v5849 = vpop.xlane.xlu0 %5848
    %v5850 = vsel %vm48, %v5842, 0.0
    %5851 = vadd.xlane.f32.xlu0 %v5850
    %v5852 = vpop.xlane.xlu0 %5851
    %v5853 = vmul.f32 %v5849, %v55
    %v5854 = vmul.f32 %v5852, %v55
    %v5855 = vsub.f32 %v5841, %v5853
    %v5856 = vsub.f32 %v5842, %v5854
    %v5857 = vmul.f32 %v5855, %v5855
    %v5858 = vmul.f32 %v5856, %v5856
    %v5859 = vsel %vm48, %v5857, 0.0
    %5860 = vadd.xlane.f32.xlu0 %v5859
    %v5861 = vpop.xlane.xlu0 %5860
    %v5862 = vsel %vm48, %v5858, 0.0
    %5863 = vadd.xlane.f32.xlu0 %v5862
    %v5864 = vpop.xlane.xlu0 %5863
    %v5865 = vmul.f32 %v5861, 0.032258064
    %v5866 = vmul.f32 %v5864, 0.032258064
    %v5867 = vrsqrt.pop %v5865
    %v5868 = vmul.f32 %v5865, %v5867
    %vm5869 = vcmp.eq.f32.partialorder %v5865, inf
    %v5870 = vsel %vm5869, %v5865, %v5868
    %vm5871 = vcmp.eq.f32.partialorder %v5865, 0.0
    %v5872 = vand.u32 %v5865, 2147483648
    %v5873 = vsel %vm5871, %v5872, %v5870
    %v5874 = vrsqrt.pop %v5866
    %v5875 = vmul.f32 %v5866, %v5874
    %vm5876 = vcmp.eq.f32.partialorder %v5866, inf
    %v5877 = vsel %vm5876, %v5866, %v5875
    %vm5878 = vcmp.eq.f32.partialorder %v5866, 0.0
    %v5879 = vand.u32 %v5866, 2147483648
    %v5880 = vsel %vm5878, %v5879, %v5877
    %v5881 = vadd.f32 %v5873, 1e-06
    %v5882 = vadd.f32 %v5880, 1e-06
    %v5883 = vrcp.pop %v5881
    %v5884 = vrcp.pop %v5882
    %v5886 = vlaneseq
    %v5887 = vshrl.u32 %v5886, 7
    %v5888 = vsub.s32 0, %v5887
    %v5889 = vrot.slane %v5844, %v5888
    %v5891 = vmul.f32 %v5889, %v5855
    %v5892 = vmul.f32 %v5889, %v5856
    %v5893 = vmul.f32 %v5891, %v5883
    %v5894 = vmul.f32 %v5892, %v5884
    %v5896 = vlaneseq
    %v5897 = vshrl.u32 %v5896, 7
    %v5898 = vsub.s32 0, %v5897
    %v5899 = vrot.slane %v5846, %v5898
    %v5901 = vadd.f32 %v5893, %v5899
    %v5902 = vadd.f32 %v5894, %v5899
    %s5903 = scalar_lea.vmem %s7, 32
    %v5904 = vld [vmem:[%s5903] sm:$0xff]
    %v5905 = vld [vmem:[%s5903 + $0x8] sm:$0xff]
    %v5906 = vld [vmem:[%s5903 + $0x10] sm:$0xff]
    %v5907 = vld [vmem:[%s5903 + $0x18] sm:$0xff]
    %s5908 = scalar_lea.vmem %s8, 1
    %v5909 = vld [vmem:[%s5908] sm:$0x1]
    %v5911 = vlaneseq
    %v5912 = vshrl.u32 %v5911, 7
    %v5913 = vsub.s32 0, %v5912
    %v5914 = vrot.slane %v5909, %v5913
    %v5917 = vsel %vm48, %v5901, 0
    %v5920 = vsel %vm48, %v5902, 0
    %5922 = vmatprep.subr.mxu0 0.0
    %5923 = vmatpush1.msra.mxu0 0.0
    %5924 = vmatprep.subr.mxu0 0.0
    %5925 = vmatpush1.msra.mxu0 0.0
    %5926 = vmatprep.subr.mxu0 0.0
    %5927 = vmatpush1.msra.mxu0 0.0
    %5928 = vmatprep.subr.mxu0 0.0
    %5929 = vmatpush1.msra.mxu0 0.0
    %5930 = vmatprep.subr.mxu0 0.0
    %5931 = vmatpush1.msra.mxu0 0.0
    %5932 = vmatprep.subr.mxu0 0.0
    %5933 = vmatpush1.msra.mxu0 0.0
    %5934 = vmatprep.subr.mxu0 0.0
    %5935 = vmatpush1.msra.mxu0 0.0
    %5936 = vmatprep.subr.mxu0 0.0
    %5937 = vmatpush1.msra.mxu0 0.0
    %5938 = vmatprep.subr.mxu0 0.0
    %5939 = vmatpush1.msra.mxu0 0.0
    %5940 = vmatprep.subr.mxu0 0.0
    %5941 = vmatpush1.msra.mxu0 0.0
    %5942 = vmatprep.subr.mxu0 0.0
    %5943 = vmatpush1.msra.mxu0 0.0
    %5944 = vmatprep.subr.mxu0 0.0
    %5945 = vmatpush1.msra.mxu0 0.0
    %5946 = vmatprep.subr.mxu0 0.0
    %5947 = vmatpush1.msra.mxu0 %v5907
    %5948 = vmatprep.subr.mxu0 0.0
    %5949 = vmatpush1.msra.mxu0 %v5906
    %5950 = vmatprep.subr.mxu0 0.0
    %5951 = vmatpush1.msra.mxu0 %v5905
    %5952 = vmatprep.subr.mxu0 0.0
    %5953 = vmatpush1.msra.mxu0 %v5904
    %5954 = vmatprep.subr.mxu0 0.0
    %5955 = vmatpush2.msra.mxu0 0.0
    %5956 = vmatprep.subr.mxu0 0.0
    %5957 = vmatpush2.msra.mxu0 0.0
    %5958 = vmatprep.subr.mxu0 0.0
    %5959 = vmatpush2.msra.mxu0 0.0
    %5960 = vmatprep.subr.mxu0 0.0
    %5961 = vmatpush2.msra.mxu0 0.0
    %5962 = vmatprep.subr.mxu0 0.0
    %5963 = vmatpush2.msra.mxu0 0.0
    %5964 = vmatprep.subr.mxu0 0.0
    %5965 = vmatpush2.msra.mxu0 0.0
    %5966 = vmatprep.subr.mxu0 0.0
    %5967 = vmatpush2.msra.mxu0 0.0
    %5968 = vmatprep.subr.mxu0 0.0
    %5969 = vmatpush2.msra.mxu0 0.0
    %5970 = vmatprep.subr.mxu0 0.0
    %5971 = vmatpush2.msra.mxu0 0.0
    %5972 = vmatprep.subr.mxu0 0.0
    %5973 = vmatpush2.msra.mxu0 0.0
    %5974 = vmatprep.subr.mxu0 0.0
    %5975 = vmatpush2.msra.mxu0 0.0
    %5976 = vmatprep.subr.mxu0 0.0
    %5977 = vmatpush2.msra.mxu0 0.0
    %5978 = vmatprep.subr.mxu0 0.0
    %5979 = vmatpush2.msra.mxu0 0.0
    %5980 = vmatprep.subr.mxu0 0.0
    %5981 = vmatpush2.msra.mxu0 0.0
    %5982 = vmatprep.subr.mxu0 0.0
    %5983 = vmatpush2.msra.mxu0 0.0
    %5984 = vmatprep.subr.mxu0 0.0
    %5985 = vmatpush2.msra.mxu0 0.0
    %5986 = vmatprep.mubr.f32.mxu0 0.0
    %5987 = vmatmul.mubr.f32.gmra.mxu0 %v5917
    %v5988 = vpop.f32.mrf.mxu0
    %v5989 = vadd.f32 %v5914, %v5988
    %v5990 = vpop.f32.mrf.mxu0
    %5991 = vmatprep.mubr.f32.mxu0 0.0
    %5992 = vmatmul.mubr.f32.gmra.mxu0 %v5920
    %v5993 = vpop.f32.mrf.mxu0
    %v5994 = vadd.f32 %v5914, %v5993
    %v5995 = vpop.f32.mrf.mxu0
    %5996 = vdwg.mxu0
    %v5997 = vmax.f32 %v5989, 0.0
    %v5998 = vmax.f32 %v5994, 0.0
    %s5999 = scalar_lea.vmem %s9, 64
    %v6000 = vld [vmem:[%s5999] sm:$0xff]
    %v6001 = vld [vmem:[%s5999 + $0x8] sm:$0xff]
    %v6002 = vld [vmem:[%s5999 + $0x10] sm:$0xff]
    %v6003 = vld [vmem:[%s5999 + $0x18] sm:$0xff]
    %v6004 = vld [vmem:[%s5999 + $0x20] sm:$0xff]
    %v6005 = vld [vmem:[%s5999 + $0x28] sm:$0xff]
    %v6006 = vld [vmem:[%s5999 + $0x30] sm:$0xff]
    %v6007 = vld [vmem:[%s5999 + $0x38] sm:$0xff]
    %v6009 = vsel %vm2983, %v5997, 0
    %v6012 = vsel %vm2983, %v5998, 0
    %6014 = vmatprep.subr.mxu0 0.0
    %6015 = vmatpush1.msra.mxu0 0.0
    %6016 = vmatprep.subr.mxu0 0.0
    %6017 = vmatpush1.msra.mxu0 0.0
    %6018 = vmatprep.subr.mxu0 0.0
    %6019 = vmatpush1.msra.mxu0 0.0
    %6020 = vmatprep.subr.mxu0 0.0
    %6021 = vmatpush1.msra.mxu0 0.0
    %6022 = vmatprep.subr.mxu0 0.0
    %6023 = vmatpush1.msra.mxu0 0.0
    %6024 = vmatprep.subr.mxu0 0.0
    %6025 = vmatpush1.msra.mxu0 0.0
    %6026 = vmatprep.subr.mxu0 0.0
    %6027 = vmatpush1.msra.mxu0 0.0
    %6028 = vmatprep.subr.mxu0 0.0
    %6029 = vmatpush1.msra.mxu0 0.0
    %6030 = vmatprep.subr.mxu0 0.0
    %6031 = vmatpush1.msra.mxu0 %v6007
    %6032 = vmatprep.subr.mxu0 0.0
    %6033 = vmatpush1.msra.mxu0 %v6006
    %6034 = vmatprep.subr.mxu0 0.0
    %6035 = vmatpush1.msra.mxu0 %v6005
    %6036 = vmatprep.subr.mxu0 0.0
    %6037 = vmatpush1.msra.mxu0 %v6004
    %6038 = vmatprep.subr.mxu0 0.0
    %6039 = vmatpush1.msra.mxu0 %v6003
    %6040 = vmatprep.subr.mxu0 0.0
    %6041 = vmatpush1.msra.mxu0 %v6002
    %6042 = vmatprep.subr.mxu0 0.0
    %6043 = vmatpush1.msra.mxu0 %v6001
    %6044 = vmatprep.subr.mxu0 0.0
    %6045 = vmatpush1.msra.mxu0 %v6000
    %6046 = vmatprep.subr.mxu0 0.0
    %6047 = vmatpush2.msra.mxu0 0.0
    %6048 = vmatprep.subr.mxu0 0.0
    %6049 = vmatpush2.msra.mxu0 0.0
    %6050 = vmatprep.subr.mxu0 0.0
    %6051 = vmatpush2.msra.mxu0 0.0
    %6052 = vmatprep.subr.mxu0 0.0
    %6053 = vmatpush2.msra.mxu0 0.0
    %6054 = vmatprep.subr.mxu0 0.0
    %6055 = vmatpush2.msra.mxu0 0.0
    %6056 = vmatprep.subr.mxu0 0.0
    %6057 = vmatpush2.msra.mxu0 0.0
    %6058 = vmatprep.subr.mxu0 0.0
    %6059 = vmatpush2.msra.mxu0 0.0
    %6060 = vmatprep.subr.mxu0 0.0
    %6061 = vmatpush2.msra.mxu0 0.0
    %6062 = vmatprep.subr.mxu0 0.0
    %6063 = vmatpush2.msra.mxu0 0.0
    %6064 = vmatprep.subr.mxu0 0.0
    %6065 = vmatpush2.msra.mxu0 0.0
    %6066 = vmatprep.subr.mxu0 0.0
    %6067 = vmatpush2.msra.mxu0 0.0
    %6068 = vmatprep.subr.mxu0 0.0
    %6069 = vmatpush2.msra.mxu0 0.0
    %6070 = vmatprep.subr.mxu0 0.0
    %6071 = vmatpush2.msra.mxu0 0.0
    %6072 = vmatprep.subr.mxu0 0.0
    %6073 = vmatpush2.msra.mxu0 0.0
    %6074 = vmatprep.subr.mxu0 0.0
    %6075 = vmatpush2.msra.mxu0 0.0
    %6076 = vmatprep.subr.mxu0 0.0
    %6077 = vmatpush2.msra.mxu0 0.0
    %6078 = vmatprep.mubr.f32.mxu0 0.0
    %6079 = vmatmul.mubr.f32.gmra.mxu0 %v6009
    %v6080 = vpop.f32.mrf.mxu0
    %v6081 = vadd.f32 0.0, %v6080
    %v6082 = vpop.f32.mrf.mxu0
    %6083 = vmatprep.mubr.f32.mxu0 0.0
    %6084 = vmatmul.mubr.f32.gmra.mxu0 %v6012
    %v6085 = vpop.f32.mrf.mxu0
    %v6086 = vadd.f32 0.0, %v6085
    %v6087 = vpop.f32.mrf.mxu0
    %6088 = vdwg.mxu0
    %v6089 = vadd.f32 %v5841, %v6081
    %v6090 = vadd.f32 %v5842, %v6086
    %s6091 = scalar_lea.vmem %s6, 3
    %v6092 = vld [vmem:[%s6091] sm:$0x1]
    %v6094 = vlaneseq
    %v6095 = vshrl.u32 %v6094, 7
    %v6096 = vsub.s32 0, %v6095
    %v6097 = vrot.slane %v6092, %v6096
    %v6099 = vadd.f32 %v6089, %v6097
    %v6100 = vadd.f32 %v6090, %v6097
    %v6101 = vld [vmem:[%s10] sm:$0x1]
    %s6102 = scalar_lea.vmem %s10, 1
    %v6103 = vld [vmem:[%s6102] sm:$0x1]
    %v6104 = vsel %vm48, %v6099, 0.0
    %6105 = vadd.xlane.f32.xlu0 %v6104
    %v6106 = vpop.xlane.xlu0 %6105
    %v6107 = vsel %vm48, %v6100, 0.0
    %6108 = vadd.xlane.f32.xlu0 %v6107
    %v6109 = vpop.xlane.xlu0 %6108
    %v6110 = vmul.f32 %v6106, %v55
    %v6111 = vmul.f32 %v6109, %v55
    %v6112 = vsub.f32 %v6099, %v6110
    %v6113 = vsub.f32 %v6100, %v6111
    %v6114 = vmul.f32 %v6112, %v6112
    %v6115 = vmul.f32 %v6113, %v6113
    %v6116 = vsel %vm48, %v6114, 0.0
    %6117 = vadd.xlane.f32.xlu0 %v6116
    %v6118 = vpop.xlane.xlu0 %6117
    %v6119 = vsel %vm48, %v6115, 0.0
    %6120 = vadd.xlane.f32.xlu0 %v6119
    %v6121 = vpop.xlane.xlu0 %6120
    %v6122 = vmul.f32 %v6118, 0.032258064
    %v6123 = vmul.f32 %v6121, 0.032258064
    %v6124 = vrsqrt.pop %v6122
    %v6125 = vmul.f32 %v6122, %v6124
    %vm6126 = vcmp.eq.f32.partialorder %v6122, inf
    %v6127 = vsel %vm6126, %v6122, %v6125
    %vm6128 = vcmp.eq.f32.partialorder %v6122, 0.0
    %v6129 = vand.u32 %v6122, 2147483648
    %v6130 = vsel %vm6128, %v6129, %v6127
    %v6131 = vrsqrt.pop %v6123
    %v6132 = vmul.f32 %v6123, %v6131
    %vm6133 = vcmp.eq.f32.partialorder %v6123, inf
    %v6134 = vsel %vm6133, %v6123, %v6132
    %vm6135 = vcmp.eq.f32.partialorder %v6123, 0.0
    %v6136 = vand.u32 %v6123, 2147483648
    %v6137 = vsel %vm6135, %v6136, %v6134
    %v6138 = vadd.f32 %v6130, 1e-06
    %v6139 = vadd.f32 %v6137, 1e-06
    %v6140 = vrcp.pop %v6138
    %v6141 = vrcp.pop %v6139
    %v6143 = vlaneseq
    %v6144 = vshrl.u32 %v6143, 7
    %v6145 = vsub.s32 0, %v6144
    %v6146 = vrot.slane %v6101, %v6145
    %v6148 = vmul.f32 %v6146, %v6112
    %v6149 = vmul.f32 %v6146, %v6113
    %v6150 = vmul.f32 %v6148, %v6140
    %v6151 = vmul.f32 %v6149, %v6141
    %v6153 = vlaneseq
    %v6154 = vshrl.u32 %v6153, 7
    %v6155 = vsub.s32 0, %v6154
    %v6156 = vrot.slane %v6103, %v6155
    %v6158 = vadd.f32 %v6150, %v6156
    %v6159 = vadd.f32 %v6151, %v6156
    %6160 = vst.msk [vmem:[#allocation2] sm:$0xff] %vm48, %v6158
    %6161 = vst.msk [vmem:[#allocation2 + $0x8] sm:$0xff] %vm48, %v6159
    // Predicated region
    $region46: #{encoder_forward.1} parent=1 // pred_check
      _
    $region47: #{encoder_forward.1} parent=1 // pred_check_branch
      %6163 = sbr.rel (0) target = $region49
    $region48: #{encoder_forward.1} parent=1 // pred_region
      %s6165 = ssub.s32 256, 256
      %6166 = vsyncadd [#allocation3], %s6165
      %s6167 = sshll.u32 [#allocation2], 4
      %s6168 = int_to_ptr.vmem [resolvable:$true] %s6167
      %6173 = dma.vmem_to_hbm [thread:$0]  %s6168, 256, %s11, [#allocation3], 128, 128, 8
    $region49: #{encoder_forward.1} parent=1 // pred_fallthru
      _
    // Predicated region
    $region50: #{encoder_forward.1} parent=1 // pred_check
      _
    $region51: #{encoder_forward.1} parent=1 // pred_check_branch
      %6175 = sbr.rel (0) target = $region53
    $region52: #{encoder_forward.1} parent=1 // pred_region
      %6176 = dma.done [#allocation3], 256
    $region53: #{encoder_forward.1} parent=1 // pred_fallthru
      _
    %6177 = vsyncpa [#allocation3], 1

</llo_original>
